<compile_context>
chip_gen: v7x
topology: tpu7x:2x2x1
jax: 0.10.0
libtpu: 0.0.40
codegen_flags: <defaults>
</compile_context>

<pallas_src>
import functools

import jax
import jax.numpy as jnp
from jax.experimental import pallas as pl
from jax.experimental.pallas import tpu as pltpu

FILTER_SIZES = [32, 16, 8, 8, 16, 32]
KERNEL_SIZES = [9, 5, 3, 3, 5, 9]
STRIDES = [3, 2, 2, 2, 2, 3]

LANE = 128  # TPU lane width: narrow output-channel counts are padded to this.


def _round_up(x, m):
    return (x + m - 1) // m * m


def _choose_tm(m):
    """Row-tile size: multiple of 64, <=512, preferring an EVEN grid count
    (v7x has 2 TensorCores sharing the single 'parallel' grid axis)."""
    steps = max(2, -(-m // 512))
    if steps % 2:
        steps += 1
    return min(512, _round_up(-(-m // steps), 64))


# ------------------------------ Pallas kernel ------------------------------ #

def _mm_bias_act_kernel(x_ref, w_ref, b_ref, o_ref, *, relu):
    """Fused (tm, K) @ (K, Nout) matmul + bias + optional ReLU.

    All kh*kw conv taps were folded into K by the wrapper, so there is no
    per-tap loop and no VMEM scratch accumulator: one MXU matmul (f32
    accumulate), one lane-dense store.
    """
    acc = jnp.dot(x_ref[...], w_ref[...], preferred_element_type=jnp.float32)
    acc = acc + b_ref[...]
    if relu:
        acc = jnp.maximum(acc, 0.0)
    o_ref[...] = acc.astype(o_ref.dtype)


def _flat_conv(xin, w2d, b_row, *, kh, kw, oh, ow, cout, relu, out_dtype):
    """Stride-1 'valid' conv of xin (N,H,W,C), all kh*kw taps folded into K.

    w2d:   (kh*kw*C, Nout_padded)  bf16, tap-major / channel-minor layout.
    b_row: (1, Nout_padded)        f32.
    Returns (N, oh, ow, cout).
    """
    n, h, w, c = xin.shape
    k_dim, nout_p = w2d.shape
    assert k_dim == kh * kw * c
    # Cropping invariant: only rows/cols whose full kh x kw window stays inside
    # the same image row / image are kept, so the wrapper-side shifted fold may
    # read into the next row/image only for outputs that are discarded below.
    assert oh <= h - kh + 1 and ow <= w - kw + 1

    m = n * h * w
    tm = _choose_tm(m)
    grid = -(-m // tm)
    rows = grid * tm

    # Fold ALL kh*kw taps into the contraction dim, wrapper-side.
    x2 = xin.reshape(m, c)
    x2 = jnp.pad(x2, ((0, (kh - 1) * w + (kw - 1)), (0, 0)))
    cols = [x2[dy * w + dx: dy * w + dx + m, :]
            for dy in range(kh) for dx in range(kw)]
    xk = jnp.concatenate(cols, axis=1) if len(cols) > 1 else cols[0]
    xk = jnp.pad(xk, ((0, rows - m), (0, 0)))

    out_isize = 2 if out_dtype == jnp.bfloat16 else 4
    # Guard the double-buffered VMEM footprint (v7x: 64 MiB physical).
    vmem_bytes = 2 * (tm * k_dim * 2 + k_dim * nout_p * 2
                      + tm * nout_p * out_isize + nout_p * 4)
    assert vmem_bytes < 24 * 1024 * 1024, vmem_bytes

    cost = pl.CostEstimate(
        flops=int(2 * m * k_dim * nout_p),
        transcendentals=0,
        bytes_accessed=int(rows * k_dim * 2 + k_dim * nout_p * 2
                           + nout_p * 4 + rows * nout_p * out_isize))

    out = pl.pallas_call(
        functools.partial(_mm_bias_act_kernel, relu=relu),
        out_shape=jax.ShapeDtypeStruct((rows, nout_p), out_dtype),
        grid_spec=pltpu.PrefetchScalarGridSpec(
            num_scalar_prefetch=0,
            grid=(grid,),
            in_specs=[
                pl.BlockSpec((tm, k_dim), lambda i: (i, 0)),
                pl.BlockSpec((k_dim, nout_p), lambda i: (0, 0)),
                pl.BlockSpec((1, nout_p), lambda i: (0, 0)),
            ],
            out_specs=pl.BlockSpec((tm, nout_p), lambda i: (i, 0)),
        ),
        compiler_params=pltpu.CompilerParams(
            dimension_semantics=("parallel",)),
        cost_estimate=cost,
    )(xk, w2d, b_row)

    out = out[:m, :cout].reshape(n, h, w, cout)
    return out[:, :oh, :ow, :]


# ------------------------------ layer wrappers ----------------------------- #

def conv_s2d(x, w2d, b_row, *, stride, pad, ksize, cout, relu,
             out_dtype=jnp.bfloat16):
    """Strided Conv2d via space-to-depth -> stride-1 folded matmul."""
    n, h, w, c = x.shape
    kk = _round_up(ksize, stride)
    kb = kk // stride
    oh = (h + 2 * pad - ksize) // stride + 1
    ow = (w + 2 * pad - ksize) // stride + 1
    hp = max(_round_up(h + 2 * pad, stride), (oh - 1) * stride + kk)
    wp = max(_round_up(w + 2 * pad, stride), (ow - 1) * stride + kk)
    xp = jnp.pad(x, ((0, 0), (pad, hp - h - pad), (pad, wp - w - pad), (0, 0)))
    hb, wb = hp // stride, wp // stride
    xs = xp.reshape(n, hb, stride, wb, stride, c)
    xs = xs.transpose(0, 1, 3, 2, 4, 5).reshape(n, hb, wb, stride * stride * c)
    return _flat_conv(xs, w2d, b_row, kh=kb, kw=kb, oh=oh, ow=ow,
                      cout=cout, relu=relu, out_dtype=out_dtype)


def convt_subpixel(x, w2d, b_row, *, stride, pad, ksize, out_pad, cout, relu):
    """ConvTranspose2d via sub-pixel decomposition (stride-1 conv + shuffle)."""
    n, h, w, c = x.shape
    tt = -(-ksize // stride)                      # taps per phase
    oh = (h - 1) * stride - 2 * pad + ksize + out_pad
    ow = (w - 1) * stride - 2 * pad + ksize + out_pad
    xp = jnp.pad(x, ((0, 0), (tt - 1, tt - 1), (tt - 1, tt - 1), (0, 0)))
    cpre = stride * stride * cout                 # pre-shuffle true channels
    o = _flat_conv(xp, w2d, b_row, kh=tt, kw=tt,
                   oh=h + tt - 1, ow=w + tt - 1,
                   cout=cpre, relu=relu, out_dtype=jnp.bfloat16)
    hh, ww = h + tt - 1, w + tt - 1
    o = o.reshape(n, hh, ww, stride, stride, cout)
    o = o.transpose(0, 1, 3, 2, 4, 5).reshape(n, hh * stride, ww * stride, cout)
    return o[:, pad:pad + oh, pad:pad + ow, :]


# ---------------------------- weight preparation --------------------------- #

def _pad_lanes(w2d, b_row):
    """Zero-pad output channels to 128 lanes -> unmasked full-lane stores."""
    nout = w2d.shape[-1]
    if nout >= LANE:
        return w2d, b_row
    padn = LANE - nout
    return jnp.pad(w2d, ((0, 0), (0, padn))), jnp.pad(b_row, ((0, 0), (0, padn)))


def _prep_conv_w(w, b, stride):
    """PyTorch Conv2d weight (Cout,Cin,k,k) -> folded space-to-depth matrix."""
    cout, cin, k, _ = w.shape
    kk = _round_up(k, stride)
    kb = kk // stride
    wp = jnp.zeros((cout, cin, kk, kk), w.dtype).at[:, :, :k, :k].set(w)
    wr = wp.reshape(cout, cin, kb, stride, kb, stride)
    wr = wr.transpose(2, 4, 3, 5, 1, 0)           # (dy, dx, py, px, ci, co)
    w2d = wr.reshape(kb * kb * stride * stride * cin, cout).astype(jnp.bfloat16)
    b_row = b.reshape(1, cout).astype(jnp.float32)
    return _pad_lanes(w2d, b_row)


def _prep_convt_w(w, b, stride):
    """PyTorch ConvTranspose2d weight (Cin,Cout,k,k) -> folded sub-pixel matrix."""
    cin, cout, k, _ = w.shape
    tt = -(-k // stride)
    kk = tt * stride
    wp = jnp.zeros((cin, cout, kk, kk), w.dtype).at[:, :, :k, :k].set(w)
    wr = wp.reshape(cin, cout, tt, stride, tt, stride)   # (ci, co, jy, ry, jx, rx)
    wr = jnp.flip(wr, axis=(2, 4))                       # tap flip: dy = tt-1-jy
    wr = wr.transpose(2, 4, 0, 3, 5, 1)                  # (dy, dx, ci, ry, rx, co)
    w2d = wr.reshape(tt * tt * cin, stride * stride * cout).astype(jnp.bfloat16)
    bb = jnp.tile(b.reshape(1, cout), (stride * stride, 1)).reshape(1, -1)
    return _pad_lanes(w2d, bb.astype(jnp.float32))


def prepare_params(params):
    p = {}
    p['conv1'] = _prep_conv_w(params['conv1_w'], params['conv1_b'], STRIDES[0])
    p['conv2'] = _prep_conv_w(params['conv2_w'], params['conv2_b'], STRIDES[1])
    p['conv3'] = _prep_conv_w(params['conv3_w'], params['conv3_b'], STRIDES[2])
    p['convt1'] = _prep_convt_w(params['convt1_w'], params['convt1_b'], STRIDES[3])
    p['convt2'] = _prep_convt_w(params['convt2_w'], params['convt2_b'], STRIDES[4])
    p['convt3'] = _prep_convt_w(params['convt3_w'], params['convt3_b'], STRIDES[5])
    p['head'] = _prep_conv_w(params['head_w'], params['head_b'], 1)
    return p


# ------------------------------- parameters -------------------------------- #

def init_params(key, input_channels=1):
    params = {}
    keys = iter(jax.random.split(key, 20))

    def xavier(k, shape, fan_in, fan_out):
        bound = (6.0 / (fan_in + fan_out)) ** 0.5
        return jax.random.uniform(k, shape, jnp.float32, -bound, bound)

    def bias(k, n, fan_in):
        bound = 1.0 / (fan_in ** 0.5)
        return jax.random.uniform(k, (n,), jnp.float32, -bound, bound)

    cin = input_channels
    for idx in range(3):  # conv1..conv3
        cout, ks = FILTER_SIZES[idx], KERNEL_SIZES[idx]
        fan_in, fan_out = cin * ks * ks, cout * ks * ks
        params[f'conv{idx + 1}_w'] = xavier(next(keys), (cout, cin, ks, ks), fan_in, fan_out)
        params[f'conv{idx + 1}_b'] = bias(next(keys), cout, fan_in)
        cin = cout

    for idx in range(3):  # convt1..convt3 (weight layout: (Cin, Cout, k, k))
        cout, ks = FILTER_SIZES[idx + 3], KERNEL_SIZES[idx + 3]
        fan_in, fan_out = cout * ks * ks, cin * ks * ks
        params[f'convt{idx + 1}_w'] = xavier(next(keys), (cin, cout, ks, ks), fan_in, fan_out)
        params[f'convt{idx + 1}_b'] = bias(next(keys), cout, fan_in)
        cin = cout

    # Four 2x2 output heads (pos/cos/sin/width) stacked into one 4-channel conv.
    fan_in, fan_out = cin * 2 * 2, 1 * 2 * 2
    hw, hb = [], []
    for _ in range(4):
        hw.append(xavier(next(keys), (1, cin, 2, 2), fan_in, fan_out))
        hb.append(bias(next(keys), 1, fan_in))
    params['head_w'] = jnp.concatenate(hw, axis=0)   # (4, 32, 2, 2)
    params['head_b'] = jnp.concatenate(hb, axis=0)   # (4,)
    return params


# --------------------------------- forward --------------------------------- #

def ggcnn_forward(prep, x_nchw):
    x = jnp.transpose(x_nchw, (0, 2, 3, 1)).astype(jnp.bfloat16)   # NCHW -> NHWC
    x = conv_s2d(x, *prep['conv1'], stride=3, pad=3, ksize=9,
                 cout=FILTER_SIZES[0], relu=True)
    x = conv_s2d(x, *prep['conv2'], stride=2, pad=2, ksize=5,
                 cout=FILTER_SIZES[1], relu=True)
    x = conv_s2d(x, *prep['conv3'], stride=2, pad=1, ksize=3,
                 cout=FILTER_SIZES[2], relu=True)
    x = convt_subpixel(x, *prep['convt1'], stride=2, pad=1, ksize=3, out_pad=1,
                       cout=FILTER_SIZES[3], relu=True)
    x = convt_subpixel(x, *prep['convt2'], stride=2, pad=2, ksize=5, out_pad=1,
                       cout=FILTER_SIZES[4], relu=True)
    x = convt_subpixel(x, *prep['convt3'], stride=3, pad=3, ksize=9, out_pad=1,
                       cout=FILTER_SIZES[5], relu=True)
    heads = conv_s2d(x, *prep['head'], stride=1, pad=0, ksize=2, cout=4,
                     relu=False, out_dtype=jnp.float32)
    heads = jnp.transpose(heads, (0, 3, 1, 2))       # back to NCHW
    return heads[:, 0:1], heads[:, 1:2], heads[:, 2:3], heads[:, 3:4]


# ---------------------- bf16-matched pure-XLA reference --------------------- #

def ggcnn_reference(params, x_nchw):
    """XLA reference with the SAME bf16 inter-layer activation flow."""
    def conv(x, w, b, s, p):
        y = jax.lax.conv_general_dilated(
            x.astype(jnp.bfloat16), w.astype(jnp.bfloat16),
            window_strides=(s, s), padding=[(p, p), (p, p)],
            dimension_numbers=('NCHW', 'OIHW', 'NCHW'),
            preferred_element_type=jnp.float32)
        return y + b.reshape(1, -1, 1, 1)

    def convt(x, w, b, s, p, k, op):
        wf = jnp.flip(w, (-2, -1)).transpose(1, 0, 2, 3)   # -> (Cout, Cin, k, k)
        y = jax.lax.conv_general_dilated(
            x.astype(jnp.bfloat16), wf.astype(jnp.bfloat16),
            window_strides=(1, 1),
            padding=[(k - 1 - p, k - 1 - p + op), (k - 1 - p, k - 1 - p + op)],
            lhs_dilation=(s, s),
            dimension_numbers=('NCHW', 'OIHW', 'NCHW'),
            preferred_element_type=jnp.float32)
        return y + b.reshape(1, -1, 1, 1)

    relu = lambda v: jnp.maximum(v, 0.0).astype(jnp.bfloat16)
    x = x_nchw
    x = relu(conv(x, params['conv1_w'], params['conv1_b'], 3, 3))
    x = relu(conv(x, params['conv2_w'], params['conv2_b'], 2, 2))
    x = relu(conv(x, params['conv3_w'], params['conv3_b'], 2, 1))
    x = relu(convt(x, params['convt1_w'], params['convt1_b'], 2, 1, 3, 1))
    x = relu(convt(x, params['convt2_w'], params['convt2_b'], 2, 2, 5, 1))
    x = relu(convt(x, params['convt3_w'], params['convt3_b'], 3, 3, 9, 1))
    return conv(x, params['head_w'], params['head_b'], 1, 0).astype(jnp.float32)


if __name__ == "__main__":
    key = jax.random.PRNGKey(0)
    pkey, xkey = jax.random.split(key)
    params = init_params(pkey, input_channels=1)
    prep = prepare_params(params)

    # batch=2, input_channels=1, spatial 48x48 (NCHW, matching the PyTorch module)
    x = jax.random.normal(xkey, (2, 1, 48, 48), jnp.float32)

    outs = jax.block_until_ready(jax.jit(ggcnn_forward)(prep, x))
    pos, cos, sin, width = outs

    # 48 -> conv(16) -> conv(8) -> conv(4) -> convT(8) -> convT(16) -> convT(49) -> head(48)
    assert pos.shape == (2, 1, 48, 48), pos.shape
    assert cos.shape == sin.shape == width.shape == (2, 1, 48, 48)
    assert all(o.dtype == jnp.float32 for o in outs)

    # Numerical check against a bf16-matched XLA reference (review concern #1).
    ref = jax.block_until_ready(jax.jit(ggcnn_reference)(params, x))
    got = jnp.concatenate([pos, cos, sin, width], axis=1)
    rel_err = float(jnp.max(jnp.abs(got - ref)) / (jnp.max(jnp.abs(ref)) + 1e-6))
    assert rel_err < 0.06, f"numerical mismatch: rel_err={rel_err:.4f}"

    print("KERNEL_OK")
</pallas_src>

<mosaic_0001>
module attributes {stable_mosaic.version = 11 : i64} {
  func.func @_mm_bias_act_kernel(%arg0: i32, %arg1: memref<384x81xbf16, #tpu.memory_space<vmem>>, %arg2: memref<81x128xbf16, #tpu.memory_space<vmem>>, %arg3: memref<1x128xf32, #tpu.memory_space<vmem>>, %arg4: memref<384x128xbf16, #tpu.memory_space<vmem>>) attributes {dimension_semantics = [#tpu.dimension_semantics<parallel>], iteration_bounds = array<i64: 2>, scalar_prefetch = 0 : i64, scratch_operands = 0 : i64, tpu.core_type = #tpu.core_type<tc>, window_params = [{transform_indices = @transform_0, window_bounds = array<i64: 384, 81>}, {pipeline_mode = #tpu.pipeline_mode<synchronous>, transform_indices = @transform_1, window_bounds = array<i64: 81, 128>}, {pipeline_mode = #tpu.pipeline_mode<synchronous>, transform_indices = @transform_2, window_bounds = array<i64: 1, 128>}, {transform_indices = @transform_3, window_bounds = array<i64: 384, 128>}]} {
    %c0 = arith.constant 0 : index
    %c0_0 = arith.constant 0 : index
    %0 = vector.load %arg1[%c0, %c0_0] : memref<384x81xbf16, #tpu.memory_space<vmem>>, vector<384x81xbf16>
    %c0_1 = arith.constant 0 : index
    %c0_2 = arith.constant 0 : index
    %1 = vector.load %arg2[%c0_1, %c0_2] : memref<81x128xbf16, #tpu.memory_space<vmem>>, vector<81x128xbf16>
    %cst = arith.constant dense<0.000000e+00> : vector<384x128xf32>
    %2 = tpu.matmul %0, %1, %cst {dimension_numbers = #tpu.dot_dimension_numbers<[1], [0], [0], [1], [0, 0, 1, 1], [], []>} : vector<384x81xbf16>, vector<81x128xbf16>, vector<384x128xf32> -> vector<384x128xf32>
    %c0_3 = arith.constant 0 : index
    %c0_4 = arith.constant 0 : index
    %3 = vector.load %arg3[%c0_3, %c0_4] : memref<1x128xf32, #tpu.memory_space<vmem>>, vector<1x128xf32>
    %4 = vector.broadcast %3 : vector<1x128xf32> to vector<384x128xf32>
    %5 = arith.addf %2, %4 : vector<384x128xf32>
    %cst_5 = arith.constant 0.000000e+00 : f32
    %6 = vector.broadcast %cst_5 : f32 to vector<384x128xf32>
    %7 = arith.maximumf %5, %6 : vector<384x128xf32>
    %8 = arith.truncf %7 : vector<384x128xf32> to vector<384x128xbf16>
    %c0_6 = arith.constant 0 : index
    %c0_7 = arith.constant 0 : index
    %9 = vector.load %arg4[%c0_6, %c0_7] : memref<384x128xbf16, #tpu.memory_space<vmem>>, vector<384x128xbf16>
    tpu.vector_store %arg4[%c0_6, %c0_7], %8 {strides = array<i32>} : memref<384x128xbf16, #tpu.memory_space<vmem>>, vector<384x128xbf16>,
    return
  }
  func.func @transform_0(%arg0: i32) -> (i32, i32) {
    %c0_i32 = arith.constant 0 : i32
    %c0_i32_0 = arith.constant 0 : i32
    return %arg0, %c0_i32 : i32, i32
  }
  func.func @transform_1(%arg0: i32) -> (i32, i32) {
    %c0_i32 = arith.constant 0 : i32
    %c0_i32_0 = arith.constant 0 : i32
    %c0_i32_1 = arith.constant 0 : i32
    return %c0_i32, %c0_i32_0 : i32, i32
  }
  func.func @transform_2(%arg0: i32) -> (i32, i32) {
    %c0_i32 = arith.constant 0 : i32
    %c0_i32_0 = arith.constant 0 : i32
    %c0_i32_1 = arith.constant 0 : i32
    return %c0_i32, %c0_i32_0 : i32, i32
  }
  func.func @transform_3(%arg0: i32) -> (i32, i32) {
    %c0_i32 = arith.constant 0 : i32
    %c0_i32_0 = arith.constant 0 : i32
    return %arg0, %c0_i32 : i32, i32
  }
}

module attributes {stable_mosaic.version = 11 : i64} {
  func.func @_mm_bias_act_kernel(%arg0: i32, %arg1: memref<128x1152xbf16, #tpu.memory_space<vmem>>, %arg2: memref<1152x128xbf16, #tpu.memory_space<vmem>>, %arg3: memref<1x128xf32, #tpu.memory_space<vmem>>, %arg4: memref<128x128xbf16, #tpu.memory_space<vmem>>) attributes {dimension_semantics = [#tpu.dimension_semantics<parallel>], iteration_bounds = array<i64: 2>, scalar_prefetch = 0 : i64, scratch_operands = 0 : i64, tpu.core_type = #tpu.core_type<tc>, window_params = [{transform_indices = @transform_0, window_bounds = array<i64: 128, 1152>}, {pipeline_mode = #tpu.pipeline_mode<synchronous>, transform_indices = @transform_1, window_bounds = array<i64: 1152, 128>}, {pipeline_mode = #tpu.pipeline_mode<synchronous>, transform_indices = @transform_2, window_bounds = array<i64: 1, 128>}, {transform_indices = @transform_3, window_bounds = array<i64: 128, 128>}]} {
    %c0 = arith.constant 0 : index
    %c0_0 = arith.constant 0 : index
    %0 = vector.load %arg1[%c0, %c0_0] : memref<128x1152xbf16, #tpu.memory_space<vmem>>, vector<128x1152xbf16>
    %c0_1 = arith.constant 0 : index
    %c0_2 = arith.constant 0 : index
    %1 = vector.load %arg2[%c0_1, %c0_2] : memref<1152x128xbf16, #tpu.memory_space<vmem>>, vector<1152x128xbf16>
    %cst = arith.constant dense<0.000000e+00> : vector<128x128xf32>
    %2 = tpu.matmul %0, %1, %cst {dimension_numbers = #tpu.dot_dimension_numbers<[1], [0], [0], [1], [0, 0, 1, 1], [], []>} : vector<128x1152xbf16>, vector<1152x128xbf16>, vector<128x128xf32> -> vector<128x128xf32>
    %c0_3 = arith.constant 0 : index
    %c0_4 = arith.constant 0 : index
    %3 = vector.load %arg3[%c0_3, %c0_4] : memref<1x128xf32, #tpu.memory_space<vmem>>, vector<1x128xf32>
    %4 = vector.broadcast %3 : vector<1x128xf32> to vector<128x128xf32>
    %5 = arith.addf %2, %4 : vector<128x128xf32>
    %cst_5 = arith.constant 0.000000e+00 : f32
    %6 = vector.broadcast %cst_5 : f32 to vector<128x128xf32>
    %7 = arith.maximumf %5, %6 : vector<128x128xf32>
    %8 = arith.truncf %7 : vector<128x128xf32> to vector<128x128xbf16>
    %c0_6 = arith.constant 0 : index
    %c0_7 = arith.constant 0 : index
    %9 = vector.load %arg4[%c0_6, %c0_7] : memref<128x128xbf16, #tpu.memory_space<vmem>>, vector<128x128xbf16>
    tpu.vector_store %arg4[%c0_6, %c0_7], %8 {strides = array<i32>} : memref<128x128xbf16, #tpu.memory_space<vmem>>, vector<128x128xbf16>,
    return
  }
  func.func @transform_0(%arg0: i32) -> (i32, i32) {
    %c0_i32 = arith.constant 0 : i32
    %c0_i32_0 = arith.constant 0 : i32
    return %arg0, %c0_i32 : i32, i32
  }
  func.func @transform_1(%arg0: i32) -> (i32, i32) {
    %c0_i32 = arith.constant 0 : i32
    %c0_i32_0 = arith.constant 0 : i32
    %c0_i32_1 = arith.constant 0 : i32
    return %c0_i32, %c0_i32_0 : i32, i32
  }
  func.func @transform_2(%arg0: i32) -> (i32, i32) {
    %c0_i32 = arith.constant 0 : i32
    %c0_i32_0 = arith.constant 0 : i32
    %c0_i32_1 = arith.constant 0 : i32
    return %c0_i32, %c0_i32_0 : i32, i32
  }
  func.func @transform_3(%arg0: i32) -> (i32, i32) {
    %c0_i32 = arith.constant 0 : i32
    %c0_i32_0 = arith.constant 0 : i32
    return %arg0, %c0_i32 : i32, i32
  }
}

module attributes {stable_mosaic.version = 11 : i64} {
  func.func @_mm_bias_act_kernel(%arg0: i32, %arg1: memref<64x256xbf16, #tpu.memory_space<vmem>>, %arg2: memref<256x128xbf16, #tpu.memory_space<vmem>>, %arg3: memref<1x128xf32, #tpu.memory_space<vmem>>, %arg4: memref<64x128xbf16, #tpu.memory_space<vmem>>) attributes {dimension_semantics = [#tpu.dimension_semantics<parallel>], iteration_bounds = array<i64: 1>, scalar_prefetch = 0 : i64, scratch_operands = 0 : i64, tpu.core_type = #tpu.core_type<tc>, window_params = [{transform_indices = @transform_0, window_bounds = array<i64: 64, 256>}, {pipeline_mode = #tpu.pipeline_mode<synchronous>, transform_indices = @transform_1, window_bounds = array<i64: 256, 128>}, {pipeline_mode = #tpu.pipeline_mode<synchronous>, transform_indices = @transform_2, window_bounds = array<i64: 1, 128>}, {transform_indices = @transform_3, window_bounds = array<i64: 64, 128>}]} {
    %c0 = arith.constant 0 : index
    %c0_0 = arith.constant 0 : index
    %0 = vector.load %arg1[%c0, %c0_0] : memref<64x256xbf16, #tpu.memory_space<vmem>>, vector<64x256xbf16>
    %c0_1 = arith.constant 0 : index
    %c0_2 = arith.constant 0 : index
    %1 = vector.load %arg2[%c0_1, %c0_2] : memref<256x128xbf16, #tpu.memory_space<vmem>>, vector<256x128xbf16>
    %cst = arith.constant dense<0.000000e+00> : vector<64x128xf32>
    %2 = tpu.matmul %0, %1, %cst {dimension_numbers = #tpu.dot_dimension_numbers<[1], [0], [0], [1], [0, 0, 1, 1], [], []>} : vector<64x256xbf16>, vector<256x128xbf16>, vector<64x128xf32> -> vector<64x128xf32>
    %c0_3 = arith.constant 0 : index
    %c0_4 = arith.constant 0 : index
    %3 = vector.load %arg3[%c0_3, %c0_4] : memref<1x128xf32, #tpu.memory_space<vmem>>, vector<1x128xf32>
    %4 = vector.broadcast %3 : vector<1x128xf32> to vector<64x128xf32>
    %5 = arith.addf %2, %4 : vector<64x128xf32>
    %cst_5 = arith.constant 0.000000e+00 : f32
    %6 = vector.broadcast %cst_5 : f32 to vector<64x128xf32>
    %7 = arith.maximumf %5, %6 : vector<64x128xf32>
    %8 = arith.truncf %7 : vector<64x128xf32> to vector<64x128xbf16>
    %c0_6 = arith.constant 0 : index
    %c0_7 = arith.constant 0 : index
    %9 = vector.load %arg4[%c0_6, %c0_7] : memref<64x128xbf16, #tpu.memory_space<vmem>>, vector<64x128xbf16>
    tpu.vector_store %arg4[%c0_6, %c0_7], %8 {strides = array<i32>} : memref<64x128xbf16, #tpu.memory_space<vmem>>, vector<64x128xbf16>,
    return
  }
  func.func @transform_0(%arg0: i32) -> (i32, i32) {
    %c0_i32 = arith.constant 0 : i32
    %c0_i32_0 = arith.constant 0 : i32
    return %arg0, %c0_i32 : i32, i32
  }
  func.func @transform_1(%arg0: i32) -> (i32, i32) {
    %c0_i32 = arith.constant 0 : i32
    %c0_i32_0 = arith.constant 0 : i32
    %c0_i32_1 = arith.constant 0 : i32
    return %c0_i32, %c0_i32_0 : i32, i32
  }
  func.func @transform_2(%arg0: i32) -> (i32, i32) {
    %c0_i32 = arith.constant 0 : i32
    %c0_i32_0 = arith.constant 0 : i32
    %c0_i32_1 = arith.constant 0 : i32
    return %c0_i32, %c0_i32_0 : i32, i32
  }
  func.func @transform_3(%arg0: i32) -> (i32, i32) {
    %c0_i32 = arith.constant 0 : i32
    %c0_i32_0 = arith.constant 0 : i32
    return %arg0, %c0_i32 : i32, i32
  }
}

module attributes {stable_mosaic.version = 11 : i64} {
  func.func @_mm_bias_act_kernel(%arg0: i32, %arg1: memref<64x32xbf16, #tpu.memory_space<vmem>>, %arg2: memref<32x128xbf16, #tpu.memory_space<vmem>>, %arg3: memref<1x128xf32, #tpu.memory_space<vmem>>, %arg4: memref<64x128xbf16, #tpu.memory_space<vmem>>) attributes {dimension_semantics = [#tpu.dimension_semantics<parallel>], iteration_bounds = array<i64: 2>, scalar_prefetch = 0 : i64, scratch_operands = 0 : i64, tpu.core_type = #tpu.core_type<tc>, window_params = [{transform_indices = @transform_0, window_bounds = array<i64: 64, 32>}, {pipeline_mode = #tpu.pipeline_mode<synchronous>, transform_indices = @transform_1, window_bounds = array<i64: 32, 128>}, {pipeline_mode = #tpu.pipeline_mode<synchronous>, transform_indices = @transform_2, window_bounds = array<i64: 1, 128>}, {transform_indices = @transform_3, window_bounds = array<i64: 64, 128>}]} {
    %c0 = arith.constant 0 : index
    %c0_0 = arith.constant 0 : index
    %0 = vector.load %arg1[%c0, %c0_0] : memref<64x32xbf16, #tpu.memory_space<vmem>>, vector<64x32xbf16>
    %c0_1 = arith.constant 0 : index
    %c0_2 = arith.constant 0 : index
    %1 = vector.load %arg2[%c0_1, %c0_2] : memref<32x128xbf16, #tpu.memory_space<vmem>>, vector<32x128xbf16>
    %cst = arith.constant dense<0.000000e+00> : vector<64x128xf32>
    %2 = tpu.matmul %0, %1, %cst {dimension_numbers = #tpu.dot_dimension_numbers<[1], [0], [0], [1], [0, 0, 1, 1], [], []>} : vector<64x32xbf16>, vector<32x128xbf16>, vector<64x128xf32> -> vector<64x128xf32>
    %c0_3 = arith.constant 0 : index
    %c0_4 = arith.constant 0 : index
    %3 = vector.load %arg3[%c0_3, %c0_4] : memref<1x128xf32, #tpu.memory_space<vmem>>, vector<1x128xf32>
    %4 = vector.broadcast %3 : vector<1x128xf32> to vector<64x128xf32>
    %5 = arith.addf %2, %4 : vector<64x128xf32>
    %cst_5 = arith.constant 0.000000e+00 : f32
    %6 = vector.broadcast %cst_5 : f32 to vector<64x128xf32>
    %7 = arith.maximumf %5, %6 : vector<64x128xf32>
    %8 = arith.truncf %7 : vector<64x128xf32> to vector<64x128xbf16>
    %c0_6 = arith.constant 0 : index
    %c0_7 = arith.constant 0 : index
    %9 = vector.load %arg4[%c0_6, %c0_7] : memref<64x128xbf16, #tpu.memory_space<vmem>>, vector<64x128xbf16>
    tpu.vector_store %arg4[%c0_6, %c0_7], %8 {strides = array<i32>} : memref<64x128xbf16, #tpu.memory_space<vmem>>, vector<64x128xbf16>,
    return
  }
  func.func @transform_0(%arg0: i32) -> (i32, i32) {
    %c0_i32 = arith.constant 0 : i32
    %c0_i32_0 = arith.constant 0 : i32
    return %arg0, %c0_i32 : i32, i32
  }
  func.func @transform_1(%arg0: i32) -> (i32, i32) {
    %c0_i32 = arith.constant 0 : i32
    %c0_i32_0 = arith.constant 0 : i32
    %c0_i32_1 = arith.constant 0 : i32
    return %c0_i32, %c0_i32_0 : i32, i32
  }
  func.func @transform_2(%arg0: i32) -> (i32, i32) {
    %c0_i32 = arith.constant 0 : i32
    %c0_i32_0 = arith.constant 0 : i32
    %c0_i32_1 = arith.constant 0 : i32
    return %c0_i32, %c0_i32_0 : i32, i32
  }
  func.func @transform_3(%arg0: i32) -> (i32, i32) {
    %c0_i32 = arith.constant 0 : i32
    %c0_i32_0 = arith.constant 0 : i32
    return %arg0, %c0_i32 : i32, i32
  }
}

module attributes {stable_mosaic.version = 11 : i64} {
  func.func @_mm_bias_act_kernel(%arg0: i32, %arg1: memref<192x72xbf16, #tpu.memory_space<vmem>>, %arg2: memref<72x128xbf16, #tpu.memory_space<vmem>>, %arg3: memref<1x128xf32, #tpu.memory_space<vmem>>, %arg4: memref<192x128xbf16, #tpu.memory_space<vmem>>) attributes {dimension_semantics = [#tpu.dimension_semantics<parallel>], iteration_bounds = array<i64: 2>, scalar_prefetch = 0 : i64, scratch_operands = 0 : i64, tpu.core_type = #tpu.core_type<tc>, window_params = [{transform_indices = @transform_0, window_bounds = array<i64: 192, 72>}, {pipeline_mode = #tpu.pipeline_mode<synchronous>, transform_indices = @transform_1, window_bounds = array<i64: 72, 128>}, {pipeline_mode = #tpu.pipeline_mode<synchronous>, transform_indices = @transform_2, window_bounds = array<i64: 1, 128>}, {transform_indices = @transform_3, window_bounds = array<i64: 192, 128>}]} {
    %c0 = arith.constant 0 : index
    %c0_0 = arith.constant 0 : index
    %0 = vector.load %arg1[%c0, %c0_0] : memref<192x72xbf16, #tpu.memory_space<vmem>>, vector<192x72xbf16>
    %c0_1 = arith.constant 0 : index
    %c0_2 = arith.constant 0 : index
    %1 = vector.load %arg2[%c0_1, %c0_2] : memref<72x128xbf16, #tpu.memory_space<vmem>>, vector<72x128xbf16>
    %cst = arith.constant dense<0.000000e+00> : vector<192x128xf32>
    %2 = tpu.matmul %0, %1, %cst {dimension_numbers = #tpu.dot_dimension_numbers<[1], [0], [0], [1], [0, 0, 1, 1], [], []>} : vector<192x72xbf16>, vector<72x128xbf16>, vector<192x128xf32> -> vector<192x128xf32>
    %c0_3 = arith.constant 0 : index
    %c0_4 = arith.constant 0 : index
    %3 = vector.load %arg3[%c0_3, %c0_4] : memref<1x128xf32, #tpu.memory_space<vmem>>, vector<1x128xf32>
    %4 = vector.broadcast %3 : vector<1x128xf32> to vector<192x128xf32>
    %5 = arith.addf %2, %4 : vector<192x128xf32>
    %cst_5 = arith.constant 0.000000e+00 : f32
    %6 = vector.broadcast %cst_5 : f32 to vector<192x128xf32>
    %7 = arith.maximumf %5, %6 : vector<192x128xf32>
    %8 = arith.truncf %7 : vector<192x128xf32> to vector<192x128xbf16>
    %c0_6 = arith.constant 0 : index
    %c0_7 = arith.constant 0 : index
    %9 = vector.load %arg4[%c0_6, %c0_7] : memref<192x128xbf16, #tpu.memory_space<vmem>>, vector<192x128xbf16>
    tpu.vector_store %arg4[%c0_6, %c0_7], %8 {strides = array<i32>} : memref<192x128xbf16, #tpu.memory_space<vmem>>, vector<192x128xbf16>,
    return
  }
  func.func @transform_0(%arg0: i32) -> (i32, i32) {
    %c0_i32 = arith.constant 0 : i32
    %c0_i32_0 = arith.constant 0 : i32
    return %arg0, %c0_i32 : i32, i32
  }
  func.func @transform_1(%arg0: i32) -> (i32, i32) {
    %c0_i32 = arith.constant 0 : i32
    %c0_i32_0 = arith.constant 0 : i32
    %c0_i32_1 = arith.constant 0 : i32
    return %c0_i32, %c0_i32_0 : i32, i32
  }
  func.func @transform_2(%arg0: i32) -> (i32, i32) {
    %c0_i32 = arith.constant 0 : i32
    %c0_i32_0 = arith.constant 0 : i32
    %c0_i32_1 = arith.constant 0 : i32
    return %c0_i32, %c0_i32_0 : i32, i32
  }
  func.func @transform_3(%arg0: i32) -> (i32, i32) {
    %c0_i32 = arith.constant 0 : i32
    %c0_i32_0 = arith.constant 0 : i32
    return %arg0, %c0_i32 : i32, i32
  }
}

module attributes {stable_mosaic.version = 11 : i64} {
  func.func @_mm_bias_act_kernel(%arg0: i32, %arg1: memref<448x144xbf16, #tpu.memory_space<vmem>>, %arg2: memref<144x288xbf16, #tpu.memory_space<vmem>>, %arg3: memref<1x288xf32, #tpu.memory_space<vmem>>, %arg4: memref<448x288xbf16, #tpu.memory_space<vmem>>) attributes {dimension_semantics = [#tpu.dimension_semantics<parallel>], iteration_bounds = array<i64: 2>, scalar_prefetch = 0 : i64, scratch_operands = 0 : i64, tpu.core_type = #tpu.core_type<tc>, window_params = [{transform_indices = @transform_0, window_bounds = array<i64: 448, 144>}, {pipeline_mode = #tpu.pipeline_mode<synchronous>, transform_indices = @transform_1, window_bounds = array<i64: 144, 288>}, {pipeline_mode = #tpu.pipeline_mode<synchronous>, transform_indices = @transform_2, window_bounds = array<i64: 1, 288>}, {transform_indices = @transform_3, window_bounds = array<i64: 448, 288>}]} {
    %c0 = arith.constant 0 : index
    %c0_0 = arith.constant 0 : index
    %0 = vector.load %arg1[%c0, %c0_0] : memref<448x144xbf16, #tpu.memory_space<vmem>>, vector<448x144xbf16>
    %c0_1 = arith.constant 0 : index
    %c0_2 = arith.constant 0 : index
    %1 = vector.load %arg2[%c0_1, %c0_2] : memref<144x288xbf16, #tpu.memory_space<vmem>>, vector<144x288xbf16>
    %cst = arith.constant dense<0.000000e+00> : vector<448x288xf32>
    %2 = tpu.matmul %0, %1, %cst {dimension_numbers = #tpu.dot_dimension_numbers<[1], [0], [0], [1], [0, 0, 1, 1], [], []>} : vector<448x144xbf16>, vector<144x288xbf16>, vector<448x288xf32> -> vector<448x288xf32>
    %c0_3 = arith.constant 0 : index
    %c0_4 = arith.constant 0 : index
    %3 = vector.load %arg3[%c0_3, %c0_4] : memref<1x288xf32, #tpu.memory_space<vmem>>, vector<1x288xf32>
    %4 = vector.broadcast %3 : vector<1x288xf32> to vector<448x288xf32>
    %5 = arith.addf %2, %4 : vector<448x288xf32>
    %cst_5 = arith.constant 0.000000e+00 : f32
    %6 = vector.broadcast %cst_5 : f32 to vector<448x288xf32>
    %7 = arith.maximumf %5, %6 : vector<448x288xf32>
    %8 = arith.truncf %7 : vector<448x288xf32> to vector<448x288xbf16>
    %c0_6 = arith.constant 0 : index
    %c0_7 = arith.constant 0 : index
    %9 = vector.load %arg4[%c0_6, %c0_7] : memref<448x288xbf16, #tpu.memory_space<vmem>>, vector<448x288xbf16>
    tpu.vector_store %arg4[%c0_6, %c0_7], %8 {strides = array<i32>} : memref<448x288xbf16, #tpu.memory_space<vmem>>, vector<448x288xbf16>,
    return
  }
  func.func @transform_0(%arg0: i32) -> (i32, i32) {
    %c0_i32 = arith.constant 0 : i32
    %c0_i32_0 = arith.constant 0 : i32
    return %arg0, %c0_i32 : i32, i32
  }
  func.func @transform_1(%arg0: i32) -> (i32, i32) {
    %c0_i32 = arith.constant 0 : i32
    %c0_i32_0 = arith.constant 0 : i32
    %c0_i32_1 = arith.constant 0 : i32
    return %c0_i32, %c0_i32_0 : i32, i32
  }
  func.func @transform_2(%arg0: i32) -> (i32, i32) {
    %c0_i32 = arith.constant 0 : i32
    %c0_i32_0 = arith.constant 0 : i32
    %c0_i32_1 = arith.constant 0 : i32
    return %c0_i32, %c0_i32_0 : i32, i32
  }
  func.func @transform_3(%arg0: i32) -> (i32, i32) {
    %c0_i32 = arith.constant 0 : i32
    %c0_i32_0 = arith.constant 0 : i32
    return %arg0, %c0_i32 : i32, i32
  }
}

module attributes {stable_mosaic.version = 11 : i64} {
  func.func @_mm_bias_act_kernel(%arg0: i32, %arg1: memref<512x128xbf16, #tpu.memory_space<vmem>>, %arg2: memref<128x128xbf16, #tpu.memory_space<vmem>>, %arg3: memref<1x128xf32, #tpu.memory_space<vmem>>, %arg4: memref<512x128xf32, #tpu.memory_space<vmem>>) attributes {dimension_semantics = [#tpu.dimension_semantics<parallel>], iteration_bounds = array<i64: 10>, scalar_prefetch = 0 : i64, scratch_operands = 0 : i64, tpu.core_type = #tpu.core_type<tc>, window_params = [{transform_indices = @transform_0, window_bounds = array<i64: 512, 128>}, {pipeline_mode = #tpu.pipeline_mode<synchronous>, transform_indices = @transform_1, window_bounds = array<i64: 128, 128>}, {pipeline_mode = #tpu.pipeline_mode<synchronous>, transform_indices = @transform_2, window_bounds = array<i64: 1, 128>}, {transform_indices = @transform_3, window_bounds = array<i64: 512, 128>}]} {
    %c0 = arith.constant 0 : index
    %c0_0 = arith.constant 0 : index
    %0 = vector.load %arg1[%c0, %c0_0] : memref<512x128xbf16, #tpu.memory_space<vmem>>, vector<512x128xbf16>
    %c0_1 = arith.constant 0 : index
    %c0_2 = arith.constant 0 : index
    %1 = vector.load %arg2[%c0_1, %c0_2] : memref<128x128xbf16, #tpu.memory_space<vmem>>, vector<128x128xbf16>
    %cst = arith.constant dense<0.000000e+00> : vector<512x128xf32>
    %2 = tpu.matmul %0, %1, %cst {dimension_numbers = #tpu.dot_dimension_numbers<[1], [0], [0], [1], [0, 0, 1, 1], [], []>} : vector<512x128xbf16>, vector<128x128xbf16>, vector<512x128xf32> -> vector<512x128xf32>
    %c0_3 = arith.constant 0 : index
    %c0_4 = arith.constant 0 : index
    %3 = vector.load %arg3[%c0_3, %c0_4] : memref<1x128xf32, #tpu.memory_space<vmem>>, vector<1x128xf32>
    %4 = vector.broadcast %3 : vector<1x128xf32> to vector<512x128xf32>
    %5 = arith.addf %2, %4 : vector<512x128xf32>
    %c0_5 = arith.constant 0 : index
    %c0_6 = arith.constant 0 : index
    %6 = vector.load %arg4[%c0_5, %c0_6] : memref<512x128xf32, #tpu.memory_space<vmem>>, vector<512x128xf32>
    tpu.vector_store %arg4[%c0_5, %c0_6], %5 {strides = array<i32>} : memref<512x128xf32, #tpu.memory_space<vmem>>, vector<512x128xf32>,
    return
  }
  func.func @transform_0(%arg0: i32) -> (i32, i32) {
    %c0_i32 = arith.constant 0 : i32
    %c0_i32_0 = arith.constant 0 : i32
    return %arg0, %c0_i32 : i32, i32
  }
  func.func @transform_1(%arg0: i32) -> (i32, i32) {
    %c0_i32 = arith.constant 0 : i32
    %c0_i32_0 = arith.constant 0 : i32
    %c0_i32_1 = arith.constant 0 : i32
    return %c0_i32, %c0_i32_0 : i32, i32
  }
  func.func @transform_2(%arg0: i32) -> (i32, i32) {
    %c0_i32 = arith.constant 0 : i32
    %c0_i32_0 = arith.constant 0 : i32
    %c0_i32_1 = arith.constant 0 : i32
    return %c0_i32, %c0_i32_0 : i32, i32
  }
  func.func @transform_3(%arg0: i32) -> (i32, i32) {
    %c0_i32 = arith.constant 0 : i32
    %c0_i32_0 = arith.constant 0 : i32
    return %arg0, %c0_i32 : i32, i32
  }
}

</mosaic_0001>

<llo_original>
// kernel: ggcnn_forward.7
$region0: #{ggcnn_forward.7}
  #allocation0 [shape = 'u32[]', space=smem, size = 0x4, offset = 0x4, fixed_abs, tag = 'smem constant byte address 0x4 - core index']
  #allocation1 [shape = 'u32[144,128]{1,0:T(1,128)}', space=vmem, size = 0x12000, scoped, tag = 'internal scratch']
  %s0 = inlined_call_operand.vmem [shape: bf16[768,81], index: 0, kind: input, shape index: {}]
  %s1 = inlined_call_operand.vmem [shape: bf16[81,128], index: 1, kind: input, shape index: {}]
  %s2 = inlined_call_operand.vmem [shape: f32[1,128], index: 2, kind: input, shape index: {}]
  %s3 = inlined_call_operand.vmem [shape: bf16[768,128], index: 3, kind: output, shape index: {}]
  %s4 = sld [smem:[#allocation0]]
  $region45: #{ggcnn_forward.7} parent=0
    _
  %s6 = ssub.s32 1, %s4
  %s7 = scalar_select 0, %s6, %s4
  loop: start=0, step=1, limit=4
  $region2: #{ggcnn_forward.7} parent=0 // loop_pre_header
    _
  $region3: #{ggcnn_forward.7} parent=0 // loop_header
    %s9 = sphi 0, %s13
    %p10 = scmp.ge.s32.totalorder %s9, 4
    %s19 = sphi 0, %s21
    %s22 = sphi 0, %s19
    %s23 = sphi 0, %s22
    %s39 = sphi 0, %s23
    %s43 = sphi 0, %s43
    %s45 = sphi 0, %s43
    %s46 = sphi 0, %s45
    %s60 = sphi 0, %s46
    %s64 = sphi 0, %s64
    %s66 = sphi 0, %s64
    %s67 = sphi 0, %s66
    %s81 = sphi 0, %s67
    %s87 = sphi 0, %s89
    %s90 = sphi 0, %s87
    %s91 = sphi 0, %s90
    %s107 = sphi 0, %s91
  $region4: #{ggcnn_forward.7} parent=0 // loop_header_branch
    %12 = sbr.rel (%p10) target = $region8
  $region5: #{ggcnn_forward.7} parent=0 // loop_body
    %s14 = ssub.s32 %s9, 1
    %s15 = ssub.s32 %s9, 2
    %s16 = sadd.s32 %s9, 1
    %s17 = ssub.s32 %s9, %s16
    %p18 = scmp.eq.s32.totalorder %s17, 0
    %s20 = sadd.s32 %s19, 1
    %s21 = scalar_select %p18, %s19, %s20
    %p24 = pneg %p18
    %p25 = scmp.eq.s32.totalorder %s9, 1
    %p26 = por %p24, %p25
    %p27 = scmp.ne.s32.totalorder %s19, %s22
    %p28 = scmp.eq.s32.totalorder %s9, 0
    %p29 = por %p27, %p28
    %p30 = scmp.ne.s32.totalorder %s19, %s22
    %p31 = scmp.eq.s32.totalorder %s14, 1
    %p32 = por %p30, %p31
    %p33 = scmp.ne.s32.totalorder %s22, %s23
    %p34 = scmp.eq.s32.totalorder %s14, 0
    %p35 = por %p33, %p34
    %p36 = scmp.ne.s32.totalorder %s22, %s23
    %p37 = scmp.eq.s32.totalorder %s15, 1
    %p38 = por %p36, %p37
    %p40 = scmp.ne.s32.totalorder %s23, %s39
    %p41 = scmp.eq.s32.totalorder %s15, 0
    %p42 = por %p40, %p41
    %s44 = sadd.s32 %s43, 1
    %p47 = scmp.eq.s32.totalorder %s9, 1
    %p48 = scmp.ne.s32.totalorder %s43, %s45
    %p49 = scmp.eq.s32.totalorder %s9, 0
    %p50 = por %p48, %p49
    %p51 = scmp.ne.s32.totalorder %s43, %s45
    %p52 = scmp.eq.s32.totalorder %s14, 1
    %p53 = por %p51, %p52
    %p54 = scmp.ne.s32.totalorder %s45, %s46
    %p55 = scmp.eq.s32.totalorder %s14, 0
    %p56 = por %p54, %p55
    %p57 = scmp.ne.s32.totalorder %s45, %s46
    %p58 = scmp.eq.s32.totalorder %s15, 1
    %p59 = por %p57, %p58
    %p61 = scmp.ne.s32.totalorder %s46, %s60
    %p62 = scmp.eq.s32.totalorder %s15, 0
    %p63 = por %p61, %p62
    %s65 = sadd.s32 %s64, 1
    %p68 = scmp.eq.s32.totalorder %s9, 1
    %p69 = scmp.ne.s32.totalorder %s64, %s66
    %p70 = scmp.eq.s32.totalorder %s9, 0
    %p71 = por %p69, %p70
    %p72 = scmp.ne.s32.totalorder %s64, %s66
    %p73 = scmp.eq.s32.totalorder %s14, 1
    %p74 = por %p72, %p73
    %p75 = scmp.ne.s32.totalorder %s66, %s67
    %p76 = scmp.eq.s32.totalorder %s14, 0
    %p77 = por %p75, %p76
    %p78 = scmp.ne.s32.totalorder %s66, %s67
    %p79 = scmp.eq.s32.totalorder %s15, 1
    %p80 = por %p78, %p79
    %p82 = scmp.ne.s32.totalorder %s67, %s81
    %p83 = scmp.eq.s32.totalorder %s15, 0
    %p84 = por %p82, %p83
    %s85 = ssub.s32 %s9, %s16
    %p86 = scmp.eq.s32.totalorder %s85, 0
    %s88 = sadd.s32 %s87, 1
    %s89 = scalar_select %p86, %s87, %s88
    %p92 = pneg %p86
    %p93 = scmp.eq.s32.totalorder %s9, 1
    %p94 = por %p92, %p93
    %p95 = scmp.ne.s32.totalorder %s87, %s90
    %p96 = scmp.eq.s32.totalorder %s9, 0
    %p97 = por %p95, %p96
    %p98 = scmp.ne.s32.totalorder %s87, %s90
    %p99 = scmp.eq.s32.totalorder %s14, 1
    %p100 = por %p98, %p99
    %p101 = scmp.ne.s32.totalorder %s90, %s91
    %p102 = scmp.eq.s32.totalorder %s14, 0
    %p103 = por %p101, %p102
    %p104 = scmp.ne.s32.totalorder %s90, %s91
    %p105 = scmp.eq.s32.totalorder %s15, 1
    %p106 = por %p104, %p105
    %p108 = scmp.ne.s32.totalorder %s91, %s107
    %p109 = scmp.eq.s32.totalorder %s15, 0
    %p110 = por %p108, %p109
    %p111 = scmp.le.s32.totalorder 1, %s9
    %p112 = scmp.lt.s32.totalorder %s9, 3
    %p113 = pnand %p111, %p112
    %p114 = pneg %p113
    // Predicated region
    $region9: #{ggcnn_forward.7} parent=5 // pred_check
      _
    $region10: #{ggcnn_forward.7} parent=5 // pred_check_branch
      %116 = sbr.rel (%p113) target = $region12
    $region11: #{ggcnn_forward.7} parent=5 // pred_region
      %s117 = ssub.s32 %s9, 1
      // Predicated region
      $region13: #{ggcnn_forward.7} parent=11 // pred_check
        %p118 = pneg %p56
      $region14: #{ggcnn_forward.7} parent=11 // pred_check_branch
        %120 = sbr.rel (%p118) target = $region16
      $region15: #{ggcnn_forward.7} parent=11 // pred_region
        _
      $region16: #{ggcnn_forward.7} parent=11 // pred_fallthru
        _
      // Predicated region
      $region17: #{ggcnn_forward.7} parent=11 // pred_check
        %p121 = pneg %p77
      $region18: #{ggcnn_forward.7} parent=11 // pred_check_branch
        %123 = sbr.rel (%p121) target = $region20
      $region19: #{ggcnn_forward.7} parent=11 // pred_region
        _
      $region20: #{ggcnn_forward.7} parent=11 // pred_fallthru
        _
    $region12: #{ggcnn_forward.7} parent=5 // pred_fallthru
      _
    %p124 = scmp.lt.s32.totalorder %s9, 2
    // Predicated region
    $region21: #{ggcnn_forward.7} parent=5 // pred_check
      %p125 = pneg %p124
    $region22: #{ggcnn_forward.7} parent=5 // pred_check_branch
      %127 = sbr.rel (%p125) target = $region24
    $region23: #{ggcnn_forward.7} parent=5 // pred_region
      // Predicated region
      $region25: #{ggcnn_forward.7} parent=23 // pred_check
        %p128 = pneg %p29
      $region26: #{ggcnn_forward.7} parent=23 // pred_check_branch
        %130 = sbr.rel (%p128) target = $region28
      $region27: #{ggcnn_forward.7} parent=23 // pred_region
        %s131 = smul.u32 48, %s9
        %p132 = scmp.lt.s32.totalorder %s131, 95
        %s133 = scalar_select %p132, %s131, 95
        %s134 = smul.addr %s133, 4
        %s135 = scalar_lea.vmem %s0, %s134
        %s136 = smul.u32 48, %s9
      $region28: #{ggcnn_forward.7} parent=23 // pred_fallthru
        _
    $region24: #{ggcnn_forward.7} parent=5 // pred_fallthru
      _
    %p137 = scmp.le.s32.totalorder 1, %s9
    %p138 = scmp.lt.s32.totalorder %s9, 3
    %p139 = pnand %p137, %p138
    %p140 = pneg %p139
    // Predicated region
    $region29: #{ggcnn_forward.7} parent=5 // pred_check
      _
    $region30: #{ggcnn_forward.7} parent=5 // pred_check_branch
      %142 = sbr.rel (%p139) target = $region32
    $region31: #{ggcnn_forward.7} parent=5 // pred_region
      %s143 = ssub.s32 %s9, 1
      %s144 = smul.u32 48, %s14
      %p145 = scmp.lt.s32.totalorder %s144, 95
      %s146 = scalar_select %p145, %s144, 95
      %s147 = smul.addr %s146, 4
      %s148 = scalar_lea.vmem %s0, %s147
      %p149 = pneg %p35
      %p150 = pneg %p32
      %p151 = pneg %p56
      %p152 = pneg %p53
      %p153 = pneg %p77
      %p154 = pneg %p74
      %p155 = pneg %p103
      %p156 = pneg %p100
      %s157 = smul.u32 48, %s14
      %p158 = scmp.lt.s32.totalorder %s157, 95
      %s159 = scalar_select %p158, %s157, 95
      %s160 = smul.addr %s159, 4
      %s161 = scalar_lea.vmem %s3, %s160
      %s162 = smul.u32 48, %s14
      %p163 = scmp.lt.s32.totalorder %s162, 95
      %s164 = scalar_select %p163, %s162, 95
      %s165 = smul.addr %s164, 4
      %s166 = scalar_lea.vmem %s0, %s165
      %s167 = smul.u32 48, %s14
      %s168 = smul.u32 48, %s14
      %p169 = scmp.lt.s32.totalorder %s168, 95
      %s170 = scalar_select %p169, %s168, 95
      %s171 = smul.addr %s170, 4
      %s172 = scalar_lea.vmem %s3, %s171
      %s173 = smul.u32 48, %s14
      %v175 = vld [vmem:[%s166] sm:$0xf]
      %v176 = vld [vmem:[%s166 + $0x4] sm:$0xf]
      %v177 = vld [vmem:[%s166 + $0x8] sm:$0xf]
      %v178 = vld [vmem:[%s166 + $0xc] sm:$0xf]
      %v179 = vld [vmem:[%s166 + $0x10] sm:$0xf]
      %v180 = vld [vmem:[%s166 + $0x14] sm:$0xf]
      %v181 = vld [vmem:[%s166 + $0x18] sm:$0xf]
      %v182 = vld [vmem:[%s166 + $0x1c] sm:$0xf]
      %v183 = vld [vmem:[%s166 + $0x20] sm:$0xf]
      %v184 = vld [vmem:[%s166 + $0x24] sm:$0xf]
      %v185 = vld [vmem:[%s166 + $0x28] sm:$0xf]
      %v186 = vld [vmem:[%s166 + $0x2c] sm:$0xf]
      %v187 = vld [vmem:[%s166 + $0x30] sm:$0xf]
      %v188 = vld [vmem:[%s166 + $0x34] sm:$0xf]
      %v189 = vld [vmem:[%s166 + $0x38] sm:$0xf]
      %v190 = vld [vmem:[%s166 + $0x3c] sm:$0xf]
      %v191 = vld [vmem:[%s166 + $0x40] sm:$0xf]
      %v192 = vld [vmem:[%s166 + $0x44] sm:$0xf]
      %v193 = vld [vmem:[%s166 + $0x48] sm:$0xf]
      %v194 = vld [vmem:[%s166 + $0x4c] sm:$0xf]
      %v195 = vld [vmem:[%s166 + $0x50] sm:$0xf]
      %v196 = vld [vmem:[%s166 + $0x54] sm:$0xf]
      %v197 = vld [vmem:[%s166 + $0x58] sm:$0xf]
      %v198 = vld [vmem:[%s166 + $0x5c] sm:$0xf]
      %v199 = vld [vmem:[%s166 + $0x60] sm:$0xf]
      %v200 = vld [vmem:[%s166 + $0x64] sm:$0xf]
      %v201 = vld [vmem:[%s166 + $0x68] sm:$0xf]
      %v202 = vld [vmem:[%s166 + $0x6c] sm:$0xf]
      %v203 = vld [vmem:[%s166 + $0x70] sm:$0xf]
      %v204 = vld [vmem:[%s166 + $0x74] sm:$0xf]
      %v205 = vld [vmem:[%s166 + $0x78] sm:$0xf]
      %v206 = vld [vmem:[%s166 + $0x7c] sm:$0xf]
      %v207 = vld [vmem:[%s166 + $0x80] sm:$0xf]
      %v208 = vld [vmem:[%s166 + $0x84] sm:$0xf]
      %v209 = vld [vmem:[%s166 + $0x88] sm:$0xf]
      %v210 = vld [vmem:[%s166 + $0x8c] sm:$0xf]
      %v211 = vld [vmem:[%s166 + $0x90] sm:$0xf]
      %v212 = vld [vmem:[%s166 + $0x94] sm:$0xf]
      %v213 = vld [vmem:[%s166 + $0x98] sm:$0xf]
      %v214 = vld [vmem:[%s166 + $0x9c] sm:$0xf]
      %v215 = vld [vmem:[%s166 + $0xa0] sm:$0xf]
      %v216 = vld [vmem:[%s166 + $0xa4] sm:$0xf]
      %v217 = vld [vmem:[%s166 + $0xa8] sm:$0xf]
      %v218 = vld [vmem:[%s166 + $0xac] sm:$0xf]
      %v219 = vld [vmem:[%s166 + $0xb0] sm:$0xf]
      %v220 = vld [vmem:[%s166 + $0xb4] sm:$0xf]
      %v221 = vld [vmem:[%s166 + $0xb8] sm:$0xf]
      %v222 = vld [vmem:[%s166 + $0xbc] sm:$0xf]
      %v223 = vld [vmem:[%s1] sm:$0xf]
      %v224 = vld [vmem:[%s1 + $0x4] sm:$0xf]
      %v225 = vld [vmem:[%s1 + $0x8] sm:$0xf]
      %v226 = vld [vmem:[%s1 + $0xc] sm:$0xf]
      %v227 = vld [vmem:[%s1 + $0x10] sm:$0xf]
      %v228 = vld [vmem:[%s1 + $0x14] sm:$0xf]
      %v229 = vld [vmem:[%s1 + $0x18] sm:$0xf]
      %v230 = vld [vmem:[%s1 + $0x1c] sm:$0xf]
      %v231 = vld [vmem:[%s1 + $0x20] sm:$0xf]
      %v232 = vld [vmem:[%s1 + $0x24] sm:$0xf]
      %v233 = vld [vmem:[%s1 + $0x28] sm:$0x1]
      %v234 = vld [vmem:[%s2] sm:$0x1]
      %v236 = vlaneseq
      %v237 = vshrl.u32 %v236, 7
      %v238 = vsub.s32 0, %v237
      %v239 = vrot.slane %v234, %v238
      %v289 = vunpack.c.l.b16 %v175
      %v290 = vunpack.c.l.b16 %v176
      %v291 = vunpack.c.l.b16 %v177
      %v292 = vunpack.c.l.b16 %v178
      %v293 = vunpack.c.l.b16 %v179
      %v294 = vunpack.c.l.b16 %v180
      %v295 = vunpack.c.l.b16 %v181
      %v296 = vunpack.c.l.b16 %v182
      %v297 = vunpack.c.l.b16 %v183
      %v298 = vunpack.c.l.b16 %v184
      %v299 = vunpack.c.l.b16 %v185
      %v300 = vunpack.c.l.b16 %v186
      %v301 = vunpack.c.l.b16 %v187
      %v302 = vunpack.c.l.b16 %v188
      %v303 = vunpack.c.l.b16 %v189
      %v304 = vunpack.c.l.b16 %v190
      %v305 = vunpack.c.l.b16 %v191
      %v306 = vunpack.c.l.b16 %v192
      %v307 = vunpack.c.l.b16 %v193
      %v308 = vunpack.c.l.b16 %v194
      %v309 = vunpack.c.l.b16 %v195
      %v310 = vunpack.c.l.b16 %v196
      %v311 = vunpack.c.l.b16 %v197
      %v312 = vunpack.c.l.b16 %v198
      %v313 = vunpack.c.l.b16 %v199
      %v314 = vunpack.c.l.b16 %v200
      %v315 = vunpack.c.l.b16 %v201
      %v316 = vunpack.c.l.b16 %v202
      %v317 = vunpack.c.l.b16 %v203
      %v318 = vunpack.c.l.b16 %v204
      %v319 = vunpack.c.l.b16 %v205
      %v320 = vunpack.c.l.b16 %v206
      %v321 = vunpack.c.l.b16 %v207
      %v322 = vunpack.c.l.b16 %v208
      %v323 = vunpack.c.l.b16 %v209
      %v324 = vunpack.c.l.b16 %v210
      %v325 = vunpack.c.l.b16 %v211
      %v326 = vunpack.c.l.b16 %v212
      %v327 = vunpack.c.l.b16 %v213
      %v328 = vunpack.c.l.b16 %v214
      %v329 = vunpack.c.l.b16 %v215
      %v330 = vunpack.c.l.b16 %v216
      %v331 = vunpack.c.l.b16 %v217
      %v332 = vunpack.c.l.b16 %v218
      %v333 = vunpack.c.l.b16 %v219
      %v334 = vunpack.c.l.b16 %v220
      %v335 = vunpack.c.l.b16 %v221
      %v336 = vunpack.c.l.b16 %v222
      %v337 = vpack.c.b16 %v290, %v289
      %v338 = vpack.c.b16 %v292, %v291
      %v339 = vpack.c.b16 %v294, %v293
      %v340 = vpack.c.b16 %v296, %v295
      %v341 = vpack.c.b16 %v298, %v297
      %v342 = vpack.c.b16 %v300, %v299
      %v343 = vpack.c.b16 %v302, %v301
      %v344 = vpack.c.b16 %v304, %v303
      %v345 = vpack.c.b16 %v306, %v305
      %v346 = vpack.c.b16 %v308, %v307
      %v347 = vpack.c.b16 %v310, %v309
      %v348 = vpack.c.b16 %v312, %v311
      %v349 = vpack.c.b16 %v314, %v313
      %v350 = vpack.c.b16 %v316, %v315
      %v351 = vpack.c.b16 %v318, %v317
      %v352 = vpack.c.b16 %v320, %v319
      %v353 = vpack.c.b16 %v322, %v321
      %v354 = vpack.c.b16 %v324, %v323
      %v355 = vpack.c.b16 %v326, %v325
      %v356 = vpack.c.b16 %v328, %v327
      %v357 = vpack.c.b16 %v330, %v329
      %v358 = vpack.c.b16 %v332, %v331
      %v359 = vpack.c.b16 %v334, %v333
      %v360 = vpack.c.b16 %v336, %v335
      %v372 = vunpack.c.l.b16 %v223
      %v373 = vunpack.c.l.b16 %v224
      %v374 = vunpack.c.l.b16 %v225
      %v375 = vunpack.c.l.b16 %v226
      %v376 = vunpack.c.l.b16 %v227
      %v377 = vunpack.c.l.b16 %v228
      %v378 = vunpack.c.l.b16 %v229
      %v379 = vunpack.c.l.b16 %v230
      %v380 = vunpack.c.l.b16 %v231
      %v381 = vunpack.c.l.b16 %v232
      %v382 = vunpack.c.l.b16 %v233
      %v383 = vpack.c.b16 %v373, %v372
      %v384 = vpack.c.b16 %v375, %v374
      %v385 = vpack.c.b16 %v377, %v376
      %v386 = vpack.c.b16 %v379, %v378
      %v387 = vpack.c.b16 %v381, %v380
      %v388 = vpack.c.b16 %v382, %v382
      %vm394 = vcmask 662528
      %v396 = vsel %vm394, %v337, 0
      %v399 = vsel %vm394, %v338, 0
      %v402 = vsel %vm394, %v339, 0
      %v405 = vsel %vm394, %v340, 0
      %v408 = vsel %vm394, %v341, 0
      %v411 = vsel %vm394, %v342, 0
      %v414 = vsel %vm394, %v343, 0
      %v417 = vsel %vm394, %v344, 0
      %v420 = vsel %vm394, %v345, 0
      %v423 = vsel %vm394, %v346, 0
      %v426 = vsel %vm394, %v347, 0
      %v429 = vsel %vm394, %v348, 0
      %v432 = vsel %vm394, %v349, 0
      %v435 = vsel %vm394, %v350, 0
      %v438 = vsel %vm394, %v351, 0
      %v441 = vsel %vm394, %v352, 0
      %v444 = vsel %vm394, %v353, 0
      %v447 = vsel %vm394, %v354, 0
      %v450 = vsel %vm394, %v355, 0
      %v453 = vsel %vm394, %v356, 0
      %v456 = vsel %vm394, %v357, 0
      %v459 = vsel %vm394, %v358, 0
      %v462 = vsel %vm394, %v359, 0
      %v465 = vsel %vm394, %v360, 0
      %vm467 = vcmask 1040384
      %v468 = vsel 0, 4294967295, 65535
      %v469 = vsel %vm467, %v468, 0
      %v471 = vand.u32 %v388, %v469
      %473 = vmatprep.subr.bf16.mxu0 0
      %474 = vmatpush1.bf16.msra.mxu0 %v383
      %475 = vmatprep.subr.bf16.mxu0 0
      %476 = vmatpush1.bf16.msra.mxu0 %v384
      %477 = vmatprep.subr.bf16.mxu0 0
      %478 = vmatpush1.bf16.msra.mxu0 %v385
      %479 = vmatprep.subr.bf16.mxu0 0
      %480 = vmatpush1.bf16.msra.mxu0 %v386
      %481 = vmatprep.subr.bf16.mxu0 0
      %482 = vmatpush1.bf16.msra.mxu0 %v387
      %483 = vmatprep.subr.bf16.mxu0 0
      %484 = vmatpush1.bf16.msra.mxu0 %v471
      %485 = vmatprep.subr.bf16.mxu0 0
      %486 = vmatpush1.bf16.msra.mxu0 0
      %487 = vmatprep.subr.bf16.mxu0 0
      %488 = vmatpush1.bf16.msra.mxu0 0
      %489 = vmatprep.subr.bf16.mxu0 0
      %490 = vmatpush1.bf16.msra.mxu0 0
      %491 = vmatprep.subr.bf16.mxu0 0
      %492 = vmatpush1.bf16.msra.mxu0 0
      %493 = vmatprep.subr.bf16.mxu0 0
      %494 = vmatpush1.bf16.msra.mxu0 0
      %495 = vmatprep.subr.bf16.mxu0 0
      %496 = vmatpush1.bf16.msra.mxu0 0
      %497 = vmatprep.subr.bf16.mxu0 0
      %498 = vmatpush1.bf16.msra.mxu0 0
      %499 = vmatprep.subr.bf16.mxu0 0
      %500 = vmatpush1.bf16.msra.mxu0 0
      %501 = vmatprep.subr.bf16.mxu0 0
      %502 = vmatpush1.bf16.msra.mxu0 0
      %503 = vmatprep.subr.bf16.mxu0 0
      %504 = vmatpush1.bf16.msra.mxu0 0
      %505 = vmatprep.mubr.bf16.mxu0 0
      %506 = vmatmul.mubr.bf16.gmra.mrb[0].mxu0 %v396
      %v507 = vpop.f32.mrb[0].mxu0
      %v508 = vadd.f32 %v239, %v507
      %v509 = vpop.f32.mrb[0].mxu0
      %v510 = vpop.f32.mrb[0].mxu0
      %v511 = vadd.f32 %v239, %v510
      %v512 = vpop.f32.mrb[0].mxu0
      %513 = vmatprep.mubr.bf16.mxu0 0
      %514 = vmatmul.mubr.bf16.gmra.mrb[0].mxu0 %v399
      %v515 = vpop.f32.mrb[0].mxu0
      %v516 = vadd.f32 %v239, %v515
      %v517 = vpop.f32.mrb[0].mxu0
      %v518 = vpop.f32.mrb[0].mxu0
      %v519 = vadd.f32 %v239, %v518
      %v520 = vpop.f32.mrb[0].mxu0
      %521 = vmatprep.mubr.bf16.mxu0 0
      %522 = vmatmul.mubr.bf16.gmra.mrb[0].mxu0 %v402
      %v523 = vpop.f32.mrb[0].mxu0
      %v524 = vadd.f32 %v239, %v523
      %v525 = vpop.f32.mrb[0].mxu0
      %v526 = vpop.f32.mrb[0].mxu0
      %v527 = vadd.f32 %v239, %v526
      %v528 = vpop.f32.mrb[0].mxu0
      %529 = vmatprep.mubr.bf16.mxu0 0
      %530 = vmatmul.mubr.bf16.gmra.mrb[0].mxu0 %v405
      %v531 = vpop.f32.mrb[0].mxu0
      %v532 = vadd.f32 %v239, %v531
      %v533 = vpop.f32.mrb[0].mxu0
      %v534 = vpop.f32.mrb[0].mxu0
      %v535 = vadd.f32 %v239, %v534
      %v536 = vpop.f32.mrb[0].mxu0
      %537 = vmatprep.mubr.bf16.mxu0 0
      %538 = vmatmul.mubr.bf16.gmra.mrb[0].mxu0 %v408
      %v539 = vpop.f32.mrb[0].mxu0
      %v540 = vadd.f32 %v239, %v539
      %v541 = vpop.f32.mrb[0].mxu0
      %v542 = vpop.f32.mrb[0].mxu0
      %v543 = vadd.f32 %v239, %v542
      %v544 = vpop.f32.mrb[0].mxu0
      %545 = vmatprep.mubr.bf16.mxu0 0
      %546 = vmatmul.mubr.bf16.gmra.mrb[0].mxu0 %v411
      %v547 = vpop.f32.mrb[0].mxu0
      %v548 = vadd.f32 %v239, %v547
      %v549 = vpop.f32.mrb[0].mxu0
      %v550 = vpop.f32.mrb[0].mxu0
      %v551 = vadd.f32 %v239, %v550
      %v552 = vpop.f32.mrb[0].mxu0
      %553 = vmatprep.mubr.bf16.mxu0 0
      %554 = vmatmul.mubr.bf16.gmra.mrb[0].mxu0 %v414
      %v555 = vpop.f32.mrb[0].mxu0
      %v556 = vadd.f32 %v239, %v555
      %v557 = vpop.f32.mrb[0].mxu0
      %v558 = vpop.f32.mrb[0].mxu0
      %v559 = vadd.f32 %v239, %v558
      %v560 = vpop.f32.mrb[0].mxu0
      %561 = vmatprep.mubr.bf16.mxu0 0
      %562 = vmatmul.mubr.bf16.gmra.mrb[0].mxu0 %v417
      %v563 = vpop.f32.mrb[0].mxu0
      %v564 = vadd.f32 %v239, %v563
      %v565 = vpop.f32.mrb[0].mxu0
      %v566 = vpop.f32.mrb[0].mxu0
      %v567 = vadd.f32 %v239, %v566
      %v568 = vpop.f32.mrb[0].mxu0
      %569 = vmatprep.mubr.bf16.mxu0 0
      %570 = vmatmul.mubr.bf16.gmra.mrb[0].mxu0 %v420
      %v571 = vpop.f32.mrb[0].mxu0
      %v572 = vadd.f32 %v239, %v571
      %v573 = vpop.f32.mrb[0].mxu0
      %v574 = vpop.f32.mrb[0].mxu0
      %v575 = vadd.f32 %v239, %v574
      %v576 = vpop.f32.mrb[0].mxu0
      %577 = vmatprep.mubr.bf16.mxu0 0
      %578 = vmatmul.mubr.bf16.gmra.mrb[0].mxu0 %v423
      %v579 = vpop.f32.mrb[0].mxu0
      %v580 = vadd.f32 %v239, %v579
      %v581 = vpop.f32.mrb[0].mxu0
      %v582 = vpop.f32.mrb[0].mxu0
      %v583 = vadd.f32 %v239, %v582
      %v584 = vpop.f32.mrb[0].mxu0
      %585 = vmatprep.mubr.bf16.mxu0 0
      %586 = vmatmul.mubr.bf16.gmra.mrb[0].mxu0 %v426
      %v587 = vpop.f32.mrb[0].mxu0
      %v588 = vadd.f32 %v239, %v587
      %v589 = vpop.f32.mrb[0].mxu0
      %v590 = vpop.f32.mrb[0].mxu0
      %v591 = vadd.f32 %v239, %v590
      %v592 = vpop.f32.mrb[0].mxu0
      %593 = vmatprep.mubr.bf16.mxu0 0
      %594 = vmatmul.mubr.bf16.gmra.mrb[0].mxu0 %v429
      %v595 = vpop.f32.mrb[0].mxu0
      %v596 = vadd.f32 %v239, %v595
      %v597 = vpop.f32.mrb[0].mxu0
      %v598 = vpop.f32.mrb[0].mxu0
      %v599 = vadd.f32 %v239, %v598
      %v600 = vpop.f32.mrb[0].mxu0
      %601 = vmatprep.mubr.bf16.mxu0 0
      %602 = vmatmul.mubr.bf16.gmra.mrb[0].mxu0 %v432
      %v603 = vpop.f32.mrb[0].mxu0
      %v604 = vadd.f32 %v239, %v603
      %v605 = vpop.f32.mrb[0].mxu0
      %v606 = vpop.f32.mrb[0].mxu0
      %v607 = vadd.f32 %v239, %v606
      %v608 = vpop.f32.mrb[0].mxu0
      %609 = vmatprep.mubr.bf16.mxu0 0
      %610 = vmatmul.mubr.bf16.gmra.mrb[0].mxu0 %v435
      %v611 = vpop.f32.mrb[0].mxu0
      %v612 = vadd.f32 %v239, %v611
      %v613 = vpop.f32.mrb[0].mxu0
      %v614 = vpop.f32.mrb[0].mxu0
      %v615 = vadd.f32 %v239, %v614
      %v616 = vpop.f32.mrb[0].mxu0
      %617 = vmatprep.mubr.bf16.mxu0 0
      %618 = vmatmul.mubr.bf16.gmra.mrb[0].mxu0 %v438
      %v619 = vpop.f32.mrb[0].mxu0
      %v620 = vadd.f32 %v239, %v619
      %v621 = vpop.f32.mrb[0].mxu0
      %v622 = vpop.f32.mrb[0].mxu0
      %v623 = vadd.f32 %v239, %v622
      %v624 = vpop.f32.mrb[0].mxu0
      %625 = vmatprep.mubr.bf16.mxu0 0
      %626 = vmatmul.mubr.bf16.gmra.mrb[0].mxu0 %v441
      %v627 = vpop.f32.mrb[0].mxu0
      %v628 = vadd.f32 %v239, %v627
      %v629 = vpop.f32.mrb[0].mxu0
      %v630 = vpop.f32.mrb[0].mxu0
      %v631 = vadd.f32 %v239, %v630
      %v632 = vpop.f32.mrb[0].mxu0
      %633 = vmatprep.mubr.bf16.mxu0 0
      %634 = vmatmul.mubr.bf16.gmra.mrb[0].mxu0 %v444
      %v635 = vpop.f32.mrb[0].mxu0
      %v636 = vadd.f32 %v239, %v635
      %v637 = vpop.f32.mrb[0].mxu0
      %v638 = vpop.f32.mrb[0].mxu0
      %v639 = vadd.f32 %v239, %v638
      %v640 = vpop.f32.mrb[0].mxu0
      %641 = vmatprep.mubr.bf16.mxu0 0
      %642 = vmatmul.mubr.bf16.gmra.mrb[0].mxu0 %v447
      %v643 = vpop.f32.mrb[0].mxu0
      %v644 = vadd.f32 %v239, %v643
      %v645 = vpop.f32.mrb[0].mxu0
      %v646 = vpop.f32.mrb[0].mxu0
      %v647 = vadd.f32 %v239, %v646
      %v648 = vpop.f32.mrb[0].mxu0
      %649 = vmatprep.mubr.bf16.mxu0 0
      %650 = vmatmul.mubr.bf16.gmra.mrb[0].mxu0 %v450
      %v651 = vpop.f32.mrb[0].mxu0
      %v652 = vadd.f32 %v239, %v651
      %v653 = vpop.f32.mrb[0].mxu0
      %v654 = vpop.f32.mrb[0].mxu0
      %v655 = vadd.f32 %v239, %v654
      %v656 = vpop.f32.mrb[0].mxu0
      %657 = vmatprep.mubr.bf16.mxu0 0
      %658 = vmatmul.mubr.bf16.gmra.mrb[0].mxu0 %v453
      %v659 = vpop.f32.mrb[0].mxu0
      %v660 = vadd.f32 %v239, %v659
      %v661 = vpop.f32.mrb[0].mxu0
      %v662 = vpop.f32.mrb[0].mxu0
      %v663 = vadd.f32 %v239, %v662
      %v664 = vpop.f32.mrb[0].mxu0
      %665 = vmatprep.mubr.bf16.mxu0 0
      %666 = vmatmul.mubr.bf16.gmra.mrb[0].mxu0 %v456
      %v667 = vpop.f32.mrb[0].mxu0
      %v668 = vadd.f32 %v239, %v667
      %v669 = vpop.f32.mrb[0].mxu0
      %v670 = vpop.f32.mrb[0].mxu0
      %v671 = vadd.f32 %v239, %v670
      %v672 = vpop.f32.mrb[0].mxu0
      %673 = vmatprep.mubr.bf16.mxu0 0
      %674 = vmatmul.mubr.bf16.gmra.mrb[0].mxu0 %v459
      %v675 = vpop.f32.mrb[0].mxu0
      %v676 = vadd.f32 %v239, %v675
      %v677 = vpop.f32.mrb[0].mxu0
      %v678 = vpop.f32.mrb[0].mxu0
      %v679 = vadd.f32 %v239, %v678
      %v680 = vpop.f32.mrb[0].mxu0
      %681 = vmatprep.mubr.bf16.mxu0 0
      %682 = vmatmul.mubr.bf16.gmra.mrb[0].mxu0 %v462
      %v683 = vpop.f32.mrb[0].mxu0
      %v684 = vadd.f32 %v239, %v683
      %v685 = vpop.f32.mrb[0].mxu0
      %v686 = vpop.f32.mrb[0].mxu0
      %v687 = vadd.f32 %v239, %v686
      %v688 = vpop.f32.mrb[0].mxu0
      %689 = vmatprep.mubr.bf16.mxu0 0
      %690 = vmatmul.mubr.bf16.gmra.mrb[0].mxu0 %v465
      %v691 = vpop.f32.mrb[0].mxu0
      %v692 = vadd.f32 %v239, %v691
      %v693 = vpop.f32.mrb[0].mxu0
      %v694 = vpop.f32.mrb[0].mxu0
      %v695 = vadd.f32 %v239, %v694
      %v696 = vpop.f32.mrb[0].mxu0
      %697 = vdwg.mxu0
      %v698 = vmax.f32 %v508, 0.0
      %v699 = vmax.f32 %v511, 0.0
      %v700 = vmax.f32 %v516, 0.0
      %v701 = vmax.f32 %v519, 0.0
      %v702 = vmax.f32 %v524, 0.0
      %v703 = vmax.f32 %v527, 0.0
      %v704 = vmax.f32 %v532, 0.0
      %v705 = vmax.f32 %v535, 0.0
      %v706 = vmax.f32 %v540, 0.0
      %v707 = vmax.f32 %v543, 0.0
      %v708 = vmax.f32 %v548, 0.0
      %v709 = vmax.f32 %v551, 0.0
      %v710 = vmax.f32 %v556, 0.0
      %v711 = vmax.f32 %v559, 0.0
      %v712 = vmax.f32 %v564, 0.0
      %v713 = vmax.f32 %v567, 0.0
      %v714 = vmax.f32 %v572, 0.0
      %v715 = vmax.f32 %v575, 0.0
      %v716 = vmax.f32 %v580, 0.0
      %v717 = vmax.f32 %v583, 0.0
      %v718 = vmax.f32 %v588, 0.0
      %v719 = vmax.f32 %v591, 0.0
      %v720 = vmax.f32 %v596, 0.0
      %v721 = vmax.f32 %v599, 0.0
      %v722 = vmax.f32 %v604, 0.0
      %v723 = vmax.f32 %v607, 0.0
      %v724 = vmax.f32 %v612, 0.0
      %v725 = vmax.f32 %v615, 0.0
      %v726 = vmax.f32 %v620, 0.0
      %v727 = vmax.f32 %v623, 0.0
      %v728 = vmax.f32 %v628, 0.0
      %v729 = vmax.f32 %v631, 0.0
      %v730 = vmax.f32 %v636, 0.0
      %v731 = vmax.f32 %v639, 0.0
      %v732 = vmax.f32 %v644, 0.0
      %v733 = vmax.f32 %v647, 0.0
      %v734 = vmax.f32 %v652, 0.0
      %v735 = vmax.f32 %v655, 0.0
      %v736 = vmax.f32 %v660, 0.0
      %v737 = vmax.f32 %v663, 0.0
      %v738 = vmax.f32 %v668, 0.0
      %v739 = vmax.f32 %v671, 0.0
      %v740 = vmax.f32 %v676, 0.0
      %v741 = vmax.f32 %v679, 0.0
      %v742 = vmax.f32 %v684, 0.0
      %v743 = vmax.f32 %v687, 0.0
      %v744 = vmax.f32 %v692, 0.0
      %v745 = vmax.f32 %v695, 0.0
      %v746 = vpack.c.bf16 %v699, %v698
      %v747 = vpack.c.bf16 %v701, %v700
      %v748 = vpack.c.bf16 %v703, %v702
      %v749 = vpack.c.bf16 %v705, %v704
      %v750 = vpack.c.bf16 %v707, %v706
      %v751 = vpack.c.bf16 %v709, %v708
      %v752 = vpack.c.bf16 %v711, %v710
      %v753 = vpack.c.bf16 %v713, %v712
      %v754 = vpack.c.bf16 %v715, %v714
      %v755 = vpack.c.bf16 %v717, %v716
      %v756 = vpack.c.bf16 %v719, %v718
      %v757 = vpack.c.bf16 %v721, %v720
      %v758 = vpack.c.bf16 %v723, %v722
      %v759 = vpack.c.bf16 %v725, %v724
      %v760 = vpack.c.bf16 %v727, %v726
      %v761 = vpack.c.bf16 %v729, %v728
      %v762 = vpack.c.bf16 %v731, %v730
      %v763 = vpack.c.bf16 %v733, %v732
      %v764 = vpack.c.bf16 %v735, %v734
      %v765 = vpack.c.bf16 %v737, %v736
      %v766 = vpack.c.bf16 %v739, %v738
      %v767 = vpack.c.bf16 %v741, %v740
      %v768 = vpack.c.bf16 %v743, %v742
      %v769 = vpack.c.bf16 %v745, %v744
      %v794 = vunpack.c.l.b16 %v746
      %v795 = vunpack.c.h.b16 %v746
      %v796 = vunpack.c.l.b16 %v747
      %v797 = vunpack.c.h.b16 %v747
      %v798 = vunpack.c.l.b16 %v748
      %v799 = vunpack.c.h.b16 %v748
      %v800 = vunpack.c.l.b16 %v749
      %v801 = vunpack.c.h.b16 %v749
      %v802 = vunpack.c.l.b16 %v750
      %v803 = vunpack.c.h.b16 %v750
      %v804 = vunpack.c.l.b16 %v751
      %v805 = vunpack.c.h.b16 %v751
      %v806 = vunpack.c.l.b16 %v752
      %v807 = vunpack.c.h.b16 %v752
      %v808 = vunpack.c.l.b16 %v753
      %v809 = vunpack.c.h.b16 %v753
      %v810 = vunpack.c.l.b16 %v754
      %v811 = vunpack.c.h.b16 %v754
      %v812 = vunpack.c.l.b16 %v755
      %v813 = vunpack.c.h.b16 %v755
      %v814 = vunpack.c.l.b16 %v756
      %v815 = vunpack.c.h.b16 %v756
      %v816 = vunpack.c.l.b16 %v757
      %v817 = vunpack.c.h.b16 %v757
      %v818 = vunpack.c.l.b16 %v758
      %v819 = vunpack.c.h.b16 %v758
      %v820 = vunpack.c.l.b16 %v759
      %v821 = vunpack.c.h.b16 %v759
      %v822 = vunpack.c.l.b16 %v760
      %v823 = vunpack.c.h.b16 %v760
      %v824 = vunpack.c.l.b16 %v761
      %v825 = vunpack.c.h.b16 %v761
      %v826 = vunpack.c.l.b16 %v762
      %v827 = vunpack.c.h.b16 %v762
      %v828 = vunpack.c.l.b16 %v763
      %v829 = vunpack.c.h.b16 %v763
      %v830 = vunpack.c.l.b16 %v764
      %v831 = vunpack.c.h.b16 %v764
      %v832 = vunpack.c.l.b16 %v765
      %v833 = vunpack.c.h.b16 %v765
      %v834 = vunpack.c.l.b16 %v766
      %v835 = vunpack.c.h.b16 %v766
      %v836 = vunpack.c.l.b16 %v767
      %v837 = vunpack.c.h.b16 %v767
      %v838 = vunpack.c.l.b16 %v768
      %v839 = vunpack.c.h.b16 %v768
      %v840 = vunpack.c.l.b16 %v769
      %v841 = vunpack.c.h.b16 %v769
      %v842 = vpack.c.b16 %v794, %v794
      %v843 = vpack.c.b16 %v795, %v795
      %v844 = vpack.c.b16 %v796, %v796
      %v845 = vpack.c.b16 %v797, %v797
      %v846 = vpack.c.b16 %v798, %v798
      %v847 = vpack.c.b16 %v799, %v799
      %v848 = vpack.c.b16 %v800, %v800
      %v849 = vpack.c.b16 %v801, %v801
      %v850 = vpack.c.b16 %v802, %v802
      %v851 = vpack.c.b16 %v803, %v803
      %v852 = vpack.c.b16 %v804, %v804
      %v853 = vpack.c.b16 %v805, %v805
      %v854 = vpack.c.b16 %v806, %v806
      %v855 = vpack.c.b16 %v807, %v807
      %v856 = vpack.c.b16 %v808, %v808
      %v857 = vpack.c.b16 %v809, %v809
      %v858 = vpack.c.b16 %v810, %v810
      %v859 = vpack.c.b16 %v811, %v811
      %v860 = vpack.c.b16 %v812, %v812
      %v861 = vpack.c.b16 %v813, %v813
      %v862 = vpack.c.b16 %v814, %v814
      %v863 = vpack.c.b16 %v815, %v815
      %v864 = vpack.c.b16 %v816, %v816
      %v865 = vpack.c.b16 %v817, %v817
      %v866 = vpack.c.b16 %v818, %v818
      %v867 = vpack.c.b16 %v819, %v819
      %v868 = vpack.c.b16 %v820, %v820
      %v869 = vpack.c.b16 %v821, %v821
      %v870 = vpack.c.b16 %v822, %v822
      %v871 = vpack.c.b16 %v823, %v823
      %v872 = vpack.c.b16 %v824, %v824
      %v873 = vpack.c.b16 %v825, %v825
      %v874 = vpack.c.b16 %v826, %v826
      %v875 = vpack.c.b16 %v827, %v827
      %v876 = vpack.c.b16 %v828, %v828
      %v877 = vpack.c.b16 %v829, %v829
      %v878 = vpack.c.b16 %v830, %v830
      %v879 = vpack.c.b16 %v831, %v831
      %v880 = vpack.c.b16 %v832, %v832
      %v881 = vpack.c.b16 %v833, %v833
      %v882 = vpack.c.b16 %v834, %v834
      %v883 = vpack.c.b16 %v835, %v835
      %v884 = vpack.c.b16 %v836, %v836
      %v885 = vpack.c.b16 %v837, %v837
      %v886 = vpack.c.b16 %v838, %v838
      %v887 = vpack.c.b16 %v839, %v839
      %v888 = vpack.c.b16 %v840, %v840
      %v889 = vpack.c.b16 %v841, %v841
      %938 = vst [vmem:[%s172] sm:$0xf] %v842
      %939 = vst [vmem:[%s172 + $0x4] sm:$0xf] %v843
      %940 = vst [vmem:[%s172 + $0x8] sm:$0xf] %v844
      %941 = vst [vmem:[%s172 + $0xc] sm:$0xf] %v845
      %942 = vst [vmem:[%s172 + $0x10] sm:$0xf] %v846
      %943 = vst [vmem:[%s172 + $0x14] sm:$0xf] %v847
      %944 = vst [vmem:[%s172 + $0x18] sm:$0xf] %v848
      %945 = vst [vmem:[%s172 + $0x1c] sm:$0xf] %v849
      %946 = vst [vmem:[%s172 + $0x20] sm:$0xf] %v850
      %947 = vst [vmem:[%s172 + $0x24] sm:$0xf] %v851
      %948 = vst [vmem:[%s172 + $0x28] sm:$0xf] %v852
      %949 = vst [vmem:[%s172 + $0x2c] sm:$0xf] %v853
      %950 = vst [vmem:[%s172 + $0x30] sm:$0xf] %v854
      %951 = vst [vmem:[%s172 + $0x34] sm:$0xf] %v855
      %952 = vst [vmem:[%s172 + $0x38] sm:$0xf] %v856
      %953 = vst [vmem:[%s172 + $0x3c] sm:$0xf] %v857
      %954 = vst [vmem:[%s172 + $0x40] sm:$0xf] %v858
      %955 = vst [vmem:[%s172 + $0x44] sm:$0xf] %v859
      %956 = vst [vmem:[%s172 + $0x48] sm:$0xf] %v860
      %957 = vst [vmem:[%s172 + $0x4c] sm:$0xf] %v861
      %958 = vst [vmem:[%s172 + $0x50] sm:$0xf] %v862
      %959 = vst [vmem:[%s172 + $0x54] sm:$0xf] %v863
      %960 = vst [vmem:[%s172 + $0x58] sm:$0xf] %v864
      %961 = vst [vmem:[%s172 + $0x5c] sm:$0xf] %v865
      %962 = vst [vmem:[%s172 + $0x60] sm:$0xf] %v866
      %963 = vst [vmem:[%s172 + $0x64] sm:$0xf] %v867
      %964 = vst [vmem:[%s172 + $0x68] sm:$0xf] %v868
      %965 = vst [vmem:[%s172 + $0x6c] sm:$0xf] %v869
      %966 = vst [vmem:[%s172 + $0x70] sm:$0xf] %v870
      %967 = vst [vmem:[%s172 + $0x74] sm:$0xf] %v871
      %968 = vst [vmem:[%s172 + $0x78] sm:$0xf] %v872
      %969 = vst [vmem:[%s172 + $0x7c] sm:$0xf] %v873
      %970 = vst [vmem:[%s172 + $0x80] sm:$0xf] %v874
      %971 = vst [vmem:[%s172 + $0x84] sm:$0xf] %v875
      %972 = vst [vmem:[%s172 + $0x88] sm:$0xf] %v876
      %973 = vst [vmem:[%s172 + $0x8c] sm:$0xf] %v877
      %974 = vst [vmem:[%s172 + $0x90] sm:$0xf] %v878
      %975 = vst [vmem:[%s172 + $0x94] sm:$0xf] %v879
      %976 = vst [vmem:[%s172 + $0x98] sm:$0xf] %v880
      %977 = vst [vmem:[%s172 + $0x9c] sm:$0xf] %v881
      %978 = vst [vmem:[%s172 + $0xa0] sm:$0xf] %v882
      %979 = vst [vmem:[%s172 + $0xa4] sm:$0xf] %v883
      %980 = vst [vmem:[%s172 + $0xa8] sm:$0xf] %v884
      %981 = vst [vmem:[%s172 + $0xac] sm:$0xf] %v885
      %982 = vst [vmem:[%s172 + $0xb0] sm:$0xf] %v886
      %983 = vst [vmem:[%s172 + $0xb4] sm:$0xf] %v887
      %984 = vst [vmem:[%s172 + $0xb8] sm:$0xf] %v888
      %985 = vst [vmem:[%s172 + $0xbc] sm:$0xf] %v889
      %s986 = smul.u32 48, %s14
      %p987 = scmp.lt.s32.totalorder %s986, 95
      %s988 = scalar_select %p987, %s986, 95
      %s989 = smul.addr %s988, 4
      %s990 = scalar_lea.vmem %s3, %s989
      // Predicated region
      $region33: #{ggcnn_forward.7} parent=31 // pred_check
        %p991 = pneg %p100
      $region34: #{ggcnn_forward.7} parent=31 // pred_check_branch
        %993 = sbr.rel (%p991) target = $region36
      $region35: #{ggcnn_forward.7} parent=31 // pred_region
        %s994 = smul.u32 48, %s14
      $region36: #{ggcnn_forward.7} parent=31 // pred_fallthru
        _
    $region32: #{ggcnn_forward.7} parent=5 // pred_fallthru
      _
    %p995 = scmp.le.s32.totalorder 2, %s9
    // Predicated region
    $region37: #{ggcnn_forward.7} parent=5 // pred_check
      %p996 = pneg %p995
    $region38: #{ggcnn_forward.7} parent=5 // pred_check_branch
      %998 = sbr.rel (%p996) target = $region40
    $region39: #{ggcnn_forward.7} parent=5 // pred_region
      %s999 = ssub.s32 %s9, 2
      // Predicated region
      $region41: #{ggcnn_forward.7} parent=39 // pred_check
        %p1000 = pneg %p106
      $region42: #{ggcnn_forward.7} parent=39 // pred_check_branch
        %1002 = sbr.rel (%p1000) target = $region44
      $region43: #{ggcnn_forward.7} parent=39 // pred_region
        %s1003 = smul.u32 48, %s15
        %p1004 = scmp.lt.s32.totalorder %s1003, 95
        %s1005 = scalar_select %p1004, %s1003, 95
        %s1006 = smul.addr %s1005, 4
        %s1007 = scalar_lea.vmem %s3, %s1006
      $region44: #{ggcnn_forward.7} parent=39 // pred_fallthru
        _
    $region40: #{ggcnn_forward.7} parent=5 // pred_fallthru
      _
  $region6: #{ggcnn_forward.7} parent=0 // loop_footer
    %s13 = sadd.s32 1, %s9
  $region7: #{ggcnn_forward.7} parent=0 // loop_footer_branch
    %8 = sbr.rel target = $region3
  $region8: #{ggcnn_forward.7} parent=0 // loop_exit
    _

// kernel: ggcnn_forward.8
$region0: #{ggcnn_forward.8}
  #allocation0 [shape = 'u32[]', space=smem, size = 0x4, offset = 0x4, fixed_abs, tag = 'smem constant byte address 0x4 - core index']
  #allocation1 [shape = 'u32[144,128]{1,0:T(1,128)}', space=vmem, size = 0x12000, scoped, tag = 'internal scratch']
  %s0 = inlined_call_operand.vmem [shape: bf16[256,1152], index: 0, kind: input, shape index: {}]
  %s1 = inlined_call_operand.vmem [shape: bf16[1152,128], index: 1, kind: input, shape index: {}]
  %s2 = inlined_call_operand.vmem [shape: f32[1,128], index: 2, kind: input, shape index: {}]
  %s3 = inlined_call_operand.vmem [shape: bf16[256,128], index: 3, kind: output, shape index: {}]
  %s4 = sld [smem:[#allocation0]]
  $region45: #{ggcnn_forward.8} parent=0
    _
  %s6 = ssub.s32 1, %s4
  %s7 = scalar_select 0, %s6, %s4
  loop: start=0, step=1, limit=4
  $region2: #{ggcnn_forward.8} parent=0 // loop_pre_header
    _
  $region3: #{ggcnn_forward.8} parent=0 // loop_header
    %s9 = sphi 0, %s13
    %p10 = scmp.ge.s32.totalorder %s9, 4
    %s19 = sphi 0, %s21
    %s22 = sphi 0, %s19
    %s23 = sphi 0, %s22
    %s39 = sphi 0, %s23
    %s43 = sphi 0, %s43
    %s45 = sphi 0, %s43
    %s46 = sphi 0, %s45
    %s60 = sphi 0, %s46
    %s64 = sphi 0, %s64
    %s66 = sphi 0, %s64
    %s67 = sphi 0, %s66
    %s81 = sphi 0, %s67
    %s87 = sphi 0, %s89
    %s90 = sphi 0, %s87
    %s91 = sphi 0, %s90
    %s107 = sphi 0, %s91
  $region4: #{ggcnn_forward.8} parent=0 // loop_header_branch
    %12 = sbr.rel (%p10) target = $region8
  $region5: #{ggcnn_forward.8} parent=0 // loop_body
    %s14 = ssub.s32 %s9, 1
    %s15 = ssub.s32 %s9, 2
    %s16 = sadd.s32 %s9, 1
    %s17 = ssub.s32 %s9, %s16
    %p18 = scmp.eq.s32.totalorder %s17, 0
    %s20 = sadd.s32 %s19, 1
    %s21 = scalar_select %p18, %s19, %s20
    %p24 = pneg %p18
    %p25 = scmp.eq.s32.totalorder %s9, 1
    %p26 = por %p24, %p25
    %p27 = scmp.ne.s32.totalorder %s19, %s22
    %p28 = scmp.eq.s32.totalorder %s9, 0
    %p29 = por %p27, %p28
    %p30 = scmp.ne.s32.totalorder %s19, %s22
    %p31 = scmp.eq.s32.totalorder %s14, 1
    %p32 = por %p30, %p31
    %p33 = scmp.ne.s32.totalorder %s22, %s23
    %p34 = scmp.eq.s32.totalorder %s14, 0
    %p35 = por %p33, %p34
    %p36 = scmp.ne.s32.totalorder %s22, %s23
    %p37 = scmp.eq.s32.totalorder %s15, 1
    %p38 = por %p36, %p37
    %p40 = scmp.ne.s32.totalorder %s23, %s39
    %p41 = scmp.eq.s32.totalorder %s15, 0
    %p42 = por %p40, %p41
    %s44 = sadd.s32 %s43, 1
    %p47 = scmp.eq.s32.totalorder %s9, 1
    %p48 = scmp.ne.s32.totalorder %s43, %s45
    %p49 = scmp.eq.s32.totalorder %s9, 0
    %p50 = por %p48, %p49
    %p51 = scmp.ne.s32.totalorder %s43, %s45
    %p52 = scmp.eq.s32.totalorder %s14, 1
    %p53 = por %p51, %p52
    %p54 = scmp.ne.s32.totalorder %s45, %s46
    %p55 = scmp.eq.s32.totalorder %s14, 0
    %p56 = por %p54, %p55
    %p57 = scmp.ne.s32.totalorder %s45, %s46
    %p58 = scmp.eq.s32.totalorder %s15, 1
    %p59 = por %p57, %p58
    %p61 = scmp.ne.s32.totalorder %s46, %s60
    %p62 = scmp.eq.s32.totalorder %s15, 0
    %p63 = por %p61, %p62
    %s65 = sadd.s32 %s64, 1
    %p68 = scmp.eq.s32.totalorder %s9, 1
    %p69 = scmp.ne.s32.totalorder %s64, %s66
    %p70 = scmp.eq.s32.totalorder %s9, 0
    %p71 = por %p69, %p70
    %p72 = scmp.ne.s32.totalorder %s64, %s66
    %p73 = scmp.eq.s32.totalorder %s14, 1
    %p74 = por %p72, %p73
    %p75 = scmp.ne.s32.totalorder %s66, %s67
    %p76 = scmp.eq.s32.totalorder %s14, 0
    %p77 = por %p75, %p76
    %p78 = scmp.ne.s32.totalorder %s66, %s67
    %p79 = scmp.eq.s32.totalorder %s15, 1
    %p80 = por %p78, %p79
    %p82 = scmp.ne.s32.totalorder %s67, %s81
    %p83 = scmp.eq.s32.totalorder %s15, 0
    %p84 = por %p82, %p83
    %s85 = ssub.s32 %s9, %s16
    %p86 = scmp.eq.s32.totalorder %s85, 0
    %s88 = sadd.s32 %s87, 1
    %s89 = scalar_select %p86, %s87, %s88
    %p92 = pneg %p86
    %p93 = scmp.eq.s32.totalorder %s9, 1
    %p94 = por %p92, %p93
    %p95 = scmp.ne.s32.totalorder %s87, %s90
    %p96 = scmp.eq.s32.totalorder %s9, 0
    %p97 = por %p95, %p96
    %p98 = scmp.ne.s32.totalorder %s87, %s90
    %p99 = scmp.eq.s32.totalorder %s14, 1
    %p100 = por %p98, %p99
    %p101 = scmp.ne.s32.totalorder %s90, %s91
    %p102 = scmp.eq.s32.totalorder %s14, 0
    %p103 = por %p101, %p102
    %p104 = scmp.ne.s32.totalorder %s90, %s91
    %p105 = scmp.eq.s32.totalorder %s15, 1
    %p106 = por %p104, %p105
    %p108 = scmp.ne.s32.totalorder %s91, %s107
    %p109 = scmp.eq.s32.totalorder %s15, 0
    %p110 = por %p108, %p109
    %p111 = scmp.le.s32.totalorder 1, %s9
    %p112 = scmp.lt.s32.totalorder %s9, 3
    %p113 = pnand %p111, %p112
    %p114 = pneg %p113
    // Predicated region
    $region9: #{ggcnn_forward.8} parent=5 // pred_check
      _
    $region10: #{ggcnn_forward.8} parent=5 // pred_check_branch
      %116 = sbr.rel (%p113) target = $region12
    $region11: #{ggcnn_forward.8} parent=5 // pred_region
      %s117 = ssub.s32 %s9, 1
      // Predicated region
      $region13: #{ggcnn_forward.8} parent=11 // pred_check
        %p118 = pneg %p56
      $region14: #{ggcnn_forward.8} parent=11 // pred_check_branch
        %120 = sbr.rel (%p118) target = $region16
      $region15: #{ggcnn_forward.8} parent=11 // pred_region
        _
      $region16: #{ggcnn_forward.8} parent=11 // pred_fallthru
        _
      // Predicated region
      $region17: #{ggcnn_forward.8} parent=11 // pred_check
        %p121 = pneg %p77
      $region18: #{ggcnn_forward.8} parent=11 // pred_check_branch
        %123 = sbr.rel (%p121) target = $region20
      $region19: #{ggcnn_forward.8} parent=11 // pred_region
        _
      $region20: #{ggcnn_forward.8} parent=11 // pred_fallthru
        _
    $region12: #{ggcnn_forward.8} parent=5 // pred_fallthru
      _
    %p124 = scmp.lt.s32.totalorder %s9, 2
    // Predicated region
    $region21: #{ggcnn_forward.8} parent=5 // pred_check
      %p125 = pneg %p124
    $region22: #{ggcnn_forward.8} parent=5 // pred_check_branch
      %127 = sbr.rel (%p125) target = $region24
    $region23: #{ggcnn_forward.8} parent=5 // pred_region
      // Predicated region
      $region25: #{ggcnn_forward.8} parent=23 // pred_check
        %p128 = pneg %p29
      $region26: #{ggcnn_forward.8} parent=23 // pred_check_branch
        %130 = sbr.rel (%p128) target = $region28
      $region27: #{ggcnn_forward.8} parent=23 // pred_region
        %s131 = smul.u32 16, %s9
        %p132 = scmp.lt.s32.totalorder %s131, 31
        %s133 = scalar_select %p132, %s131, 31
        %s134 = smul.addr %s133, 9
        %s135 = smul.addr %s134, 4
        %s136 = scalar_lea.vmem %s0, %s135
        %s137 = smul.u32 16, %s9
      $region28: #{ggcnn_forward.8} parent=23 // pred_fallthru
        _
    $region24: #{ggcnn_forward.8} parent=5 // pred_fallthru
      _
    %p138 = scmp.le.s32.totalorder 1, %s9
    %p139 = scmp.lt.s32.totalorder %s9, 3
    %p140 = pnand %p138, %p139
    %p141 = pneg %p140
    // Predicated region
    $region29: #{ggcnn_forward.8} parent=5 // pred_check
      _
    $region30: #{ggcnn_forward.8} parent=5 // pred_check_branch
      %143 = sbr.rel (%p140) target = $region32
    $region31: #{ggcnn_forward.8} parent=5 // pred_region
      %s144 = ssub.s32 %s9, 1
      %s145 = smul.u32 16, %s14
      %p146 = scmp.lt.s32.totalorder %s145, 31
      %s147 = scalar_select %p146, %s145, 31
      %s148 = smul.addr %s147, 9
      %s149 = smul.addr %s148, 4
      %s150 = scalar_lea.vmem %s0, %s149
      %p151 = pneg %p35
      %p152 = pneg %p32
      %p153 = pneg %p56
      %p154 = pneg %p53
      %p155 = pneg %p77
      %p156 = pneg %p74
      %p157 = pneg %p103
      %p158 = pneg %p100
      %s159 = smul.u32 16, %s14
      %p160 = scmp.lt.s32.totalorder %s159, 31
      %s161 = scalar_select %p160, %s159, 31
      %s162 = smul.addr %s161, 4
      %s163 = scalar_lea.vmem %s3, %s162
      %s164 = smul.u32 16, %s14
      %p165 = scmp.lt.s32.totalorder %s164, 31
      %s166 = scalar_select %p165, %s164, 31
      %s167 = smul.addr %s166, 9
      %s168 = smul.addr %s167, 4
      %s169 = scalar_lea.vmem %s0, %s168
      %s170 = smul.u32 16, %s14
      %s171 = smul.u32 16, %s14
      %p172 = scmp.lt.s32.totalorder %s171, 31
      %s173 = scalar_select %p172, %s171, 31
      %s174 = smul.addr %s173, 4
      %s175 = scalar_lea.vmem %s3, %s174
      %s176 = smul.u32 16, %s14
      %v178 = vld [vmem:[%s169] sm:$0xff]
      %v179 = vld [vmem:[%s169 + $0x8] sm:$0xff]
      %v180 = vld [vmem:[%s169 + $0x10] sm:$0xff]
      %v181 = vld [vmem:[%s169 + $0x18] sm:$0xff]
      %v182 = vld [vmem:[%s169 + $0x20] sm:$0xf]
      %v183 = vld [vmem:[%s169 + $0x24] sm:$0xff]
      %v184 = vld [vmem:[%s169 + $0x2c] sm:$0xff]
      %v185 = vld [vmem:[%s169 + $0x34] sm:$0xff]
      %v186 = vld [vmem:[%s169 + $0x3c] sm:$0xff]
      %v187 = vld [vmem:[%s169 + $0x44] sm:$0xf]
      %v188 = vld [vmem:[%s169 + $0x48] sm:$0xff]
      %v189 = vld [vmem:[%s169 + $0x50] sm:$0xff]
      %v190 = vld [vmem:[%s169 + $0x58] sm:$0xff]
      %v191 = vld [vmem:[%s169 + $0x60] sm:$0xff]
      %v192 = vld [vmem:[%s169 + $0x68] sm:$0xf]
      %v193 = vld [vmem:[%s169 + $0x6c] sm:$0xff]
      %v194 = vld [vmem:[%s169 + $0x74] sm:$0xff]
      %v195 = vld [vmem:[%s169 + $0x7c] sm:$0xff]
      %v196 = vld [vmem:[%s169 + $0x84] sm:$0xff]
      %v197 = vld [vmem:[%s169 + $0x8c] sm:$0xf]
      %v198 = vld [vmem:[%s169 + $0x90] sm:$0xff]
      %v199 = vld [vmem:[%s169 + $0x98] sm:$0xff]
      %v200 = vld [vmem:[%s169 + $0xa0] sm:$0xff]
      %v201 = vld [vmem:[%s169 + $0xa8] sm:$0xff]
      %v202 = vld [vmem:[%s169 + $0xb0] sm:$0xf]
      %v203 = vld [vmem:[%s169 + $0xb4] sm:$0xff]
      %v204 = vld [vmem:[%s169 + $0xbc] sm:$0xff]
      %v205 = vld [vmem:[%s169 + $0xc4] sm:$0xff]
      %v206 = vld [vmem:[%s169 + $0xcc] sm:$0xff]
      %v207 = vld [vmem:[%s169 + $0xd4] sm:$0xf]
      %v208 = vld [vmem:[%s169 + $0xd8] sm:$0xff]
      %v209 = vld [vmem:[%s169 + $0xe0] sm:$0xff]
      %v210 = vld [vmem:[%s169 + $0xe8] sm:$0xff]
      %v211 = vld [vmem:[%s169 + $0xf0] sm:$0xff]
      %v212 = vld [vmem:[%s169 + $0xf8] sm:$0xf]
      %v213 = vld [vmem:[%s169 + $0xfc] sm:$0xff]
      %v214 = vld [vmem:[%s169 + $0x104] sm:$0xff]
      %v215 = vld [vmem:[%s169 + $0x10c] sm:$0xff]
      %v216 = vld [vmem:[%s169 + $0x114] sm:$0xff]
      %v217 = vld [vmem:[%s169 + $0x11c] sm:$0xf]
      %v218 = vld [vmem:[%s169 + $0x120] sm:$0xff]
      %v219 = vld [vmem:[%s169 + $0x128] sm:$0xff]
      %v220 = vld [vmem:[%s169 + $0x130] sm:$0xff]
      %v221 = vld [vmem:[%s169 + $0x138] sm:$0xff]
      %v222 = vld [vmem:[%s169 + $0x140] sm:$0xf]
      %v223 = vld [vmem:[%s169 + $0x144] sm:$0xff]
      %v224 = vld [vmem:[%s169 + $0x14c] sm:$0xff]
      %v225 = vld [vmem:[%s169 + $0x154] sm:$0xff]
      %v226 = vld [vmem:[%s169 + $0x15c] sm:$0xff]
      %v227 = vld [vmem:[%s169 + $0x164] sm:$0xf]
      %v228 = vld [vmem:[%s169 + $0x168] sm:$0xff]
      %v229 = vld [vmem:[%s169 + $0x170] sm:$0xff]
      %v230 = vld [vmem:[%s169 + $0x178] sm:$0xff]
      %v231 = vld [vmem:[%s169 + $0x180] sm:$0xff]
      %v232 = vld [vmem:[%s169 + $0x188] sm:$0xf]
      %v233 = vld [vmem:[%s169 + $0x18c] sm:$0xff]
      %v234 = vld [vmem:[%s169 + $0x194] sm:$0xff]
      %v235 = vld [vmem:[%s169 + $0x19c] sm:$0xff]
      %v236 = vld [vmem:[%s169 + $0x1a4] sm:$0xff]
      %v237 = vld [vmem:[%s169 + $0x1ac] sm:$0xf]
      %v238 = vld [vmem:[%s169 + $0x1b0] sm:$0xff]
      %v239 = vld [vmem:[%s169 + $0x1b8] sm:$0xff]
      %v240 = vld [vmem:[%s169 + $0x1c0] sm:$0xff]
      %v241 = vld [vmem:[%s169 + $0x1c8] sm:$0xff]
      %v242 = vld [vmem:[%s169 + $0x1d0] sm:$0xf]
      %v243 = vld [vmem:[%s169 + $0x1d4] sm:$0xff]
      %v244 = vld [vmem:[%s169 + $0x1dc] sm:$0xff]
      %v245 = vld [vmem:[%s169 + $0x1e4] sm:$0xff]
      %v246 = vld [vmem:[%s169 + $0x1ec] sm:$0xff]
      %v247 = vld [vmem:[%s169 + $0x1f4] sm:$0xf]
      %v248 = vld [vmem:[%s169 + $0x1f8] sm:$0xff]
      %v249 = vld [vmem:[%s169 + $0x200] sm:$0xff]
      %v250 = vld [vmem:[%s169 + $0x208] sm:$0xff]
      %v251 = vld [vmem:[%s169 + $0x210] sm:$0xff]
      %v252 = vld [vmem:[%s169 + $0x218] sm:$0xf]
      %v253 = vld [vmem:[%s169 + $0x21c] sm:$0xff]
      %v254 = vld [vmem:[%s169 + $0x224] sm:$0xff]
      %v255 = vld [vmem:[%s169 + $0x22c] sm:$0xff]
      %v256 = vld [vmem:[%s169 + $0x234] sm:$0xff]
      %v257 = vld [vmem:[%s169 + $0x23c] sm:$0xf]
      %v258 = vld [vmem:[%s1] sm:$0xf]
      %v259 = vld [vmem:[%s1 + $0x4] sm:$0xf]
      %v260 = vld [vmem:[%s1 + $0x8] sm:$0xf]
      %v261 = vld [vmem:[%s1 + $0xc] sm:$0xf]
      %v262 = vld [vmem:[%s1 + $0x10] sm:$0xf]
      %v263 = vld [vmem:[%s1 + $0x14] sm:$0xf]
      %v264 = vld [vmem:[%s1 + $0x18] sm:$0xf]
      %v265 = vld [vmem:[%s1 + $0x1c] sm:$0xf]
      %v266 = vld [vmem:[%s1 + $0x20] sm:$0xf]
      %v267 = vld [vmem:[%s1 + $0x24] sm:$0xf]
      %v268 = vld [vmem:[%s1 + $0x28] sm:$0xf]
      %v269 = vld [vmem:[%s1 + $0x2c] sm:$0xf]
      %v270 = vld [vmem:[%s1 + $0x30] sm:$0xf]
      %v271 = vld [vmem:[%s1 + $0x34] sm:$0xf]
      %v272 = vld [vmem:[%s1 + $0x38] sm:$0xf]
      %v273 = vld [vmem:[%s1 + $0x3c] sm:$0xf]
      %v274 = vld [vmem:[%s1 + $0x40] sm:$0xf]
      %v275 = vld [vmem:[%s1 + $0x44] sm:$0xf]
      %v276 = vld [vmem:[%s1 + $0x48] sm:$0xf]
      %v277 = vld [vmem:[%s1 + $0x4c] sm:$0xf]
      %v278 = vld [vmem:[%s1 + $0x50] sm:$0xf]
      %v279 = vld [vmem:[%s1 + $0x54] sm:$0xf]
      %v280 = vld [vmem:[%s1 + $0x58] sm:$0xf]
      %v281 = vld [vmem:[%s1 + $0x5c] sm:$0xf]
      %v282 = vld [vmem:[%s1 + $0x60] sm:$0xf]
      %v283 = vld [vmem:[%s1 + $0x64] sm:$0xf]
      %v284 = vld [vmem:[%s1 + $0x68] sm:$0xf]
      %v285 = vld [vmem:[%s1 + $0x6c] sm:$0xf]
      %v286 = vld [vmem:[%s1 + $0x70] sm:$0xf]
      %v287 = vld [vmem:[%s1 + $0x74] sm:$0xf]
      %v288 = vld [vmem:[%s1 + $0x78] sm:$0xf]
      %v289 = vld [vmem:[%s1 + $0x7c] sm:$0xf]
      %v290 = vld [vmem:[%s1 + $0x80] sm:$0xf]
      %v291 = vld [vmem:[%s1 + $0x84] sm:$0xf]
      %v292 = vld [vmem:[%s1 + $0x88] sm:$0xf]
      %v293 = vld [vmem:[%s1 + $0x8c] sm:$0xf]
      %v294 = vld [vmem:[%s1 + $0x90] sm:$0xf]
      %v295 = vld [vmem:[%s1 + $0x94] sm:$0xf]
      %v296 = vld [vmem:[%s1 + $0x98] sm:$0xf]
      %v297 = vld [vmem:[%s1 + $0x9c] sm:$0xf]
      %v298 = vld [vmem:[%s1 + $0xa0] sm:$0xf]
      %v299 = vld [vmem:[%s1 + $0xa4] sm:$0xf]
      %v300 = vld [vmem:[%s1 + $0xa8] sm:$0xf]
      %v301 = vld [vmem:[%s1 + $0xac] sm:$0xf]
      %v302 = vld [vmem:[%s1 + $0xb0] sm:$0xf]
      %v303 = vld [vmem:[%s1 + $0xb4] sm:$0xf]
      %v304 = vld [vmem:[%s1 + $0xb8] sm:$0xf]
      %v305 = vld [vmem:[%s1 + $0xbc] sm:$0xf]
      %v306 = vld [vmem:[%s1 + $0xc0] sm:$0xf]
      %v307 = vld [vmem:[%s1 + $0xc4] sm:$0xf]
      %v308 = vld [vmem:[%s1 + $0xc8] sm:$0xf]
      %v309 = vld [vmem:[%s1 + $0xcc] sm:$0xf]
      %v310 = vld [vmem:[%s1 + $0xd0] sm:$0xf]
      %v311 = vld [vmem:[%s1 + $0xd4] sm:$0xf]
      %v312 = vld [vmem:[%s1 + $0xd8] sm:$0xf]
      %v313 = vld [vmem:[%s1 + $0xdc] sm:$0xf]
      %v314 = vld [vmem:[%s1 + $0xe0] sm:$0xf]
      %v315 = vld [vmem:[%s1 + $0xe4] sm:$0xf]
      %v316 = vld [vmem:[%s1 + $0xe8] sm:$0xf]
      %v317 = vld [vmem:[%s1 + $0xec] sm:$0xf]
      %v318 = vld [vmem:[%s1 + $0xf0] sm:$0xf]
      %v319 = vld [vmem:[%s1 + $0xf4] sm:$0xf]
      %v320 = vld [vmem:[%s1 + $0xf8] sm:$0xf]
      %v321 = vld [vmem:[%s1 + $0xfc] sm:$0xf]
      %v322 = vld [vmem:[%s1 + $0x100] sm:$0xf]
      %v323 = vld [vmem:[%s1 + $0x104] sm:$0xf]
      %v324 = vld [vmem:[%s1 + $0x108] sm:$0xf]
      %v325 = vld [vmem:[%s1 + $0x10c] sm:$0xf]
      %v326 = vld [vmem:[%s1 + $0x110] sm:$0xf]
      %v327 = vld [vmem:[%s1 + $0x114] sm:$0xf]
      %v328 = vld [vmem:[%s1 + $0x118] sm:$0xf]
      %v329 = vld [vmem:[%s1 + $0x11c] sm:$0xf]
      %v330 = vld [vmem:[%s1 + $0x120] sm:$0xf]
      %v331 = vld [vmem:[%s1 + $0x124] sm:$0xf]
      %v332 = vld [vmem:[%s1 + $0x128] sm:$0xf]
      %v333 = vld [vmem:[%s1 + $0x12c] sm:$0xf]
      %v334 = vld [vmem:[%s1 + $0x130] sm:$0xf]
      %v335 = vld [vmem:[%s1 + $0x134] sm:$0xf]
      %v336 = vld [vmem:[%s1 + $0x138] sm:$0xf]
      %v337 = vld [vmem:[%s1 + $0x13c] sm:$0xf]
      %v338 = vld [vmem:[%s1 + $0x140] sm:$0xf]
      %v339 = vld [vmem:[%s1 + $0x144] sm:$0xf]
      %v340 = vld [vmem:[%s1 + $0x148] sm:$0xf]
      %v341 = vld [vmem:[%s1 + $0x14c] sm:$0xf]
      %v342 = vld [vmem:[%s1 + $0x150] sm:$0xf]
      %v343 = vld [vmem:[%s1 + $0x154] sm:$0xf]
      %v344 = vld [vmem:[%s1 + $0x158] sm:$0xf]
      %v345 = vld [vmem:[%s1 + $0x15c] sm:$0xf]
      %v346 = vld [vmem:[%s1 + $0x160] sm:$0xf]
      %v347 = vld [vmem:[%s1 + $0x164] sm:$0xf]
      %v348 = vld [vmem:[%s1 + $0x168] sm:$0xf]
      %v349 = vld [vmem:[%s1 + $0x16c] sm:$0xf]
      %v350 = vld [vmem:[%s1 + $0x170] sm:$0xf]
      %v351 = vld [vmem:[%s1 + $0x174] sm:$0xf]
      %v352 = vld [vmem:[%s1 + $0x178] sm:$0xf]
      %v353 = vld [vmem:[%s1 + $0x17c] sm:$0xf]
      %v354 = vld [vmem:[%s1 + $0x180] sm:$0xf]
      %v355 = vld [vmem:[%s1 + $0x184] sm:$0xf]
      %v356 = vld [vmem:[%s1 + $0x188] sm:$0xf]
      %v357 = vld [vmem:[%s1 + $0x18c] sm:$0xf]
      %v358 = vld [vmem:[%s1 + $0x190] sm:$0xf]
      %v359 = vld [vmem:[%s1 + $0x194] sm:$0xf]
      %v360 = vld [vmem:[%s1 + $0x198] sm:$0xf]
      %v361 = vld [vmem:[%s1 + $0x19c] sm:$0xf]
      %v362 = vld [vmem:[%s1 + $0x1a0] sm:$0xf]
      %v363 = vld [vmem:[%s1 + $0x1a4] sm:$0xf]
      %v364 = vld [vmem:[%s1 + $0x1a8] sm:$0xf]
      %v365 = vld [vmem:[%s1 + $0x1ac] sm:$0xf]
      %v366 = vld [vmem:[%s1 + $0x1b0] sm:$0xf]
      %v367 = vld [vmem:[%s1 + $0x1b4] sm:$0xf]
      %v368 = vld [vmem:[%s1 + $0x1b8] sm:$0xf]
      %v369 = vld [vmem:[%s1 + $0x1bc] sm:$0xf]
      %v370 = vld [vmem:[%s1 + $0x1c0] sm:$0xf]
      %v371 = vld [vmem:[%s1 + $0x1c4] sm:$0xf]
      %v372 = vld [vmem:[%s1 + $0x1c8] sm:$0xf]
      %v373 = vld [vmem:[%s1 + $0x1cc] sm:$0xf]
      %v374 = vld [vmem:[%s1 + $0x1d0] sm:$0xf]
      %v375 = vld [vmem:[%s1 + $0x1d4] sm:$0xf]
      %v376 = vld [vmem:[%s1 + $0x1d8] sm:$0xf]
      %v377 = vld [vmem:[%s1 + $0x1dc] sm:$0xf]
      %v378 = vld [vmem:[%s1 + $0x1e0] sm:$0xf]
      %v379 = vld [vmem:[%s1 + $0x1e4] sm:$0xf]
      %v380 = vld [vmem:[%s1 + $0x1e8] sm:$0xf]
      %v381 = vld [vmem:[%s1 + $0x1ec] sm:$0xf]
      %v382 = vld [vmem:[%s1 + $0x1f0] sm:$0xf]
      %v383 = vld [vmem:[%s1 + $0x1f4] sm:$0xf]
      %v384 = vld [vmem:[%s1 + $0x1f8] sm:$0xf]
      %v385 = vld [vmem:[%s1 + $0x1fc] sm:$0xf]
      %v386 = vld [vmem:[%s1 + $0x200] sm:$0xf]
      %v387 = vld [vmem:[%s1 + $0x204] sm:$0xf]
      %v388 = vld [vmem:[%s1 + $0x208] sm:$0xf]
      %v389 = vld [vmem:[%s1 + $0x20c] sm:$0xf]
      %v390 = vld [vmem:[%s1 + $0x210] sm:$0xf]
      %v391 = vld [vmem:[%s1 + $0x214] sm:$0xf]
      %v392 = vld [vmem:[%s1 + $0x218] sm:$0xf]
      %v393 = vld [vmem:[%s1 + $0x21c] sm:$0xf]
      %v394 = vld [vmem:[%s1 + $0x220] sm:$0xf]
      %v395 = vld [vmem:[%s1 + $0x224] sm:$0xf]
      %v396 = vld [vmem:[%s1 + $0x228] sm:$0xf]
      %v397 = vld [vmem:[%s1 + $0x22c] sm:$0xf]
      %v398 = vld [vmem:[%s1 + $0x230] sm:$0xf]
      %v399 = vld [vmem:[%s1 + $0x234] sm:$0xf]
      %v400 = vld [vmem:[%s1 + $0x238] sm:$0xf]
      %v401 = vld [vmem:[%s1 + $0x23c] sm:$0xf]
      %v402 = vld [vmem:[%s2] sm:$0x1]
      %v404 = vlaneseq
      %v405 = vshrl.u32 %v404, 7
      %v406 = vsub.s32 0, %v405
      %v407 = vrot.slane %v402, %v406
      %v489 = vunpack.c.l.b16 %v178
      %v490 = vunpack.c.h.b16 %v178
      %v491 = vunpack.c.l.b16 %v179
      %v492 = vunpack.c.h.b16 %v179
      %v493 = vunpack.c.l.b16 %v180
      %v494 = vunpack.c.h.b16 %v180
      %v495 = vunpack.c.l.b16 %v181
      %v496 = vunpack.c.h.b16 %v181
      %v497 = vunpack.c.l.b16 %v182
      %v498 = vunpack.c.l.b16 %v183
      %v499 = vunpack.c.h.b16 %v183
      %v500 = vunpack.c.l.b16 %v184
      %v501 = vunpack.c.h.b16 %v184
      %v502 = vunpack.c.l.b16 %v185
      %v503 = vunpack.c.h.b16 %v185
      %v504 = vunpack.c.l.b16 %v186
      %v505 = vunpack.c.h.b16 %v186
      %v506 = vunpack.c.l.b16 %v187
      %v507 = vunpack.c.l.b16 %v188
      %v508 = vunpack.c.h.b16 %v188
      %v509 = vunpack.c.l.b16 %v189
      %v510 = vunpack.c.h.b16 %v189
      %v511 = vunpack.c.l.b16 %v190
      %v512 = vunpack.c.h.b16 %v190
      %v513 = vunpack.c.l.b16 %v191
      %v514 = vunpack.c.h.b16 %v191
      %v515 = vunpack.c.l.b16 %v192
      %v516 = vunpack.c.l.b16 %v193
      %v517 = vunpack.c.h.b16 %v193
      %v518 = vunpack.c.l.b16 %v194
      %v519 = vunpack.c.h.b16 %v194
      %v520 = vunpack.c.l.b16 %v195
      %v521 = vunpack.c.h.b16 %v195
      %v522 = vunpack.c.l.b16 %v196
      %v523 = vunpack.c.h.b16 %v196
      %v524 = vunpack.c.l.b16 %v197
      %v525 = vunpack.c.l.b16 %v198
      %v526 = vunpack.c.h.b16 %v198
      %v527 = vunpack.c.l.b16 %v199
      %v528 = vunpack.c.h.b16 %v199
      %v529 = vunpack.c.l.b16 %v200
      %v530 = vunpack.c.h.b16 %v200
      %v531 = vunpack.c.l.b16 %v201
      %v532 = vunpack.c.h.b16 %v201
      %v533 = vunpack.c.l.b16 %v202
      %v534 = vunpack.c.l.b16 %v203
      %v535 = vunpack.c.h.b16 %v203
      %v536 = vunpack.c.l.b16 %v204
      %v537 = vunpack.c.h.b16 %v204
      %v538 = vunpack.c.l.b16 %v205
      %v539 = vunpack.c.h.b16 %v205
      %v540 = vunpack.c.l.b16 %v206
      %v541 = vunpack.c.h.b16 %v206
      %v542 = vunpack.c.l.b16 %v207
      %v543 = vunpack.c.l.b16 %v208
      %v544 = vunpack.c.h.b16 %v208
      %v545 = vunpack.c.l.b16 %v209
      %v546 = vunpack.c.h.b16 %v209
      %v547 = vunpack.c.l.b16 %v210
      %v548 = vunpack.c.h.b16 %v210
      %v549 = vunpack.c.l.b16 %v211
      %v550 = vunpack.c.h.b16 %v211
      %v551 = vunpack.c.l.b16 %v212
      %v552 = vunpack.c.l.b16 %v213
      %v553 = vunpack.c.h.b16 %v213
      %v554 = vunpack.c.l.b16 %v214
      %v555 = vunpack.c.h.b16 %v214
      %v556 = vunpack.c.l.b16 %v215
      %v557 = vunpack.c.h.b16 %v215
      %v558 = vunpack.c.l.b16 %v216
      %v559 = vunpack.c.h.b16 %v216
      %v560 = vunpack.c.l.b16 %v217
      %v561 = vunpack.c.l.b16 %v218
      %v562 = vunpack.c.h.b16 %v218
      %v563 = vunpack.c.l.b16 %v219
      %v564 = vunpack.c.h.b16 %v219
      %v565 = vunpack.c.l.b16 %v220
      %v566 = vunpack.c.h.b16 %v220
      %v567 = vunpack.c.l.b16 %v221
      %v568 = vunpack.c.h.b16 %v221
      %v569 = vunpack.c.l.b16 %v222
      %v570 = vunpack.c.l.b16 %v223
      %v571 = vunpack.c.h.b16 %v223
      %v572 = vunpack.c.l.b16 %v224
      %v573 = vunpack.c.h.b16 %v224
      %v574 = vunpack.c.l.b16 %v225
      %v575 = vunpack.c.h.b16 %v225
      %v576 = vunpack.c.l.b16 %v226
      %v577 = vunpack.c.h.b16 %v226
      %v578 = vunpack.c.l.b16 %v227
      %v579 = vunpack.c.l.b16 %v228
      %v580 = vunpack.c.h.b16 %v228
      %v581 = vunpack.c.l.b16 %v229
      %v582 = vunpack.c.h.b16 %v229
      %v583 = vunpack.c.l.b16 %v230
      %v584 = vunpack.c.h.b16 %v230
      %v585 = vunpack.c.l.b16 %v231
      %v586 = vunpack.c.h.b16 %v231
      %v587 = vunpack.c.l.b16 %v232
      %v588 = vunpack.c.l.b16 %v233
      %v589 = vunpack.c.h.b16 %v233
      %v590 = vunpack.c.l.b16 %v234
      %v591 = vunpack.c.h.b16 %v234
      %v592 = vunpack.c.l.b16 %v235
      %v593 = vunpack.c.h.b16 %v235
      %v594 = vunpack.c.l.b16 %v236
      %v595 = vunpack.c.h.b16 %v236
      %v596 = vunpack.c.l.b16 %v237
      %v597 = vunpack.c.l.b16 %v238
      %v598 = vunpack.c.h.b16 %v238
      %v599 = vunpack.c.l.b16 %v239
      %v600 = vunpack.c.h.b16 %v239
      %v601 = vunpack.c.l.b16 %v240
      %v602 = vunpack.c.h.b16 %v240
      %v603 = vunpack.c.l.b16 %v241
      %v604 = vunpack.c.h.b16 %v241
      %v605 = vunpack.c.l.b16 %v242
      %v606 = vunpack.c.l.b16 %v243
      %v607 = vunpack.c.h.b16 %v243
      %v608 = vunpack.c.l.b16 %v244
      %v609 = vunpack.c.h.b16 %v244
      %v610 = vunpack.c.l.b16 %v245
      %v611 = vunpack.c.h.b16 %v245
      %v612 = vunpack.c.l.b16 %v246
      %v613 = vunpack.c.h.b16 %v246
      %v614 = vunpack.c.l.b16 %v247
      %v615 = vunpack.c.l.b16 %v248
      %v616 = vunpack.c.h.b16 %v248
      %v617 = vunpack.c.l.b16 %v249
      %v618 = vunpack.c.h.b16 %v249
      %v619 = vunpack.c.l.b16 %v250
      %v620 = vunpack.c.h.b16 %v250
      %v621 = vunpack.c.l.b16 %v251
      %v622 = vunpack.c.h.b16 %v251
      %v623 = vunpack.c.l.b16 %v252
      %v624 = vunpack.c.l.b16 %v253
      %v625 = vunpack.c.h.b16 %v253
      %v626 = vunpack.c.l.b16 %v254
      %v627 = vunpack.c.h.b16 %v254
      %v628 = vunpack.c.l.b16 %v255
      %v629 = vunpack.c.h.b16 %v255
      %v630 = vunpack.c.l.b16 %v256
      %v631 = vunpack.c.h.b16 %v256
      %v632 = vunpack.c.l.b16 %v257
      %v633 = vpack.c.b16 %v498, %v489
      %v634 = vpack.c.b16 %v499, %v490
      %v635 = vpack.c.b16 %v500, %v491
      %v636 = vpack.c.b16 %v501, %v492
      %v637 = vpack.c.b16 %v502, %v493
      %v638 = vpack.c.b16 %v503, %v494
      %v639 = vpack.c.b16 %v504, %v495
      %v640 = vpack.c.b16 %v505, %v496
      %v641 = vpack.c.b16 %v506, %v497
      %v642 = vpack.c.b16 %v516, %v507
      %v643 = vpack.c.b16 %v517, %v508
      %v644 = vpack.c.b16 %v518, %v509
      %v645 = vpack.c.b16 %v519, %v510
      %v646 = vpack.c.b16 %v520, %v511
      %v647 = vpack.c.b16 %v521, %v512
      %v648 = vpack.c.b16 %v522, %v513
      %v649 = vpack.c.b16 %v523, %v514
      %v650 = vpack.c.b16 %v524, %v515
      %v651 = vpack.c.b16 %v534, %v525
      %v652 = vpack.c.b16 %v535, %v526
      %v653 = vpack.c.b16 %v536, %v527
      %v654 = vpack.c.b16 %v537, %v528
      %v655 = vpack.c.b16 %v538, %v529
      %v656 = vpack.c.b16 %v539, %v530
      %v657 = vpack.c.b16 %v540, %v531
      %v658 = vpack.c.b16 %v541, %v532
      %v659 = vpack.c.b16 %v542, %v533
      %v660 = vpack.c.b16 %v552, %v543
      %v661 = vpack.c.b16 %v553, %v544
      %v662 = vpack.c.b16 %v554, %v545
      %v663 = vpack.c.b16 %v555, %v546
      %v664 = vpack.c.b16 %v556, %v547
      %v665 = vpack.c.b16 %v557, %v548
      %v666 = vpack.c.b16 %v558, %v549
      %v667 = vpack.c.b16 %v559, %v550
      %v668 = vpack.c.b16 %v560, %v551
      %v669 = vpack.c.b16 %v570, %v561
      %v670 = vpack.c.b16 %v571, %v562
      %v671 = vpack.c.b16 %v572, %v563
      %v672 = vpack.c.b16 %v573, %v564
      %v673 = vpack.c.b16 %v574, %v565
      %v674 = vpack.c.b16 %v575, %v566
      %v675 = vpack.c.b16 %v576, %v567
      %v676 = vpack.c.b16 %v577, %v568
      %v677 = vpack.c.b16 %v578, %v569
      %v678 = vpack.c.b16 %v588, %v579
      %v679 = vpack.c.b16 %v589, %v580
      %v680 = vpack.c.b16 %v590, %v581
      %v681 = vpack.c.b16 %v591, %v582
      %v682 = vpack.c.b16 %v592, %v583
      %v683 = vpack.c.b16 %v593, %v584
      %v684 = vpack.c.b16 %v594, %v585
      %v685 = vpack.c.b16 %v595, %v586
      %v686 = vpack.c.b16 %v596, %v587
      %v687 = vpack.c.b16 %v606, %v597
      %v688 = vpack.c.b16 %v607, %v598
      %v689 = vpack.c.b16 %v608, %v599
      %v690 = vpack.c.b16 %v609, %v600
      %v691 = vpack.c.b16 %v610, %v601
      %v692 = vpack.c.b16 %v611, %v602
      %v693 = vpack.c.b16 %v612, %v603
      %v694 = vpack.c.b16 %v613, %v604
      %v695 = vpack.c.b16 %v614, %v605
      %v696 = vpack.c.b16 %v624, %v615
      %v697 = vpack.c.b16 %v625, %v616
      %v698 = vpack.c.b16 %v626, %v617
      %v699 = vpack.c.b16 %v627, %v618
      %v700 = vpack.c.b16 %v628, %v619
      %v701 = vpack.c.b16 %v629, %v620
      %v702 = vpack.c.b16 %v630, %v621
      %v703 = vpack.c.b16 %v631, %v622
      %v704 = vpack.c.b16 %v632, %v623
      %v921 = vunpack.c.l.b16 %v258
      %v922 = vunpack.c.l.b16 %v259
      %v923 = vunpack.c.l.b16 %v260
      %v924 = vunpack.c.l.b16 %v261
      %v925 = vunpack.c.l.b16 %v262
      %v926 = vunpack.c.l.b16 %v263
      %v927 = vunpack.c.l.b16 %v264
      %v928 = vunpack.c.l.b16 %v265
      %v929 = vunpack.c.l.b16 %v266
      %v930 = vunpack.c.l.b16 %v267
      %v931 = vunpack.c.l.b16 %v268
      %v932 = vunpack.c.l.b16 %v269
      %v933 = vunpack.c.l.b16 %v270
      %v934 = vunpack.c.l.b16 %v271
      %v935 = vunpack.c.l.b16 %v272
      %v936 = vunpack.c.l.b16 %v273
      %v937 = vunpack.c.l.b16 %v274
      %v938 = vunpack.c.l.b16 %v275
      %v939 = vunpack.c.l.b16 %v276
      %v940 = vunpack.c.l.b16 %v277
      %v941 = vunpack.c.l.b16 %v278
      %v942 = vunpack.c.l.b16 %v279
      %v943 = vunpack.c.l.b16 %v280
      %v944 = vunpack.c.l.b16 %v281
      %v945 = vunpack.c.l.b16 %v282
      %v946 = vunpack.c.l.b16 %v283
      %v947 = vunpack.c.l.b16 %v284
      %v948 = vunpack.c.l.b16 %v285
      %v949 = vunpack.c.l.b16 %v286
      %v950 = vunpack.c.l.b16 %v287
      %v951 = vunpack.c.l.b16 %v288
      %v952 = vunpack.c.l.b16 %v289
      %v953 = vunpack.c.l.b16 %v290
      %v954 = vunpack.c.l.b16 %v291
      %v955 = vunpack.c.l.b16 %v292
      %v956 = vunpack.c.l.b16 %v293
      %v957 = vunpack.c.l.b16 %v294
      %v958 = vunpack.c.l.b16 %v295
      %v959 = vunpack.c.l.b16 %v296
      %v960 = vunpack.c.l.b16 %v297
      %v961 = vunpack.c.l.b16 %v298
      %v962 = vunpack.c.l.b16 %v299
      %v963 = vunpack.c.l.b16 %v300
      %v964 = vunpack.c.l.b16 %v301
      %v965 = vunpack.c.l.b16 %v302
      %v966 = vunpack.c.l.b16 %v303
      %v967 = vunpack.c.l.b16 %v304
      %v968 = vunpack.c.l.b16 %v305
      %v969 = vunpack.c.l.b16 %v306
      %v970 = vunpack.c.l.b16 %v307
      %v971 = vunpack.c.l.b16 %v308
      %v972 = vunpack.c.l.b16 %v309
      %v973 = vunpack.c.l.b16 %v310
      %v974 = vunpack.c.l.b16 %v311
      %v975 = vunpack.c.l.b16 %v312
      %v976 = vunpack.c.l.b16 %v313
      %v977 = vunpack.c.l.b16 %v314
      %v978 = vunpack.c.l.b16 %v315
      %v979 = vunpack.c.l.b16 %v316
      %v980 = vunpack.c.l.b16 %v317
      %v981 = vunpack.c.l.b16 %v318
      %v982 = vunpack.c.l.b16 %v319
      %v983 = vunpack.c.l.b16 %v320
      %v984 = vunpack.c.l.b16 %v321
      %v985 = vunpack.c.l.b16 %v322
      %v986 = vunpack.c.l.b16 %v323
      %v987 = vunpack.c.l.b16 %v324
      %v988 = vunpack.c.l.b16 %v325
      %v989 = vunpack.c.l.b16 %v326
      %v990 = vunpack.c.l.b16 %v327
      %v991 = vunpack.c.l.b16 %v328
      %v992 = vunpack.c.l.b16 %v329
      %v993 = vunpack.c.l.b16 %v330
      %v994 = vunpack.c.l.b16 %v331
      %v995 = vunpack.c.l.b16 %v332
      %v996 = vunpack.c.l.b16 %v333
      %v997 = vunpack.c.l.b16 %v334
      %v998 = vunpack.c.l.b16 %v335
      %v999 = vunpack.c.l.b16 %v336
      %v1000 = vunpack.c.l.b16 %v337
      %v1001 = vunpack.c.l.b16 %v338
      %v1002 = vunpack.c.l.b16 %v339
      %v1003 = vunpack.c.l.b16 %v340
      %v1004 = vunpack.c.l.b16 %v341
      %v1005 = vunpack.c.l.b16 %v342
      %v1006 = vunpack.c.l.b16 %v343
      %v1007 = vunpack.c.l.b16 %v344
      %v1008 = vunpack.c.l.b16 %v345
      %v1009 = vunpack.c.l.b16 %v346
      %v1010 = vunpack.c.l.b16 %v347
      %v1011 = vunpack.c.l.b16 %v348
      %v1012 = vunpack.c.l.b16 %v349
      %v1013 = vunpack.c.l.b16 %v350
      %v1014 = vunpack.c.l.b16 %v351
      %v1015 = vunpack.c.l.b16 %v352
      %v1016 = vunpack.c.l.b16 %v353
      %v1017 = vunpack.c.l.b16 %v354
      %v1018 = vunpack.c.l.b16 %v355
      %v1019 = vunpack.c.l.b16 %v356
      %v1020 = vunpack.c.l.b16 %v357
      %v1021 = vunpack.c.l.b16 %v358
      %v1022 = vunpack.c.l.b16 %v359
      %v1023 = vunpack.c.l.b16 %v360
      %v1024 = vunpack.c.l.b16 %v361
      %v1025 = vunpack.c.l.b16 %v362
      %v1026 = vunpack.c.l.b16 %v363
      %v1027 = vunpack.c.l.b16 %v364
      %v1028 = vunpack.c.l.b16 %v365
      %v1029 = vunpack.c.l.b16 %v366
      %v1030 = vunpack.c.l.b16 %v367
      %v1031 = vunpack.c.l.b16 %v368
      %v1032 = vunpack.c.l.b16 %v369
      %v1033 = vunpack.c.l.b16 %v370
      %v1034 = vunpack.c.l.b16 %v371
      %v1035 = vunpack.c.l.b16 %v372
      %v1036 = vunpack.c.l.b16 %v373
      %v1037 = vunpack.c.l.b16 %v374
      %v1038 = vunpack.c.l.b16 %v375
      %v1039 = vunpack.c.l.b16 %v376
      %v1040 = vunpack.c.l.b16 %v377
      %v1041 = vunpack.c.l.b16 %v378
      %v1042 = vunpack.c.l.b16 %v379
      %v1043 = vunpack.c.l.b16 %v380
      %v1044 = vunpack.c.l.b16 %v381
      %v1045 = vunpack.c.l.b16 %v382
      %v1046 = vunpack.c.l.b16 %v383
      %v1047 = vunpack.c.l.b16 %v384
      %v1048 = vunpack.c.l.b16 %v385
      %v1049 = vunpack.c.l.b16 %v386
      %v1050 = vunpack.c.l.b16 %v387
      %v1051 = vunpack.c.l.b16 %v388
      %v1052 = vunpack.c.l.b16 %v389
      %v1053 = vunpack.c.l.b16 %v390
      %v1054 = vunpack.c.l.b16 %v391
      %v1055 = vunpack.c.l.b16 %v392
      %v1056 = vunpack.c.l.b16 %v393
      %v1057 = vunpack.c.l.b16 %v394
      %v1058 = vunpack.c.l.b16 %v395
      %v1059 = vunpack.c.l.b16 %v396
      %v1060 = vunpack.c.l.b16 %v397
      %v1061 = vunpack.c.l.b16 %v398
      %v1062 = vunpack.c.l.b16 %v399
      %v1063 = vunpack.c.l.b16 %v400
      %v1064 = vunpack.c.l.b16 %v401
      %v1065 = vpack.c.b16 %v922, %v921
      %v1066 = vpack.c.b16 %v924, %v923
      %v1067 = vpack.c.b16 %v926, %v925
      %v1068 = vpack.c.b16 %v928, %v927
      %v1069 = vpack.c.b16 %v930, %v929
      %v1070 = vpack.c.b16 %v932, %v931
      %v1071 = vpack.c.b16 %v934, %v933
      %v1072 = vpack.c.b16 %v936, %v935
      %v1073 = vpack.c.b16 %v938, %v937
      %v1074 = vpack.c.b16 %v940, %v939
      %v1075 = vpack.c.b16 %v942, %v941
      %v1076 = vpack.c.b16 %v944, %v943
      %v1077 = vpack.c.b16 %v946, %v945
      %v1078 = vpack.c.b16 %v948, %v947
      %v1079 = vpack.c.b16 %v950, %v949
      %v1080 = vpack.c.b16 %v952, %v951
      %v1081 = vpack.c.b16 %v954, %v953
      %v1082 = vpack.c.b16 %v956, %v955
      %v1083 = vpack.c.b16 %v958, %v957
      %v1084 = vpack.c.b16 %v960, %v959
      %v1085 = vpack.c.b16 %v962, %v961
      %v1086 = vpack.c.b16 %v964, %v963
      %v1087 = vpack.c.b16 %v966, %v965
      %v1088 = vpack.c.b16 %v968, %v967
      %v1089 = vpack.c.b16 %v970, %v969
      %v1090 = vpack.c.b16 %v972, %v971
      %v1091 = vpack.c.b16 %v974, %v973
      %v1092 = vpack.c.b16 %v976, %v975
      %v1093 = vpack.c.b16 %v978, %v977
      %v1094 = vpack.c.b16 %v980, %v979
      %v1095 = vpack.c.b16 %v982, %v981
      %v1096 = vpack.c.b16 %v984, %v983
      %v1097 = vpack.c.b16 %v986, %v985
      %v1098 = vpack.c.b16 %v988, %v987
      %v1099 = vpack.c.b16 %v990, %v989
      %v1100 = vpack.c.b16 %v992, %v991
      %v1101 = vpack.c.b16 %v994, %v993
      %v1102 = vpack.c.b16 %v996, %v995
      %v1103 = vpack.c.b16 %v998, %v997
      %v1104 = vpack.c.b16 %v1000, %v999
      %v1105 = vpack.c.b16 %v1002, %v1001
      %v1106 = vpack.c.b16 %v1004, %v1003
      %v1107 = vpack.c.b16 %v1006, %v1005
      %v1108 = vpack.c.b16 %v1008, %v1007
      %v1109 = vpack.c.b16 %v1010, %v1009
      %v1110 = vpack.c.b16 %v1012, %v1011
      %v1111 = vpack.c.b16 %v1014, %v1013
      %v1112 = vpack.c.b16 %v1016, %v1015
      %v1113 = vpack.c.b16 %v1018, %v1017
      %v1114 = vpack.c.b16 %v1020, %v1019
      %v1115 = vpack.c.b16 %v1022, %v1021
      %v1116 = vpack.c.b16 %v1024, %v1023
      %v1117 = vpack.c.b16 %v1026, %v1025
      %v1118 = vpack.c.b16 %v1028, %v1027
      %v1119 = vpack.c.b16 %v1030, %v1029
      %v1120 = vpack.c.b16 %v1032, %v1031
      %v1121 = vpack.c.b16 %v1034, %v1033
      %v1122 = vpack.c.b16 %v1036, %v1035
      %v1123 = vpack.c.b16 %v1038, %v1037
      %v1124 = vpack.c.b16 %v1040, %v1039
      %v1125 = vpack.c.b16 %v1042, %v1041
      %v1126 = vpack.c.b16 %v1044, %v1043
      %v1127 = vpack.c.b16 %v1046, %v1045
      %v1128 = vpack.c.b16 %v1048, %v1047
      %v1129 = vpack.c.b16 %v1050, %v1049
      %v1130 = vpack.c.b16 %v1052, %v1051
      %v1131 = vpack.c.b16 %v1054, %v1053
      %v1132 = vpack.c.b16 %v1056, %v1055
      %v1133 = vpack.c.b16 %v1058, %v1057
      %v1134 = vpack.c.b16 %v1060, %v1059
      %v1135 = vpack.c.b16 %v1062, %v1061
      %v1136 = vpack.c.b16 %v1064, %v1063
      %1209 = vmatprep.subr.bf16.mxu0 0
      %1210 = vmatpush1.bf16.msra.mxu0 %v1065
      %1211 = vmatprep.subr.bf16.mxu0 0
      %1212 = vmatpush1.bf16.msra.mxu0 %v1066
      %1213 = vmatprep.subr.bf16.mxu0 0
      %1214 = vmatpush1.bf16.msra.mxu0 %v1067
      %1215 = vmatprep.subr.bf16.mxu0 0
      %1216 = vmatpush1.bf16.msra.mxu0 %v1068
      %1217 = vmatprep.subr.bf16.mxu0 0
      %1218 = vmatpush1.bf16.msra.mxu0 %v1069
      %1219 = vmatprep.subr.bf16.mxu0 0
      %1220 = vmatpush1.bf16.msra.mxu0 %v1070
      %1221 = vmatprep.subr.bf16.mxu0 0
      %1222 = vmatpush1.bf16.msra.mxu0 %v1071
      %1223 = vmatprep.subr.bf16.mxu0 0
      %1224 = vmatpush1.bf16.msra.mxu0 %v1072
      %1225 = vmatprep.subr.bf16.mxu0 0
      %1226 = vmatpush1.bf16.msra.mxu0 %v1073
      %1227 = vmatprep.subr.bf16.mxu0 0
      %1228 = vmatpush1.bf16.msra.mxu0 %v1074
      %1229 = vmatprep.subr.bf16.mxu0 0
      %1230 = vmatpush1.bf16.msra.mxu0 %v1075
      %1231 = vmatprep.subr.bf16.mxu0 0
      %1232 = vmatpush1.bf16.msra.mxu0 %v1076
      %1233 = vmatprep.subr.bf16.mxu0 0
      %1234 = vmatpush1.bf16.msra.mxu0 %v1077
      %1235 = vmatprep.subr.bf16.mxu0 0
      %1236 = vmatpush1.bf16.msra.mxu0 %v1078
      %1237 = vmatprep.subr.bf16.mxu0 0
      %1238 = vmatpush1.bf16.msra.mxu0 %v1079
      %1239 = vmatprep.subr.bf16.mxu0 0
      %1240 = vmatpush1.bf16.msra.mxu0 %v1080
      %1241 = vmatprep.mubr.bf16.mxu0 %v634
      %1242 = vmatmul.mubr.bf16.gmra.mrb[0].mxu0 %v633
      %v1243 = vpop.f32.mrb[0].mxu0
      %v1244 = vadd.f32 %v407, %v1243
      %v1245 = vpop.f32.mrb[0].mxu0
      %v1246 = vpop.f32.mrb[0].mxu0
      %v1247 = vadd.f32 %v407, %v1246
      %v1248 = vpop.f32.mrb[0].mxu0
      %1249 = vmatprep.mubr.bf16.mxu0 %v643
      %1250 = vmatmul.mubr.bf16.gmra.mrb[0].mxu0 %v642
      %v1251 = vpop.f32.mrb[0].mxu0
      %v1252 = vadd.f32 %v407, %v1251
      %v1253 = vpop.f32.mrb[0].mxu0
      %v1254 = vpop.f32.mrb[0].mxu0
      %v1255 = vadd.f32 %v407, %v1254
      %v1256 = vpop.f32.mrb[0].mxu0
      %1257 = vmatprep.mubr.bf16.mxu0 %v652
      %1258 = vmatmul.mubr.bf16.gmra.mrb[0].mxu0 %v651
      %v1259 = vpop.f32.mrb[0].mxu0
      %v1260 = vadd.f32 %v407, %v1259
      %v1261 = vpop.f32.mrb[0].mxu0
      %v1262 = vpop.f32.mrb[0].mxu0
      %v1263 = vadd.f32 %v407, %v1262
      %v1264 = vpop.f32.mrb[0].mxu0
      %1265 = vmatprep.mubr.bf16.mxu0 %v661
      %1266 = vmatmul.mubr.bf16.gmra.mrb[0].mxu0 %v660
      %v1267 = vpop.f32.mrb[0].mxu0
      %v1268 = vadd.f32 %v407, %v1267
      %v1269 = vpop.f32.mrb[0].mxu0
      %v1270 = vpop.f32.mrb[0].mxu0
      %v1271 = vadd.f32 %v407, %v1270
      %v1272 = vpop.f32.mrb[0].mxu0
      %1273 = vmatprep.mubr.bf16.mxu0 %v670
      %1274 = vmatmul.mubr.bf16.gmra.mrb[0].mxu0 %v669
      %v1275 = vpop.f32.mrb[0].mxu0
      %v1276 = vadd.f32 %v407, %v1275
      %v1277 = vpop.f32.mrb[0].mxu0
      %v1278 = vpop.f32.mrb[0].mxu0
      %v1279 = vadd.f32 %v407, %v1278
      %v1280 = vpop.f32.mrb[0].mxu0
      %1281 = vmatprep.mubr.bf16.mxu0 %v679
      %1282 = vmatmul.mubr.bf16.gmra.mrb[0].mxu0 %v678
      %v1283 = vpop.f32.mrb[0].mxu0
      %v1284 = vadd.f32 %v407, %v1283
      %v1285 = vpop.f32.mrb[0].mxu0
      %v1286 = vpop.f32.mrb[0].mxu0
      %v1287 = vadd.f32 %v407, %v1286
      %v1288 = vpop.f32.mrb[0].mxu0
      %1289 = vmatprep.mubr.bf16.mxu0 %v688
      %1290 = vmatmul.mubr.bf16.gmra.mrb[0].mxu0 %v687
      %v1291 = vpop.f32.mrb[0].mxu0
      %v1292 = vadd.f32 %v407, %v1291
      %v1293 = vpop.f32.mrb[0].mxu0
      %v1294 = vpop.f32.mrb[0].mxu0
      %v1295 = vadd.f32 %v407, %v1294
      %v1296 = vpop.f32.mrb[0].mxu0
      %1297 = vmatprep.mubr.bf16.mxu0 %v697
      %1298 = vmatmul.mubr.bf16.gmra.mrb[0].mxu0 %v696
      %v1299 = vpop.f32.mrb[0].mxu0
      %v1300 = vadd.f32 %v407, %v1299
      %v1301 = vpop.f32.mrb[0].mxu0
      %v1302 = vpop.f32.mrb[0].mxu0
      %v1303 = vadd.f32 %v407, %v1302
      %v1304 = vpop.f32.mrb[0].mxu0
      %1305 = vdwg.mxu0
      %1306 = vmatprep.subr.bf16.mxu0 0
      %1307 = vmatpush1.bf16.msra.mxu0 %v1081
      %1308 = vmatprep.subr.bf16.mxu0 0
      %1309 = vmatpush1.bf16.msra.mxu0 %v1082
      %1310 = vmatprep.subr.bf16.mxu0 0
      %1311 = vmatpush1.bf16.msra.mxu0 %v1083
      %1312 = vmatprep.subr.bf16.mxu0 0
      %1313 = vmatpush1.bf16.msra.mxu0 %v1084
      %1314 = vmatprep.subr.bf16.mxu0 0
      %1315 = vmatpush1.bf16.msra.mxu0 %v1085
      %1316 = vmatprep.subr.bf16.mxu0 0
      %1317 = vmatpush1.bf16.msra.mxu0 %v1086
      %1318 = vmatprep.subr.bf16.mxu0 0
      %1319 = vmatpush1.bf16.msra.mxu0 %v1087
      %1320 = vmatprep.subr.bf16.mxu0 0
      %1321 = vmatpush1.bf16.msra.mxu0 %v1088
      %1322 = vmatprep.subr.bf16.mxu0 0
      %1323 = vmatpush1.bf16.msra.mxu0 %v1089
      %1324 = vmatprep.subr.bf16.mxu0 0
      %1325 = vmatpush1.bf16.msra.mxu0 %v1090
      %1326 = vmatprep.subr.bf16.mxu0 0
      %1327 = vmatpush1.bf16.msra.mxu0 %v1091
      %1328 = vmatprep.subr.bf16.mxu0 0
      %1329 = vmatpush1.bf16.msra.mxu0 %v1092
      %1330 = vmatprep.subr.bf16.mxu0 0
      %1331 = vmatpush1.bf16.msra.mxu0 %v1093
      %1332 = vmatprep.subr.bf16.mxu0 0
      %1333 = vmatpush1.bf16.msra.mxu0 %v1094
      %1334 = vmatprep.subr.bf16.mxu0 0
      %1335 = vmatpush1.bf16.msra.mxu0 %v1095
      %1336 = vmatprep.subr.bf16.mxu0 0
      %1337 = vmatpush1.bf16.msra.mxu0 %v1096
      %1338 = vmatprep.mubr.bf16.mxu0 %v636
      %1339 = vmatmul.mubr.bf16.gmra.mrb[0].mxu0 %v635
      %v1340 = vpop.f32.mrb[0].mxu0
      %v1341 = vadd.f32 %v1244, %v1340
      %v1342 = vpop.f32.mrb[0].mxu0
      %v1343 = vpop.f32.mrb[0].mxu0
      %v1344 = vadd.f32 %v1247, %v1343
      %v1345 = vpop.f32.mrb[0].mxu0
      %1346 = vmatprep.mubr.bf16.mxu0 %v645
      %1347 = vmatmul.mubr.bf16.gmra.mrb[0].mxu0 %v644
      %v1348 = vpop.f32.mrb[0].mxu0
      %v1349 = vadd.f32 %v1252, %v1348
      %v1350 = vpop.f32.mrb[0].mxu0
      %v1351 = vpop.f32.mrb[0].mxu0
      %v1352 = vadd.f32 %v1255, %v1351
      %v1353 = vpop.f32.mrb[0].mxu0
      %1354 = vmatprep.mubr.bf16.mxu0 %v654
      %1355 = vmatmul.mubr.bf16.gmra.mrb[0].mxu0 %v653
      %v1356 = vpop.f32.mrb[0].mxu0
      %v1357 = vadd.f32 %v1260, %v1356
      %v1358 = vpop.f32.mrb[0].mxu0
      %v1359 = vpop.f32.mrb[0].mxu0
      %v1360 = vadd.f32 %v1263, %v1359
      %v1361 = vpop.f32.mrb[0].mxu0
      %1362 = vmatprep.mubr.bf16.mxu0 %v663
      %1363 = vmatmul.mubr.bf16.gmra.mrb[0].mxu0 %v662
      %v1364 = vpop.f32.mrb[0].mxu0
      %v1365 = vadd.f32 %v1268, %v1364
      %v1366 = vpop.f32.mrb[0].mxu0
      %v1367 = vpop.f32.mrb[0].mxu0
      %v1368 = vadd.f32 %v1271, %v1367
      %v1369 = vpop.f32.mrb[0].mxu0
      %1370 = vmatprep.mubr.bf16.mxu0 %v672
      %1371 = vmatmul.mubr.bf16.gmra.mrb[0].mxu0 %v671
      %v1372 = vpop.f32.mrb[0].mxu0
      %v1373 = vadd.f32 %v1276, %v1372
      %v1374 = vpop.f32.mrb[0].mxu0
      %v1375 = vpop.f32.mrb[0].mxu0
      %v1376 = vadd.f32 %v1279, %v1375
      %v1377 = vpop.f32.mrb[0].mxu0
      %1378 = vmatprep.mubr.bf16.mxu0 %v681
      %1379 = vmatmul.mubr.bf16.gmra.mrb[0].mxu0 %v680
      %v1380 = vpop.f32.mrb[0].mxu0
      %v1381 = vadd.f32 %v1284, %v1380
      %v1382 = vpop.f32.mrb[0].mxu0
      %v1383 = vpop.f32.mrb[0].mxu0
      %v1384 = vadd.f32 %v1287, %v1383
      %v1385 = vpop.f32.mrb[0].mxu0
      %1386 = vmatprep.mubr.bf16.mxu0 %v690
      %1387 = vmatmul.mubr.bf16.gmra.mrb[0].mxu0 %v689
      %v1388 = vpop.f32.mrb[0].mxu0
      %v1389 = vadd.f32 %v1292, %v1388
      %v1390 = vpop.f32.mrb[0].mxu0
      %v1391 = vpop.f32.mrb[0].mxu0
      %v1392 = vadd.f32 %v1295, %v1391
      %v1393 = vpop.f32.mrb[0].mxu0
      %1394 = vmatprep.mubr.bf16.mxu0 %v699
      %1395 = vmatmul.mubr.bf16.gmra.mrb[0].mxu0 %v698
      %v1396 = vpop.f32.mrb[0].mxu0
      %v1397 = vadd.f32 %v1300, %v1396
      %v1398 = vpop.f32.mrb[0].mxu0
      %v1399 = vpop.f32.mrb[0].mxu0
      %v1400 = vadd.f32 %v1303, %v1399
      %v1401 = vpop.f32.mrb[0].mxu0
      %1402 = vdwg.mxu0
      %1403 = vmatprep.subr.bf16.mxu0 0
      %1404 = vmatpush1.bf16.msra.mxu0 %v1097
      %1405 = vmatprep.subr.bf16.mxu0 0
      %1406 = vmatpush1.bf16.msra.mxu0 %v1098
      %1407 = vmatprep.subr.bf16.mxu0 0
      %1408 = vmatpush1.bf16.msra.mxu0 %v1099
      %1409 = vmatprep.subr.bf16.mxu0 0
      %1410 = vmatpush1.bf16.msra.mxu0 %v1100
      %1411 = vmatprep.subr.bf16.mxu0 0
      %1412 = vmatpush1.bf16.msra.mxu0 %v1101
      %1413 = vmatprep.subr.bf16.mxu0 0
      %1414 = vmatpush1.bf16.msra.mxu0 %v1102
      %1415 = vmatprep.subr.bf16.mxu0 0
      %1416 = vmatpush1.bf16.msra.mxu0 %v1103
      %1417 = vmatprep.subr.bf16.mxu0 0
      %1418 = vmatpush1.bf16.msra.mxu0 %v1104
      %1419 = vmatprep.subr.bf16.mxu0 0
      %1420 = vmatpush1.bf16.msra.mxu0 %v1105
      %1421 = vmatprep.subr.bf16.mxu0 0
      %1422 = vmatpush1.bf16.msra.mxu0 %v1106
      %1423 = vmatprep.subr.bf16.mxu0 0
      %1424 = vmatpush1.bf16.msra.mxu0 %v1107
      %1425 = vmatprep.subr.bf16.mxu0 0
      %1426 = vmatpush1.bf16.msra.mxu0 %v1108
      %1427 = vmatprep.subr.bf16.mxu0 0
      %1428 = vmatpush1.bf16.msra.mxu0 %v1109
      %1429 = vmatprep.subr.bf16.mxu0 0
      %1430 = vmatpush1.bf16.msra.mxu0 %v1110
      %1431 = vmatprep.subr.bf16.mxu0 0
      %1432 = vmatpush1.bf16.msra.mxu0 %v1111
      %1433 = vmatprep.subr.bf16.mxu0 0
      %1434 = vmatpush1.bf16.msra.mxu0 %v1112
      %1435 = vmatprep.mubr.bf16.mxu0 %v638
      %1436 = vmatmul.mubr.bf16.gmra.mrb[0].mxu0 %v637
      %v1437 = vpop.f32.mrb[0].mxu0
      %v1438 = vadd.f32 %v1341, %v1437
      %v1439 = vpop.f32.mrb[0].mxu0
      %v1440 = vpop.f32.mrb[0].mxu0
      %v1441 = vadd.f32 %v1344, %v1440
      %v1442 = vpop.f32.mrb[0].mxu0
      %1443 = vmatprep.mubr.bf16.mxu0 %v647
      %1444 = vmatmul.mubr.bf16.gmra.mrb[0].mxu0 %v646
      %v1445 = vpop.f32.mrb[0].mxu0
      %v1446 = vadd.f32 %v1349, %v1445
      %v1447 = vpop.f32.mrb[0].mxu0
      %v1448 = vpop.f32.mrb[0].mxu0
      %v1449 = vadd.f32 %v1352, %v1448
      %v1450 = vpop.f32.mrb[0].mxu0
      %1451 = vmatprep.mubr.bf16.mxu0 %v656
      %1452 = vmatmul.mubr.bf16.gmra.mrb[0].mxu0 %v655
      %v1453 = vpop.f32.mrb[0].mxu0
      %v1454 = vadd.f32 %v1357, %v1453
      %v1455 = vpop.f32.mrb[0].mxu0
      %v1456 = vpop.f32.mrb[0].mxu0
      %v1457 = vadd.f32 %v1360, %v1456
      %v1458 = vpop.f32.mrb[0].mxu0
      %1459 = vmatprep.mubr.bf16.mxu0 %v665
      %1460 = vmatmul.mubr.bf16.gmra.mrb[0].mxu0 %v664
      %v1461 = vpop.f32.mrb[0].mxu0
      %v1462 = vadd.f32 %v1365, %v1461
      %v1463 = vpop.f32.mrb[0].mxu0
      %v1464 = vpop.f32.mrb[0].mxu0
      %v1465 = vadd.f32 %v1368, %v1464
      %v1466 = vpop.f32.mrb[0].mxu0
      %1467 = vmatprep.mubr.bf16.mxu0 %v674
      %1468 = vmatmul.mubr.bf16.gmra.mrb[0].mxu0 %v673
      %v1469 = vpop.f32.mrb[0].mxu0
      %v1470 = vadd.f32 %v1373, %v1469
      %v1471 = vpop.f32.mrb[0].mxu0
      %v1472 = vpop.f32.mrb[0].mxu0
      %v1473 = vadd.f32 %v1376, %v1472
      %v1474 = vpop.f32.mrb[0].mxu0
      %1475 = vmatprep.mubr.bf16.mxu0 %v683
      %1476 = vmatmul.mubr.bf16.gmra.mrb[0].mxu0 %v682
      %v1477 = vpop.f32.mrb[0].mxu0
      %v1478 = vadd.f32 %v1381, %v1477
      %v1479 = vpop.f32.mrb[0].mxu0
      %v1480 = vpop.f32.mrb[0].mxu0
      %v1481 = vadd.f32 %v1384, %v1480
      %v1482 = vpop.f32.mrb[0].mxu0
      %1483 = vmatprep.mubr.bf16.mxu0 %v692
      %1484 = vmatmul.mubr.bf16.gmra.mrb[0].mxu0 %v691
      %v1485 = vpop.f32.mrb[0].mxu0
      %v1486 = vadd.f32 %v1389, %v1485
      %v1487 = vpop.f32.mrb[0].mxu0
      %v1488 = vpop.f32.mrb[0].mxu0
      %v1489 = vadd.f32 %v1392, %v1488
      %v1490 = vpop.f32.mrb[0].mxu0
      %1491 = vmatprep.mubr.bf16.mxu0 %v701
      %1492 = vmatmul.mubr.bf16.gmra.mrb[0].mxu0 %v700
      %v1493 = vpop.f32.mrb[0].mxu0
      %v1494 = vadd.f32 %v1397, %v1493
      %v1495 = vpop.f32.mrb[0].mxu0
      %v1496 = vpop.f32.mrb[0].mxu0
      %v1497 = vadd.f32 %v1400, %v1496
      %v1498 = vpop.f32.mrb[0].mxu0
      %1499 = vdwg.mxu0
      %1500 = vmatprep.subr.bf16.mxu0 0
      %1501 = vmatpush1.bf16.msra.mxu0 %v1113
      %1502 = vmatprep.subr.bf16.mxu0 0
      %1503 = vmatpush1.bf16.msra.mxu0 %v1114
      %1504 = vmatprep.subr.bf16.mxu0 0
      %1505 = vmatpush1.bf16.msra.mxu0 %v1115
      %1506 = vmatprep.subr.bf16.mxu0 0
      %1507 = vmatpush1.bf16.msra.mxu0 %v1116
      %1508 = vmatprep.subr.bf16.mxu0 0
      %1509 = vmatpush1.bf16.msra.mxu0 %v1117
      %1510 = vmatprep.subr.bf16.mxu0 0
      %1511 = vmatpush1.bf16.msra.mxu0 %v1118
      %1512 = vmatprep.subr.bf16.mxu0 0
      %1513 = vmatpush1.bf16.msra.mxu0 %v1119
      %1514 = vmatprep.subr.bf16.mxu0 0
      %1515 = vmatpush1.bf16.msra.mxu0 %v1120
      %1516 = vmatprep.subr.bf16.mxu0 0
      %1517 = vmatpush1.bf16.msra.mxu0 %v1121
      %1518 = vmatprep.subr.bf16.mxu0 0
      %1519 = vmatpush1.bf16.msra.mxu0 %v1122
      %1520 = vmatprep.subr.bf16.mxu0 0
      %1521 = vmatpush1.bf16.msra.mxu0 %v1123
      %1522 = vmatprep.subr.bf16.mxu0 0
      %1523 = vmatpush1.bf16.msra.mxu0 %v1124
      %1524 = vmatprep.subr.bf16.mxu0 0
      %1525 = vmatpush1.bf16.msra.mxu0 %v1125
      %1526 = vmatprep.subr.bf16.mxu0 0
      %1527 = vmatpush1.bf16.msra.mxu0 %v1126
      %1528 = vmatprep.subr.bf16.mxu0 0
      %1529 = vmatpush1.bf16.msra.mxu0 %v1127
      %1530 = vmatprep.subr.bf16.mxu0 0
      %1531 = vmatpush1.bf16.msra.mxu0 %v1128
      %1532 = vmatprep.mubr.bf16.mxu0 %v640
      %1533 = vmatmul.mubr.bf16.gmra.mrb[0].mxu0 %v639
      %v1534 = vpop.f32.mrb[0].mxu0
      %v1535 = vadd.f32 %v1438, %v1534
      %v1536 = vpop.f32.mrb[0].mxu0
      %v1537 = vpop.f32.mrb[0].mxu0
      %v1538 = vadd.f32 %v1441, %v1537
      %v1539 = vpop.f32.mrb[0].mxu0
      %1540 = vmatprep.mubr.bf16.mxu0 %v649
      %1541 = vmatmul.mubr.bf16.gmra.mrb[0].mxu0 %v648
      %v1542 = vpop.f32.mrb[0].mxu0
      %v1543 = vadd.f32 %v1446, %v1542
      %v1544 = vpop.f32.mrb[0].mxu0
      %v1545 = vpop.f32.mrb[0].mxu0
      %v1546 = vadd.f32 %v1449, %v1545
      %v1547 = vpop.f32.mrb[0].mxu0
      %1548 = vmatprep.mubr.bf16.mxu0 %v658
      %1549 = vmatmul.mubr.bf16.gmra.mrb[0].mxu0 %v657
      %v1550 = vpop.f32.mrb[0].mxu0
      %v1551 = vadd.f32 %v1454, %v1550
      %v1552 = vpop.f32.mrb[0].mxu0
      %v1553 = vpop.f32.mrb[0].mxu0
      %v1554 = vadd.f32 %v1457, %v1553
      %v1555 = vpop.f32.mrb[0].mxu0
      %1556 = vmatprep.mubr.bf16.mxu0 %v667
      %1557 = vmatmul.mubr.bf16.gmra.mrb[0].mxu0 %v666
      %v1558 = vpop.f32.mrb[0].mxu0
      %v1559 = vadd.f32 %v1462, %v1558
      %v1560 = vpop.f32.mrb[0].mxu0
      %v1561 = vpop.f32.mrb[0].mxu0
      %v1562 = vadd.f32 %v1465, %v1561
      %v1563 = vpop.f32.mrb[0].mxu0
      %1564 = vmatprep.mubr.bf16.mxu0 %v676
      %1565 = vmatmul.mubr.bf16.gmra.mrb[0].mxu0 %v675
      %v1566 = vpop.f32.mrb[0].mxu0
      %v1567 = vadd.f32 %v1470, %v1566
      %v1568 = vpop.f32.mrb[0].mxu0
      %v1569 = vpop.f32.mrb[0].mxu0
      %v1570 = vadd.f32 %v1473, %v1569
      %v1571 = vpop.f32.mrb[0].mxu0
      %1572 = vmatprep.mubr.bf16.mxu0 %v685
      %1573 = vmatmul.mubr.bf16.gmra.mrb[0].mxu0 %v684
      %v1574 = vpop.f32.mrb[0].mxu0
      %v1575 = vadd.f32 %v1478, %v1574
      %v1576 = vpop.f32.mrb[0].mxu0
      %v1577 = vpop.f32.mrb[0].mxu0
      %v1578 = vadd.f32 %v1481, %v1577
      %v1579 = vpop.f32.mrb[0].mxu0
      %1580 = vmatprep.mubr.bf16.mxu0 %v694
      %1581 = vmatmul.mubr.bf16.gmra.mrb[0].mxu0 %v693
      %v1582 = vpop.f32.mrb[0].mxu0
      %v1583 = vadd.f32 %v1486, %v1582
      %v1584 = vpop.f32.mrb[0].mxu0
      %v1585 = vpop.f32.mrb[0].mxu0
      %v1586 = vadd.f32 %v1489, %v1585
      %v1587 = vpop.f32.mrb[0].mxu0
      %1588 = vmatprep.mubr.bf16.mxu0 %v703
      %1589 = vmatmul.mubr.bf16.gmra.mrb[0].mxu0 %v702
      %v1590 = vpop.f32.mrb[0].mxu0
      %v1591 = vadd.f32 %v1494, %v1590
      %v1592 = vpop.f32.mrb[0].mxu0
      %v1593 = vpop.f32.mrb[0].mxu0
      %v1594 = vadd.f32 %v1497, %v1593
      %v1595 = vpop.f32.mrb[0].mxu0
      %1596 = vdwg.mxu0
      %1597 = vmatprep.subr.bf16.mxu0 0
      %1598 = vmatpush1.bf16.msra.mxu0 %v1129
      %1599 = vmatprep.subr.bf16.mxu0 0
      %1600 = vmatpush1.bf16.msra.mxu0 %v1130
      %1601 = vmatprep.subr.bf16.mxu0 0
      %1602 = vmatpush1.bf16.msra.mxu0 %v1131
      %1603 = vmatprep.subr.bf16.mxu0 0
      %1604 = vmatpush1.bf16.msra.mxu0 %v1132
      %1605 = vmatprep.subr.bf16.mxu0 0
      %1606 = vmatpush1.bf16.msra.mxu0 %v1133
      %1607 = vmatprep.subr.bf16.mxu0 0
      %1608 = vmatpush1.bf16.msra.mxu0 %v1134
      %1609 = vmatprep.subr.bf16.mxu0 0
      %1610 = vmatpush1.bf16.msra.mxu0 %v1135
      %1611 = vmatprep.subr.bf16.mxu0 0
      %1612 = vmatpush1.bf16.msra.mxu0 %v1136
      %1613 = vmatprep.subr.bf16.mxu0 0
      %1614 = vmatpush1.bf16.msra.mxu0 0
      %1615 = vmatprep.subr.bf16.mxu0 0
      %1616 = vmatpush1.bf16.msra.mxu0 0
      %1617 = vmatprep.subr.bf16.mxu0 0
      %1618 = vmatpush1.bf16.msra.mxu0 0
      %1619 = vmatprep.subr.bf16.mxu0 0
      %1620 = vmatpush1.bf16.msra.mxu0 0
      %1621 = vmatprep.subr.bf16.mxu0 0
      %1622 = vmatpush1.bf16.msra.mxu0 0
      %1623 = vmatprep.subr.bf16.mxu0 0
      %1624 = vmatpush1.bf16.msra.mxu0 0
      %1625 = vmatprep.subr.bf16.mxu0 0
      %1626 = vmatpush1.bf16.msra.mxu0 0
      %1627 = vmatprep.subr.bf16.mxu0 0
      %1628 = vmatpush1.bf16.msra.mxu0 0
      %1629 = vmatprep.mubr.bf16.mxu0 0
      %1630 = vmatmul.mubr.bf16.gmra.mrb[0].mxu0 %v641
      %v1631 = vpop.f32.mrb[0].mxu0
      %v1632 = vadd.f32 %v1535, %v1631
      %v1633 = vpop.f32.mrb[0].mxu0
      %v1634 = vpop.f32.mrb[0].mxu0
      %v1635 = vadd.f32 %v1538, %v1634
      %v1636 = vpop.f32.mrb[0].mxu0
      %1637 = vmatprep.mubr.bf16.mxu0 0
      %1638 = vmatmul.mubr.bf16.gmra.mrb[0].mxu0 %v650
      %v1639 = vpop.f32.mrb[0].mxu0
      %v1640 = vadd.f32 %v1543, %v1639
      %v1641 = vpop.f32.mrb[0].mxu0
      %v1642 = vpop.f32.mrb[0].mxu0
      %v1643 = vadd.f32 %v1546, %v1642
      %v1644 = vpop.f32.mrb[0].mxu0
      %1645 = vmatprep.mubr.bf16.mxu0 0
      %1646 = vmatmul.mubr.bf16.gmra.mrb[0].mxu0 %v659
      %v1647 = vpop.f32.mrb[0].mxu0
      %v1648 = vadd.f32 %v1551, %v1647
      %v1649 = vpop.f32.mrb[0].mxu0
      %v1650 = vpop.f32.mrb[0].mxu0
      %v1651 = vadd.f32 %v1554, %v1650
      %v1652 = vpop.f32.mrb[0].mxu0
      %1653 = vmatprep.mubr.bf16.mxu0 0
      %1654 = vmatmul.mubr.bf16.gmra.mrb[0].mxu0 %v668
      %v1655 = vpop.f32.mrb[0].mxu0
      %v1656 = vadd.f32 %v1559, %v1655
      %v1657 = vpop.f32.mrb[0].mxu0
      %v1658 = vpop.f32.mrb[0].mxu0
      %v1659 = vadd.f32 %v1562, %v1658
      %v1660 = vpop.f32.mrb[0].mxu0
      %1661 = vmatprep.mubr.bf16.mxu0 0
      %1662 = vmatmul.mubr.bf16.gmra.mrb[0].mxu0 %v677
      %v1663 = vpop.f32.mrb[0].mxu0
      %v1664 = vadd.f32 %v1567, %v1663
      %v1665 = vpop.f32.mrb[0].mxu0
      %v1666 = vpop.f32.mrb[0].mxu0
      %v1667 = vadd.f32 %v1570, %v1666
      %v1668 = vpop.f32.mrb[0].mxu0
      %1669 = vmatprep.mubr.bf16.mxu0 0
      %1670 = vmatmul.mubr.bf16.gmra.mrb[0].mxu0 %v686
      %v1671 = vpop.f32.mrb[0].mxu0
      %v1672 = vadd.f32 %v1575, %v1671
      %v1673 = vpop.f32.mrb[0].mxu0
      %v1674 = vpop.f32.mrb[0].mxu0
      %v1675 = vadd.f32 %v1578, %v1674
      %v1676 = vpop.f32.mrb[0].mxu0
      %1677 = vmatprep.mubr.bf16.mxu0 0
      %1678 = vmatmul.mubr.bf16.gmra.mrb[0].mxu0 %v695
      %v1679 = vpop.f32.mrb[0].mxu0
      %v1680 = vadd.f32 %v1583, %v1679
      %v1681 = vpop.f32.mrb[0].mxu0
      %v1682 = vpop.f32.mrb[0].mxu0
      %v1683 = vadd.f32 %v1586, %v1682
      %v1684 = vpop.f32.mrb[0].mxu0
      %1685 = vmatprep.mubr.bf16.mxu0 0
      %1686 = vmatmul.mubr.bf16.gmra.mrb[0].mxu0 %v704
      %v1687 = vpop.f32.mrb[0].mxu0
      %v1688 = vadd.f32 %v1591, %v1687
      %v1689 = vpop.f32.mrb[0].mxu0
      %v1690 = vpop.f32.mrb[0].mxu0
      %v1691 = vadd.f32 %v1594, %v1690
      %v1692 = vpop.f32.mrb[0].mxu0
      %1693 = vdwg.mxu0
      %v1694 = vmax.f32 %v1632, 0.0
      %v1695 = vmax.f32 %v1635, 0.0
      %v1696 = vmax.f32 %v1640, 0.0
      %v1697 = vmax.f32 %v1643, 0.0
      %v1698 = vmax.f32 %v1648, 0.0
      %v1699 = vmax.f32 %v1651, 0.0
      %v1700 = vmax.f32 %v1656, 0.0
      %v1701 = vmax.f32 %v1659, 0.0
      %v1702 = vmax.f32 %v1664, 0.0
      %v1703 = vmax.f32 %v1667, 0.0
      %v1704 = vmax.f32 %v1672, 0.0
      %v1705 = vmax.f32 %v1675, 0.0
      %v1706 = vmax.f32 %v1680, 0.0
      %v1707 = vmax.f32 %v1683, 0.0
      %v1708 = vmax.f32 %v1688, 0.0
      %v1709 = vmax.f32 %v1691, 0.0
      %v1710 = vpack.c.bf16 %v1695, %v1694
      %v1711 = vpack.c.bf16 %v1697, %v1696
      %v1712 = vpack.c.bf16 %v1699, %v1698
      %v1713 = vpack.c.bf16 %v1701, %v1700
      %v1714 = vpack.c.bf16 %v1703, %v1702
      %v1715 = vpack.c.bf16 %v1705, %v1704
      %v1716 = vpack.c.bf16 %v1707, %v1706
      %v1717 = vpack.c.bf16 %v1709, %v1708
      %v1726 = vunpack.c.l.b16 %v1710
      %v1727 = vunpack.c.h.b16 %v1710
      %v1728 = vunpack.c.l.b16 %v1711
      %v1729 = vunpack.c.h.b16 %v1711
      %v1730 = vunpack.c.l.b16 %v1712
      %v1731 = vunpack.c.h.b16 %v1712
      %v1732 = vunpack.c.l.b16 %v1713
      %v1733 = vunpack.c.h.b16 %v1713
      %v1734 = vunpack.c.l.b16 %v1714
      %v1735 = vunpack.c.h.b16 %v1714
      %v1736 = vunpack.c.l.b16 %v1715
      %v1737 = vunpack.c.h.b16 %v1715
      %v1738 = vunpack.c.l.b16 %v1716
      %v1739 = vunpack.c.h.b16 %v1716
      %v1740 = vunpack.c.l.b16 %v1717
      %v1741 = vunpack.c.h.b16 %v1717
      %v1742 = vpack.c.b16 %v1726, %v1726
      %v1743 = vpack.c.b16 %v1727, %v1727
      %v1744 = vpack.c.b16 %v1728, %v1728
      %v1745 = vpack.c.b16 %v1729, %v1729
      %v1746 = vpack.c.b16 %v1730, %v1730
      %v1747 = vpack.c.b16 %v1731, %v1731
      %v1748 = vpack.c.b16 %v1732, %v1732
      %v1749 = vpack.c.b16 %v1733, %v1733
      %v1750 = vpack.c.b16 %v1734, %v1734
      %v1751 = vpack.c.b16 %v1735, %v1735
      %v1752 = vpack.c.b16 %v1736, %v1736
      %v1753 = vpack.c.b16 %v1737, %v1737
      %v1754 = vpack.c.b16 %v1738, %v1738
      %v1755 = vpack.c.b16 %v1739, %v1739
      %v1756 = vpack.c.b16 %v1740, %v1740
      %v1757 = vpack.c.b16 %v1741, %v1741
      %1774 = vst [vmem:[%s175] sm:$0xf] %v1742
      %1775 = vst [vmem:[%s175 + $0x4] sm:$0xf] %v1743
      %1776 = vst [vmem:[%s175 + $0x8] sm:$0xf] %v1744
      %1777 = vst [vmem:[%s175 + $0xc] sm:$0xf] %v1745
      %1778 = vst [vmem:[%s175 + $0x10] sm:$0xf] %v1746
      %1779 = vst [vmem:[%s175 + $0x14] sm:$0xf] %v1747
      %1780 = vst [vmem:[%s175 + $0x18] sm:$0xf] %v1748
      %1781 = vst [vmem:[%s175 + $0x1c] sm:$0xf] %v1749
      %1782 = vst [vmem:[%s175 + $0x20] sm:$0xf] %v1750
      %1783 = vst [vmem:[%s175 + $0x24] sm:$0xf] %v1751
      %1784 = vst [vmem:[%s175 + $0x28] sm:$0xf] %v1752
      %1785 = vst [vmem:[%s175 + $0x2c] sm:$0xf] %v1753
      %1786 = vst [vmem:[%s175 + $0x30] sm:$0xf] %v1754
      %1787 = vst [vmem:[%s175 + $0x34] sm:$0xf] %v1755
      %1788 = vst [vmem:[%s175 + $0x38] sm:$0xf] %v1756
      %1789 = vst [vmem:[%s175 + $0x3c] sm:$0xf] %v1757
      %s1790 = smul.u32 16, %s14
      %p1791 = scmp.lt.s32.totalorder %s1790, 31
      %s1792 = scalar_select %p1791, %s1790, 31
      %s1793 = smul.addr %s1792, 4
      %s1794 = scalar_lea.vmem %s3, %s1793
      // Predicated region
      $region33: #{ggcnn_forward.8} parent=31 // pred_check
        %p1795 = pneg %p100
      $region34: #{ggcnn_forward.8} parent=31 // pred_check_branch
        %1797 = sbr.rel (%p1795) target = $region36
      $region35: #{ggcnn_forward.8} parent=31 // pred_region
        %s1798 = smul.u32 16, %s14
      $region36: #{ggcnn_forward.8} parent=31 // pred_fallthru
        _
    $region32: #{ggcnn_forward.8} parent=5 // pred_fallthru
      _
    %p1799 = scmp.le.s32.totalorder 2, %s9
    // Predicated region
    $region37: #{ggcnn_forward.8} parent=5 // pred_check
      %p1800 = pneg %p1799
    $region38: #{ggcnn_forward.8} parent=5 // pred_check_branch
      %1802 = sbr.rel (%p1800) target = $region40
    $region39: #{ggcnn_forward.8} parent=5 // pred_region
      %s1803 = ssub.s32 %s9, 2
      // Predicated region
      $region41: #{ggcnn_forward.8} parent=39 // pred_check
        %p1804 = pneg %p106
      $region42: #{ggcnn_forward.8} parent=39 // pred_check_branch
        %1806 = sbr.rel (%p1804) target = $region44
      $region43: #{ggcnn_forward.8} parent=39 // pred_region
        %s1807 = smul.u32 16, %s15
        %p1808 = scmp.lt.s32.totalorder %s1807, 31
        %s1809 = scalar_select %p1808, %s1807, 31
        %s1810 = smul.addr %s1809, 4
        %s1811 = scalar_lea.vmem %s3, %s1810
      $region44: #{ggcnn_forward.8} parent=39 // pred_fallthru
        _
    $region40: #{ggcnn_forward.8} parent=5 // pred_fallthru
      _
  $region6: #{ggcnn_forward.8} parent=0 // loop_footer
    %s13 = sadd.s32 1, %s9
  $region7: #{ggcnn_forward.8} parent=0 // loop_footer_branch
    %8 = sbr.rel target = $region3
  $region8: #{ggcnn_forward.8} parent=0 // loop_exit
    _

// kernel: ggcnn_forward.9
$region0: #{ggcnn_forward.9}
  #allocation0 [shape = 'u32[]', space=smem, size = 0x4, offset = 0x4, fixed_abs, tag = 'smem constant byte address 0x4 - core index']
  #allocation1 [shape = 'u32[144,128]{1,0:T(1,128)}', space=vmem, size = 0x12000, scoped, tag = 'internal scratch']
  %s0 = inlined_call_operand.vmem [shape: bf16[64,256], index: 0, kind: input, shape index: {}]
  %s1 = inlined_call_operand.vmem [shape: bf16[256,128], index: 1, kind: input, shape index: {}]
  %s2 = inlined_call_operand.vmem [shape: f32[1,128], index: 2, kind: input, shape index: {}]
  %s3 = inlined_call_operand.vmem [shape: bf16[64,128], index: 3, kind: output, shape index: {}]
  %s4 = sld [smem:[#allocation0]]
  $region22: #{ggcnn_forward.9} parent=0
    _
  %s6 = ssub.s32 1, %s4
  %s7 = scalar_select 0, %s6, %s4
  // Predicated region
  $region2: #{ggcnn_forward.9} parent=0 // pred_check
    _
  $region3: #{ggcnn_forward.9} parent=0 // pred_check_branch
    %9 = sbr.rel (0) target = $region5
  $region4: #{ggcnn_forward.9} parent=0 // pred_region
    _
  $region5: #{ggcnn_forward.9} parent=0 // pred_fallthru
    _
  // Predicated region
  $region6: #{ggcnn_forward.9} parent=0 // pred_check
    _
  $region7: #{ggcnn_forward.9} parent=0 // pred_check_branch
    %11 = sbr.rel (0) target = $region9
  $region8: #{ggcnn_forward.9} parent=0 // pred_region
    _
  $region9: #{ggcnn_forward.9} parent=0 // pred_fallthru
    _
  // Predicated region
  $region10: #{ggcnn_forward.9} parent=0 // pred_check
    _
  $region11: #{ggcnn_forward.9} parent=0 // pred_check_branch
    %13 = sbr.rel (0) target = $region13
  $region12: #{ggcnn_forward.9} parent=0 // pred_region
    _
  $region13: #{ggcnn_forward.9} parent=0 // pred_fallthru
    _
  %v15 = vld [vmem:[%s0] sm:$0xff]
  %v16 = vld [vmem:[%s0 + $0x8] sm:$0xff]
  %v17 = vld [vmem:[%s0 + $0x10] sm:$0xff]
  %v18 = vld [vmem:[%s0 + $0x18] sm:$0xff]
  %v19 = vld [vmem:[%s0 + $0x20] sm:$0xff]
  %v20 = vld [vmem:[%s0 + $0x28] sm:$0xff]
  %v21 = vld [vmem:[%s0 + $0x30] sm:$0xff]
  %v22 = vld [vmem:[%s0 + $0x38] sm:$0xff]
  %v23 = vld [vmem:[%s1] sm:$0xf]
  %v24 = vld [vmem:[%s1 + $0x4] sm:$0xf]
  %v25 = vld [vmem:[%s1 + $0x8] sm:$0xf]
  %v26 = vld [vmem:[%s1 + $0xc] sm:$0xf]
  %v27 = vld [vmem:[%s1 + $0x10] sm:$0xf]
  %v28 = vld [vmem:[%s1 + $0x14] sm:$0xf]
  %v29 = vld [vmem:[%s1 + $0x18] sm:$0xf]
  %v30 = vld [vmem:[%s1 + $0x1c] sm:$0xf]
  %v31 = vld [vmem:[%s1 + $0x20] sm:$0xf]
  %v32 = vld [vmem:[%s1 + $0x24] sm:$0xf]
  %v33 = vld [vmem:[%s1 + $0x28] sm:$0xf]
  %v34 = vld [vmem:[%s1 + $0x2c] sm:$0xf]
  %v35 = vld [vmem:[%s1 + $0x30] sm:$0xf]
  %v36 = vld [vmem:[%s1 + $0x34] sm:$0xf]
  %v37 = vld [vmem:[%s1 + $0x38] sm:$0xf]
  %v38 = vld [vmem:[%s1 + $0x3c] sm:$0xf]
  %v39 = vld [vmem:[%s1 + $0x40] sm:$0xf]
  %v40 = vld [vmem:[%s1 + $0x44] sm:$0xf]
  %v41 = vld [vmem:[%s1 + $0x48] sm:$0xf]
  %v42 = vld [vmem:[%s1 + $0x4c] sm:$0xf]
  %v43 = vld [vmem:[%s1 + $0x50] sm:$0xf]
  %v44 = vld [vmem:[%s1 + $0x54] sm:$0xf]
  %v45 = vld [vmem:[%s1 + $0x58] sm:$0xf]
  %v46 = vld [vmem:[%s1 + $0x5c] sm:$0xf]
  %v47 = vld [vmem:[%s1 + $0x60] sm:$0xf]
  %v48 = vld [vmem:[%s1 + $0x64] sm:$0xf]
  %v49 = vld [vmem:[%s1 + $0x68] sm:$0xf]
  %v50 = vld [vmem:[%s1 + $0x6c] sm:$0xf]
  %v51 = vld [vmem:[%s1 + $0x70] sm:$0xf]
  %v52 = vld [vmem:[%s1 + $0x74] sm:$0xf]
  %v53 = vld [vmem:[%s1 + $0x78] sm:$0xf]
  %v54 = vld [vmem:[%s1 + $0x7c] sm:$0xf]
  %v55 = vld [vmem:[%s2] sm:$0x1]
  %v57 = vlaneseq
  %v58 = vshrl.u32 %v57, 7
  %v59 = vsub.s32 0, %v58
  %v60 = vrot.slane %v55, %v59
  %v70 = vunpack.c.l.b16 %v15
  %v71 = vunpack.c.h.b16 %v15
  %v72 = vunpack.c.l.b16 %v16
  %v73 = vunpack.c.h.b16 %v16
  %v74 = vunpack.c.l.b16 %v17
  %v75 = vunpack.c.h.b16 %v17
  %v76 = vunpack.c.l.b16 %v18
  %v77 = vunpack.c.h.b16 %v18
  %v78 = vunpack.c.l.b16 %v19
  %v79 = vunpack.c.h.b16 %v19
  %v80 = vunpack.c.l.b16 %v20
  %v81 = vunpack.c.h.b16 %v20
  %v82 = vunpack.c.l.b16 %v21
  %v83 = vunpack.c.h.b16 %v21
  %v84 = vunpack.c.l.b16 %v22
  %v85 = vunpack.c.h.b16 %v22
  %v86 = vpack.c.b16 %v72, %v70
  %v87 = vpack.c.b16 %v73, %v71
  %v88 = vpack.c.b16 %v76, %v74
  %v89 = vpack.c.b16 %v77, %v75
  %v90 = vpack.c.b16 %v80, %v78
  %v91 = vpack.c.b16 %v81, %v79
  %v92 = vpack.c.b16 %v84, %v82
  %v93 = vpack.c.b16 %v85, %v83
  %v134 = vunpack.c.l.b16 %v23
  %v135 = vunpack.c.l.b16 %v24
  %v136 = vunpack.c.l.b16 %v25
  %v137 = vunpack.c.l.b16 %v26
  %v138 = vunpack.c.l.b16 %v27
  %v139 = vunpack.c.l.b16 %v28
  %v140 = vunpack.c.l.b16 %v29
  %v141 = vunpack.c.l.b16 %v30
  %v142 = vunpack.c.l.b16 %v31
  %v143 = vunpack.c.l.b16 %v32
  %v144 = vunpack.c.l.b16 %v33
  %v145 = vunpack.c.l.b16 %v34
  %v146 = vunpack.c.l.b16 %v35
  %v147 = vunpack.c.l.b16 %v36
  %v148 = vunpack.c.l.b16 %v37
  %v149 = vunpack.c.l.b16 %v38
  %v150 = vunpack.c.l.b16 %v39
  %v151 = vunpack.c.l.b16 %v40
  %v152 = vunpack.c.l.b16 %v41
  %v153 = vunpack.c.l.b16 %v42
  %v154 = vunpack.c.l.b16 %v43
  %v155 = vunpack.c.l.b16 %v44
  %v156 = vunpack.c.l.b16 %v45
  %v157 = vunpack.c.l.b16 %v46
  %v158 = vunpack.c.l.b16 %v47
  %v159 = vunpack.c.l.b16 %v48
  %v160 = vunpack.c.l.b16 %v49
  %v161 = vunpack.c.l.b16 %v50
  %v162 = vunpack.c.l.b16 %v51
  %v163 = vunpack.c.l.b16 %v52
  %v164 = vunpack.c.l.b16 %v53
  %v165 = vunpack.c.l.b16 %v54
  %v166 = vpack.c.b16 %v135, %v134
  %v167 = vpack.c.b16 %v137, %v136
  %v168 = vpack.c.b16 %v139, %v138
  %v169 = vpack.c.b16 %v141, %v140
  %v170 = vpack.c.b16 %v143, %v142
  %v171 = vpack.c.b16 %v145, %v144
  %v172 = vpack.c.b16 %v147, %v146
  %v173 = vpack.c.b16 %v149, %v148
  %v174 = vpack.c.b16 %v151, %v150
  %v175 = vpack.c.b16 %v153, %v152
  %v176 = vpack.c.b16 %v155, %v154
  %v177 = vpack.c.b16 %v157, %v156
  %v178 = vpack.c.b16 %v159, %v158
  %v179 = vpack.c.b16 %v161, %v160
  %v180 = vpack.c.b16 %v163, %v162
  %v181 = vpack.c.b16 %v165, %v164
  %198 = vmatprep.subr.bf16.mxu0 0
  %199 = vmatpush1.bf16.msra.mxu0 %v166
  %200 = vmatprep.subr.bf16.mxu0 0
  %201 = vmatpush1.bf16.msra.mxu0 %v167
  %202 = vmatprep.subr.bf16.mxu0 0
  %203 = vmatpush1.bf16.msra.mxu0 %v168
  %204 = vmatprep.subr.bf16.mxu0 0
  %205 = vmatpush1.bf16.msra.mxu0 %v169
  %206 = vmatprep.subr.bf16.mxu0 0
  %207 = vmatpush1.bf16.msra.mxu0 %v170
  %208 = vmatprep.subr.bf16.mxu0 0
  %209 = vmatpush1.bf16.msra.mxu0 %v171
  %210 = vmatprep.subr.bf16.mxu0 0
  %211 = vmatpush1.bf16.msra.mxu0 %v172
  %212 = vmatprep.subr.bf16.mxu0 0
  %213 = vmatpush1.bf16.msra.mxu0 %v173
  %214 = vmatprep.subr.bf16.mxu0 0
  %215 = vmatpush1.bf16.msra.mxu0 %v174
  %216 = vmatprep.subr.bf16.mxu0 0
  %217 = vmatpush1.bf16.msra.mxu0 %v175
  %218 = vmatprep.subr.bf16.mxu0 0
  %219 = vmatpush1.bf16.msra.mxu0 %v176
  %220 = vmatprep.subr.bf16.mxu0 0
  %221 = vmatpush1.bf16.msra.mxu0 %v177
  %222 = vmatprep.subr.bf16.mxu0 0
  %223 = vmatpush1.bf16.msra.mxu0 %v178
  %224 = vmatprep.subr.bf16.mxu0 0
  %225 = vmatpush1.bf16.msra.mxu0 %v179
  %226 = vmatprep.subr.bf16.mxu0 0
  %227 = vmatpush1.bf16.msra.mxu0 %v180
  %228 = vmatprep.subr.bf16.mxu0 0
  %229 = vmatpush1.bf16.msra.mxu0 %v181
  %230 = vmatprep.mubr.bf16.mxu0 %v87
  %231 = vmatmul.mubr.bf16.gmra.mrb[0].mxu0 %v86
  %v232 = vpop.f32.mrb[0].mxu0
  %v233 = vadd.f32 %v60, %v232
  %v234 = vpop.f32.mrb[0].mxu0
  %v235 = vpop.f32.mrb[0].mxu0
  %v236 = vadd.f32 %v60, %v235
  %v237 = vpop.f32.mrb[0].mxu0
  %238 = vmatprep.mubr.bf16.mxu0 %v89
  %239 = vmatmul.mubr.bf16.gmra.mrb[0].mxu0 %v88
  %v240 = vpop.f32.mrb[0].mxu0
  %v241 = vadd.f32 %v60, %v240
  %v242 = vpop.f32.mrb[0].mxu0
  %v243 = vpop.f32.mrb[0].mxu0
  %v244 = vadd.f32 %v60, %v243
  %v245 = vpop.f32.mrb[0].mxu0
  %246 = vmatprep.mubr.bf16.mxu0 %v91
  %247 = vmatmul.mubr.bf16.gmra.mrb[0].mxu0 %v90
  %v248 = vpop.f32.mrb[0].mxu0
  %v249 = vadd.f32 %v60, %v248
  %v250 = vpop.f32.mrb[0].mxu0
  %v251 = vpop.f32.mrb[0].mxu0
  %v252 = vadd.f32 %v60, %v251
  %v253 = vpop.f32.mrb[0].mxu0
  %254 = vmatprep.mubr.bf16.mxu0 %v93
  %255 = vmatmul.mubr.bf16.gmra.mrb[0].mxu0 %v92
  %v256 = vpop.f32.mrb[0].mxu0
  %v257 = vadd.f32 %v60, %v256
  %v258 = vpop.f32.mrb[0].mxu0
  %v259 = vpop.f32.mrb[0].mxu0
  %v260 = vadd.f32 %v60, %v259
  %v261 = vpop.f32.mrb[0].mxu0
  %262 = vdwg.mxu0
  %v263 = vmax.f32 %v233, 0.0
  %v264 = vmax.f32 %v236, 0.0
  %v265 = vmax.f32 %v241, 0.0
  %v266 = vmax.f32 %v244, 0.0
  %v267 = vmax.f32 %v249, 0.0
  %v268 = vmax.f32 %v252, 0.0
  %v269 = vmax.f32 %v257, 0.0
  %v270 = vmax.f32 %v260, 0.0
  %v271 = vpack.c.bf16 %v264, %v263
  %v272 = vpack.c.bf16 %v266, %v265
  %v273 = vpack.c.bf16 %v268, %v267
  %v274 = vpack.c.bf16 %v270, %v269
  %v279 = vunpack.c.l.b16 %v271
  %v280 = vunpack.c.h.b16 %v271
  %v281 = vunpack.c.l.b16 %v272
  %v282 = vunpack.c.h.b16 %v272
  %v283 = vunpack.c.l.b16 %v273
  %v284 = vunpack.c.h.b16 %v273
  %v285 = vunpack.c.l.b16 %v274
  %v286 = vunpack.c.h.b16 %v274
  %v287 = vpack.c.b16 %v279, %v279
  %v288 = vpack.c.b16 %v280, %v280
  %v289 = vpack.c.b16 %v281, %v281
  %v290 = vpack.c.b16 %v282, %v282
  %v291 = vpack.c.b16 %v283, %v283
  %v292 = vpack.c.b16 %v284, %v284
  %v293 = vpack.c.b16 %v285, %v285
  %v294 = vpack.c.b16 %v286, %v286
  %303 = vst [vmem:[%s3] sm:$0xf] %v287
  %304 = vst [vmem:[%s3 + $0x4] sm:$0xf] %v288
  %305 = vst [vmem:[%s3 + $0x8] sm:$0xf] %v289
  %306 = vst [vmem:[%s3 + $0xc] sm:$0xf] %v290
  %307 = vst [vmem:[%s3 + $0x10] sm:$0xf] %v291
  %308 = vst [vmem:[%s3 + $0x14] sm:$0xf] %v292
  %309 = vst [vmem:[%s3 + $0x18] sm:$0xf] %v293
  %310 = vst [vmem:[%s3 + $0x1c] sm:$0xf] %v294
  // Predicated region
  $region14: #{ggcnn_forward.9} parent=0 // pred_check
    _
  $region15: #{ggcnn_forward.9} parent=0 // pred_check_branch
    %312 = sbr.rel (0) target = $region17
  $region16: #{ggcnn_forward.9} parent=0 // pred_region
    _
  $region17: #{ggcnn_forward.9} parent=0 // pred_fallthru
    _
  // Predicated region
  $region18: #{ggcnn_forward.9} parent=0 // pred_check
    _
  $region19: #{ggcnn_forward.9} parent=0 // pred_check_branch
    %314 = sbr.rel (0) target = $region21
  $region20: #{ggcnn_forward.9} parent=0 // pred_region
    _
  $region21: #{ggcnn_forward.9} parent=0 // pred_fallthru
    _

// kernel: ggcnn_forward.10
$region0: #{ggcnn_forward.10}
  #allocation0 [shape = 'u32[]', space=smem, size = 0x4, offset = 0x4, fixed_abs, tag = 'smem constant byte address 0x4 - core index']
  #allocation1 [shape = 'u32[144,128]{1,0:T(1,128)}', space=vmem, size = 0x12000, scoped, tag = 'internal scratch']
  %s0 = inlined_call_operand.vmem [shape: bf16[128,32], index: 0, kind: input, shape index: {}]
  %s1 = inlined_call_operand.vmem [shape: bf16[32,128], index: 1, kind: input, shape index: {}]
  %s2 = inlined_call_operand.vmem [shape: f32[1,128], index: 2, kind: input, shape index: {}]
  %s3 = inlined_call_operand.vmem [shape: bf16[128,128], index: 3, kind: output, shape index: {}]
  %s4 = sld [smem:[#allocation0]]
  $region45: #{ggcnn_forward.10} parent=0
    _
  %s6 = ssub.s32 1, %s4
  %s7 = scalar_select 0, %s6, %s4
  loop: start=0, step=1, limit=4
  $region2: #{ggcnn_forward.10} parent=0 // loop_pre_header
    _
  $region3: #{ggcnn_forward.10} parent=0 // loop_header
    %s9 = sphi 0, %s13
    %p10 = scmp.ge.s32.totalorder %s9, 4
    %s19 = sphi 0, %s21
    %s22 = sphi 0, %s19
    %s23 = sphi 0, %s22
    %s39 = sphi 0, %s23
    %s43 = sphi 0, %s43
    %s45 = sphi 0, %s43
    %s46 = sphi 0, %s45
    %s60 = sphi 0, %s46
    %s64 = sphi 0, %s64
    %s66 = sphi 0, %s64
    %s67 = sphi 0, %s66
    %s81 = sphi 0, %s67
    %s87 = sphi 0, %s89
    %s90 = sphi 0, %s87
    %s91 = sphi 0, %s90
    %s107 = sphi 0, %s91
  $region4: #{ggcnn_forward.10} parent=0 // loop_header_branch
    %12 = sbr.rel (%p10) target = $region8
  $region5: #{ggcnn_forward.10} parent=0 // loop_body
    %s14 = ssub.s32 %s9, 1
    %s15 = ssub.s32 %s9, 2
    %s16 = sadd.s32 %s9, 1
    %s17 = ssub.s32 %s9, %s16
    %p18 = scmp.eq.s32.totalorder %s17, 0
    %s20 = sadd.s32 %s19, 1
    %s21 = scalar_select %p18, %s19, %s20
    %p24 = pneg %p18
    %p25 = scmp.eq.s32.totalorder %s9, 1
    %p26 = por %p24, %p25
    %p27 = scmp.ne.s32.totalorder %s19, %s22
    %p28 = scmp.eq.s32.totalorder %s9, 0
    %p29 = por %p27, %p28
    %p30 = scmp.ne.s32.totalorder %s19, %s22
    %p31 = scmp.eq.s32.totalorder %s14, 1
    %p32 = por %p30, %p31
    %p33 = scmp.ne.s32.totalorder %s22, %s23
    %p34 = scmp.eq.s32.totalorder %s14, 0
    %p35 = por %p33, %p34
    %p36 = scmp.ne.s32.totalorder %s22, %s23
    %p37 = scmp.eq.s32.totalorder %s15, 1
    %p38 = por %p36, %p37
    %p40 = scmp.ne.s32.totalorder %s23, %s39
    %p41 = scmp.eq.s32.totalorder %s15, 0
    %p42 = por %p40, %p41
    %s44 = sadd.s32 %s43, 1
    %p47 = scmp.eq.s32.totalorder %s9, 1
    %p48 = scmp.ne.s32.totalorder %s43, %s45
    %p49 = scmp.eq.s32.totalorder %s9, 0
    %p50 = por %p48, %p49
    %p51 = scmp.ne.s32.totalorder %s43, %s45
    %p52 = scmp.eq.s32.totalorder %s14, 1
    %p53 = por %p51, %p52
    %p54 = scmp.ne.s32.totalorder %s45, %s46
    %p55 = scmp.eq.s32.totalorder %s14, 0
    %p56 = por %p54, %p55
    %p57 = scmp.ne.s32.totalorder %s45, %s46
    %p58 = scmp.eq.s32.totalorder %s15, 1
    %p59 = por %p57, %p58
    %p61 = scmp.ne.s32.totalorder %s46, %s60
    %p62 = scmp.eq.s32.totalorder %s15, 0
    %p63 = por %p61, %p62
    %s65 = sadd.s32 %s64, 1
    %p68 = scmp.eq.s32.totalorder %s9, 1
    %p69 = scmp.ne.s32.totalorder %s64, %s66
    %p70 = scmp.eq.s32.totalorder %s9, 0
    %p71 = por %p69, %p70
    %p72 = scmp.ne.s32.totalorder %s64, %s66
    %p73 = scmp.eq.s32.totalorder %s14, 1
    %p74 = por %p72, %p73
    %p75 = scmp.ne.s32.totalorder %s66, %s67
    %p76 = scmp.eq.s32.totalorder %s14, 0
    %p77 = por %p75, %p76
    %p78 = scmp.ne.s32.totalorder %s66, %s67
    %p79 = scmp.eq.s32.totalorder %s15, 1
    %p80 = por %p78, %p79
    %p82 = scmp.ne.s32.totalorder %s67, %s81
    %p83 = scmp.eq.s32.totalorder %s15, 0
    %p84 = por %p82, %p83
    %s85 = ssub.s32 %s9, %s16
    %p86 = scmp.eq.s32.totalorder %s85, 0
    %s88 = sadd.s32 %s87, 1
    %s89 = scalar_select %p86, %s87, %s88
    %p92 = pneg %p86
    %p93 = scmp.eq.s32.totalorder %s9, 1
    %p94 = por %p92, %p93
    %p95 = scmp.ne.s32.totalorder %s87, %s90
    %p96 = scmp.eq.s32.totalorder %s9, 0
    %p97 = por %p95, %p96
    %p98 = scmp.ne.s32.totalorder %s87, %s90
    %p99 = scmp.eq.s32.totalorder %s14, 1
    %p100 = por %p98, %p99
    %p101 = scmp.ne.s32.totalorder %s90, %s91
    %p102 = scmp.eq.s32.totalorder %s14, 0
    %p103 = por %p101, %p102
    %p104 = scmp.ne.s32.totalorder %s90, %s91
    %p105 = scmp.eq.s32.totalorder %s15, 1
    %p106 = por %p104, %p105
    %p108 = scmp.ne.s32.totalorder %s91, %s107
    %p109 = scmp.eq.s32.totalorder %s15, 0
    %p110 = por %p108, %p109
    %p111 = scmp.le.s32.totalorder 1, %s9
    %p112 = scmp.lt.s32.totalorder %s9, 3
    %p113 = pnand %p111, %p112
    %p114 = pneg %p113
    // Predicated region
    $region9: #{ggcnn_forward.10} parent=5 // pred_check
      _
    $region10: #{ggcnn_forward.10} parent=5 // pred_check_branch
      %116 = sbr.rel (%p113) target = $region12
    $region11: #{ggcnn_forward.10} parent=5 // pred_region
      %s117 = ssub.s32 %s9, 1
      // Predicated region
      $region13: #{ggcnn_forward.10} parent=11 // pred_check
        %p118 = pneg %p56
      $region14: #{ggcnn_forward.10} parent=11 // pred_check_branch
        %120 = sbr.rel (%p118) target = $region16
      $region15: #{ggcnn_forward.10} parent=11 // pred_region
        _
      $region16: #{ggcnn_forward.10} parent=11 // pred_fallthru
        _
      // Predicated region
      $region17: #{ggcnn_forward.10} parent=11 // pred_check
        %p121 = pneg %p77
      $region18: #{ggcnn_forward.10} parent=11 // pred_check_branch
        %123 = sbr.rel (%p121) target = $region20
      $region19: #{ggcnn_forward.10} parent=11 // pred_region
        _
      $region20: #{ggcnn_forward.10} parent=11 // pred_fallthru
        _
    $region12: #{ggcnn_forward.10} parent=5 // pred_fallthru
      _
    %p124 = scmp.lt.s32.totalorder %s9, 2
    // Predicated region
    $region21: #{ggcnn_forward.10} parent=5 // pred_check
      %p125 = pneg %p124
    $region22: #{ggcnn_forward.10} parent=5 // pred_check_branch
      %127 = sbr.rel (%p125) target = $region24
    $region23: #{ggcnn_forward.10} parent=5 // pred_region
      // Predicated region
      $region25: #{ggcnn_forward.10} parent=23 // pred_check
        %p128 = pneg %p29
      $region26: #{ggcnn_forward.10} parent=23 // pred_check_branch
        %130 = sbr.rel (%p128) target = $region28
      $region27: #{ggcnn_forward.10} parent=23 // pred_region
        %s131 = smul.u32 8, %s9
        %p132 = scmp.lt.s32.totalorder %s131, 15
        %s133 = scalar_select %p132, %s131, 15
        %s134 = smul.addr %s133, 4
        %s135 = scalar_lea.vmem %s0, %s134
        %s136 = smul.u32 8, %s9
      $region28: #{ggcnn_forward.10} parent=23 // pred_fallthru
        _
    $region24: #{ggcnn_forward.10} parent=5 // pred_fallthru
      _
    %p137 = scmp.le.s32.totalorder 1, %s9
    %p138 = scmp.lt.s32.totalorder %s9, 3
    %p139 = pnand %p137, %p138
    %p140 = pneg %p139
    // Predicated region
    $region29: #{ggcnn_forward.10} parent=5 // pred_check
      _
    $region30: #{ggcnn_forward.10} parent=5 // pred_check_branch
      %142 = sbr.rel (%p139) target = $region32
    $region31: #{ggcnn_forward.10} parent=5 // pred_region
      %s143 = ssub.s32 %s9, 1
      %s144 = smul.u32 8, %s14
      %p145 = scmp.lt.s32.totalorder %s144, 15
      %s146 = scalar_select %p145, %s144, 15
      %s147 = smul.addr %s146, 4
      %s148 = scalar_lea.vmem %s0, %s147
      %p149 = pneg %p35
      %p150 = pneg %p32
      %p151 = pneg %p56
      %p152 = pneg %p53
      %p153 = pneg %p77
      %p154 = pneg %p74
      %p155 = pneg %p103
      %p156 = pneg %p100
      %s157 = smul.u32 8, %s14
      %p158 = scmp.lt.s32.totalorder %s157, 15
      %s159 = scalar_select %p158, %s157, 15
      %s160 = smul.addr %s159, 4
      %s161 = scalar_lea.vmem %s3, %s160
      %s162 = smul.u32 8, %s14
      %p163 = scmp.lt.s32.totalorder %s162, 15
      %s164 = scalar_select %p163, %s162, 15
      %s165 = smul.addr %s164, 4
      %s166 = scalar_lea.vmem %s0, %s165
      %s167 = smul.u32 8, %s14
      %s168 = smul.u32 8, %s14
      %p169 = scmp.lt.s32.totalorder %s168, 15
      %s170 = scalar_select %p169, %s168, 15
      %s171 = smul.addr %s170, 4
      %s172 = scalar_lea.vmem %s3, %s171
      %s173 = smul.u32 8, %s14
      %v175 = vld [vmem:[%s166] sm:$0xf]
      %v176 = vld [vmem:[%s166 + $0x4] sm:$0xf]
      %v177 = vld [vmem:[%s166 + $0x8] sm:$0xf]
      %v178 = vld [vmem:[%s166 + $0xc] sm:$0xf]
      %v179 = vld [vmem:[%s166 + $0x10] sm:$0xf]
      %v180 = vld [vmem:[%s166 + $0x14] sm:$0xf]
      %v181 = vld [vmem:[%s166 + $0x18] sm:$0xf]
      %v182 = vld [vmem:[%s166 + $0x1c] sm:$0xf]
      %v183 = vld [vmem:[%s1] sm:$0xf]
      %v184 = vld [vmem:[%s1 + $0x4] sm:$0xf]
      %v185 = vld [vmem:[%s1 + $0x8] sm:$0xf]
      %v186 = vld [vmem:[%s1 + $0xc] sm:$0xf]
      %v187 = vld [vmem:[%s2] sm:$0x1]
      %v189 = vlaneseq
      %v190 = vshrl.u32 %v189, 7
      %v191 = vsub.s32 0, %v190
      %v192 = vrot.slane %v187, %v191
      %v202 = vunpack.c.l.b16 %v175
      %v203 = vunpack.c.l.b16 %v176
      %v204 = vunpack.c.l.b16 %v177
      %v205 = vunpack.c.l.b16 %v178
      %v206 = vunpack.c.l.b16 %v179
      %v207 = vunpack.c.l.b16 %v180
      %v208 = vunpack.c.l.b16 %v181
      %v209 = vunpack.c.l.b16 %v182
      %v210 = vpack.c.b16 %v203, %v202
      %v211 = vpack.c.b16 %v205, %v204
      %v212 = vpack.c.b16 %v207, %v206
      %v213 = vpack.c.b16 %v209, %v208
      %v218 = vunpack.c.l.b16 %v183
      %v219 = vunpack.c.l.b16 %v184
      %v220 = vunpack.c.l.b16 %v185
      %v221 = vunpack.c.l.b16 %v186
      %v222 = vpack.c.b16 %v219, %v218
      %v223 = vpack.c.b16 %v221, %v220
      %vm226 = vcmask 261120
      %v228 = vsel %vm226, %v210, 0
      %v231 = vsel %vm226, %v211, 0
      %v234 = vsel %vm226, %v212, 0
      %v237 = vsel %vm226, %v213, 0
      %239 = vmatprep.subr.bf16.mxu0 0
      %240 = vmatpush1.bf16.msra.mxu0 %v222
      %241 = vmatprep.subr.bf16.mxu0 0
      %242 = vmatpush1.bf16.msra.mxu0 %v223
      %243 = vmatprep.subr.bf16.mxu0 0
      %244 = vmatpush1.bf16.msra.mxu0 0
      %245 = vmatprep.subr.bf16.mxu0 0
      %246 = vmatpush1.bf16.msra.mxu0 0
      %247 = vmatprep.subr.bf16.mxu0 0
      %248 = vmatpush1.bf16.msra.mxu0 0
      %249 = vmatprep.subr.bf16.mxu0 0
      %250 = vmatpush1.bf16.msra.mxu0 0
      %251 = vmatprep.subr.bf16.mxu0 0
      %252 = vmatpush1.bf16.msra.mxu0 0
      %253 = vmatprep.subr.bf16.mxu0 0
      %254 = vmatpush1.bf16.msra.mxu0 0
      %255 = vmatprep.subr.bf16.mxu0 0
      %256 = vmatpush1.bf16.msra.mxu0 0
      %257 = vmatprep.subr.bf16.mxu0 0
      %258 = vmatpush1.bf16.msra.mxu0 0
      %259 = vmatprep.subr.bf16.mxu0 0
      %260 = vmatpush1.bf16.msra.mxu0 0
      %261 = vmatprep.subr.bf16.mxu0 0
      %262 = vmatpush1.bf16.msra.mxu0 0
      %263 = vmatprep.subr.bf16.mxu0 0
      %264 = vmatpush1.bf16.msra.mxu0 0
      %265 = vmatprep.subr.bf16.mxu0 0
      %266 = vmatpush1.bf16.msra.mxu0 0
      %267 = vmatprep.subr.bf16.mxu0 0
      %268 = vmatpush1.bf16.msra.mxu0 0
      %269 = vmatprep.subr.bf16.mxu0 0
      %270 = vmatpush1.bf16.msra.mxu0 0
      %271 = vmatprep.mubr.bf16.mxu0 0
      %272 = vmatmul.mubr.bf16.gmra.mrb[0].mxu0 %v228
      %v273 = vpop.f32.mrb[0].mxu0
      %v274 = vadd.f32 %v192, %v273
      %v275 = vpop.f32.mrb[0].mxu0
      %v276 = vpop.f32.mrb[0].mxu0
      %v277 = vadd.f32 %v192, %v276
      %v278 = vpop.f32.mrb[0].mxu0
      %279 = vmatprep.mubr.bf16.mxu0 0
      %280 = vmatmul.mubr.bf16.gmra.mrb[0].mxu0 %v231
      %v281 = vpop.f32.mrb[0].mxu0
      %v282 = vadd.f32 %v192, %v281
      %v283 = vpop.f32.mrb[0].mxu0
      %v284 = vpop.f32.mrb[0].mxu0
      %v285 = vadd.f32 %v192, %v284
      %v286 = vpop.f32.mrb[0].mxu0
      %287 = vmatprep.mubr.bf16.mxu0 0
      %288 = vmatmul.mubr.bf16.gmra.mrb[0].mxu0 %v234
      %v289 = vpop.f32.mrb[0].mxu0
      %v290 = vadd.f32 %v192, %v289
      %v291 = vpop.f32.mrb[0].mxu0
      %v292 = vpop.f32.mrb[0].mxu0
      %v293 = vadd.f32 %v192, %v292
      %v294 = vpop.f32.mrb[0].mxu0
      %295 = vmatprep.mubr.bf16.mxu0 0
      %296 = vmatmul.mubr.bf16.gmra.mrb[0].mxu0 %v237
      %v297 = vpop.f32.mrb[0].mxu0
      %v298 = vadd.f32 %v192, %v297
      %v299 = vpop.f32.mrb[0].mxu0
      %v300 = vpop.f32.mrb[0].mxu0
      %v301 = vadd.f32 %v192, %v300
      %v302 = vpop.f32.mrb[0].mxu0
      %303 = vdwg.mxu0
      %v304 = vmax.f32 %v274, 0.0
      %v305 = vmax.f32 %v277, 0.0
      %v306 = vmax.f32 %v282, 0.0
      %v307 = vmax.f32 %v285, 0.0
      %v308 = vmax.f32 %v290, 0.0
      %v309 = vmax.f32 %v293, 0.0
      %v310 = vmax.f32 %v298, 0.0
      %v311 = vmax.f32 %v301, 0.0
      %v312 = vpack.c.bf16 %v305, %v304
      %v313 = vpack.c.bf16 %v307, %v306
      %v314 = vpack.c.bf16 %v309, %v308
      %v315 = vpack.c.bf16 %v311, %v310
      %v320 = vunpack.c.l.b16 %v312
      %v321 = vunpack.c.h.b16 %v312
      %v322 = vunpack.c.l.b16 %v313
      %v323 = vunpack.c.h.b16 %v313
      %v324 = vunpack.c.l.b16 %v314
      %v325 = vunpack.c.h.b16 %v314
      %v326 = vunpack.c.l.b16 %v315
      %v327 = vunpack.c.h.b16 %v315
      %v328 = vpack.c.b16 %v320, %v320
      %v329 = vpack.c.b16 %v321, %v321
      %v330 = vpack.c.b16 %v322, %v322
      %v331 = vpack.c.b16 %v323, %v323
      %v332 = vpack.c.b16 %v324, %v324
      %v333 = vpack.c.b16 %v325, %v325
      %v334 = vpack.c.b16 %v326, %v326
      %v335 = vpack.c.b16 %v327, %v327
      %344 = vst [vmem:[%s172] sm:$0xf] %v328
      %345 = vst [vmem:[%s172 + $0x4] sm:$0xf] %v329
      %346 = vst [vmem:[%s172 + $0x8] sm:$0xf] %v330
      %347 = vst [vmem:[%s172 + $0xc] sm:$0xf] %v331
      %348 = vst [vmem:[%s172 + $0x10] sm:$0xf] %v332
      %349 = vst [vmem:[%s172 + $0x14] sm:$0xf] %v333
      %350 = vst [vmem:[%s172 + $0x18] sm:$0xf] %v334
      %351 = vst [vmem:[%s172 + $0x1c] sm:$0xf] %v335
      %s352 = smul.u32 8, %s14
      %p353 = scmp.lt.s32.totalorder %s352, 15
      %s354 = scalar_select %p353, %s352, 15
      %s355 = smul.addr %s354, 4
      %s356 = scalar_lea.vmem %s3, %s355
      // Predicated region
      $region33: #{ggcnn_forward.10} parent=31 // pred_check
        %p357 = pneg %p100
      $region34: #{ggcnn_forward.10} parent=31 // pred_check_branch
        %359 = sbr.rel (%p357) target = $region36
      $region35: #{ggcnn_forward.10} parent=31 // pred_region
        %s360 = smul.u32 8, %s14
      $region36: #{ggcnn_forward.10} parent=31 // pred_fallthru
        _
    $region32: #{ggcnn_forward.10} parent=5 // pred_fallthru
      _
    %p361 = scmp.le.s32.totalorder 2, %s9
    // Predicated region
    $region37: #{ggcnn_forward.10} parent=5 // pred_check
      %p362 = pneg %p361
    $region38: #{ggcnn_forward.10} parent=5 // pred_check_branch
      %364 = sbr.rel (%p362) target = $region40
    $region39: #{ggcnn_forward.10} parent=5 // pred_region
      %s365 = ssub.s32 %s9, 2
      // Predicated region
      $region41: #{ggcnn_forward.10} parent=39 // pred_check
        %p366 = pneg %p106
      $region42: #{ggcnn_forward.10} parent=39 // pred_check_branch
        %368 = sbr.rel (%p366) target = $region44
      $region43: #{ggcnn_forward.10} parent=39 // pred_region
        %s369 = smul.u32 8, %s15
        %p370 = scmp.lt.s32.totalorder %s369, 15
        %s371 = scalar_select %p370, %s369, 15
        %s372 = smul.addr %s371, 4
        %s373 = scalar_lea.vmem %s3, %s372
      $region44: #{ggcnn_forward.10} parent=39 // pred_fallthru
        _
    $region40: #{ggcnn_forward.10} parent=5 // pred_fallthru
      _
  $region6: #{ggcnn_forward.10} parent=0 // loop_footer
    %s13 = sadd.s32 1, %s9
  $region7: #{ggcnn_forward.10} parent=0 // loop_footer_branch
    %8 = sbr.rel target = $region3
  $region8: #{ggcnn_forward.10} parent=0 // loop_exit
    _

// kernel: ggcnn_forward.11
$region0: #{ggcnn_forward.11}
  #allocation0 [shape = 'u32[]', space=smem, size = 0x4, offset = 0x4, fixed_abs, tag = 'smem constant byte address 0x4 - core index']
  #allocation1 [shape = 'u32[144,128]{1,0:T(1,128)}', space=vmem, size = 0x12000, scoped, tag = 'internal scratch']
  %s0 = inlined_call_operand.vmem [shape: bf16[384,72], index: 0, kind: input, shape index: {}]
  %s1 = inlined_call_operand.vmem [shape: bf16[72,128], index: 1, kind: input, shape index: {}]
  %s2 = inlined_call_operand.vmem [shape: f32[1,128], index: 2, kind: input, shape index: {}]
  %s3 = inlined_call_operand.vmem [shape: bf16[384,128], index: 3, kind: output, shape index: {}]
  %s4 = sld [smem:[#allocation0]]
  $region45: #{ggcnn_forward.11} parent=0
    _
  %s6 = ssub.s32 1, %s4
  %s7 = scalar_select 0, %s6, %s4
  loop: start=0, step=1, limit=4
  $region2: #{ggcnn_forward.11} parent=0 // loop_pre_header
    _
  $region3: #{ggcnn_forward.11} parent=0 // loop_header
    %s9 = sphi 0, %s13
    %p10 = scmp.ge.s32.totalorder %s9, 4
    %s19 = sphi 0, %s21
    %s22 = sphi 0, %s19
    %s23 = sphi 0, %s22
    %s39 = sphi 0, %s23
    %s43 = sphi 0, %s43
    %s45 = sphi 0, %s43
    %s46 = sphi 0, %s45
    %s60 = sphi 0, %s46
    %s64 = sphi 0, %s64
    %s66 = sphi 0, %s64
    %s67 = sphi 0, %s66
    %s81 = sphi 0, %s67
    %s87 = sphi 0, %s89
    %s90 = sphi 0, %s87
    %s91 = sphi 0, %s90
    %s107 = sphi 0, %s91
  $region4: #{ggcnn_forward.11} parent=0 // loop_header_branch
    %12 = sbr.rel (%p10) target = $region8
  $region5: #{ggcnn_forward.11} parent=0 // loop_body
    %s14 = ssub.s32 %s9, 1
    %s15 = ssub.s32 %s9, 2
    %s16 = sadd.s32 %s9, 1
    %s17 = ssub.s32 %s9, %s16
    %p18 = scmp.eq.s32.totalorder %s17, 0
    %s20 = sadd.s32 %s19, 1
    %s21 = scalar_select %p18, %s19, %s20
    %p24 = pneg %p18
    %p25 = scmp.eq.s32.totalorder %s9, 1
    %p26 = por %p24, %p25
    %p27 = scmp.ne.s32.totalorder %s19, %s22
    %p28 = scmp.eq.s32.totalorder %s9, 0
    %p29 = por %p27, %p28
    %p30 = scmp.ne.s32.totalorder %s19, %s22
    %p31 = scmp.eq.s32.totalorder %s14, 1
    %p32 = por %p30, %p31
    %p33 = scmp.ne.s32.totalorder %s22, %s23
    %p34 = scmp.eq.s32.totalorder %s14, 0
    %p35 = por %p33, %p34
    %p36 = scmp.ne.s32.totalorder %s22, %s23
    %p37 = scmp.eq.s32.totalorder %s15, 1
    %p38 = por %p36, %p37
    %p40 = scmp.ne.s32.totalorder %s23, %s39
    %p41 = scmp.eq.s32.totalorder %s15, 0
    %p42 = por %p40, %p41
    %s44 = sadd.s32 %s43, 1
    %p47 = scmp.eq.s32.totalorder %s9, 1
    %p48 = scmp.ne.s32.totalorder %s43, %s45
    %p49 = scmp.eq.s32.totalorder %s9, 0
    %p50 = por %p48, %p49
    %p51 = scmp.ne.s32.totalorder %s43, %s45
    %p52 = scmp.eq.s32.totalorder %s14, 1
    %p53 = por %p51, %p52
    %p54 = scmp.ne.s32.totalorder %s45, %s46
    %p55 = scmp.eq.s32.totalorder %s14, 0
    %p56 = por %p54, %p55
    %p57 = scmp.ne.s32.totalorder %s45, %s46
    %p58 = scmp.eq.s32.totalorder %s15, 1
    %p59 = por %p57, %p58
    %p61 = scmp.ne.s32.totalorder %s46, %s60
    %p62 = scmp.eq.s32.totalorder %s15, 0
    %p63 = por %p61, %p62
    %s65 = sadd.s32 %s64, 1
    %p68 = scmp.eq.s32.totalorder %s9, 1
    %p69 = scmp.ne.s32.totalorder %s64, %s66
    %p70 = scmp.eq.s32.totalorder %s9, 0
    %p71 = por %p69, %p70
    %p72 = scmp.ne.s32.totalorder %s64, %s66
    %p73 = scmp.eq.s32.totalorder %s14, 1
    %p74 = por %p72, %p73
    %p75 = scmp.ne.s32.totalorder %s66, %s67
    %p76 = scmp.eq.s32.totalorder %s14, 0
    %p77 = por %p75, %p76
    %p78 = scmp.ne.s32.totalorder %s66, %s67
    %p79 = scmp.eq.s32.totalorder %s15, 1
    %p80 = por %p78, %p79
    %p82 = scmp.ne.s32.totalorder %s67, %s81
    %p83 = scmp.eq.s32.totalorder %s15, 0
    %p84 = por %p82, %p83
    %s85 = ssub.s32 %s9, %s16
    %p86 = scmp.eq.s32.totalorder %s85, 0
    %s88 = sadd.s32 %s87, 1
    %s89 = scalar_select %p86, %s87, %s88
    %p92 = pneg %p86
    %p93 = scmp.eq.s32.totalorder %s9, 1
    %p94 = por %p92, %p93
    %p95 = scmp.ne.s32.totalorder %s87, %s90
    %p96 = scmp.eq.s32.totalorder %s9, 0
    %p97 = por %p95, %p96
    %p98 = scmp.ne.s32.totalorder %s87, %s90
    %p99 = scmp.eq.s32.totalorder %s14, 1
    %p100 = por %p98, %p99
    %p101 = scmp.ne.s32.totalorder %s90, %s91
    %p102 = scmp.eq.s32.totalorder %s14, 0
    %p103 = por %p101, %p102
    %p104 = scmp.ne.s32.totalorder %s90, %s91
    %p105 = scmp.eq.s32.totalorder %s15, 1
    %p106 = por %p104, %p105
    %p108 = scmp.ne.s32.totalorder %s91, %s107
    %p109 = scmp.eq.s32.totalorder %s15, 0
    %p110 = por %p108, %p109
    %p111 = scmp.le.s32.totalorder 1, %s9
    %p112 = scmp.lt.s32.totalorder %s9, 3
    %p113 = pnand %p111, %p112
    %p114 = pneg %p113
    // Predicated region
    $region9: #{ggcnn_forward.11} parent=5 // pred_check
      _
    $region10: #{ggcnn_forward.11} parent=5 // pred_check_branch
      %116 = sbr.rel (%p113) target = $region12
    $region11: #{ggcnn_forward.11} parent=5 // pred_region
      %s117 = ssub.s32 %s9, 1
      // Predicated region
      $region13: #{ggcnn_forward.11} parent=11 // pred_check
        %p118 = pneg %p56
      $region14: #{ggcnn_forward.11} parent=11 // pred_check_branch
        %120 = sbr.rel (%p118) target = $region16
      $region15: #{ggcnn_forward.11} parent=11 // pred_region
        _
      $region16: #{ggcnn_forward.11} parent=11 // pred_fallthru
        _
      // Predicated region
      $region17: #{ggcnn_forward.11} parent=11 // pred_check
        %p121 = pneg %p77
      $region18: #{ggcnn_forward.11} parent=11 // pred_check_branch
        %123 = sbr.rel (%p121) target = $region20
      $region19: #{ggcnn_forward.11} parent=11 // pred_region
        _
      $region20: #{ggcnn_forward.11} parent=11 // pred_fallthru
        _
    $region12: #{ggcnn_forward.11} parent=5 // pred_fallthru
      _
    %p124 = scmp.lt.s32.totalorder %s9, 2
    // Predicated region
    $region21: #{ggcnn_forward.11} parent=5 // pred_check
      %p125 = pneg %p124
    $region22: #{ggcnn_forward.11} parent=5 // pred_check_branch
      %127 = sbr.rel (%p125) target = $region24
    $region23: #{ggcnn_forward.11} parent=5 // pred_region
      // Predicated region
      $region25: #{ggcnn_forward.11} parent=23 // pred_check
        %p128 = pneg %p29
      $region26: #{ggcnn_forward.11} parent=23 // pred_check_branch
        %130 = sbr.rel (%p128) target = $region28
      $region27: #{ggcnn_forward.11} parent=23 // pred_region
        %s131 = smul.u32 24, %s9
        %p132 = scmp.lt.s32.totalorder %s131, 47
        %s133 = scalar_select %p132, %s131, 47
        %s134 = smul.addr %s133, 4
        %s135 = scalar_lea.vmem %s0, %s134
        %s136 = smul.u32 24, %s9
      $region28: #{ggcnn_forward.11} parent=23 // pred_fallthru
        _
    $region24: #{ggcnn_forward.11} parent=5 // pred_fallthru
      _
    %p137 = scmp.le.s32.totalorder 1, %s9
    %p138 = scmp.lt.s32.totalorder %s9, 3
    %p139 = pnand %p137, %p138
    %p140 = pneg %p139
    // Predicated region
    $region29: #{ggcnn_forward.11} parent=5 // pred_check
      _
    $region30: #{ggcnn_forward.11} parent=5 // pred_check_branch
      %142 = sbr.rel (%p139) target = $region32
    $region31: #{ggcnn_forward.11} parent=5 // pred_region
      %s143 = ssub.s32 %s9, 1
      %s144 = smul.u32 24, %s14
      %p145 = scmp.lt.s32.totalorder %s144, 47
      %s146 = scalar_select %p145, %s144, 47
      %s147 = smul.addr %s146, 4
      %s148 = scalar_lea.vmem %s0, %s147
      %p149 = pneg %p35
      %p150 = pneg %p32
      %p151 = pneg %p56
      %p152 = pneg %p53
      %p153 = pneg %p77
      %p154 = pneg %p74
      %p155 = pneg %p103
      %p156 = pneg %p100
      %s157 = smul.u32 24, %s14
      %p158 = scmp.lt.s32.totalorder %s157, 47
      %s159 = scalar_select %p158, %s157, 47
      %s160 = smul.addr %s159, 4
      %s161 = scalar_lea.vmem %s3, %s160
      %s162 = smul.u32 24, %s14
      %p163 = scmp.lt.s32.totalorder %s162, 47
      %s164 = scalar_select %p163, %s162, 47
      %s165 = smul.addr %s164, 4
      %s166 = scalar_lea.vmem %s0, %s165
      %s167 = smul.u32 24, %s14
      %s168 = smul.u32 24, %s14
      %p169 = scmp.lt.s32.totalorder %s168, 47
      %s170 = scalar_select %p169, %s168, 47
      %s171 = smul.addr %s170, 4
      %s172 = scalar_lea.vmem %s3, %s171
      %s173 = smul.u32 24, %s14
      %v175 = vld [vmem:[%s166] sm:$0xf]
      %v176 = vld [vmem:[%s166 + $0x4] sm:$0xf]
      %v177 = vld [vmem:[%s166 + $0x8] sm:$0xf]
      %v178 = vld [vmem:[%s166 + $0xc] sm:$0xf]
      %v179 = vld [vmem:[%s166 + $0x10] sm:$0xf]
      %v180 = vld [vmem:[%s166 + $0x14] sm:$0xf]
      %v181 = vld [vmem:[%s166 + $0x18] sm:$0xf]
      %v182 = vld [vmem:[%s166 + $0x1c] sm:$0xf]
      %v183 = vld [vmem:[%s166 + $0x20] sm:$0xf]
      %v184 = vld [vmem:[%s166 + $0x24] sm:$0xf]
      %v185 = vld [vmem:[%s166 + $0x28] sm:$0xf]
      %v186 = vld [vmem:[%s166 + $0x2c] sm:$0xf]
      %v187 = vld [vmem:[%s166 + $0x30] sm:$0xf]
      %v188 = vld [vmem:[%s166 + $0x34] sm:$0xf]
      %v189 = vld [vmem:[%s166 + $0x38] sm:$0xf]
      %v190 = vld [vmem:[%s166 + $0x3c] sm:$0xf]
      %v191 = vld [vmem:[%s166 + $0x40] sm:$0xf]
      %v192 = vld [vmem:[%s166 + $0x44] sm:$0xf]
      %v193 = vld [vmem:[%s166 + $0x48] sm:$0xf]
      %v194 = vld [vmem:[%s166 + $0x4c] sm:$0xf]
      %v195 = vld [vmem:[%s166 + $0x50] sm:$0xf]
      %v196 = vld [vmem:[%s166 + $0x54] sm:$0xf]
      %v197 = vld [vmem:[%s166 + $0x58] sm:$0xf]
      %v198 = vld [vmem:[%s166 + $0x5c] sm:$0xf]
      %v199 = vld [vmem:[%s1] sm:$0xf]
      %v200 = vld [vmem:[%s1 + $0x4] sm:$0xf]
      %v201 = vld [vmem:[%s1 + $0x8] sm:$0xf]
      %v202 = vld [vmem:[%s1 + $0xc] sm:$0xf]
      %v203 = vld [vmem:[%s1 + $0x10] sm:$0xf]
      %v204 = vld [vmem:[%s1 + $0x14] sm:$0xf]
      %v205 = vld [vmem:[%s1 + $0x18] sm:$0xf]
      %v206 = vld [vmem:[%s1 + $0x1c] sm:$0xf]
      %v207 = vld [vmem:[%s1 + $0x20] sm:$0xf]
      %v208 = vld [vmem:[%s2] sm:$0x1]
      %v210 = vlaneseq
      %v211 = vshrl.u32 %v210, 7
      %v212 = vsub.s32 0, %v211
      %v213 = vrot.slane %v208, %v212
      %v239 = vunpack.c.l.b16 %v175
      %v240 = vunpack.c.l.b16 %v176
      %v241 = vunpack.c.l.b16 %v177
      %v242 = vunpack.c.l.b16 %v178
      %v243 = vunpack.c.l.b16 %v179
      %v244 = vunpack.c.l.b16 %v180
      %v245 = vunpack.c.l.b16 %v181
      %v246 = vunpack.c.l.b16 %v182
      %v247 = vunpack.c.l.b16 %v183
      %v248 = vunpack.c.l.b16 %v184
      %v249 = vunpack.c.l.b16 %v185
      %v250 = vunpack.c.l.b16 %v186
      %v251 = vunpack.c.l.b16 %v187
      %v252 = vunpack.c.l.b16 %v188
      %v253 = vunpack.c.l.b16 %v189
      %v254 = vunpack.c.l.b16 %v190
      %v255 = vunpack.c.l.b16 %v191
      %v256 = vunpack.c.l.b16 %v192
      %v257 = vunpack.c.l.b16 %v193
      %v258 = vunpack.c.l.b16 %v194
      %v259 = vunpack.c.l.b16 %v195
      %v260 = vunpack.c.l.b16 %v196
      %v261 = vunpack.c.l.b16 %v197
      %v262 = vunpack.c.l.b16 %v198
      %v263 = vpack.c.b16 %v240, %v239
      %v264 = vpack.c.b16 %v242, %v241
      %v265 = vpack.c.b16 %v244, %v243
      %v266 = vpack.c.b16 %v246, %v245
      %v267 = vpack.c.b16 %v248, %v247
      %v268 = vpack.c.b16 %v250, %v249
      %v269 = vpack.c.b16 %v252, %v251
      %v270 = vpack.c.b16 %v254, %v253
      %v271 = vpack.c.b16 %v256, %v255
      %v272 = vpack.c.b16 %v258, %v257
      %v273 = vpack.c.b16 %v260, %v259
      %v274 = vpack.c.b16 %v262, %v261
      %v284 = vunpack.c.l.b16 %v199
      %v285 = vunpack.c.l.b16 %v200
      %v286 = vunpack.c.l.b16 %v201
      %v287 = vunpack.c.l.b16 %v202
      %v288 = vunpack.c.l.b16 %v203
      %v289 = vunpack.c.l.b16 %v204
      %v290 = vunpack.c.l.b16 %v205
      %v291 = vunpack.c.l.b16 %v206
      %v292 = vunpack.c.l.b16 %v207
      %v293 = vpack.c.b16 %v285, %v284
      %v294 = vpack.c.b16 %v287, %v286
      %v295 = vpack.c.b16 %v289, %v288
      %v296 = vpack.c.b16 %v291, %v290
      %v297 = vpack.c.b16 %v292, %v292
      %vm302 = vcmask 588800
      %v304 = vsel %vm302, %v263, 0
      %v307 = vsel %vm302, %v264, 0
      %v310 = vsel %vm302, %v265, 0
      %v313 = vsel %vm302, %v266, 0
      %v316 = vsel %vm302, %v267, 0
      %v319 = vsel %vm302, %v268, 0
      %v322 = vsel %vm302, %v269, 0
      %v325 = vsel %vm302, %v270, 0
      %v328 = vsel %vm302, %v271, 0
      %v331 = vsel %vm302, %v272, 0
      %v334 = vsel %vm302, %v273, 0
      %v337 = vsel %vm302, %v274, 0
      %vm339 = vcmask 1043456
      %v341 = vsel %vm339, %v297, 0
      %343 = vmatprep.subr.bf16.mxu0 0
      %344 = vmatpush1.bf16.msra.mxu0 %v293
      %345 = vmatprep.subr.bf16.mxu0 0
      %346 = vmatpush1.bf16.msra.mxu0 %v294
      %347 = vmatprep.subr.bf16.mxu0 0
      %348 = vmatpush1.bf16.msra.mxu0 %v295
      %349 = vmatprep.subr.bf16.mxu0 0
      %350 = vmatpush1.bf16.msra.mxu0 %v296
      %351 = vmatprep.subr.bf16.mxu0 0
      %352 = vmatpush1.bf16.msra.mxu0 %v341
      %353 = vmatprep.subr.bf16.mxu0 0
      %354 = vmatpush1.bf16.msra.mxu0 0
      %355 = vmatprep.subr.bf16.mxu0 0
      %356 = vmatpush1.bf16.msra.mxu0 0
      %357 = vmatprep.subr.bf16.mxu0 0
      %358 = vmatpush1.bf16.msra.mxu0 0
      %359 = vmatprep.subr.bf16.mxu0 0
      %360 = vmatpush1.bf16.msra.mxu0 0
      %361 = vmatprep.subr.bf16.mxu0 0
      %362 = vmatpush1.bf16.msra.mxu0 0
      %363 = vmatprep.subr.bf16.mxu0 0
      %364 = vmatpush1.bf16.msra.mxu0 0
      %365 = vmatprep.subr.bf16.mxu0 0
      %366 = vmatpush1.bf16.msra.mxu0 0
      %367 = vmatprep.subr.bf16.mxu0 0
      %368 = vmatpush1.bf16.msra.mxu0 0
      %369 = vmatprep.subr.bf16.mxu0 0
      %370 = vmatpush1.bf16.msra.mxu0 0
      %371 = vmatprep.subr.bf16.mxu0 0
      %372 = vmatpush1.bf16.msra.mxu0 0
      %373 = vmatprep.subr.bf16.mxu0 0
      %374 = vmatpush1.bf16.msra.mxu0 0
      %375 = vmatprep.mubr.bf16.mxu0 0
      %376 = vmatmul.mubr.bf16.gmra.mrb[0].mxu0 %v304
      %v377 = vpop.f32.mrb[0].mxu0
      %v378 = vadd.f32 %v213, %v377
      %v379 = vpop.f32.mrb[0].mxu0
      %v380 = vpop.f32.mrb[0].mxu0
      %v381 = vadd.f32 %v213, %v380
      %v382 = vpop.f32.mrb[0].mxu0
      %383 = vmatprep.mubr.bf16.mxu0 0
      %384 = vmatmul.mubr.bf16.gmra.mrb[0].mxu0 %v307
      %v385 = vpop.f32.mrb[0].mxu0
      %v386 = vadd.f32 %v213, %v385
      %v387 = vpop.f32.mrb[0].mxu0
      %v388 = vpop.f32.mrb[0].mxu0
      %v389 = vadd.f32 %v213, %v388
      %v390 = vpop.f32.mrb[0].mxu0
      %391 = vmatprep.mubr.bf16.mxu0 0
      %392 = vmatmul.mubr.bf16.gmra.mrb[0].mxu0 %v310
      %v393 = vpop.f32.mrb[0].mxu0
      %v394 = vadd.f32 %v213, %v393
      %v395 = vpop.f32.mrb[0].mxu0
      %v396 = vpop.f32.mrb[0].mxu0
      %v397 = vadd.f32 %v213, %v396
      %v398 = vpop.f32.mrb[0].mxu0
      %399 = vmatprep.mubr.bf16.mxu0 0
      %400 = vmatmul.mubr.bf16.gmra.mrb[0].mxu0 %v313
      %v401 = vpop.f32.mrb[0].mxu0
      %v402 = vadd.f32 %v213, %v401
      %v403 = vpop.f32.mrb[0].mxu0
      %v404 = vpop.f32.mrb[0].mxu0
      %v405 = vadd.f32 %v213, %v404
      %v406 = vpop.f32.mrb[0].mxu0
      %407 = vmatprep.mubr.bf16.mxu0 0
      %408 = vmatmul.mubr.bf16.gmra.mrb[0].mxu0 %v316
      %v409 = vpop.f32.mrb[0].mxu0
      %v410 = vadd.f32 %v213, %v409
      %v411 = vpop.f32.mrb[0].mxu0
      %v412 = vpop.f32.mrb[0].mxu0
      %v413 = vadd.f32 %v213, %v412
      %v414 = vpop.f32.mrb[0].mxu0
      %415 = vmatprep.mubr.bf16.mxu0 0
      %416 = vmatmul.mubr.bf16.gmra.mrb[0].mxu0 %v319
      %v417 = vpop.f32.mrb[0].mxu0
      %v418 = vadd.f32 %v213, %v417
      %v419 = vpop.f32.mrb[0].mxu0
      %v420 = vpop.f32.mrb[0].mxu0
      %v421 = vadd.f32 %v213, %v420
      %v422 = vpop.f32.mrb[0].mxu0
      %423 = vmatprep.mubr.bf16.mxu0 0
      %424 = vmatmul.mubr.bf16.gmra.mrb[0].mxu0 %v322
      %v425 = vpop.f32.mrb[0].mxu0
      %v426 = vadd.f32 %v213, %v425
      %v427 = vpop.f32.mrb[0].mxu0
      %v428 = vpop.f32.mrb[0].mxu0
      %v429 = vadd.f32 %v213, %v428
      %v430 = vpop.f32.mrb[0].mxu0
      %431 = vmatprep.mubr.bf16.mxu0 0
      %432 = vmatmul.mubr.bf16.gmra.mrb[0].mxu0 %v325
      %v433 = vpop.f32.mrb[0].mxu0
      %v434 = vadd.f32 %v213, %v433
      %v435 = vpop.f32.mrb[0].mxu0
      %v436 = vpop.f32.mrb[0].mxu0
      %v437 = vadd.f32 %v213, %v436
      %v438 = vpop.f32.mrb[0].mxu0
      %439 = vmatprep.mubr.bf16.mxu0 0
      %440 = vmatmul.mubr.bf16.gmra.mrb[0].mxu0 %v328
      %v441 = vpop.f32.mrb[0].mxu0
      %v442 = vadd.f32 %v213, %v441
      %v443 = vpop.f32.mrb[0].mxu0
      %v444 = vpop.f32.mrb[0].mxu0
      %v445 = vadd.f32 %v213, %v444
      %v446 = vpop.f32.mrb[0].mxu0
      %447 = vmatprep.mubr.bf16.mxu0 0
      %448 = vmatmul.mubr.bf16.gmra.mrb[0].mxu0 %v331
      %v449 = vpop.f32.mrb[0].mxu0
      %v450 = vadd.f32 %v213, %v449
      %v451 = vpop.f32.mrb[0].mxu0
      %v452 = vpop.f32.mrb[0].mxu0
      %v453 = vadd.f32 %v213, %v452
      %v454 = vpop.f32.mrb[0].mxu0
      %455 = vmatprep.mubr.bf16.mxu0 0
      %456 = vmatmul.mubr.bf16.gmra.mrb[0].mxu0 %v334
      %v457 = vpop.f32.mrb[0].mxu0
      %v458 = vadd.f32 %v213, %v457
      %v459 = vpop.f32.mrb[0].mxu0
      %v460 = vpop.f32.mrb[0].mxu0
      %v461 = vadd.f32 %v213, %v460
      %v462 = vpop.f32.mrb[0].mxu0
      %463 = vmatprep.mubr.bf16.mxu0 0
      %464 = vmatmul.mubr.bf16.gmra.mrb[0].mxu0 %v337
      %v465 = vpop.f32.mrb[0].mxu0
      %v466 = vadd.f32 %v213, %v465
      %v467 = vpop.f32.mrb[0].mxu0
      %v468 = vpop.f32.mrb[0].mxu0
      %v469 = vadd.f32 %v213, %v468
      %v470 = vpop.f32.mrb[0].mxu0
      %471 = vdwg.mxu0
      %v472 = vmax.f32 %v378, 0.0
      %v473 = vmax.f32 %v381, 0.0
      %v474 = vmax.f32 %v386, 0.0
      %v475 = vmax.f32 %v389, 0.0
      %v476 = vmax.f32 %v394, 0.0
      %v477 = vmax.f32 %v397, 0.0
      %v478 = vmax.f32 %v402, 0.0
      %v479 = vmax.f32 %v405, 0.0
      %v480 = vmax.f32 %v410, 0.0
      %v481 = vmax.f32 %v413, 0.0
      %v482 = vmax.f32 %v418, 0.0
      %v483 = vmax.f32 %v421, 0.0
      %v484 = vmax.f32 %v426, 0.0
      %v485 = vmax.f32 %v429, 0.0
      %v486 = vmax.f32 %v434, 0.0
      %v487 = vmax.f32 %v437, 0.0
      %v488 = vmax.f32 %v442, 0.0
      %v489 = vmax.f32 %v445, 0.0
      %v490 = vmax.f32 %v450, 0.0
      %v491 = vmax.f32 %v453, 0.0
      %v492 = vmax.f32 %v458, 0.0
      %v493 = vmax.f32 %v461, 0.0
      %v494 = vmax.f32 %v466, 0.0
      %v495 = vmax.f32 %v469, 0.0
      %v496 = vpack.c.bf16 %v473, %v472
      %v497 = vpack.c.bf16 %v475, %v474
      %v498 = vpack.c.bf16 %v477, %v476
      %v499 = vpack.c.bf16 %v479, %v478
      %v500 = vpack.c.bf16 %v481, %v480
      %v501 = vpack.c.bf16 %v483, %v482
      %v502 = vpack.c.bf16 %v485, %v484
      %v503 = vpack.c.bf16 %v487, %v486
      %v504 = vpack.c.bf16 %v489, %v488
      %v505 = vpack.c.bf16 %v491, %v490
      %v506 = vpack.c.bf16 %v493, %v492
      %v507 = vpack.c.bf16 %v495, %v494
      %v520 = vunpack.c.l.b16 %v496
      %v521 = vunpack.c.h.b16 %v496
      %v522 = vunpack.c.l.b16 %v497
      %v523 = vunpack.c.h.b16 %v497
      %v524 = vunpack.c.l.b16 %v498
      %v525 = vunpack.c.h.b16 %v498
      %v526 = vunpack.c.l.b16 %v499
      %v527 = vunpack.c.h.b16 %v499
      %v528 = vunpack.c.l.b16 %v500
      %v529 = vunpack.c.h.b16 %v500
      %v530 = vunpack.c.l.b16 %v501
      %v531 = vunpack.c.h.b16 %v501
      %v532 = vunpack.c.l.b16 %v502
      %v533 = vunpack.c.h.b16 %v502
      %v534 = vunpack.c.l.b16 %v503
      %v535 = vunpack.c.h.b16 %v503
      %v536 = vunpack.c.l.b16 %v504
      %v537 = vunpack.c.h.b16 %v504
      %v538 = vunpack.c.l.b16 %v505
      %v539 = vunpack.c.h.b16 %v505
      %v540 = vunpack.c.l.b16 %v506
      %v541 = vunpack.c.h.b16 %v506
      %v542 = vunpack.c.l.b16 %v507
      %v543 = vunpack.c.h.b16 %v507
      %v544 = vpack.c.b16 %v520, %v520
      %v545 = vpack.c.b16 %v521, %v521
      %v546 = vpack.c.b16 %v522, %v522
      %v547 = vpack.c.b16 %v523, %v523
      %v548 = vpack.c.b16 %v524, %v524
      %v549 = vpack.c.b16 %v525, %v525
      %v550 = vpack.c.b16 %v526, %v526
      %v551 = vpack.c.b16 %v527, %v527
      %v552 = vpack.c.b16 %v528, %v528
      %v553 = vpack.c.b16 %v529, %v529
      %v554 = vpack.c.b16 %v530, %v530
      %v555 = vpack.c.b16 %v531, %v531
      %v556 = vpack.c.b16 %v532, %v532
      %v557 = vpack.c.b16 %v533, %v533
      %v558 = vpack.c.b16 %v534, %v534
      %v559 = vpack.c.b16 %v535, %v535
      %v560 = vpack.c.b16 %v536, %v536
      %v561 = vpack.c.b16 %v537, %v537
      %v562 = vpack.c.b16 %v538, %v538
      %v563 = vpack.c.b16 %v539, %v539
      %v564 = vpack.c.b16 %v540, %v540
      %v565 = vpack.c.b16 %v541, %v541
      %v566 = vpack.c.b16 %v542, %v542
      %v567 = vpack.c.b16 %v543, %v543
      %592 = vst [vmem:[%s172] sm:$0xf] %v544
      %593 = vst [vmem:[%s172 + $0x4] sm:$0xf] %v545
      %594 = vst [vmem:[%s172 + $0x8] sm:$0xf] %v546
      %595 = vst [vmem:[%s172 + $0xc] sm:$0xf] %v547
      %596 = vst [vmem:[%s172 + $0x10] sm:$0xf] %v548
      %597 = vst [vmem:[%s172 + $0x14] sm:$0xf] %v549
      %598 = vst [vmem:[%s172 + $0x18] sm:$0xf] %v550
      %599 = vst [vmem:[%s172 + $0x1c] sm:$0xf] %v551
      %600 = vst [vmem:[%s172 + $0x20] sm:$0xf] %v552
      %601 = vst [vmem:[%s172 + $0x24] sm:$0xf] %v553
      %602 = vst [vmem:[%s172 + $0x28] sm:$0xf] %v554
      %603 = vst [vmem:[%s172 + $0x2c] sm:$0xf] %v555
      %604 = vst [vmem:[%s172 + $0x30] sm:$0xf] %v556
      %605 = vst [vmem:[%s172 + $0x34] sm:$0xf] %v557
      %606 = vst [vmem:[%s172 + $0x38] sm:$0xf] %v558
      %607 = vst [vmem:[%s172 + $0x3c] sm:$0xf] %v559
      %608 = vst [vmem:[%s172 + $0x40] sm:$0xf] %v560
      %609 = vst [vmem:[%s172 + $0x44] sm:$0xf] %v561
      %610 = vst [vmem:[%s172 + $0x48] sm:$0xf] %v562
      %611 = vst [vmem:[%s172 + $0x4c] sm:$0xf] %v563
      %612 = vst [vmem:[%s172 + $0x50] sm:$0xf] %v564
      %613 = vst [vmem:[%s172 + $0x54] sm:$0xf] %v565
      %614 = vst [vmem:[%s172 + $0x58] sm:$0xf] %v566
      %615 = vst [vmem:[%s172 + $0x5c] sm:$0xf] %v567
      %s616 = smul.u32 24, %s14
      %p617 = scmp.lt.s32.totalorder %s616, 47
      %s618 = scalar_select %p617, %s616, 47
      %s619 = smul.addr %s618, 4
      %s620 = scalar_lea.vmem %s3, %s619
      // Predicated region
      $region33: #{ggcnn_forward.11} parent=31 // pred_check
        %p621 = pneg %p100
      $region34: #{ggcnn_forward.11} parent=31 // pred_check_branch
        %623 = sbr.rel (%p621) target = $region36
      $region35: #{ggcnn_forward.11} parent=31 // pred_region
        %s624 = smul.u32 24, %s14
      $region36: #{ggcnn_forward.11} parent=31 // pred_fallthru
        _
    $region32: #{ggcnn_forward.11} parent=5 // pred_fallthru
      _
    %p625 = scmp.le.s32.totalorder 2, %s9
    // Predicated region
    $region37: #{ggcnn_forward.11} parent=5 // pred_check
      %p626 = pneg %p625
    $region38: #{ggcnn_forward.11} parent=5 // pred_check_branch
      %628 = sbr.rel (%p626) target = $region40
    $region39: #{ggcnn_forward.11} parent=5 // pred_region
      %s629 = ssub.s32 %s9, 2
      // Predicated region
      $region41: #{ggcnn_forward.11} parent=39 // pred_check
        %p630 = pneg %p106
      $region42: #{ggcnn_forward.11} parent=39 // pred_check_branch
        %632 = sbr.rel (%p630) target = $region44
      $region43: #{ggcnn_forward.11} parent=39 // pred_region
        %s633 = smul.u32 24, %s15
        %p634 = scmp.lt.s32.totalorder %s633, 47
        %s635 = scalar_select %p634, %s633, 47
        %s636 = smul.addr %s635, 4
        %s637 = scalar_lea.vmem %s3, %s636
      $region44: #{ggcnn_forward.11} parent=39 // pred_fallthru
        _
    $region40: #{ggcnn_forward.11} parent=5 // pred_fallthru
      _
  $region6: #{ggcnn_forward.11} parent=0 // loop_footer
    %s13 = sadd.s32 1, %s9
  $region7: #{ggcnn_forward.11} parent=0 // loop_footer_branch
    %8 = sbr.rel target = $region3
  $region8: #{ggcnn_forward.11} parent=0 // loop_exit
    _

// kernel: ggcnn_forward.12
$region0: #{ggcnn_forward.12}
  #allocation0 [shape = 'u32[]', space=smem, size = 0x4, offset = 0x4, fixed_abs, tag = 'smem constant byte address 0x4 - core index']
  #allocation1 [shape = 'u32[144,128]{1,0:T(1,128)}', space=vmem, size = 0x12000, scoped, tag = 'internal scratch']
  %s0 = inlined_call_operand.vmem [shape: bf16[896,144], index: 0, kind: input, shape index: {}]
  %s1 = inlined_call_operand.vmem [shape: bf16[144,288], index: 1, kind: input, shape index: {}]
  %s2 = inlined_call_operand.vmem [shape: f32[1,288], index: 2, kind: input, shape index: {}]
  %s3 = inlined_call_operand.vmem [shape: bf16[896,288], index: 3, kind: output, shape index: {}]
  %s4 = sld [smem:[#allocation0]]
  $region45: #{ggcnn_forward.12} parent=0
    _
  %s6 = ssub.s32 1, %s4
  %s7 = scalar_select 0, %s6, %s4
  loop: start=0, step=1, limit=4
  $region2: #{ggcnn_forward.12} parent=0 // loop_pre_header
    _
  $region3: #{ggcnn_forward.12} parent=0 // loop_header
    %s9 = sphi 0, %s13
    %p10 = scmp.ge.s32.totalorder %s9, 4
    %s19 = sphi 0, %s21
    %s22 = sphi 0, %s19
    %s23 = sphi 0, %s22
    %s39 = sphi 0, %s23
    %s43 = sphi 0, %s43
    %s45 = sphi 0, %s43
    %s46 = sphi 0, %s45
    %s60 = sphi 0, %s46
    %s64 = sphi 0, %s64
    %s66 = sphi 0, %s64
    %s67 = sphi 0, %s66
    %s81 = sphi 0, %s67
    %s87 = sphi 0, %s89
    %s90 = sphi 0, %s87
    %s91 = sphi 0, %s90
    %s107 = sphi 0, %s91
  $region4: #{ggcnn_forward.12} parent=0 // loop_header_branch
    %12 = sbr.rel (%p10) target = $region8
  $region5: #{ggcnn_forward.12} parent=0 // loop_body
    %s14 = ssub.s32 %s9, 1
    %s15 = ssub.s32 %s9, 2
    %s16 = sadd.s32 %s9, 1
    %s17 = ssub.s32 %s9, %s16
    %p18 = scmp.eq.s32.totalorder %s17, 0
    %s20 = sadd.s32 %s19, 1
    %s21 = scalar_select %p18, %s19, %s20
    %p24 = pneg %p18
    %p25 = scmp.eq.s32.totalorder %s9, 1
    %p26 = por %p24, %p25
    %p27 = scmp.ne.s32.totalorder %s19, %s22
    %p28 = scmp.eq.s32.totalorder %s9, 0
    %p29 = por %p27, %p28
    %p30 = scmp.ne.s32.totalorder %s19, %s22
    %p31 = scmp.eq.s32.totalorder %s14, 1
    %p32 = por %p30, %p31
    %p33 = scmp.ne.s32.totalorder %s22, %s23
    %p34 = scmp.eq.s32.totalorder %s14, 0
    %p35 = por %p33, %p34
    %p36 = scmp.ne.s32.totalorder %s22, %s23
    %p37 = scmp.eq.s32.totalorder %s15, 1
    %p38 = por %p36, %p37
    %p40 = scmp.ne.s32.totalorder %s23, %s39
    %p41 = scmp.eq.s32.totalorder %s15, 0
    %p42 = por %p40, %p41
    %s44 = sadd.s32 %s43, 1
    %p47 = scmp.eq.s32.totalorder %s9, 1
    %p48 = scmp.ne.s32.totalorder %s43, %s45
    %p49 = scmp.eq.s32.totalorder %s9, 0
    %p50 = por %p48, %p49
    %p51 = scmp.ne.s32.totalorder %s43, %s45
    %p52 = scmp.eq.s32.totalorder %s14, 1
    %p53 = por %p51, %p52
    %p54 = scmp.ne.s32.totalorder %s45, %s46
    %p55 = scmp.eq.s32.totalorder %s14, 0
    %p56 = por %p54, %p55
    %p57 = scmp.ne.s32.totalorder %s45, %s46
    %p58 = scmp.eq.s32.totalorder %s15, 1
    %p59 = por %p57, %p58
    %p61 = scmp.ne.s32.totalorder %s46, %s60
    %p62 = scmp.eq.s32.totalorder %s15, 0
    %p63 = por %p61, %p62
    %s65 = sadd.s32 %s64, 1
    %p68 = scmp.eq.s32.totalorder %s9, 1
    %p69 = scmp.ne.s32.totalorder %s64, %s66
    %p70 = scmp.eq.s32.totalorder %s9, 0
    %p71 = por %p69, %p70
    %p72 = scmp.ne.s32.totalorder %s64, %s66
    %p73 = scmp.eq.s32.totalorder %s14, 1
    %p74 = por %p72, %p73
    %p75 = scmp.ne.s32.totalorder %s66, %s67
    %p76 = scmp.eq.s32.totalorder %s14, 0
    %p77 = por %p75, %p76
    %p78 = scmp.ne.s32.totalorder %s66, %s67
    %p79 = scmp.eq.s32.totalorder %s15, 1
    %p80 = por %p78, %p79
    %p82 = scmp.ne.s32.totalorder %s67, %s81
    %p83 = scmp.eq.s32.totalorder %s15, 0
    %p84 = por %p82, %p83
    %s85 = ssub.s32 %s9, %s16
    %p86 = scmp.eq.s32.totalorder %s85, 0
    %s88 = sadd.s32 %s87, 1
    %s89 = scalar_select %p86, %s87, %s88
    %p92 = pneg %p86
    %p93 = scmp.eq.s32.totalorder %s9, 1
    %p94 = por %p92, %p93
    %p95 = scmp.ne.s32.totalorder %s87, %s90
    %p96 = scmp.eq.s32.totalorder %s9, 0
    %p97 = por %p95, %p96
    %p98 = scmp.ne.s32.totalorder %s87, %s90
    %p99 = scmp.eq.s32.totalorder %s14, 1
    %p100 = por %p98, %p99
    %p101 = scmp.ne.s32.totalorder %s90, %s91
    %p102 = scmp.eq.s32.totalorder %s14, 0
    %p103 = por %p101, %p102
    %p104 = scmp.ne.s32.totalorder %s90, %s91
    %p105 = scmp.eq.s32.totalorder %s15, 1
    %p106 = por %p104, %p105
    %p108 = scmp.ne.s32.totalorder %s91, %s107
    %p109 = scmp.eq.s32.totalorder %s15, 0
    %p110 = por %p108, %p109
    %p111 = scmp.le.s32.totalorder 1, %s9
    %p112 = scmp.lt.s32.totalorder %s9, 3
    %p113 = pnand %p111, %p112
    %p114 = pneg %p113
    // Predicated region
    $region9: #{ggcnn_forward.12} parent=5 // pred_check
      _
    $region10: #{ggcnn_forward.12} parent=5 // pred_check_branch
      %116 = sbr.rel (%p113) target = $region12
    $region11: #{ggcnn_forward.12} parent=5 // pred_region
      %s117 = ssub.s32 %s9, 1
      // Predicated region
      $region13: #{ggcnn_forward.12} parent=11 // pred_check
        %p118 = pneg %p56
      $region14: #{ggcnn_forward.12} parent=11 // pred_check_branch
        %120 = sbr.rel (%p118) target = $region16
      $region15: #{ggcnn_forward.12} parent=11 // pred_region
        _
      $region16: #{ggcnn_forward.12} parent=11 // pred_fallthru
        _
      // Predicated region
      $region17: #{ggcnn_forward.12} parent=11 // pred_check
        %p121 = pneg %p77
      $region18: #{ggcnn_forward.12} parent=11 // pred_check_branch
        %123 = sbr.rel (%p121) target = $region20
      $region19: #{ggcnn_forward.12} parent=11 // pred_region
        _
      $region20: #{ggcnn_forward.12} parent=11 // pred_fallthru
        _
    $region12: #{ggcnn_forward.12} parent=5 // pred_fallthru
      _
    %p124 = scmp.lt.s32.totalorder %s9, 2
    // Predicated region
    $region21: #{ggcnn_forward.12} parent=5 // pred_check
      %p125 = pneg %p124
    $region22: #{ggcnn_forward.12} parent=5 // pred_check_branch
      %127 = sbr.rel (%p125) target = $region24
    $region23: #{ggcnn_forward.12} parent=5 // pred_region
      // Predicated region
      $region25: #{ggcnn_forward.12} parent=23 // pred_check
        %p128 = pneg %p29
      $region26: #{ggcnn_forward.12} parent=23 // pred_check_branch
        %130 = sbr.rel (%p128) target = $region28
      $region27: #{ggcnn_forward.12} parent=23 // pred_region
        %s131 = smul.u32 56, %s9
        %p132 = scmp.lt.s32.totalorder %s131, 111
        %s133 = scalar_select %p132, %s131, 111
        %s134 = smul.addr %s133, 2
        %s135 = smul.addr %s134, 4
        %s136 = scalar_lea.vmem %s0, %s135
        %s137 = smul.u32 56, %s9
      $region28: #{ggcnn_forward.12} parent=23 // pred_fallthru
        _
    $region24: #{ggcnn_forward.12} parent=5 // pred_fallthru
      _
    %p138 = scmp.le.s32.totalorder 1, %s9
    %p139 = scmp.lt.s32.totalorder %s9, 3
    %p140 = pnand %p138, %p139
    %p141 = pneg %p140
    // Predicated region
    $region29: #{ggcnn_forward.12} parent=5 // pred_check
      _
    $region30: #{ggcnn_forward.12} parent=5 // pred_check_branch
      %143 = sbr.rel (%p140) target = $region32
    $region31: #{ggcnn_forward.12} parent=5 // pred_region
      %s144 = ssub.s32 %s9, 1
      %s145 = smul.u32 56, %s14
      %p146 = scmp.lt.s32.totalorder %s145, 111
      %s147 = scalar_select %p146, %s145, 111
      %s148 = smul.addr %s147, 2
      %s149 = smul.addr %s148, 4
      %s150 = scalar_lea.vmem %s0, %s149
      %p151 = pneg %p35
      %p152 = pneg %p32
      %p153 = pneg %p56
      %p154 = pneg %p53
      %p155 = pneg %p77
      %p156 = pneg %p74
      %p157 = pneg %p103
      %p158 = pneg %p100
      %s159 = smul.u32 56, %s14
      %p160 = scmp.lt.s32.totalorder %s159, 111
      %s161 = scalar_select %p160, %s159, 111
      %s162 = smul.addr %s161, 3
      %s163 = smul.addr %s162, 4
      %s164 = scalar_lea.vmem %s3, %s163
      %s165 = smul.u32 56, %s14
      %p166 = scmp.lt.s32.totalorder %s165, 111
      %s167 = scalar_select %p166, %s165, 111
      %s168 = smul.addr %s167, 2
      %s169 = smul.addr %s168, 4
      %s170 = scalar_lea.vmem %s0, %s169
      %s171 = smul.u32 56, %s14
      %s172 = smul.u32 56, %s14
      %p173 = scmp.lt.s32.totalorder %s172, 111
      %s174 = scalar_select %p173, %s172, 111
      %s175 = smul.addr %s174, 3
      %s176 = smul.addr %s175, 4
      %s177 = scalar_lea.vmem %s3, %s176
      %s178 = smul.u32 56, %s14
      %v180 = vld [vmem:[%s170] sm:$0xff]
      %v181 = vld [vmem:[%s170 + $0x8] sm:$0xff]
      %v182 = vld [vmem:[%s170 + $0x10] sm:$0xff]
      %v183 = vld [vmem:[%s170 + $0x18] sm:$0xff]
      %v184 = vld [vmem:[%s170 + $0x20] sm:$0xff]
      %v185 = vld [vmem:[%s170 + $0x28] sm:$0xff]
      %v186 = vld [vmem:[%s170 + $0x30] sm:$0xff]
      %v187 = vld [vmem:[%s170 + $0x38] sm:$0xff]
      %v188 = vld [vmem:[%s170 + $0x40] sm:$0xff]
      %v189 = vld [vmem:[%s170 + $0x48] sm:$0xff]
      %v190 = vld [vmem:[%s170 + $0x50] sm:$0xff]
      %v191 = vld [vmem:[%s170 + $0x58] sm:$0xff]
      %v192 = vld [vmem:[%s170 + $0x60] sm:$0xff]
      %v193 = vld [vmem:[%s170 + $0x68] sm:$0xff]
      %v194 = vld [vmem:[%s170 + $0x70] sm:$0xff]
      %v195 = vld [vmem:[%s170 + $0x78] sm:$0xff]
      %v196 = vld [vmem:[%s170 + $0x80] sm:$0xff]
      %v197 = vld [vmem:[%s170 + $0x88] sm:$0xff]
      %v198 = vld [vmem:[%s170 + $0x90] sm:$0xff]
      %v199 = vld [vmem:[%s170 + $0x98] sm:$0xff]
      %v200 = vld [vmem:[%s170 + $0xa0] sm:$0xff]
      %v201 = vld [vmem:[%s170 + $0xa8] sm:$0xff]
      %v202 = vld [vmem:[%s170 + $0xb0] sm:$0xff]
      %v203 = vld [vmem:[%s170 + $0xb8] sm:$0xff]
      %v204 = vld [vmem:[%s170 + $0xc0] sm:$0xff]
      %v205 = vld [vmem:[%s170 + $0xc8] sm:$0xff]
      %v206 = vld [vmem:[%s170 + $0xd0] sm:$0xff]
      %v207 = vld [vmem:[%s170 + $0xd8] sm:$0xff]
      %v208 = vld [vmem:[%s170 + $0xe0] sm:$0xff]
      %v209 = vld [vmem:[%s170 + $0xe8] sm:$0xff]
      %v210 = vld [vmem:[%s170 + $0xf0] sm:$0xff]
      %v211 = vld [vmem:[%s170 + $0xf8] sm:$0xff]
      %v212 = vld [vmem:[%s170 + $0x100] sm:$0xff]
      %v213 = vld [vmem:[%s170 + $0x108] sm:$0xff]
      %v214 = vld [vmem:[%s170 + $0x110] sm:$0xff]
      %v215 = vld [vmem:[%s170 + $0x118] sm:$0xff]
      %v216 = vld [vmem:[%s170 + $0x120] sm:$0xff]
      %v217 = vld [vmem:[%s170 + $0x128] sm:$0xff]
      %v218 = vld [vmem:[%s170 + $0x130] sm:$0xff]
      %v219 = vld [vmem:[%s170 + $0x138] sm:$0xff]
      %v220 = vld [vmem:[%s170 + $0x140] sm:$0xff]
      %v221 = vld [vmem:[%s170 + $0x148] sm:$0xff]
      %v222 = vld [vmem:[%s170 + $0x150] sm:$0xff]
      %v223 = vld [vmem:[%s170 + $0x158] sm:$0xff]
      %v224 = vld [vmem:[%s170 + $0x160] sm:$0xff]
      %v225 = vld [vmem:[%s170 + $0x168] sm:$0xff]
      %v226 = vld [vmem:[%s170 + $0x170] sm:$0xff]
      %v227 = vld [vmem:[%s170 + $0x178] sm:$0xff]
      %v228 = vld [vmem:[%s170 + $0x180] sm:$0xff]
      %v229 = vld [vmem:[%s170 + $0x188] sm:$0xff]
      %v230 = vld [vmem:[%s170 + $0x190] sm:$0xff]
      %v231 = vld [vmem:[%s170 + $0x198] sm:$0xff]
      %v232 = vld [vmem:[%s170 + $0x1a0] sm:$0xff]
      %v233 = vld [vmem:[%s170 + $0x1a8] sm:$0xff]
      %v234 = vld [vmem:[%s170 + $0x1b0] sm:$0xff]
      %v235 = vld [vmem:[%s170 + $0x1b8] sm:$0xff]
      %v236 = vld [vmem:[%s1] sm:$0xff]
      %v237 = vld [vmem:[%s1 + $0x8] sm:$0xf]
      %v238 = vld [vmem:[%s1 + $0xc] sm:$0xff]
      %v239 = vld [vmem:[%s1 + $0x14] sm:$0xf]
      %v240 = vld [vmem:[%s1 + $0x18] sm:$0xff]
      %v241 = vld [vmem:[%s1 + $0x20] sm:$0xf]
      %v242 = vld [vmem:[%s1 + $0x24] sm:$0xff]
      %v243 = vld [vmem:[%s1 + $0x2c] sm:$0xf]
      %v244 = vld [vmem:[%s1 + $0x30] sm:$0xff]
      %v245 = vld [vmem:[%s1 + $0x38] sm:$0xf]
      %v246 = vld [vmem:[%s1 + $0x3c] sm:$0xff]
      %v247 = vld [vmem:[%s1 + $0x44] sm:$0xf]
      %v248 = vld [vmem:[%s1 + $0x48] sm:$0xff]
      %v249 = vld [vmem:[%s1 + $0x50] sm:$0xf]
      %v250 = vld [vmem:[%s1 + $0x54] sm:$0xff]
      %v251 = vld [vmem:[%s1 + $0x5c] sm:$0xf]
      %v252 = vld [vmem:[%s1 + $0x60] sm:$0xff]
      %v253 = vld [vmem:[%s1 + $0x68] sm:$0xf]
      %v254 = vld [vmem:[%s1 + $0x6c] sm:$0xff]
      %v255 = vld [vmem:[%s1 + $0x74] sm:$0xf]
      %v256 = vld [vmem:[%s1 + $0x78] sm:$0xff]
      %v257 = vld [vmem:[%s1 + $0x80] sm:$0xf]
      %v258 = vld [vmem:[%s1 + $0x84] sm:$0xff]
      %v259 = vld [vmem:[%s1 + $0x8c] sm:$0xf]
      %v260 = vld [vmem:[%s1 + $0x90] sm:$0xff]
      %v261 = vld [vmem:[%s1 + $0x98] sm:$0xf]
      %v262 = vld [vmem:[%s1 + $0x9c] sm:$0xff]
      %v263 = vld [vmem:[%s1 + $0xa4] sm:$0xf]
      %v264 = vld [vmem:[%s1 + $0xa8] sm:$0xff]
      %v265 = vld [vmem:[%s1 + $0xb0] sm:$0xf]
      %v266 = vld [vmem:[%s1 + $0xb4] sm:$0xff]
      %v267 = vld [vmem:[%s1 + $0xbc] sm:$0xf]
      %v268 = vld [vmem:[%s1 + $0xc0] sm:$0xff]
      %v269 = vld [vmem:[%s1 + $0xc8] sm:$0xf]
      %v270 = vld [vmem:[%s1 + $0xcc] sm:$0xff]
      %v271 = vld [vmem:[%s1 + $0xd4] sm:$0xf]
      %v272 = vld [vmem:[%s2] sm:$0x7]
      %v274 = vlaneseq
      %v275 = vshrl.u32 %v274, 7
      %v276 = vsub.s32 0, %v275
      %v277 = vrot.slane %v272, %v276
      %v278 = vlaneseq
      %v279 = vshrl.u32 %v278, 7
      %v280 = vsub.s32 1, %v279
      %v281 = vrot.slane %v272, %v280
      %v282 = vlaneseq
      %v283 = vshrl.u32 %v282, 7
      %v284 = vsub.s32 2, %v283
      %v285 = vrot.slane %v272, %v284
      %v345 = vunpack.c.l.b16 %v180
      %v346 = vunpack.c.h.b16 %v180
      %v347 = vunpack.c.l.b16 %v181
      %v348 = vunpack.c.h.b16 %v181
      %v349 = vunpack.c.l.b16 %v182
      %v350 = vunpack.c.h.b16 %v182
      %v351 = vunpack.c.l.b16 %v183
      %v352 = vunpack.c.h.b16 %v183
      %v353 = vunpack.c.l.b16 %v184
      %v354 = vunpack.c.h.b16 %v184
      %v355 = vunpack.c.l.b16 %v185
      %v356 = vunpack.c.h.b16 %v185
      %v357 = vunpack.c.l.b16 %v186
      %v358 = vunpack.c.h.b16 %v186
      %v359 = vunpack.c.l.b16 %v187
      %v360 = vunpack.c.h.b16 %v187
      %v361 = vunpack.c.l.b16 %v188
      %v362 = vunpack.c.h.b16 %v188
      %v363 = vunpack.c.l.b16 %v189
      %v364 = vunpack.c.h.b16 %v189
      %v365 = vunpack.c.l.b16 %v190
      %v366 = vunpack.c.h.b16 %v190
      %v367 = vunpack.c.l.b16 %v191
      %v368 = vunpack.c.h.b16 %v191
      %v369 = vunpack.c.l.b16 %v192
      %v370 = vunpack.c.h.b16 %v192
      %v371 = vunpack.c.l.b16 %v193
      %v372 = vunpack.c.h.b16 %v193
      %v373 = vunpack.c.l.b16 %v194
      %v374 = vunpack.c.h.b16 %v194
      %v375 = vunpack.c.l.b16 %v195
      %v376 = vunpack.c.h.b16 %v195
      %v377 = vunpack.c.l.b16 %v196
      %v378 = vunpack.c.h.b16 %v196
      %v379 = vunpack.c.l.b16 %v197
      %v380 = vunpack.c.h.b16 %v197
      %v381 = vunpack.c.l.b16 %v198
      %v382 = vunpack.c.h.b16 %v198
      %v383 = vunpack.c.l.b16 %v199
      %v384 = vunpack.c.h.b16 %v199
      %v385 = vunpack.c.l.b16 %v200
      %v386 = vunpack.c.h.b16 %v200
      %v387 = vunpack.c.l.b16 %v201
      %v388 = vunpack.c.h.b16 %v201
      %v389 = vunpack.c.l.b16 %v202
      %v390 = vunpack.c.h.b16 %v202
      %v391 = vunpack.c.l.b16 %v203
      %v392 = vunpack.c.h.b16 %v203
      %v393 = vunpack.c.l.b16 %v204
      %v394 = vunpack.c.h.b16 %v204
      %v395 = vunpack.c.l.b16 %v205
      %v396 = vunpack.c.h.b16 %v205
      %v397 = vunpack.c.l.b16 %v206
      %v398 = vunpack.c.h.b16 %v206
      %v399 = vunpack.c.l.b16 %v207
      %v400 = vunpack.c.h.b16 %v207
      %v401 = vunpack.c.l.b16 %v208
      %v402 = vunpack.c.h.b16 %v208
      %v403 = vunpack.c.l.b16 %v209
      %v404 = vunpack.c.h.b16 %v209
      %v405 = vunpack.c.l.b16 %v210
      %v406 = vunpack.c.h.b16 %v210
      %v407 = vunpack.c.l.b16 %v211
      %v408 = vunpack.c.h.b16 %v211
      %v409 = vunpack.c.l.b16 %v212
      %v410 = vunpack.c.h.b16 %v212
      %v411 = vunpack.c.l.b16 %v213
      %v412 = vunpack.c.h.b16 %v213
      %v413 = vunpack.c.l.b16 %v214
      %v414 = vunpack.c.h.b16 %v214
      %v415 = vunpack.c.l.b16 %v215
      %v416 = vunpack.c.h.b16 %v215
      %v417 = vunpack.c.l.b16 %v216
      %v418 = vunpack.c.h.b16 %v216
      %v419 = vunpack.c.l.b16 %v217
      %v420 = vunpack.c.h.b16 %v217
      %v421 = vunpack.c.l.b16 %v218
      %v422 = vunpack.c.h.b16 %v218
      %v423 = vunpack.c.l.b16 %v219
      %v424 = vunpack.c.h.b16 %v219
      %v425 = vunpack.c.l.b16 %v220
      %v426 = vunpack.c.h.b16 %v220
      %v427 = vunpack.c.l.b16 %v221
      %v428 = vunpack.c.h.b16 %v221
      %v429 = vunpack.c.l.b16 %v222
      %v430 = vunpack.c.h.b16 %v222
      %v431 = vunpack.c.l.b16 %v223
      %v432 = vunpack.c.h.b16 %v223
      %v433 = vunpack.c.l.b16 %v224
      %v434 = vunpack.c.h.b16 %v224
      %v435 = vunpack.c.l.b16 %v225
      %v436 = vunpack.c.h.b16 %v225
      %v437 = vunpack.c.l.b16 %v226
      %v438 = vunpack.c.h.b16 %v226
      %v439 = vunpack.c.l.b16 %v227
      %v440 = vunpack.c.h.b16 %v227
      %v441 = vunpack.c.l.b16 %v228
      %v442 = vunpack.c.h.b16 %v228
      %v443 = vunpack.c.l.b16 %v229
      %v444 = vunpack.c.h.b16 %v229
      %v445 = vunpack.c.l.b16 %v230
      %v446 = vunpack.c.h.b16 %v230
      %v447 = vunpack.c.l.b16 %v231
      %v448 = vunpack.c.h.b16 %v231
      %v449 = vunpack.c.l.b16 %v232
      %v450 = vunpack.c.h.b16 %v232
      %v451 = vunpack.c.l.b16 %v233
      %v452 = vunpack.c.h.b16 %v233
      %v453 = vunpack.c.l.b16 %v234
      %v454 = vunpack.c.h.b16 %v234
      %v455 = vunpack.c.l.b16 %v235
      %v456 = vunpack.c.h.b16 %v235
      %v457 = vpack.c.b16 %v347, %v345
      %v458 = vpack.c.b16 %v348, %v346
      %v459 = vpack.c.b16 %v351, %v349
      %v460 = vpack.c.b16 %v352, %v350
      %v461 = vpack.c.b16 %v355, %v353
      %v462 = vpack.c.b16 %v356, %v354
      %v463 = vpack.c.b16 %v359, %v357
      %v464 = vpack.c.b16 %v360, %v358
      %v465 = vpack.c.b16 %v363, %v361
      %v466 = vpack.c.b16 %v364, %v362
      %v467 = vpack.c.b16 %v367, %v365
      %v468 = vpack.c.b16 %v368, %v366
      %v469 = vpack.c.b16 %v371, %v369
      %v470 = vpack.c.b16 %v372, %v370
      %v471 = vpack.c.b16 %v375, %v373
      %v472 = vpack.c.b16 %v376, %v374
      %v473 = vpack.c.b16 %v379, %v377
      %v474 = vpack.c.b16 %v380, %v378
      %v475 = vpack.c.b16 %v383, %v381
      %v476 = vpack.c.b16 %v384, %v382
      %v477 = vpack.c.b16 %v387, %v385
      %v478 = vpack.c.b16 %v388, %v386
      %v479 = vpack.c.b16 %v391, %v389
      %v480 = vpack.c.b16 %v392, %v390
      %v481 = vpack.c.b16 %v395, %v393
      %v482 = vpack.c.b16 %v396, %v394
      %v483 = vpack.c.b16 %v399, %v397
      %v484 = vpack.c.b16 %v400, %v398
      %v485 = vpack.c.b16 %v403, %v401
      %v486 = vpack.c.b16 %v404, %v402
      %v487 = vpack.c.b16 %v407, %v405
      %v488 = vpack.c.b16 %v408, %v406
      %v489 = vpack.c.b16 %v411, %v409
      %v490 = vpack.c.b16 %v412, %v410
      %v491 = vpack.c.b16 %v415, %v413
      %v492 = vpack.c.b16 %v416, %v414
      %v493 = vpack.c.b16 %v419, %v417
      %v494 = vpack.c.b16 %v420, %v418
      %v495 = vpack.c.b16 %v423, %v421
      %v496 = vpack.c.b16 %v424, %v422
      %v497 = vpack.c.b16 %v427, %v425
      %v498 = vpack.c.b16 %v428, %v426
      %v499 = vpack.c.b16 %v431, %v429
      %v500 = vpack.c.b16 %v432, %v430
      %v501 = vpack.c.b16 %v435, %v433
      %v502 = vpack.c.b16 %v436, %v434
      %v503 = vpack.c.b16 %v439, %v437
      %v504 = vpack.c.b16 %v440, %v438
      %v505 = vpack.c.b16 %v443, %v441
      %v506 = vpack.c.b16 %v444, %v442
      %v507 = vpack.c.b16 %v447, %v445
      %v508 = vpack.c.b16 %v448, %v446
      %v509 = vpack.c.b16 %v451, %v449
      %v510 = vpack.c.b16 %v452, %v450
      %v511 = vpack.c.b16 %v455, %v453
      %v512 = vpack.c.b16 %v456, %v454
      %v577 = vunpack.c.l.b16 %v236
      %v578 = vunpack.c.h.b16 %v236
      %v579 = vunpack.c.l.b16 %v237
      %v580 = vunpack.c.l.b16 %v238
      %v581 = vunpack.c.h.b16 %v238
      %v582 = vunpack.c.l.b16 %v239
      %v583 = vunpack.c.l.b16 %v240
      %v584 = vunpack.c.h.b16 %v240
      %v585 = vunpack.c.l.b16 %v241
      %v586 = vunpack.c.l.b16 %v242
      %v587 = vunpack.c.h.b16 %v242
      %v588 = vunpack.c.l.b16 %v243
      %v589 = vunpack.c.l.b16 %v244
      %v590 = vunpack.c.h.b16 %v244
      %v591 = vunpack.c.l.b16 %v245
      %v592 = vunpack.c.l.b16 %v246
      %v593 = vunpack.c.h.b16 %v246
      %v594 = vunpack.c.l.b16 %v247
      %v595 = vunpack.c.l.b16 %v248
      %v596 = vunpack.c.h.b16 %v248
      %v597 = vunpack.c.l.b16 %v249
      %v598 = vunpack.c.l.b16 %v250
      %v599 = vunpack.c.h.b16 %v250
      %v600 = vunpack.c.l.b16 %v251
      %v601 = vunpack.c.l.b16 %v252
      %v602 = vunpack.c.h.b16 %v252
      %v603 = vunpack.c.l.b16 %v253
      %v604 = vunpack.c.l.b16 %v254
      %v605 = vunpack.c.h.b16 %v254
      %v606 = vunpack.c.l.b16 %v255
      %v607 = vunpack.c.l.b16 %v256
      %v608 = vunpack.c.h.b16 %v256
      %v609 = vunpack.c.l.b16 %v257
      %v610 = vunpack.c.l.b16 %v258
      %v611 = vunpack.c.h.b16 %v258
      %v612 = vunpack.c.l.b16 %v259
      %v613 = vunpack.c.l.b16 %v260
      %v614 = vunpack.c.h.b16 %v260
      %v615 = vunpack.c.l.b16 %v261
      %v616 = vunpack.c.l.b16 %v262
      %v617 = vunpack.c.h.b16 %v262
      %v618 = vunpack.c.l.b16 %v263
      %v619 = vunpack.c.l.b16 %v264
      %v620 = vunpack.c.h.b16 %v264
      %v621 = vunpack.c.l.b16 %v265
      %v622 = vunpack.c.l.b16 %v266
      %v623 = vunpack.c.h.b16 %v266
      %v624 = vunpack.c.l.b16 %v267
      %v625 = vunpack.c.l.b16 %v268
      %v626 = vunpack.c.h.b16 %v268
      %v627 = vunpack.c.l.b16 %v269
      %v628 = vunpack.c.l.b16 %v270
      %v629 = vunpack.c.h.b16 %v270
      %v630 = vunpack.c.l.b16 %v271
      %v631 = vpack.c.b16 %v580, %v577
      %v632 = vpack.c.b16 %v581, %v578
      %v633 = vpack.c.b16 %v582, %v579
      %v634 = vpack.c.b16 %v586, %v583
      %v635 = vpack.c.b16 %v587, %v584
      %v636 = vpack.c.b16 %v588, %v585
      %v637 = vpack.c.b16 %v592, %v589
      %v638 = vpack.c.b16 %v593, %v590
      %v639 = vpack.c.b16 %v594, %v591
      %v640 = vpack.c.b16 %v598, %v595
      %v641 = vpack.c.b16 %v599, %v596
      %v642 = vpack.c.b16 %v600, %v597
      %v643 = vpack.c.b16 %v604, %v601
      %v644 = vpack.c.b16 %v605, %v602
      %v645 = vpack.c.b16 %v606, %v603
      %v646 = vpack.c.b16 %v610, %v607
      %v647 = vpack.c.b16 %v611, %v608
      %v648 = vpack.c.b16 %v612, %v609
      %v649 = vpack.c.b16 %v616, %v613
      %v650 = vpack.c.b16 %v617, %v614
      %v651 = vpack.c.b16 %v618, %v615
      %v652 = vpack.c.b16 %v622, %v619
      %v653 = vpack.c.b16 %v623, %v620
      %v654 = vpack.c.b16 %v624, %v621
      %v655 = vpack.c.b16 %v628, %v625
      %v656 = vpack.c.b16 %v629, %v626
      %v657 = vpack.c.b16 %v630, %v627
      %vm685 = vcmask 130048
      %v687 = vsel %vm685, %v458, 0
      %v690 = vsel %vm685, %v460, 0
      %v693 = vsel %vm685, %v462, 0
      %v696 = vsel %vm685, %v464, 0
      %v699 = vsel %vm685, %v466, 0
      %v702 = vsel %vm685, %v468, 0
      %v705 = vsel %vm685, %v470, 0
      %v708 = vsel %vm685, %v472, 0
      %v711 = vsel %vm685, %v474, 0
      %v714 = vsel %vm685, %v476, 0
      %v717 = vsel %vm685, %v478, 0
      %v720 = vsel %vm685, %v480, 0
      %v723 = vsel %vm685, %v482, 0
      %v726 = vsel %vm685, %v484, 0
      %v729 = vsel %vm685, %v486, 0
      %v732 = vsel %vm685, %v488, 0
      %v735 = vsel %vm685, %v490, 0
      %v738 = vsel %vm685, %v492, 0
      %v741 = vsel %vm685, %v494, 0
      %v744 = vsel %vm685, %v496, 0
      %v747 = vsel %vm685, %v498, 0
      %v750 = vsel %vm685, %v500, 0
      %v753 = vsel %vm685, %v502, 0
      %v756 = vsel %vm685, %v504, 0
      %v759 = vsel %vm685, %v506, 0
      %v762 = vsel %vm685, %v508, 0
      %v765 = vsel %vm685, %v510, 0
      %v768 = vsel %vm685, %v512, 0
      %770 = vmatprep.subr.bf16.mxu0 %v632
      %771 = vmatpush1.bf16.msra.mxu0 %v631
      %772 = vmatprep.subr.bf16.mxu0 %v635
      %773 = vmatpush1.bf16.msra.mxu0 %v634
      %774 = vmatprep.subr.bf16.mxu0 %v638
      %775 = vmatpush1.bf16.msra.mxu0 %v637
      %776 = vmatprep.subr.bf16.mxu0 %v641
      %777 = vmatpush1.bf16.msra.mxu0 %v640
      %778 = vmatprep.subr.bf16.mxu0 %v644
      %779 = vmatpush1.bf16.msra.mxu0 %v643
      %780 = vmatprep.subr.bf16.mxu0 %v647
      %781 = vmatpush1.bf16.msra.mxu0 %v646
      %782 = vmatprep.subr.bf16.mxu0 %v650
      %783 = vmatpush1.bf16.msra.mxu0 %v649
      %784 = vmatprep.subr.bf16.mxu0 %v653
      %785 = vmatpush1.bf16.msra.mxu0 %v652
      %786 = vmatprep.subr.bf16.mxu0 %v656
      %787 = vmatpush1.bf16.msra.mxu0 %v655
      %788 = vmatprep.subr.bf16.mxu0 0
      %789 = vmatpush1.bf16.msra.mxu0 0
      %790 = vmatprep.subr.bf16.mxu0 0
      %791 = vmatpush1.bf16.msra.mxu0 0
      %792 = vmatprep.subr.bf16.mxu0 0
      %793 = vmatpush1.bf16.msra.mxu0 0
      %794 = vmatprep.subr.bf16.mxu0 0
      %795 = vmatpush1.bf16.msra.mxu0 0
      %796 = vmatprep.subr.bf16.mxu0 0
      %797 = vmatpush1.bf16.msra.mxu0 0
      %798 = vmatprep.subr.bf16.mxu0 0
      %799 = vmatpush1.bf16.msra.mxu0 0
      %800 = vmatprep.subr.bf16.mxu0 0
      %801 = vmatpush1.bf16.msra.mxu0 0
      %802 = vmatprep.mubr.bf16.mxu0 %v687
      %803 = vmatmul.mubr.bf16.gmra.mrb[0].mxu0 %v457
      %v804 = vpop.f32.mrb[0].mxu0
      %v805 = vadd.f32 %v277, %v804
      %v806 = vpop.f32.mrb[0].mxu0
      %v807 = vadd.f32 %v281, %v806
      %v808 = vpop.f32.mrb[0].mxu0
      %v809 = vadd.f32 %v277, %v808
      %v810 = vpop.f32.mrb[0].mxu0
      %v811 = vadd.f32 %v281, %v810
      %812 = vmatprep.mubr.bf16.mxu0 %v690
      %813 = vmatmul.mubr.bf16.gmra.mrb[0].mxu0 %v459
      %v814 = vpop.f32.mrb[0].mxu0
      %v815 = vadd.f32 %v277, %v814
      %v816 = vpop.f32.mrb[0].mxu0
      %v817 = vadd.f32 %v281, %v816
      %v818 = vpop.f32.mrb[0].mxu0
      %v819 = vadd.f32 %v277, %v818
      %v820 = vpop.f32.mrb[0].mxu0
      %v821 = vadd.f32 %v281, %v820
      %822 = vmatprep.mubr.bf16.mxu0 %v693
      %823 = vmatmul.mubr.bf16.gmra.mrb[0].mxu0 %v461
      %v824 = vpop.f32.mrb[0].mxu0
      %v825 = vadd.f32 %v277, %v824
      %v826 = vpop.f32.mrb[0].mxu0
      %v827 = vadd.f32 %v281, %v826
      %v828 = vpop.f32.mrb[0].mxu0
      %v829 = vadd.f32 %v277, %v828
      %v830 = vpop.f32.mrb[0].mxu0
      %v831 = vadd.f32 %v281, %v830
      %832 = vmatprep.mubr.bf16.mxu0 %v696
      %833 = vmatmul.mubr.bf16.gmra.mrb[0].mxu0 %v463
      %v834 = vpop.f32.mrb[0].mxu0
      %v835 = vadd.f32 %v277, %v834
      %v836 = vpop.f32.mrb[0].mxu0
      %v837 = vadd.f32 %v281, %v836
      %v838 = vpop.f32.mrb[0].mxu0
      %v839 = vadd.f32 %v277, %v838
      %v840 = vpop.f32.mrb[0].mxu0
      %v841 = vadd.f32 %v281, %v840
      %842 = vmatprep.mubr.bf16.mxu0 %v699
      %843 = vmatmul.mubr.bf16.gmra.mrb[0].mxu0 %v465
      %v844 = vpop.f32.mrb[0].mxu0
      %v845 = vadd.f32 %v277, %v844
      %v846 = vpop.f32.mrb[0].mxu0
      %v847 = vadd.f32 %v281, %v846
      %v848 = vpop.f32.mrb[0].mxu0
      %v849 = vadd.f32 %v277, %v848
      %v850 = vpop.f32.mrb[0].mxu0
      %v851 = vadd.f32 %v281, %v850
      %852 = vmatprep.mubr.bf16.mxu0 %v702
      %853 = vmatmul.mubr.bf16.gmra.mrb[0].mxu0 %v467
      %v854 = vpop.f32.mrb[0].mxu0
      %v855 = vadd.f32 %v277, %v854
      %v856 = vpop.f32.mrb[0].mxu0
      %v857 = vadd.f32 %v281, %v856
      %v858 = vpop.f32.mrb[0].mxu0
      %v859 = vadd.f32 %v277, %v858
      %v860 = vpop.f32.mrb[0].mxu0
      %v861 = vadd.f32 %v281, %v860
      %862 = vmatprep.mubr.bf16.mxu0 %v705
      %863 = vmatmul.mubr.bf16.gmra.mrb[0].mxu0 %v469
      %v864 = vpop.f32.mrb[0].mxu0
      %v865 = vadd.f32 %v277, %v864
      %v866 = vpop.f32.mrb[0].mxu0
      %v867 = vadd.f32 %v281, %v866
      %v868 = vpop.f32.mrb[0].mxu0
      %v869 = vadd.f32 %v277, %v868
      %v870 = vpop.f32.mrb[0].mxu0
      %v871 = vadd.f32 %v281, %v870
      %872 = vmatprep.mubr.bf16.mxu0 %v708
      %873 = vmatmul.mubr.bf16.gmra.mrb[0].mxu0 %v471
      %v874 = vpop.f32.mrb[0].mxu0
      %v875 = vadd.f32 %v277, %v874
      %v876 = vpop.f32.mrb[0].mxu0
      %v877 = vadd.f32 %v281, %v876
      %v878 = vpop.f32.mrb[0].mxu0
      %v879 = vadd.f32 %v277, %v878
      %v880 = vpop.f32.mrb[0].mxu0
      %v881 = vadd.f32 %v281, %v880
      %882 = vmatprep.mubr.bf16.mxu0 %v711
      %883 = vmatmul.mubr.bf16.gmra.mrb[0].mxu0 %v473
      %v884 = vpop.f32.mrb[0].mxu0
      %v885 = vadd.f32 %v277, %v884
      %v886 = vpop.f32.mrb[0].mxu0
      %v887 = vadd.f32 %v281, %v886
      %v888 = vpop.f32.mrb[0].mxu0
      %v889 = vadd.f32 %v277, %v888
      %v890 = vpop.f32.mrb[0].mxu0
      %v891 = vadd.f32 %v281, %v890
      %892 = vmatprep.mubr.bf16.mxu0 %v714
      %893 = vmatmul.mubr.bf16.gmra.mrb[0].mxu0 %v475
      %v894 = vpop.f32.mrb[0].mxu0
      %v895 = vadd.f32 %v277, %v894
      %v896 = vpop.f32.mrb[0].mxu0
      %v897 = vadd.f32 %v281, %v896
      %v898 = vpop.f32.mrb[0].mxu0
      %v899 = vadd.f32 %v277, %v898
      %v900 = vpop.f32.mrb[0].mxu0
      %v901 = vadd.f32 %v281, %v900
      %902 = vmatprep.mubr.bf16.mxu0 %v717
      %903 = vmatmul.mubr.bf16.gmra.mrb[0].mxu0 %v477
      %v904 = vpop.f32.mrb[0].mxu0
      %v905 = vadd.f32 %v277, %v904
      %v906 = vpop.f32.mrb[0].mxu0
      %v907 = vadd.f32 %v281, %v906
      %v908 = vpop.f32.mrb[0].mxu0
      %v909 = vadd.f32 %v277, %v908
      %v910 = vpop.f32.mrb[0].mxu0
      %v911 = vadd.f32 %v281, %v910
      %912 = vmatprep.mubr.bf16.mxu0 %v720
      %913 = vmatmul.mubr.bf16.gmra.mrb[0].mxu0 %v479
      %v914 = vpop.f32.mrb[0].mxu0
      %v915 = vadd.f32 %v277, %v914
      %v916 = vpop.f32.mrb[0].mxu0
      %v917 = vadd.f32 %v281, %v916
      %v918 = vpop.f32.mrb[0].mxu0
      %v919 = vadd.f32 %v277, %v918
      %v920 = vpop.f32.mrb[0].mxu0
      %v921 = vadd.f32 %v281, %v920
      %922 = vmatprep.mubr.bf16.mxu0 %v723
      %923 = vmatmul.mubr.bf16.gmra.mrb[0].mxu0 %v481
      %v924 = vpop.f32.mrb[0].mxu0
      %v925 = vadd.f32 %v277, %v924
      %v926 = vpop.f32.mrb[0].mxu0
      %v927 = vadd.f32 %v281, %v926
      %v928 = vpop.f32.mrb[0].mxu0
      %v929 = vadd.f32 %v277, %v928
      %v930 = vpop.f32.mrb[0].mxu0
      %v931 = vadd.f32 %v281, %v930
      %932 = vmatprep.mubr.bf16.mxu0 %v726
      %933 = vmatmul.mubr.bf16.gmra.mrb[0].mxu0 %v483
      %v934 = vpop.f32.mrb[0].mxu0
      %v935 = vadd.f32 %v277, %v934
      %v936 = vpop.f32.mrb[0].mxu0
      %v937 = vadd.f32 %v281, %v936
      %v938 = vpop.f32.mrb[0].mxu0
      %v939 = vadd.f32 %v277, %v938
      %v940 = vpop.f32.mrb[0].mxu0
      %v941 = vadd.f32 %v281, %v940
      %942 = vmatprep.mubr.bf16.mxu0 %v729
      %943 = vmatmul.mubr.bf16.gmra.mrb[0].mxu0 %v485
      %v944 = vpop.f32.mrb[0].mxu0
      %v945 = vadd.f32 %v277, %v944
      %v946 = vpop.f32.mrb[0].mxu0
      %v947 = vadd.f32 %v281, %v946
      %v948 = vpop.f32.mrb[0].mxu0
      %v949 = vadd.f32 %v277, %v948
      %v950 = vpop.f32.mrb[0].mxu0
      %v951 = vadd.f32 %v281, %v950
      %952 = vmatprep.mubr.bf16.mxu0 %v732
      %953 = vmatmul.mubr.bf16.gmra.mrb[0].mxu0 %v487
      %v954 = vpop.f32.mrb[0].mxu0
      %v955 = vadd.f32 %v277, %v954
      %v956 = vpop.f32.mrb[0].mxu0
      %v957 = vadd.f32 %v281, %v956
      %v958 = vpop.f32.mrb[0].mxu0
      %v959 = vadd.f32 %v277, %v958
      %v960 = vpop.f32.mrb[0].mxu0
      %v961 = vadd.f32 %v281, %v960
      %962 = vmatprep.mubr.bf16.mxu0 %v735
      %963 = vmatmul.mubr.bf16.gmra.mrb[0].mxu0 %v489
      %v964 = vpop.f32.mrb[0].mxu0
      %v965 = vadd.f32 %v277, %v964
      %v966 = vpop.f32.mrb[0].mxu0
      %v967 = vadd.f32 %v281, %v966
      %v968 = vpop.f32.mrb[0].mxu0
      %v969 = vadd.f32 %v277, %v968
      %v970 = vpop.f32.mrb[0].mxu0
      %v971 = vadd.f32 %v281, %v970
      %972 = vmatprep.mubr.bf16.mxu0 %v738
      %973 = vmatmul.mubr.bf16.gmra.mrb[0].mxu0 %v491
      %v974 = vpop.f32.mrb[0].mxu0
      %v975 = vadd.f32 %v277, %v974
      %v976 = vpop.f32.mrb[0].mxu0
      %v977 = vadd.f32 %v281, %v976
      %v978 = vpop.f32.mrb[0].mxu0
      %v979 = vadd.f32 %v277, %v978
      %v980 = vpop.f32.mrb[0].mxu0
      %v981 = vadd.f32 %v281, %v980
      %982 = vmatprep.mubr.bf16.mxu0 %v741
      %983 = vmatmul.mubr.bf16.gmra.mrb[0].mxu0 %v493
      %v984 = vpop.f32.mrb[0].mxu0
      %v985 = vadd.f32 %v277, %v984
      %v986 = vpop.f32.mrb[0].mxu0
      %v987 = vadd.f32 %v281, %v986
      %v988 = vpop.f32.mrb[0].mxu0
      %v989 = vadd.f32 %v277, %v988
      %v990 = vpop.f32.mrb[0].mxu0
      %v991 = vadd.f32 %v281, %v990
      %992 = vmatprep.mubr.bf16.mxu0 %v744
      %993 = vmatmul.mubr.bf16.gmra.mrb[0].mxu0 %v495
      %v994 = vpop.f32.mrb[0].mxu0
      %v995 = vadd.f32 %v277, %v994
      %v996 = vpop.f32.mrb[0].mxu0
      %v997 = vadd.f32 %v281, %v996
      %v998 = vpop.f32.mrb[0].mxu0
      %v999 = vadd.f32 %v277, %v998
      %v1000 = vpop.f32.mrb[0].mxu0
      %v1001 = vadd.f32 %v281, %v1000
      %1002 = vmatprep.mubr.bf16.mxu0 %v747
      %1003 = vmatmul.mubr.bf16.gmra.mrb[0].mxu0 %v497
      %v1004 = vpop.f32.mrb[0].mxu0
      %v1005 = vadd.f32 %v277, %v1004
      %v1006 = vpop.f32.mrb[0].mxu0
      %v1007 = vadd.f32 %v281, %v1006
      %v1008 = vpop.f32.mrb[0].mxu0
      %v1009 = vadd.f32 %v277, %v1008
      %v1010 = vpop.f32.mrb[0].mxu0
      %v1011 = vadd.f32 %v281, %v1010
      %1012 = vmatprep.mubr.bf16.mxu0 %v750
      %1013 = vmatmul.mubr.bf16.gmra.mrb[0].mxu0 %v499
      %v1014 = vpop.f32.mrb[0].mxu0
      %v1015 = vadd.f32 %v277, %v1014
      %v1016 = vpop.f32.mrb[0].mxu0
      %v1017 = vadd.f32 %v281, %v1016
      %v1018 = vpop.f32.mrb[0].mxu0
      %v1019 = vadd.f32 %v277, %v1018
      %v1020 = vpop.f32.mrb[0].mxu0
      %v1021 = vadd.f32 %v281, %v1020
      %1022 = vmatprep.mubr.bf16.mxu0 %v753
      %1023 = vmatmul.mubr.bf16.gmra.mrb[0].mxu0 %v501
      %v1024 = vpop.f32.mrb[0].mxu0
      %v1025 = vadd.f32 %v277, %v1024
      %v1026 = vpop.f32.mrb[0].mxu0
      %v1027 = vadd.f32 %v281, %v1026
      %v1028 = vpop.f32.mrb[0].mxu0
      %v1029 = vadd.f32 %v277, %v1028
      %v1030 = vpop.f32.mrb[0].mxu0
      %v1031 = vadd.f32 %v281, %v1030
      %1032 = vmatprep.mubr.bf16.mxu0 %v756
      %1033 = vmatmul.mubr.bf16.gmra.mrb[0].mxu0 %v503
      %v1034 = vpop.f32.mrb[0].mxu0
      %v1035 = vadd.f32 %v277, %v1034
      %v1036 = vpop.f32.mrb[0].mxu0
      %v1037 = vadd.f32 %v281, %v1036
      %v1038 = vpop.f32.mrb[0].mxu0
      %v1039 = vadd.f32 %v277, %v1038
      %v1040 = vpop.f32.mrb[0].mxu0
      %v1041 = vadd.f32 %v281, %v1040
      %1042 = vmatprep.mubr.bf16.mxu0 %v759
      %1043 = vmatmul.mubr.bf16.gmra.mrb[0].mxu0 %v505
      %v1044 = vpop.f32.mrb[0].mxu0
      %v1045 = vadd.f32 %v277, %v1044
      %v1046 = vpop.f32.mrb[0].mxu0
      %v1047 = vadd.f32 %v281, %v1046
      %v1048 = vpop.f32.mrb[0].mxu0
      %v1049 = vadd.f32 %v277, %v1048
      %v1050 = vpop.f32.mrb[0].mxu0
      %v1051 = vadd.f32 %v281, %v1050
      %1052 = vmatprep.mubr.bf16.mxu0 %v762
      %1053 = vmatmul.mubr.bf16.gmra.mrb[0].mxu0 %v507
      %v1054 = vpop.f32.mrb[0].mxu0
      %v1055 = vadd.f32 %v277, %v1054
      %v1056 = vpop.f32.mrb[0].mxu0
      %v1057 = vadd.f32 %v281, %v1056
      %v1058 = vpop.f32.mrb[0].mxu0
      %v1059 = vadd.f32 %v277, %v1058
      %v1060 = vpop.f32.mrb[0].mxu0
      %v1061 = vadd.f32 %v281, %v1060
      %1062 = vmatprep.mubr.bf16.mxu0 %v765
      %1063 = vmatmul.mubr.bf16.gmra.mrb[0].mxu0 %v509
      %v1064 = vpop.f32.mrb[0].mxu0
      %v1065 = vadd.f32 %v277, %v1064
      %v1066 = vpop.f32.mrb[0].mxu0
      %v1067 = vadd.f32 %v281, %v1066
      %v1068 = vpop.f32.mrb[0].mxu0
      %v1069 = vadd.f32 %v277, %v1068
      %v1070 = vpop.f32.mrb[0].mxu0
      %v1071 = vadd.f32 %v281, %v1070
      %1072 = vmatprep.mubr.bf16.mxu0 %v768
      %1073 = vmatmul.mubr.bf16.gmra.mrb[0].mxu0 %v511
      %v1074 = vpop.f32.mrb[0].mxu0
      %v1075 = vadd.f32 %v277, %v1074
      %v1076 = vpop.f32.mrb[0].mxu0
      %v1077 = vadd.f32 %v281, %v1076
      %v1078 = vpop.f32.mrb[0].mxu0
      %v1079 = vadd.f32 %v277, %v1078
      %v1080 = vpop.f32.mrb[0].mxu0
      %v1081 = vadd.f32 %v281, %v1080
      %1082 = vdwg.mxu0
      %1083 = vmatprep.subr.bf16.mxu0 0
      %1084 = vmatpush1.bf16.msra.mxu0 %v633
      %1085 = vmatprep.subr.bf16.mxu0 0
      %1086 = vmatpush1.bf16.msra.mxu0 %v636
      %1087 = vmatprep.subr.bf16.mxu0 0
      %1088 = vmatpush1.bf16.msra.mxu0 %v639
      %1089 = vmatprep.subr.bf16.mxu0 0
      %1090 = vmatpush1.bf16.msra.mxu0 %v642
      %1091 = vmatprep.subr.bf16.mxu0 0
      %1092 = vmatpush1.bf16.msra.mxu0 %v645
      %1093 = vmatprep.subr.bf16.mxu0 0
      %1094 = vmatpush1.bf16.msra.mxu0 %v648
      %1095 = vmatprep.subr.bf16.mxu0 0
      %1096 = vmatpush1.bf16.msra.mxu0 %v651
      %1097 = vmatprep.subr.bf16.mxu0 0
      %1098 = vmatpush1.bf16.msra.mxu0 %v654
      %1099 = vmatprep.subr.bf16.mxu0 0
      %1100 = vmatpush1.bf16.msra.mxu0 %v657
      %1101 = vmatprep.subr.bf16.mxu0 0
      %1102 = vmatpush1.bf16.msra.mxu0 0
      %1103 = vmatprep.subr.bf16.mxu0 0
      %1104 = vmatpush1.bf16.msra.mxu0 0
      %1105 = vmatprep.subr.bf16.mxu0 0
      %1106 = vmatpush1.bf16.msra.mxu0 0
      %1107 = vmatprep.subr.bf16.mxu0 0
      %1108 = vmatpush1.bf16.msra.mxu0 0
      %1109 = vmatprep.subr.bf16.mxu0 0
      %1110 = vmatpush1.bf16.msra.mxu0 0
      %1111 = vmatprep.subr.bf16.mxu0 0
      %1112 = vmatpush1.bf16.msra.mxu0 0
      %1113 = vmatprep.subr.bf16.mxu0 0
      %1114 = vmatpush1.bf16.msra.mxu0 0
      %1115 = vmatprep.mubr.bf16.mxu0 %v687
      %1116 = vmatmul.mubr.bf16.gmra.mrb[0].mxu0 %v457
      %v1117 = vpop.f32.mrb[0].mxu0
      %v1118 = vadd.f32 %v285, %v1117
      %v1119 = vpop.f32.mrb[0].mxu0
      %v1120 = vpop.f32.mrb[0].mxu0
      %v1121 = vadd.f32 %v285, %v1120
      %v1122 = vpop.f32.mrb[0].mxu0
      %1123 = vmatprep.mubr.bf16.mxu0 %v690
      %1124 = vmatmul.mubr.bf16.gmra.mrb[0].mxu0 %v459
      %v1125 = vpop.f32.mrb[0].mxu0
      %v1126 = vadd.f32 %v285, %v1125
      %v1127 = vpop.f32.mrb[0].mxu0
      %v1128 = vpop.f32.mrb[0].mxu0
      %v1129 = vadd.f32 %v285, %v1128
      %v1130 = vpop.f32.mrb[0].mxu0
      %1131 = vmatprep.mubr.bf16.mxu0 %v693
      %1132 = vmatmul.mubr.bf16.gmra.mrb[0].mxu0 %v461
      %v1133 = vpop.f32.mrb[0].mxu0
      %v1134 = vadd.f32 %v285, %v1133
      %v1135 = vpop.f32.mrb[0].mxu0
      %v1136 = vpop.f32.mrb[0].mxu0
      %v1137 = vadd.f32 %v285, %v1136
      %v1138 = vpop.f32.mrb[0].mxu0
      %1139 = vmatprep.mubr.bf16.mxu0 %v696
      %1140 = vmatmul.mubr.bf16.gmra.mrb[0].mxu0 %v463
      %v1141 = vpop.f32.mrb[0].mxu0
      %v1142 = vadd.f32 %v285, %v1141
      %v1143 = vpop.f32.mrb[0].mxu0
      %v1144 = vpop.f32.mrb[0].mxu0
      %v1145 = vadd.f32 %v285, %v1144
      %v1146 = vpop.f32.mrb[0].mxu0
      %1147 = vmatprep.mubr.bf16.mxu0 %v699
      %1148 = vmatmul.mubr.bf16.gmra.mrb[0].mxu0 %v465
      %v1149 = vpop.f32.mrb[0].mxu0
      %v1150 = vadd.f32 %v285, %v1149
      %v1151 = vpop.f32.mrb[0].mxu0
      %v1152 = vpop.f32.mrb[0].mxu0
      %v1153 = vadd.f32 %v285, %v1152
      %v1154 = vpop.f32.mrb[0].mxu0
      %1155 = vmatprep.mubr.bf16.mxu0 %v702
      %1156 = vmatmul.mubr.bf16.gmra.mrb[0].mxu0 %v467
      %v1157 = vpop.f32.mrb[0].mxu0
      %v1158 = vadd.f32 %v285, %v1157
      %v1159 = vpop.f32.mrb[0].mxu0
      %v1160 = vpop.f32.mrb[0].mxu0
      %v1161 = vadd.f32 %v285, %v1160
      %v1162 = vpop.f32.mrb[0].mxu0
      %1163 = vmatprep.mubr.bf16.mxu0 %v705
      %1164 = vmatmul.mubr.bf16.gmra.mrb[0].mxu0 %v469
      %v1165 = vpop.f32.mrb[0].mxu0
      %v1166 = vadd.f32 %v285, %v1165
      %v1167 = vpop.f32.mrb[0].mxu0
      %v1168 = vpop.f32.mrb[0].mxu0
      %v1169 = vadd.f32 %v285, %v1168
      %v1170 = vpop.f32.mrb[0].mxu0
      %1171 = vmatprep.mubr.bf16.mxu0 %v708
      %1172 = vmatmul.mubr.bf16.gmra.mrb[0].mxu0 %v471
      %v1173 = vpop.f32.mrb[0].mxu0
      %v1174 = vadd.f32 %v285, %v1173
      %v1175 = vpop.f32.mrb[0].mxu0
      %v1176 = vpop.f32.mrb[0].mxu0
      %v1177 = vadd.f32 %v285, %v1176
      %v1178 = vpop.f32.mrb[0].mxu0
      %1179 = vmatprep.mubr.bf16.mxu0 %v711
      %1180 = vmatmul.mubr.bf16.gmra.mrb[0].mxu0 %v473
      %v1181 = vpop.f32.mrb[0].mxu0
      %v1182 = vadd.f32 %v285, %v1181
      %v1183 = vpop.f32.mrb[0].mxu0
      %v1184 = vpop.f32.mrb[0].mxu0
      %v1185 = vadd.f32 %v285, %v1184
      %v1186 = vpop.f32.mrb[0].mxu0
      %1187 = vmatprep.mubr.bf16.mxu0 %v714
      %1188 = vmatmul.mubr.bf16.gmra.mrb[0].mxu0 %v475
      %v1189 = vpop.f32.mrb[0].mxu0
      %v1190 = vadd.f32 %v285, %v1189
      %v1191 = vpop.f32.mrb[0].mxu0
      %v1192 = vpop.f32.mrb[0].mxu0
      %v1193 = vadd.f32 %v285, %v1192
      %v1194 = vpop.f32.mrb[0].mxu0
      %1195 = vmatprep.mubr.bf16.mxu0 %v717
      %1196 = vmatmul.mubr.bf16.gmra.mrb[0].mxu0 %v477
      %v1197 = vpop.f32.mrb[0].mxu0
      %v1198 = vadd.f32 %v285, %v1197
      %v1199 = vpop.f32.mrb[0].mxu0
      %v1200 = vpop.f32.mrb[0].mxu0
      %v1201 = vadd.f32 %v285, %v1200
      %v1202 = vpop.f32.mrb[0].mxu0
      %1203 = vmatprep.mubr.bf16.mxu0 %v720
      %1204 = vmatmul.mubr.bf16.gmra.mrb[0].mxu0 %v479
      %v1205 = vpop.f32.mrb[0].mxu0
      %v1206 = vadd.f32 %v285, %v1205
      %v1207 = vpop.f32.mrb[0].mxu0
      %v1208 = vpop.f32.mrb[0].mxu0
      %v1209 = vadd.f32 %v285, %v1208
      %v1210 = vpop.f32.mrb[0].mxu0
      %1211 = vmatprep.mubr.bf16.mxu0 %v723
      %1212 = vmatmul.mubr.bf16.gmra.mrb[0].mxu0 %v481
      %v1213 = vpop.f32.mrb[0].mxu0
      %v1214 = vadd.f32 %v285, %v1213
      %v1215 = vpop.f32.mrb[0].mxu0
      %v1216 = vpop.f32.mrb[0].mxu0
      %v1217 = vadd.f32 %v285, %v1216
      %v1218 = vpop.f32.mrb[0].mxu0
      %1219 = vmatprep.mubr.bf16.mxu0 %v726
      %1220 = vmatmul.mubr.bf16.gmra.mrb[0].mxu0 %v483
      %v1221 = vpop.f32.mrb[0].mxu0
      %v1222 = vadd.f32 %v285, %v1221
      %v1223 = vpop.f32.mrb[0].mxu0
      %v1224 = vpop.f32.mrb[0].mxu0
      %v1225 = vadd.f32 %v285, %v1224
      %v1226 = vpop.f32.mrb[0].mxu0
      %1227 = vmatprep.mubr.bf16.mxu0 %v729
      %1228 = vmatmul.mubr.bf16.gmra.mrb[0].mxu0 %v485
      %v1229 = vpop.f32.mrb[0].mxu0
      %v1230 = vadd.f32 %v285, %v1229
      %v1231 = vpop.f32.mrb[0].mxu0
      %v1232 = vpop.f32.mrb[0].mxu0
      %v1233 = vadd.f32 %v285, %v1232
      %v1234 = vpop.f32.mrb[0].mxu0
      %1235 = vmatprep.mubr.bf16.mxu0 %v732
      %1236 = vmatmul.mubr.bf16.gmra.mrb[0].mxu0 %v487
      %v1237 = vpop.f32.mrb[0].mxu0
      %v1238 = vadd.f32 %v285, %v1237
      %v1239 = vpop.f32.mrb[0].mxu0
      %v1240 = vpop.f32.mrb[0].mxu0
      %v1241 = vadd.f32 %v285, %v1240
      %v1242 = vpop.f32.mrb[0].mxu0
      %1243 = vmatprep.mubr.bf16.mxu0 %v735
      %1244 = vmatmul.mubr.bf16.gmra.mrb[0].mxu0 %v489
      %v1245 = vpop.f32.mrb[0].mxu0
      %v1246 = vadd.f32 %v285, %v1245
      %v1247 = vpop.f32.mrb[0].mxu0
      %v1248 = vpop.f32.mrb[0].mxu0
      %v1249 = vadd.f32 %v285, %v1248
      %v1250 = vpop.f32.mrb[0].mxu0
      %1251 = vmatprep.mubr.bf16.mxu0 %v738
      %1252 = vmatmul.mubr.bf16.gmra.mrb[0].mxu0 %v491
      %v1253 = vpop.f32.mrb[0].mxu0
      %v1254 = vadd.f32 %v285, %v1253
      %v1255 = vpop.f32.mrb[0].mxu0
      %v1256 = vpop.f32.mrb[0].mxu0
      %v1257 = vadd.f32 %v285, %v1256
      %v1258 = vpop.f32.mrb[0].mxu0
      %1259 = vmatprep.mubr.bf16.mxu0 %v741
      %1260 = vmatmul.mubr.bf16.gmra.mrb[0].mxu0 %v493
      %v1261 = vpop.f32.mrb[0].mxu0
      %v1262 = vadd.f32 %v285, %v1261
      %v1263 = vpop.f32.mrb[0].mxu0
      %v1264 = vpop.f32.mrb[0].mxu0
      %v1265 = vadd.f32 %v285, %v1264
      %v1266 = vpop.f32.mrb[0].mxu0
      %1267 = vmatprep.mubr.bf16.mxu0 %v744
      %1268 = vmatmul.mubr.bf16.gmra.mrb[0].mxu0 %v495
      %v1269 = vpop.f32.mrb[0].mxu0
      %v1270 = vadd.f32 %v285, %v1269
      %v1271 = vpop.f32.mrb[0].mxu0
      %v1272 = vpop.f32.mrb[0].mxu0
      %v1273 = vadd.f32 %v285, %v1272
      %v1274 = vpop.f32.mrb[0].mxu0
      %1275 = vmatprep.mubr.bf16.mxu0 %v747
      %1276 = vmatmul.mubr.bf16.gmra.mrb[0].mxu0 %v497
      %v1277 = vpop.f32.mrb[0].mxu0
      %v1278 = vadd.f32 %v285, %v1277
      %v1279 = vpop.f32.mrb[0].mxu0
      %v1280 = vpop.f32.mrb[0].mxu0
      %v1281 = vadd.f32 %v285, %v1280
      %v1282 = vpop.f32.mrb[0].mxu0
      %1283 = vmatprep.mubr.bf16.mxu0 %v750
      %1284 = vmatmul.mubr.bf16.gmra.mrb[0].mxu0 %v499
      %v1285 = vpop.f32.mrb[0].mxu0
      %v1286 = vadd.f32 %v285, %v1285
      %v1287 = vpop.f32.mrb[0].mxu0
      %v1288 = vpop.f32.mrb[0].mxu0
      %v1289 = vadd.f32 %v285, %v1288
      %v1290 = vpop.f32.mrb[0].mxu0
      %1291 = vmatprep.mubr.bf16.mxu0 %v753
      %1292 = vmatmul.mubr.bf16.gmra.mrb[0].mxu0 %v501
      %v1293 = vpop.f32.mrb[0].mxu0
      %v1294 = vadd.f32 %v285, %v1293
      %v1295 = vpop.f32.mrb[0].mxu0
      %v1296 = vpop.f32.mrb[0].mxu0
      %v1297 = vadd.f32 %v285, %v1296
      %v1298 = vpop.f32.mrb[0].mxu0
      %1299 = vmatprep.mubr.bf16.mxu0 %v756
      %1300 = vmatmul.mubr.bf16.gmra.mrb[0].mxu0 %v503
      %v1301 = vpop.f32.mrb[0].mxu0
      %v1302 = vadd.f32 %v285, %v1301
      %v1303 = vpop.f32.mrb[0].mxu0
      %v1304 = vpop.f32.mrb[0].mxu0
      %v1305 = vadd.f32 %v285, %v1304
      %v1306 = vpop.f32.mrb[0].mxu0
      %1307 = vmatprep.mubr.bf16.mxu0 %v759
      %1308 = vmatmul.mubr.bf16.gmra.mrb[0].mxu0 %v505
      %v1309 = vpop.f32.mrb[0].mxu0
      %v1310 = vadd.f32 %v285, %v1309
      %v1311 = vpop.f32.mrb[0].mxu0
      %v1312 = vpop.f32.mrb[0].mxu0
      %v1313 = vadd.f32 %v285, %v1312
      %v1314 = vpop.f32.mrb[0].mxu0
      %1315 = vmatprep.mubr.bf16.mxu0 %v762
      %1316 = vmatmul.mubr.bf16.gmra.mrb[0].mxu0 %v507
      %v1317 = vpop.f32.mrb[0].mxu0
      %v1318 = vadd.f32 %v285, %v1317
      %v1319 = vpop.f32.mrb[0].mxu0
      %v1320 = vpop.f32.mrb[0].mxu0
      %v1321 = vadd.f32 %v285, %v1320
      %v1322 = vpop.f32.mrb[0].mxu0
      %1323 = vmatprep.mubr.bf16.mxu0 %v765
      %1324 = vmatmul.mubr.bf16.gmra.mrb[0].mxu0 %v509
      %v1325 = vpop.f32.mrb[0].mxu0
      %v1326 = vadd.f32 %v285, %v1325
      %v1327 = vpop.f32.mrb[0].mxu0
      %v1328 = vpop.f32.mrb[0].mxu0
      %v1329 = vadd.f32 %v285, %v1328
      %v1330 = vpop.f32.mrb[0].mxu0
      %1331 = vmatprep.mubr.bf16.mxu0 %v768
      %1332 = vmatmul.mubr.bf16.gmra.mrb[0].mxu0 %v511
      %v1333 = vpop.f32.mrb[0].mxu0
      %v1334 = vadd.f32 %v285, %v1333
      %v1335 = vpop.f32.mrb[0].mxu0
      %v1336 = vpop.f32.mrb[0].mxu0
      %v1337 = vadd.f32 %v285, %v1336
      %v1338 = vpop.f32.mrb[0].mxu0
      %1339 = vdwg.mxu0
      %v1340 = vmax.f32 %v805, 0.0
      %v1341 = vmax.f32 %v807, 0.0
      %v1342 = vmax.f32 %v1118, 0.0
      %v1343 = vmax.f32 %v809, 0.0
      %v1344 = vmax.f32 %v811, 0.0
      %v1345 = vmax.f32 %v1121, 0.0
      %v1346 = vmax.f32 %v815, 0.0
      %v1347 = vmax.f32 %v817, 0.0
      %v1348 = vmax.f32 %v1126, 0.0
      %v1349 = vmax.f32 %v819, 0.0
      %v1350 = vmax.f32 %v821, 0.0
      %v1351 = vmax.f32 %v1129, 0.0
      %v1352 = vmax.f32 %v825, 0.0
      %v1353 = vmax.f32 %v827, 0.0
      %v1354 = vmax.f32 %v1134, 0.0
      %v1355 = vmax.f32 %v829, 0.0
      %v1356 = vmax.f32 %v831, 0.0
      %v1357 = vmax.f32 %v1137, 0.0
      %v1358 = vmax.f32 %v835, 0.0
      %v1359 = vmax.f32 %v837, 0.0
      %v1360 = vmax.f32 %v1142, 0.0
      %v1361 = vmax.f32 %v839, 0.0
      %v1362 = vmax.f32 %v841, 0.0
      %v1363 = vmax.f32 %v1145, 0.0
      %v1364 = vmax.f32 %v845, 0.0
      %v1365 = vmax.f32 %v847, 0.0
      %v1366 = vmax.f32 %v1150, 0.0
      %v1367 = vmax.f32 %v849, 0.0
      %v1368 = vmax.f32 %v851, 0.0
      %v1369 = vmax.f32 %v1153, 0.0
      %v1370 = vmax.f32 %v855, 0.0
      %v1371 = vmax.f32 %v857, 0.0
      %v1372 = vmax.f32 %v1158, 0.0
      %v1373 = vmax.f32 %v859, 0.0
      %v1374 = vmax.f32 %v861, 0.0
      %v1375 = vmax.f32 %v1161, 0.0
      %v1376 = vmax.f32 %v865, 0.0
      %v1377 = vmax.f32 %v867, 0.0
      %v1378 = vmax.f32 %v1166, 0.0
      %v1379 = vmax.f32 %v869, 0.0
      %v1380 = vmax.f32 %v871, 0.0
      %v1381 = vmax.f32 %v1169, 0.0
      %v1382 = vmax.f32 %v875, 0.0
      %v1383 = vmax.f32 %v877, 0.0
      %v1384 = vmax.f32 %v1174, 0.0
      %v1385 = vmax.f32 %v879, 0.0
      %v1386 = vmax.f32 %v881, 0.0
      %v1387 = vmax.f32 %v1177, 0.0
      %v1388 = vmax.f32 %v885, 0.0
      %v1389 = vmax.f32 %v887, 0.0
      %v1390 = vmax.f32 %v1182, 0.0
      %v1391 = vmax.f32 %v889, 0.0
      %v1392 = vmax.f32 %v891, 0.0
      %v1393 = vmax.f32 %v1185, 0.0
      %v1394 = vmax.f32 %v895, 0.0
      %v1395 = vmax.f32 %v897, 0.0
      %v1396 = vmax.f32 %v1190, 0.0
      %v1397 = vmax.f32 %v899, 0.0
      %v1398 = vmax.f32 %v901, 0.0
      %v1399 = vmax.f32 %v1193, 0.0
      %v1400 = vmax.f32 %v905, 0.0
      %v1401 = vmax.f32 %v907, 0.0
      %v1402 = vmax.f32 %v1198, 0.0
      %v1403 = vmax.f32 %v909, 0.0
      %v1404 = vmax.f32 %v911, 0.0
      %v1405 = vmax.f32 %v1201, 0.0
      %v1406 = vmax.f32 %v915, 0.0
      %v1407 = vmax.f32 %v917, 0.0
      %v1408 = vmax.f32 %v1206, 0.0
      %v1409 = vmax.f32 %v919, 0.0
      %v1410 = vmax.f32 %v921, 0.0
      %v1411 = vmax.f32 %v1209, 0.0
      %v1412 = vmax.f32 %v925, 0.0
      %v1413 = vmax.f32 %v927, 0.0
      %v1414 = vmax.f32 %v1214, 0.0
      %v1415 = vmax.f32 %v929, 0.0
      %v1416 = vmax.f32 %v931, 0.0
      %v1417 = vmax.f32 %v1217, 0.0
      %v1418 = vmax.f32 %v935, 0.0
      %v1419 = vmax.f32 %v937, 0.0
      %v1420 = vmax.f32 %v1222, 0.0
      %v1421 = vmax.f32 %v939, 0.0
      %v1422 = vmax.f32 %v941, 0.0
      %v1423 = vmax.f32 %v1225, 0.0
      %v1424 = vmax.f32 %v945, 0.0
      %v1425 = vmax.f32 %v947, 0.0
      %v1426 = vmax.f32 %v1230, 0.0
      %v1427 = vmax.f32 %v949, 0.0
      %v1428 = vmax.f32 %v951, 0.0
      %v1429 = vmax.f32 %v1233, 0.0
      %v1430 = vmax.f32 %v955, 0.0
      %v1431 = vmax.f32 %v957, 0.0
      %v1432 = vmax.f32 %v1238, 0.0
      %v1433 = vmax.f32 %v959, 0.0
      %v1434 = vmax.f32 %v961, 0.0
      %v1435 = vmax.f32 %v1241, 0.0
      %v1436 = vmax.f32 %v965, 0.0
      %v1437 = vmax.f32 %v967, 0.0
      %v1438 = vmax.f32 %v1246, 0.0
      %v1439 = vmax.f32 %v969, 0.0
      %v1440 = vmax.f32 %v971, 0.0
      %v1441 = vmax.f32 %v1249, 0.0
      %v1442 = vmax.f32 %v975, 0.0
      %v1443 = vmax.f32 %v977, 0.0
      %v1444 = vmax.f32 %v1254, 0.0
      %v1445 = vmax.f32 %v979, 0.0
      %v1446 = vmax.f32 %v981, 0.0
      %v1447 = vmax.f32 %v1257, 0.0
      %v1448 = vmax.f32 %v985, 0.0
      %v1449 = vmax.f32 %v987, 0.0
      %v1450 = vmax.f32 %v1262, 0.0
      %v1451 = vmax.f32 %v989, 0.0
      %v1452 = vmax.f32 %v991, 0.0
      %v1453 = vmax.f32 %v1265, 0.0
      %v1454 = vmax.f32 %v995, 0.0
      %v1455 = vmax.f32 %v997, 0.0
      %v1456 = vmax.f32 %v1270, 0.0
      %v1457 = vmax.f32 %v999, 0.0
      %v1458 = vmax.f32 %v1001, 0.0
      %v1459 = vmax.f32 %v1273, 0.0
      %v1460 = vmax.f32 %v1005, 0.0
      %v1461 = vmax.f32 %v1007, 0.0
      %v1462 = vmax.f32 %v1278, 0.0
      %v1463 = vmax.f32 %v1009, 0.0
      %v1464 = vmax.f32 %v1011, 0.0
      %v1465 = vmax.f32 %v1281, 0.0
      %v1466 = vmax.f32 %v1015, 0.0
      %v1467 = vmax.f32 %v1017, 0.0
      %v1468 = vmax.f32 %v1286, 0.0
      %v1469 = vmax.f32 %v1019, 0.0
      %v1470 = vmax.f32 %v1021, 0.0
      %v1471 = vmax.f32 %v1289, 0.0
      %v1472 = vmax.f32 %v1025, 0.0
      %v1473 = vmax.f32 %v1027, 0.0
      %v1474 = vmax.f32 %v1294, 0.0
      %v1475 = vmax.f32 %v1029, 0.0
      %v1476 = vmax.f32 %v1031, 0.0
      %v1477 = vmax.f32 %v1297, 0.0
      %v1478 = vmax.f32 %v1035, 0.0
      %v1479 = vmax.f32 %v1037, 0.0
      %v1480 = vmax.f32 %v1302, 0.0
      %v1481 = vmax.f32 %v1039, 0.0
      %v1482 = vmax.f32 %v1041, 0.0
      %v1483 = vmax.f32 %v1305, 0.0
      %v1484 = vmax.f32 %v1045, 0.0
      %v1485 = vmax.f32 %v1047, 0.0
      %v1486 = vmax.f32 %v1310, 0.0
      %v1487 = vmax.f32 %v1049, 0.0
      %v1488 = vmax.f32 %v1051, 0.0
      %v1489 = vmax.f32 %v1313, 0.0
      %v1490 = vmax.f32 %v1055, 0.0
      %v1491 = vmax.f32 %v1057, 0.0
      %v1492 = vmax.f32 %v1318, 0.0
      %v1493 = vmax.f32 %v1059, 0.0
      %v1494 = vmax.f32 %v1061, 0.0
      %v1495 = vmax.f32 %v1321, 0.0
      %v1496 = vmax.f32 %v1065, 0.0
      %v1497 = vmax.f32 %v1067, 0.0
      %v1498 = vmax.f32 %v1326, 0.0
      %v1499 = vmax.f32 %v1069, 0.0
      %v1500 = vmax.f32 %v1071, 0.0
      %v1501 = vmax.f32 %v1329, 0.0
      %v1502 = vmax.f32 %v1075, 0.0
      %v1503 = vmax.f32 %v1077, 0.0
      %v1504 = vmax.f32 %v1334, 0.0
      %v1505 = vmax.f32 %v1079, 0.0
      %v1506 = vmax.f32 %v1081, 0.0
      %v1507 = vmax.f32 %v1337, 0.0
      %v1508 = vpack.c.bf16 %v1343, %v1340
      %v1509 = vpack.c.bf16 %v1344, %v1341
      %v1510 = vpack.c.bf16 %v1345, %v1342
      %v1511 = vpack.c.bf16 %v1349, %v1346
      %v1512 = vpack.c.bf16 %v1350, %v1347
      %v1513 = vpack.c.bf16 %v1351, %v1348
      %v1514 = vpack.c.bf16 %v1355, %v1352
      %v1515 = vpack.c.bf16 %v1356, %v1353
      %v1516 = vpack.c.bf16 %v1357, %v1354
      %v1517 = vpack.c.bf16 %v1361, %v1358
      %v1518 = vpack.c.bf16 %v1362, %v1359
      %v1519 = vpack.c.bf16 %v1363, %v1360
      %v1520 = vpack.c.bf16 %v1367, %v1364
      %v1521 = vpack.c.bf16 %v1368, %v1365
      %v1522 = vpack.c.bf16 %v1369, %v1366
      %v1523 = vpack.c.bf16 %v1373, %v1370
      %v1524 = vpack.c.bf16 %v1374, %v1371
      %v1525 = vpack.c.bf16 %v1375, %v1372
      %v1526 = vpack.c.bf16 %v1379, %v1376
      %v1527 = vpack.c.bf16 %v1380, %v1377
      %v1528 = vpack.c.bf16 %v1381, %v1378
      %v1529 = vpack.c.bf16 %v1385, %v1382
      %v1530 = vpack.c.bf16 %v1386, %v1383
      %v1531 = vpack.c.bf16 %v1387, %v1384
      %v1532 = vpack.c.bf16 %v1391, %v1388
      %v1533 = vpack.c.bf16 %v1392, %v1389
      %v1534 = vpack.c.bf16 %v1393, %v1390
      %v1535 = vpack.c.bf16 %v1397, %v1394
      %v1536 = vpack.c.bf16 %v1398, %v1395
      %v1537 = vpack.c.bf16 %v1399, %v1396
      %v1538 = vpack.c.bf16 %v1403, %v1400
      %v1539 = vpack.c.bf16 %v1404, %v1401
      %v1540 = vpack.c.bf16 %v1405, %v1402
      %v1541 = vpack.c.bf16 %v1409, %v1406
      %v1542 = vpack.c.bf16 %v1410, %v1407
      %v1543 = vpack.c.bf16 %v1411, %v1408
      %v1544 = vpack.c.bf16 %v1415, %v1412
      %v1545 = vpack.c.bf16 %v1416, %v1413
      %v1546 = vpack.c.bf16 %v1417, %v1414
      %v1547 = vpack.c.bf16 %v1421, %v1418
      %v1548 = vpack.c.bf16 %v1422, %v1419
      %v1549 = vpack.c.bf16 %v1423, %v1420
      %v1550 = vpack.c.bf16 %v1427, %v1424
      %v1551 = vpack.c.bf16 %v1428, %v1425
      %v1552 = vpack.c.bf16 %v1429, %v1426
      %v1553 = vpack.c.bf16 %v1433, %v1430
      %v1554 = vpack.c.bf16 %v1434, %v1431
      %v1555 = vpack.c.bf16 %v1435, %v1432
      %v1556 = vpack.c.bf16 %v1439, %v1436
      %v1557 = vpack.c.bf16 %v1440, %v1437
      %v1558 = vpack.c.bf16 %v1441, %v1438
      %v1559 = vpack.c.bf16 %v1445, %v1442
      %v1560 = vpack.c.bf16 %v1446, %v1443
      %v1561 = vpack.c.bf16 %v1447, %v1444
      %v1562 = vpack.c.bf16 %v1451, %v1448
      %v1563 = vpack.c.bf16 %v1452, %v1449
      %v1564 = vpack.c.bf16 %v1453, %v1450
      %v1565 = vpack.c.bf16 %v1457, %v1454
      %v1566 = vpack.c.bf16 %v1458, %v1455
      %v1567 = vpack.c.bf16 %v1459, %v1456
      %v1568 = vpack.c.bf16 %v1463, %v1460
      %v1569 = vpack.c.bf16 %v1464, %v1461
      %v1570 = vpack.c.bf16 %v1465, %v1462
      %v1571 = vpack.c.bf16 %v1469, %v1466
      %v1572 = vpack.c.bf16 %v1470, %v1467
      %v1573 = vpack.c.bf16 %v1471, %v1468
      %v1574 = vpack.c.bf16 %v1475, %v1472
      %v1575 = vpack.c.bf16 %v1476, %v1473
      %v1576 = vpack.c.bf16 %v1477, %v1474
      %v1577 = vpack.c.bf16 %v1481, %v1478
      %v1578 = vpack.c.bf16 %v1482, %v1479
      %v1579 = vpack.c.bf16 %v1483, %v1480
      %v1580 = vpack.c.bf16 %v1487, %v1484
      %v1581 = vpack.c.bf16 %v1488, %v1485
      %v1582 = vpack.c.bf16 %v1489, %v1486
      %v1583 = vpack.c.bf16 %v1493, %v1490
      %v1584 = vpack.c.bf16 %v1494, %v1491
      %v1585 = vpack.c.bf16 %v1495, %v1492
      %v1586 = vpack.c.bf16 %v1499, %v1496
      %v1587 = vpack.c.bf16 %v1500, %v1497
      %v1588 = vpack.c.bf16 %v1501, %v1498
      %v1589 = vpack.c.bf16 %v1505, %v1502
      %v1590 = vpack.c.bf16 %v1506, %v1503
      %v1591 = vpack.c.bf16 %v1507, %v1504
      %v1676 = vunpack.c.l.b16 %v1508
      %v1677 = vunpack.c.l.b16 %v1509
      %v1678 = vunpack.c.l.b16 %v1510
      %v1679 = vunpack.c.h.b16 %v1508
      %v1680 = vunpack.c.h.b16 %v1509
      %v1681 = vunpack.c.h.b16 %v1510
      %v1682 = vunpack.c.l.b16 %v1511
      %v1683 = vunpack.c.l.b16 %v1512
      %v1684 = vunpack.c.l.b16 %v1513
      %v1685 = vunpack.c.h.b16 %v1511
      %v1686 = vunpack.c.h.b16 %v1512
      %v1687 = vunpack.c.h.b16 %v1513
      %v1688 = vunpack.c.l.b16 %v1514
      %v1689 = vunpack.c.l.b16 %v1515
      %v1690 = vunpack.c.l.b16 %v1516
      %v1691 = vunpack.c.h.b16 %v1514
      %v1692 = vunpack.c.h.b16 %v1515
      %v1693 = vunpack.c.h.b16 %v1516
      %v1694 = vunpack.c.l.b16 %v1517
      %v1695 = vunpack.c.l.b16 %v1518
      %v1696 = vunpack.c.l.b16 %v1519
      %v1697 = vunpack.c.h.b16 %v1517
      %v1698 = vunpack.c.h.b16 %v1518
      %v1699 = vunpack.c.h.b16 %v1519
      %v1700 = vunpack.c.l.b16 %v1520
      %v1701 = vunpack.c.l.b16 %v1521
      %v1702 = vunpack.c.l.b16 %v1522
      %v1703 = vunpack.c.h.b16 %v1520
      %v1704 = vunpack.c.h.b16 %v1521
      %v1705 = vunpack.c.h.b16 %v1522
      %v1706 = vunpack.c.l.b16 %v1523
      %v1707 = vunpack.c.l.b16 %v1524
      %v1708 = vunpack.c.l.b16 %v1525
      %v1709 = vunpack.c.h.b16 %v1523
      %v1710 = vunpack.c.h.b16 %v1524
      %v1711 = vunpack.c.h.b16 %v1525
      %v1712 = vunpack.c.l.b16 %v1526
      %v1713 = vunpack.c.l.b16 %v1527
      %v1714 = vunpack.c.l.b16 %v1528
      %v1715 = vunpack.c.h.b16 %v1526
      %v1716 = vunpack.c.h.b16 %v1527
      %v1717 = vunpack.c.h.b16 %v1528
      %v1718 = vunpack.c.l.b16 %v1529
      %v1719 = vunpack.c.l.b16 %v1530
      %v1720 = vunpack.c.l.b16 %v1531
      %v1721 = vunpack.c.h.b16 %v1529
      %v1722 = vunpack.c.h.b16 %v1530
      %v1723 = vunpack.c.h.b16 %v1531
      %v1724 = vunpack.c.l.b16 %v1532
      %v1725 = vunpack.c.l.b16 %v1533
      %v1726 = vunpack.c.l.b16 %v1534
      %v1727 = vunpack.c.h.b16 %v1532
      %v1728 = vunpack.c.h.b16 %v1533
      %v1729 = vunpack.c.h.b16 %v1534
      %v1730 = vunpack.c.l.b16 %v1535
      %v1731 = vunpack.c.l.b16 %v1536
      %v1732 = vunpack.c.l.b16 %v1537
      %v1733 = vunpack.c.h.b16 %v1535
      %v1734 = vunpack.c.h.b16 %v1536
      %v1735 = vunpack.c.h.b16 %v1537
      %v1736 = vunpack.c.l.b16 %v1538
      %v1737 = vunpack.c.l.b16 %v1539
      %v1738 = vunpack.c.l.b16 %v1540
      %v1739 = vunpack.c.h.b16 %v1538
      %v1740 = vunpack.c.h.b16 %v1539
      %v1741 = vunpack.c.h.b16 %v1540
      %v1742 = vunpack.c.l.b16 %v1541
      %v1743 = vunpack.c.l.b16 %v1542
      %v1744 = vunpack.c.l.b16 %v1543
      %v1745 = vunpack.c.h.b16 %v1541
      %v1746 = vunpack.c.h.b16 %v1542
      %v1747 = vunpack.c.h.b16 %v1543
      %v1748 = vunpack.c.l.b16 %v1544
      %v1749 = vunpack.c.l.b16 %v1545
      %v1750 = vunpack.c.l.b16 %v1546
      %v1751 = vunpack.c.h.b16 %v1544
      %v1752 = vunpack.c.h.b16 %v1545
      %v1753 = vunpack.c.h.b16 %v1546
      %v1754 = vunpack.c.l.b16 %v1547
      %v1755 = vunpack.c.l.b16 %v1548
      %v1756 = vunpack.c.l.b16 %v1549
      %v1757 = vunpack.c.h.b16 %v1547
      %v1758 = vunpack.c.h.b16 %v1548
      %v1759 = vunpack.c.h.b16 %v1549
      %v1760 = vunpack.c.l.b16 %v1550
      %v1761 = vunpack.c.l.b16 %v1551
      %v1762 = vunpack.c.l.b16 %v1552
      %v1763 = vunpack.c.h.b16 %v1550
      %v1764 = vunpack.c.h.b16 %v1551
      %v1765 = vunpack.c.h.b16 %v1552
      %v1766 = vunpack.c.l.b16 %v1553
      %v1767 = vunpack.c.l.b16 %v1554
      %v1768 = vunpack.c.l.b16 %v1555
      %v1769 = vunpack.c.h.b16 %v1553
      %v1770 = vunpack.c.h.b16 %v1554
      %v1771 = vunpack.c.h.b16 %v1555
      %v1772 = vunpack.c.l.b16 %v1556
      %v1773 = vunpack.c.l.b16 %v1557
      %v1774 = vunpack.c.l.b16 %v1558
      %v1775 = vunpack.c.h.b16 %v1556
      %v1776 = vunpack.c.h.b16 %v1557
      %v1777 = vunpack.c.h.b16 %v1558
      %v1778 = vunpack.c.l.b16 %v1559
      %v1779 = vunpack.c.l.b16 %v1560
      %v1780 = vunpack.c.l.b16 %v1561
      %v1781 = vunpack.c.h.b16 %v1559
      %v1782 = vunpack.c.h.b16 %v1560
      %v1783 = vunpack.c.h.b16 %v1561
      %v1784 = vunpack.c.l.b16 %v1562
      %v1785 = vunpack.c.l.b16 %v1563
      %v1786 = vunpack.c.l.b16 %v1564
      %v1787 = vunpack.c.h.b16 %v1562
      %v1788 = vunpack.c.h.b16 %v1563
      %v1789 = vunpack.c.h.b16 %v1564
      %v1790 = vunpack.c.l.b16 %v1565
      %v1791 = vunpack.c.l.b16 %v1566
      %v1792 = vunpack.c.l.b16 %v1567
      %v1793 = vunpack.c.h.b16 %v1565
      %v1794 = vunpack.c.h.b16 %v1566
      %v1795 = vunpack.c.h.b16 %v1567
      %v1796 = vunpack.c.l.b16 %v1568
      %v1797 = vunpack.c.l.b16 %v1569
      %v1798 = vunpack.c.l.b16 %v1570
      %v1799 = vunpack.c.h.b16 %v1568
      %v1800 = vunpack.c.h.b16 %v1569
      %v1801 = vunpack.c.h.b16 %v1570
      %v1802 = vunpack.c.l.b16 %v1571
      %v1803 = vunpack.c.l.b16 %v1572
      %v1804 = vunpack.c.l.b16 %v1573
      %v1805 = vunpack.c.h.b16 %v1571
      %v1806 = vunpack.c.h.b16 %v1572
      %v1807 = vunpack.c.h.b16 %v1573
      %v1808 = vunpack.c.l.b16 %v1574
      %v1809 = vunpack.c.l.b16 %v1575
      %v1810 = vunpack.c.l.b16 %v1576
      %v1811 = vunpack.c.h.b16 %v1574
      %v1812 = vunpack.c.h.b16 %v1575
      %v1813 = vunpack.c.h.b16 %v1576
      %v1814 = vunpack.c.l.b16 %v1577
      %v1815 = vunpack.c.l.b16 %v1578
      %v1816 = vunpack.c.l.b16 %v1579
      %v1817 = vunpack.c.h.b16 %v1577
      %v1818 = vunpack.c.h.b16 %v1578
      %v1819 = vunpack.c.h.b16 %v1579
      %v1820 = vunpack.c.l.b16 %v1580
      %v1821 = vunpack.c.l.b16 %v1581
      %v1822 = vunpack.c.l.b16 %v1582
      %v1823 = vunpack.c.h.b16 %v1580
      %v1824 = vunpack.c.h.b16 %v1581
      %v1825 = vunpack.c.h.b16 %v1582
      %v1826 = vunpack.c.l.b16 %v1583
      %v1827 = vunpack.c.l.b16 %v1584
      %v1828 = vunpack.c.l.b16 %v1585
      %v1829 = vunpack.c.h.b16 %v1583
      %v1830 = vunpack.c.h.b16 %v1584
      %v1831 = vunpack.c.h.b16 %v1585
      %v1832 = vunpack.c.l.b16 %v1586
      %v1833 = vunpack.c.l.b16 %v1587
      %v1834 = vunpack.c.l.b16 %v1588
      %v1835 = vunpack.c.h.b16 %v1586
      %v1836 = vunpack.c.h.b16 %v1587
      %v1837 = vunpack.c.h.b16 %v1588
      %v1838 = vunpack.c.l.b16 %v1589
      %v1839 = vunpack.c.l.b16 %v1590
      %v1840 = vunpack.c.l.b16 %v1591
      %v1841 = vunpack.c.h.b16 %v1589
      %v1842 = vunpack.c.h.b16 %v1590
      %v1843 = vunpack.c.h.b16 %v1591
      %v1844 = vpack.c.b16 %v1677, %v1676
      %v1845 = vpack.c.b16 %v1678, %v1678
      %v1846 = vpack.c.b16 %v1680, %v1679
      %v1847 = vpack.c.b16 %v1681, %v1681
      %v1848 = vpack.c.b16 %v1683, %v1682
      %v1849 = vpack.c.b16 %v1684, %v1684
      %v1850 = vpack.c.b16 %v1686, %v1685
      %v1851 = vpack.c.b16 %v1687, %v1687
      %v1852 = vpack.c.b16 %v1689, %v1688
      %v1853 = vpack.c.b16 %v1690, %v1690
      %v1854 = vpack.c.b16 %v1692, %v1691
      %v1855 = vpack.c.b16 %v1693, %v1693
      %v1856 = vpack.c.b16 %v1695, %v1694
      %v1857 = vpack.c.b16 %v1696, %v1696
      %v1858 = vpack.c.b16 %v1698, %v1697
      %v1859 = vpack.c.b16 %v1699, %v1699
      %v1860 = vpack.c.b16 %v1701, %v1700
      %v1861 = vpack.c.b16 %v1702, %v1702
      %v1862 = vpack.c.b16 %v1704, %v1703
      %v1863 = vpack.c.b16 %v1705, %v1705
      %v1864 = vpack.c.b16 %v1707, %v1706
      %v1865 = vpack.c.b16 %v1708, %v1708
      %v1866 = vpack.c.b16 %v1710, %v1709
      %v1867 = vpack.c.b16 %v1711, %v1711
      %v1868 = vpack.c.b16 %v1713, %v1712
      %v1869 = vpack.c.b16 %v1714, %v1714
      %v1870 = vpack.c.b16 %v1716, %v1715
      %v1871 = vpack.c.b16 %v1717, %v1717
      %v1872 = vpack.c.b16 %v1719, %v1718
      %v1873 = vpack.c.b16 %v1720, %v1720
      %v1874 = vpack.c.b16 %v1722, %v1721
      %v1875 = vpack.c.b16 %v1723, %v1723
      %v1876 = vpack.c.b16 %v1725, %v1724
      %v1877 = vpack.c.b16 %v1726, %v1726
      %v1878 = vpack.c.b16 %v1728, %v1727
      %v1879 = vpack.c.b16 %v1729, %v1729
      %v1880 = vpack.c.b16 %v1731, %v1730
      %v1881 = vpack.c.b16 %v1732, %v1732
      %v1882 = vpack.c.b16 %v1734, %v1733
      %v1883 = vpack.c.b16 %v1735, %v1735
      %v1884 = vpack.c.b16 %v1737, %v1736
      %v1885 = vpack.c.b16 %v1738, %v1738
      %v1886 = vpack.c.b16 %v1740, %v1739
      %v1887 = vpack.c.b16 %v1741, %v1741
      %v1888 = vpack.c.b16 %v1743, %v1742
      %v1889 = vpack.c.b16 %v1744, %v1744
      %v1890 = vpack.c.b16 %v1746, %v1745
      %v1891 = vpack.c.b16 %v1747, %v1747
      %v1892 = vpack.c.b16 %v1749, %v1748
      %v1893 = vpack.c.b16 %v1750, %v1750
      %v1894 = vpack.c.b16 %v1752, %v1751
      %v1895 = vpack.c.b16 %v1753, %v1753
      %v1896 = vpack.c.b16 %v1755, %v1754
      %v1897 = vpack.c.b16 %v1756, %v1756
      %v1898 = vpack.c.b16 %v1758, %v1757
      %v1899 = vpack.c.b16 %v1759, %v1759
      %v1900 = vpack.c.b16 %v1761, %v1760
      %v1901 = vpack.c.b16 %v1762, %v1762
      %v1902 = vpack.c.b16 %v1764, %v1763
      %v1903 = vpack.c.b16 %v1765, %v1765
      %v1904 = vpack.c.b16 %v1767, %v1766
      %v1905 = vpack.c.b16 %v1768, %v1768
      %v1906 = vpack.c.b16 %v1770, %v1769
      %v1907 = vpack.c.b16 %v1771, %v1771
      %v1908 = vpack.c.b16 %v1773, %v1772
      %v1909 = vpack.c.b16 %v1774, %v1774
      %v1910 = vpack.c.b16 %v1776, %v1775
      %v1911 = vpack.c.b16 %v1777, %v1777
      %v1912 = vpack.c.b16 %v1779, %v1778
      %v1913 = vpack.c.b16 %v1780, %v1780
      %v1914 = vpack.c.b16 %v1782, %v1781
      %v1915 = vpack.c.b16 %v1783, %v1783
      %v1916 = vpack.c.b16 %v1785, %v1784
      %v1917 = vpack.c.b16 %v1786, %v1786
      %v1918 = vpack.c.b16 %v1788, %v1787
      %v1919 = vpack.c.b16 %v1789, %v1789
      %v1920 = vpack.c.b16 %v1791, %v1790
      %v1921 = vpack.c.b16 %v1792, %v1792
      %v1922 = vpack.c.b16 %v1794, %v1793
      %v1923 = vpack.c.b16 %v1795, %v1795
      %v1924 = vpack.c.b16 %v1797, %v1796
      %v1925 = vpack.c.b16 %v1798, %v1798
      %v1926 = vpack.c.b16 %v1800, %v1799
      %v1927 = vpack.c.b16 %v1801, %v1801
      %v1928 = vpack.c.b16 %v1803, %v1802
      %v1929 = vpack.c.b16 %v1804, %v1804
      %v1930 = vpack.c.b16 %v1806, %v1805
      %v1931 = vpack.c.b16 %v1807, %v1807
      %v1932 = vpack.c.b16 %v1809, %v1808
      %v1933 = vpack.c.b16 %v1810, %v1810
      %v1934 = vpack.c.b16 %v1812, %v1811
      %v1935 = vpack.c.b16 %v1813, %v1813
      %v1936 = vpack.c.b16 %v1815, %v1814
      %v1937 = vpack.c.b16 %v1816, %v1816
      %v1938 = vpack.c.b16 %v1818, %v1817
      %v1939 = vpack.c.b16 %v1819, %v1819
      %v1940 = vpack.c.b16 %v1821, %v1820
      %v1941 = vpack.c.b16 %v1822, %v1822
      %v1942 = vpack.c.b16 %v1824, %v1823
      %v1943 = vpack.c.b16 %v1825, %v1825
      %v1944 = vpack.c.b16 %v1827, %v1826
      %v1945 = vpack.c.b16 %v1828, %v1828
      %v1946 = vpack.c.b16 %v1830, %v1829
      %v1947 = vpack.c.b16 %v1831, %v1831
      %v1948 = vpack.c.b16 %v1833, %v1832
      %v1949 = vpack.c.b16 %v1834, %v1834
      %v1950 = vpack.c.b16 %v1836, %v1835
      %v1951 = vpack.c.b16 %v1837, %v1837
      %v1952 = vpack.c.b16 %v1839, %v1838
      %v1953 = vpack.c.b16 %v1840, %v1840
      %v1954 = vpack.c.b16 %v1842, %v1841
      %v1955 = vpack.c.b16 %v1843, %v1843
      %2068 = vst [vmem:[%s177] sm:$0xff] %v1844
      %vm2069 = vcmask 257024
      %2070 = vst.msk [vmem:[%s177 + $0x8] sm:$0xf] %vm2069, %v1845
      %2071 = vst [vmem:[%s177 + $0xc] sm:$0xff] %v1846
      %2072 = vst.msk [vmem:[%s177 + $0x14] sm:$0xf] %vm2069, %v1847
      %2073 = vst [vmem:[%s177 + $0x18] sm:$0xff] %v1848
      %2074 = vst.msk [vmem:[%s177 + $0x20] sm:$0xf] %vm2069, %v1849
      %2075 = vst [vmem:[%s177 + $0x24] sm:$0xff] %v1850
      %2076 = vst.msk [vmem:[%s177 + $0x2c] sm:$0xf] %vm2069, %v1851
      %2077 = vst [vmem:[%s177 + $0x30] sm:$0xff] %v1852
      %2078 = vst.msk [vmem:[%s177 + $0x38] sm:$0xf] %vm2069, %v1853
      %2079 = vst [vmem:[%s177 + $0x3c] sm:$0xff] %v1854
      %2080 = vst.msk [vmem:[%s177 + $0x44] sm:$0xf] %vm2069, %v1855
      %2081 = vst [vmem:[%s177 + $0x48] sm:$0xff] %v1856
      %2082 = vst.msk [vmem:[%s177 + $0x50] sm:$0xf] %vm2069, %v1857
      %2083 = vst [vmem:[%s177 + $0x54] sm:$0xff] %v1858
      %2084 = vst.msk [vmem:[%s177 + $0x5c] sm:$0xf] %vm2069, %v1859
      %2085 = vst [vmem:[%s177 + $0x60] sm:$0xff] %v1860
      %2086 = vst.msk [vmem:[%s177 + $0x68] sm:$0xf] %vm2069, %v1861
      %2087 = vst [vmem:[%s177 + $0x6c] sm:$0xff] %v1862
      %2088 = vst.msk [vmem:[%s177 + $0x74] sm:$0xf] %vm2069, %v1863
      %2089 = vst [vmem:[%s177 + $0x78] sm:$0xff] %v1864
      %2090 = vst.msk [vmem:[%s177 + $0x80] sm:$0xf] %vm2069, %v1865
      %2091 = vst [vmem:[%s177 + $0x84] sm:$0xff] %v1866
      %2092 = vst.msk [vmem:[%s177 + $0x8c] sm:$0xf] %vm2069, %v1867
      %2093 = vst [vmem:[%s177 + $0x90] sm:$0xff] %v1868
      %2094 = vst.msk [vmem:[%s177 + $0x98] sm:$0xf] %vm2069, %v1869
      %2095 = vst [vmem:[%s177 + $0x9c] sm:$0xff] %v1870
      %2096 = vst.msk [vmem:[%s177 + $0xa4] sm:$0xf] %vm2069, %v1871
      %2097 = vst [vmem:[%s177 + $0xa8] sm:$0xff] %v1872
      %2098 = vst.msk [vmem:[%s177 + $0xb0] sm:$0xf] %vm2069, %v1873
      %2099 = vst [vmem:[%s177 + $0xb4] sm:$0xff] %v1874
      %2100 = vst.msk [vmem:[%s177 + $0xbc] sm:$0xf] %vm2069, %v1875
      %2101 = vst [vmem:[%s177 + $0xc0] sm:$0xff] %v1876
      %2102 = vst.msk [vmem:[%s177 + $0xc8] sm:$0xf] %vm2069, %v1877
      %2103 = vst [vmem:[%s177 + $0xcc] sm:$0xff] %v1878
      %2104 = vst.msk [vmem:[%s177 + $0xd4] sm:$0xf] %vm2069, %v1879
      %2105 = vst [vmem:[%s177 + $0xd8] sm:$0xff] %v1880
      %2106 = vst.msk [vmem:[%s177 + $0xe0] sm:$0xf] %vm2069, %v1881
      %2107 = vst [vmem:[%s177 + $0xe4] sm:$0xff] %v1882
      %2108 = vst.msk [vmem:[%s177 + $0xec] sm:$0xf] %vm2069, %v1883
      %2109 = vst [vmem:[%s177 + $0xf0] sm:$0xff] %v1884
      %2110 = vst.msk [vmem:[%s177 + $0xf8] sm:$0xf] %vm2069, %v1885
      %2111 = vst [vmem:[%s177 + $0xfc] sm:$0xff] %v1886
      %2112 = vst.msk [vmem:[%s177 + $0x104] sm:$0xf] %vm2069, %v1887
      %2113 = vst [vmem:[%s177 + $0x108] sm:$0xff] %v1888
      %2114 = vst.msk [vmem:[%s177 + $0x110] sm:$0xf] %vm2069, %v1889
      %2115 = vst [vmem:[%s177 + $0x114] sm:$0xff] %v1890
      %2116 = vst.msk [vmem:[%s177 + $0x11c] sm:$0xf] %vm2069, %v1891
      %2117 = vst [vmem:[%s177 + $0x120] sm:$0xff] %v1892
      %2118 = vst.msk [vmem:[%s177 + $0x128] sm:$0xf] %vm2069, %v1893
      %2119 = vst [vmem:[%s177 + $0x12c] sm:$0xff] %v1894
      %2120 = vst.msk [vmem:[%s177 + $0x134] sm:$0xf] %vm2069, %v1895
      %2121 = vst [vmem:[%s177 + $0x138] sm:$0xff] %v1896
      %2122 = vst.msk [vmem:[%s177 + $0x140] sm:$0xf] %vm2069, %v1897
      %2123 = vst [vmem:[%s177 + $0x144] sm:$0xff] %v1898
      %2124 = vst.msk [vmem:[%s177 + $0x14c] sm:$0xf] %vm2069, %v1899
      %2125 = vst [vmem:[%s177 + $0x150] sm:$0xff] %v1900
      %2126 = vst.msk [vmem:[%s177 + $0x158] sm:$0xf] %vm2069, %v1901
      %2127 = vst [vmem:[%s177 + $0x15c] sm:$0xff] %v1902
      %2128 = vst.msk [vmem:[%s177 + $0x164] sm:$0xf] %vm2069, %v1903
      %2129 = vst [vmem:[%s177 + $0x168] sm:$0xff] %v1904
      %2130 = vst.msk [vmem:[%s177 + $0x170] sm:$0xf] %vm2069, %v1905
      %2131 = vst [vmem:[%s177 + $0x174] sm:$0xff] %v1906
      %2132 = vst.msk [vmem:[%s177 + $0x17c] sm:$0xf] %vm2069, %v1907
      %2133 = vst [vmem:[%s177 + $0x180] sm:$0xff] %v1908
      %2134 = vst.msk [vmem:[%s177 + $0x188] sm:$0xf] %vm2069, %v1909
      %2135 = vst [vmem:[%s177 + $0x18c] sm:$0xff] %v1910
      %2136 = vst.msk [vmem:[%s177 + $0x194] sm:$0xf] %vm2069, %v1911
      %2137 = vst [vmem:[%s177 + $0x198] sm:$0xff] %v1912
      %2138 = vst.msk [vmem:[%s177 + $0x1a0] sm:$0xf] %vm2069, %v1913
      %2139 = vst [vmem:[%s177 + $0x1a4] sm:$0xff] %v1914
      %2140 = vst.msk [vmem:[%s177 + $0x1ac] sm:$0xf] %vm2069, %v1915
      %2141 = vst [vmem:[%s177 + $0x1b0] sm:$0xff] %v1916
      %2142 = vst.msk [vmem:[%s177 + $0x1b8] sm:$0xf] %vm2069, %v1917
      %2143 = vst [vmem:[%s177 + $0x1bc] sm:$0xff] %v1918
      %2144 = vst.msk [vmem:[%s177 + $0x1c4] sm:$0xf] %vm2069, %v1919
      %2145 = vst [vmem:[%s177 + $0x1c8] sm:$0xff] %v1920
      %2146 = vst.msk [vmem:[%s177 + $0x1d0] sm:$0xf] %vm2069, %v1921
      %2147 = vst [vmem:[%s177 + $0x1d4] sm:$0xff] %v1922
      %2148 = vst.msk [vmem:[%s177 + $0x1dc] sm:$0xf] %vm2069, %v1923
      %2149 = vst [vmem:[%s177 + $0x1e0] sm:$0xff] %v1924
      %2150 = vst.msk [vmem:[%s177 + $0x1e8] sm:$0xf] %vm2069, %v1925
      %2151 = vst [vmem:[%s177 + $0x1ec] sm:$0xff] %v1926
      %2152 = vst.msk [vmem:[%s177 + $0x1f4] sm:$0xf] %vm2069, %v1927
      %2153 = vst [vmem:[%s177 + $0x1f8] sm:$0xff] %v1928
      %2154 = vst.msk [vmem:[%s177 + $0x200] sm:$0xf] %vm2069, %v1929
      %2155 = vst [vmem:[%s177 + $0x204] sm:$0xff] %v1930
      %2156 = vst.msk [vmem:[%s177 + $0x20c] sm:$0xf] %vm2069, %v1931
      %2157 = vst [vmem:[%s177 + $0x210] sm:$0xff] %v1932
      %2158 = vst.msk [vmem:[%s177 + $0x218] sm:$0xf] %vm2069, %v1933
      %2159 = vst [vmem:[%s177 + $0x21c] sm:$0xff] %v1934
      %2160 = vst.msk [vmem:[%s177 + $0x224] sm:$0xf] %vm2069, %v1935
      %2161 = vst [vmem:[%s177 + $0x228] sm:$0xff] %v1936
      %2162 = vst.msk [vmem:[%s177 + $0x230] sm:$0xf] %vm2069, %v1937
      %2163 = vst [vmem:[%s177 + $0x234] sm:$0xff] %v1938
      %2164 = vst.msk [vmem:[%s177 + $0x23c] sm:$0xf] %vm2069, %v1939
      %2165 = vst [vmem:[%s177 + $0x240] sm:$0xff] %v1940
      %2166 = vst.msk [vmem:[%s177 + $0x248] sm:$0xf] %vm2069, %v1941
      %2167 = vst [vmem:[%s177 + $0x24c] sm:$0xff] %v1942
      %2168 = vst.msk [vmem:[%s177 + $0x254] sm:$0xf] %vm2069, %v1943
      %2169 = vst [vmem:[%s177 + $0x258] sm:$0xff] %v1944
      %2170 = vst.msk [vmem:[%s177 + $0x260] sm:$0xf] %vm2069, %v1945
      %2171 = vst [vmem:[%s177 + $0x264] sm:$0xff] %v1946
      %2172 = vst.msk [vmem:[%s177 + $0x26c] sm:$0xf] %vm2069, %v1947
      %2173 = vst [vmem:[%s177 + $0x270] sm:$0xff] %v1948
      %2174 = vst.msk [vmem:[%s177 + $0x278] sm:$0xf] %vm2069, %v1949
      %2175 = vst [vmem:[%s177 + $0x27c] sm:$0xff] %v1950
      %2176 = vst.msk [vmem:[%s177 + $0x284] sm:$0xf] %vm2069, %v1951
      %2177 = vst [vmem:[%s177 + $0x288] sm:$0xff] %v1952
      %2178 = vst.msk [vmem:[%s177 + $0x290] sm:$0xf] %vm2069, %v1953
      %2179 = vst [vmem:[%s177 + $0x294] sm:$0xff] %v1954
      %2180 = vst.msk [vmem:[%s177 + $0x29c] sm:$0xf] %vm2069, %v1955
      %s2181 = smul.u32 56, %s14
      %p2182 = scmp.lt.s32.totalorder %s2181, 111
      %s2183 = scalar_select %p2182, %s2181, 111
      %s2184 = smul.addr %s2183, 3
      %s2185 = smul.addr %s2184, 4
      %s2186 = scalar_lea.vmem %s3, %s2185
      // Predicated region
      $region33: #{ggcnn_forward.12} parent=31 // pred_check
        %p2187 = pneg %p100
      $region34: #{ggcnn_forward.12} parent=31 // pred_check_branch
        %2189 = sbr.rel (%p2187) target = $region36
      $region35: #{ggcnn_forward.12} parent=31 // pred_region
        %s2190 = smul.u32 56, %s14
      $region36: #{ggcnn_forward.12} parent=31 // pred_fallthru
        _
    $region32: #{ggcnn_forward.12} parent=5 // pred_fallthru
      _
    %p2191 = scmp.le.s32.totalorder 2, %s9
    // Predicated region
    $region37: #{ggcnn_forward.12} parent=5 // pred_check
      %p2192 = pneg %p2191
    $region38: #{ggcnn_forward.12} parent=5 // pred_check_branch
      %2194 = sbr.rel (%p2192) target = $region40
    $region39: #{ggcnn_forward.12} parent=5 // pred_region
      %s2195 = ssub.s32 %s9, 2
      // Predicated region
      $region41: #{ggcnn_forward.12} parent=39 // pred_check
        %p2196 = pneg %p106
      $region42: #{ggcnn_forward.12} parent=39 // pred_check_branch
        %2198 = sbr.rel (%p2196) target = $region44
      $region43: #{ggcnn_forward.12} parent=39 // pred_region
        %s2199 = smul.u32 56, %s15
        %p2200 = scmp.lt.s32.totalorder %s2199, 111
        %s2201 = scalar_select %p2200, %s2199, 111
        %s2202 = smul.addr %s2201, 3
        %s2203 = smul.addr %s2202, 4
        %s2204 = scalar_lea.vmem %s3, %s2203
      $region44: #{ggcnn_forward.12} parent=39 // pred_fallthru
        _
    $region40: #{ggcnn_forward.12} parent=5 // pred_fallthru
      _
  $region6: #{ggcnn_forward.12} parent=0 // loop_footer
    %s13 = sadd.s32 1, %s9
  $region7: #{ggcnn_forward.12} parent=0 // loop_footer_branch
    %8 = sbr.rel target = $region3
  $region8: #{ggcnn_forward.12} parent=0 // loop_exit
    _

// kernel: ggcnn_forward.13
$region0: #{ggcnn_forward.13}
  #allocation0 [shape = 'u32[]', space=smem, size = 0x4, offset = 0x4, fixed_abs, tag = 'smem constant byte address 0x4 - core index']
  #allocation1 [shape = 'u32[144,128]{1,0:T(1,128)}', space=vmem, size = 0x12000, scoped, tag = 'internal scratch']
  %s0 = inlined_call_operand.vmem [shape: bf16[5120,128], index: 0, kind: input, shape index: {}]
  %s1 = inlined_call_operand.vmem [shape: bf16[128,128], index: 1, kind: input, shape index: {}]
  %s2 = inlined_call_operand.vmem [shape: f32[1,128], index: 2, kind: input, shape index: {}]
  %s3 = inlined_call_operand.vmem [shape: f32[5120,128], index: 3, kind: output, shape index: {}]
  %s4 = sld [smem:[#allocation0]]
  $region45: #{ggcnn_forward.13} parent=0
    _
  %s6 = ssub.s32 1, %s4
  %s7 = scalar_select 0, %s6, %s4
  loop: start=0, step=1, limit=12
  $region2: #{ggcnn_forward.13} parent=0 // loop_pre_header
    _
  $region3: #{ggcnn_forward.13} parent=0 // loop_header
    %s9 = sphi 0, %s13
    %p10 = scmp.ge.s32.totalorder %s9, 12
    %s19 = sphi 0, %s21
    %s22 = sphi 0, %s19
    %s23 = sphi 0, %s22
    %s39 = sphi 0, %s23
    %s43 = sphi 0, %s43
    %s45 = sphi 0, %s43
    %s46 = sphi 0, %s45
    %s60 = sphi 0, %s46
    %s64 = sphi 0, %s64
    %s66 = sphi 0, %s64
    %s67 = sphi 0, %s66
    %s81 = sphi 0, %s67
    %s87 = sphi 0, %s89
    %s90 = sphi 0, %s87
    %s91 = sphi 0, %s90
    %s107 = sphi 0, %s91
  $region4: #{ggcnn_forward.13} parent=0 // loop_header_branch
    %12 = sbr.rel (%p10) target = $region8
  $region5: #{ggcnn_forward.13} parent=0 // loop_body
    %s14 = ssub.s32 %s9, 1
    %s15 = ssub.s32 %s9, 2
    %s16 = sadd.s32 %s9, 1
    %s17 = ssub.s32 %s9, %s16
    %p18 = scmp.eq.s32.totalorder %s17, 0
    %s20 = sadd.s32 %s19, 1
    %s21 = scalar_select %p18, %s19, %s20
    %p24 = pneg %p18
    %p25 = scmp.eq.s32.totalorder %s9, 9
    %p26 = por %p24, %p25
    %p27 = scmp.ne.s32.totalorder %s19, %s22
    %p28 = scmp.eq.s32.totalorder %s9, 0
    %p29 = por %p27, %p28
    %p30 = scmp.ne.s32.totalorder %s19, %s22
    %p31 = scmp.eq.s32.totalorder %s14, 9
    %p32 = por %p30, %p31
    %p33 = scmp.ne.s32.totalorder %s22, %s23
    %p34 = scmp.eq.s32.totalorder %s14, 0
    %p35 = por %p33, %p34
    %p36 = scmp.ne.s32.totalorder %s22, %s23
    %p37 = scmp.eq.s32.totalorder %s15, 9
    %p38 = por %p36, %p37
    %p40 = scmp.ne.s32.totalorder %s23, %s39
    %p41 = scmp.eq.s32.totalorder %s15, 0
    %p42 = por %p40, %p41
    %s44 = sadd.s32 %s43, 1
    %p47 = scmp.eq.s32.totalorder %s9, 9
    %p48 = scmp.ne.s32.totalorder %s43, %s45
    %p49 = scmp.eq.s32.totalorder %s9, 0
    %p50 = por %p48, %p49
    %p51 = scmp.ne.s32.totalorder %s43, %s45
    %p52 = scmp.eq.s32.totalorder %s14, 9
    %p53 = por %p51, %p52
    %p54 = scmp.ne.s32.totalorder %s45, %s46
    %p55 = scmp.eq.s32.totalorder %s14, 0
    %p56 = por %p54, %p55
    %p57 = scmp.ne.s32.totalorder %s45, %s46
    %p58 = scmp.eq.s32.totalorder %s15, 9
    %p59 = por %p57, %p58
    %p61 = scmp.ne.s32.totalorder %s46, %s60
    %p62 = scmp.eq.s32.totalorder %s15, 0
    %p63 = por %p61, %p62
    %s65 = sadd.s32 %s64, 1
    %p68 = scmp.eq.s32.totalorder %s9, 9
    %p69 = scmp.ne.s32.totalorder %s64, %s66
    %p70 = scmp.eq.s32.totalorder %s9, 0
    %p71 = por %p69, %p70
    %p72 = scmp.ne.s32.totalorder %s64, %s66
    %p73 = scmp.eq.s32.totalorder %s14, 9
    %p74 = por %p72, %p73
    %p75 = scmp.ne.s32.totalorder %s66, %s67
    %p76 = scmp.eq.s32.totalorder %s14, 0
    %p77 = por %p75, %p76
    %p78 = scmp.ne.s32.totalorder %s66, %s67
    %p79 = scmp.eq.s32.totalorder %s15, 9
    %p80 = por %p78, %p79
    %p82 = scmp.ne.s32.totalorder %s67, %s81
    %p83 = scmp.eq.s32.totalorder %s15, 0
    %p84 = por %p82, %p83
    %s85 = ssub.s32 %s9, %s16
    %p86 = scmp.eq.s32.totalorder %s85, 0
    %s88 = sadd.s32 %s87, 1
    %s89 = scalar_select %p86, %s87, %s88
    %p92 = pneg %p86
    %p93 = scmp.eq.s32.totalorder %s9, 9
    %p94 = por %p92, %p93
    %p95 = scmp.ne.s32.totalorder %s87, %s90
    %p96 = scmp.eq.s32.totalorder %s9, 0
    %p97 = por %p95, %p96
    %p98 = scmp.ne.s32.totalorder %s87, %s90
    %p99 = scmp.eq.s32.totalorder %s14, 9
    %p100 = por %p98, %p99
    %p101 = scmp.ne.s32.totalorder %s90, %s91
    %p102 = scmp.eq.s32.totalorder %s14, 0
    %p103 = por %p101, %p102
    %p104 = scmp.ne.s32.totalorder %s90, %s91
    %p105 = scmp.eq.s32.totalorder %s15, 9
    %p106 = por %p104, %p105
    %p108 = scmp.ne.s32.totalorder %s91, %s107
    %p109 = scmp.eq.s32.totalorder %s15, 0
    %p110 = por %p108, %p109
    %p111 = scmp.le.s32.totalorder 1, %s9
    %p112 = scmp.lt.s32.totalorder %s9, 11
    %p113 = pnand %p111, %p112
    %p114 = pneg %p113
    // Predicated region
    $region9: #{ggcnn_forward.13} parent=5 // pred_check
      _
    $region10: #{ggcnn_forward.13} parent=5 // pred_check_branch
      %116 = sbr.rel (%p113) target = $region12
    $region11: #{ggcnn_forward.13} parent=5 // pred_region
      %s117 = ssub.s32 %s9, 1
      // Predicated region
      $region13: #{ggcnn_forward.13} parent=11 // pred_check
        %p118 = pneg %p56
      $region14: #{ggcnn_forward.13} parent=11 // pred_check_branch
        %120 = sbr.rel (%p118) target = $region16
      $region15: #{ggcnn_forward.13} parent=11 // pred_region
        _
      $region16: #{ggcnn_forward.13} parent=11 // pred_fallthru
        _
      // Predicated region
      $region17: #{ggcnn_forward.13} parent=11 // pred_check
        %p121 = pneg %p77
      $region18: #{ggcnn_forward.13} parent=11 // pred_check_branch
        %123 = sbr.rel (%p121) target = $region20
      $region19: #{ggcnn_forward.13} parent=11 // pred_region
        _
      $region20: #{ggcnn_forward.13} parent=11 // pred_fallthru
        _
    $region12: #{ggcnn_forward.13} parent=5 // pred_fallthru
      _
    %p124 = scmp.lt.s32.totalorder %s9, 10
    // Predicated region
    $region21: #{ggcnn_forward.13} parent=5 // pred_check
      %p125 = pneg %p124
    $region22: #{ggcnn_forward.13} parent=5 // pred_check_branch
      %127 = sbr.rel (%p125) target = $region24
    $region23: #{ggcnn_forward.13} parent=5 // pred_region
      // Predicated region
      $region25: #{ggcnn_forward.13} parent=23 // pred_check
        %p128 = pneg %p29
      $region26: #{ggcnn_forward.13} parent=23 // pred_check_branch
        %130 = sbr.rel (%p128) target = $region28
      $region27: #{ggcnn_forward.13} parent=23 // pred_region
        %s131 = smul.u32 64, %s9
        %p132 = scmp.lt.s32.totalorder %s131, 639
        %s133 = scalar_select %p132, %s131, 639
        %s134 = smul.addr %s133, 4
        %s135 = scalar_lea.vmem %s0, %s134
        %s136 = smul.u32 64, %s9
      $region28: #{ggcnn_forward.13} parent=23 // pred_fallthru
        _
    $region24: #{ggcnn_forward.13} parent=5 // pred_fallthru
      _
    %p137 = scmp.le.s32.totalorder 1, %s9
    %p138 = scmp.lt.s32.totalorder %s9, 11
    %p139 = pnand %p137, %p138
    %p140 = pneg %p139
    // Predicated region
    $region29: #{ggcnn_forward.13} parent=5 // pred_check
      _
    $region30: #{ggcnn_forward.13} parent=5 // pred_check_branch
      %142 = sbr.rel (%p139) target = $region32
    $region31: #{ggcnn_forward.13} parent=5 // pred_region
      %s143 = ssub.s32 %s9, 1
      %s144 = smul.u32 64, %s14
      %p145 = scmp.lt.s32.totalorder %s144, 639
      %s146 = scalar_select %p145, %s144, 639
      %s147 = smul.addr %s146, 4
      %s148 = scalar_lea.vmem %s0, %s147
      %p149 = pneg %p35
      %p150 = pneg %p32
      %p151 = pneg %p56
      %p152 = pneg %p53
      %p153 = pneg %p77
      %p154 = pneg %p74
      %p155 = pneg %p103
      %p156 = pneg %p100
      %s157 = smul.u32 64, %s14
      %p158 = scmp.lt.s32.totalorder %s157, 639
      %s159 = scalar_select %p158, %s157, 639
      %s160 = smul.addr %s159, 8
      %s161 = scalar_lea.vmem %s3, %s160
      %s162 = smul.u32 64, %s14
      %p163 = scmp.lt.s32.totalorder %s162, 639
      %s164 = scalar_select %p163, %s162, 639
      %s165 = smul.addr %s164, 4
      %s166 = scalar_lea.vmem %s0, %s165
      %s167 = smul.u32 64, %s14
      %s168 = smul.u32 64, %s14
      %p169 = scmp.lt.s32.totalorder %s168, 639
      %s170 = scalar_select %p169, %s168, 639
      %s171 = smul.addr %s170, 8
      %s172 = scalar_lea.vmem %s3, %s171
      %s173 = smul.u32 64, %s14
      %v175 = vld [vmem:[%s166] sm:$0xf]
      %v176 = vld [vmem:[%s166 + $0x4] sm:$0xf]
      %v177 = vld [vmem:[%s166 + $0x8] sm:$0xf]
      %v178 = vld [vmem:[%s166 + $0xc] sm:$0xf]
      %v179 = vld [vmem:[%s166 + $0x10] sm:$0xf]
      %v180 = vld [vmem:[%s166 + $0x14] sm:$0xf]
      %v181 = vld [vmem:[%s166 + $0x18] sm:$0xf]
      %v182 = vld [vmem:[%s166 + $0x1c] sm:$0xf]
      %v183 = vld [vmem:[%s166 + $0x20] sm:$0xf]
      %v184 = vld [vmem:[%s166 + $0x24] sm:$0xf]
      %v185 = vld [vmem:[%s166 + $0x28] sm:$0xf]
      %v186 = vld [vmem:[%s166 + $0x2c] sm:$0xf]
      %v187 = vld [vmem:[%s166 + $0x30] sm:$0xf]
      %v188 = vld [vmem:[%s166 + $0x34] sm:$0xf]
      %v189 = vld [vmem:[%s166 + $0x38] sm:$0xf]
      %v190 = vld [vmem:[%s166 + $0x3c] sm:$0xf]
      %v191 = vld [vmem:[%s166 + $0x40] sm:$0xf]
      %v192 = vld [vmem:[%s166 + $0x44] sm:$0xf]
      %v193 = vld [vmem:[%s166 + $0x48] sm:$0xf]
      %v194 = vld [vmem:[%s166 + $0x4c] sm:$0xf]
      %v195 = vld [vmem:[%s166 + $0x50] sm:$0xf]
      %v196 = vld [vmem:[%s166 + $0x54] sm:$0xf]
      %v197 = vld [vmem:[%s166 + $0x58] sm:$0xf]
      %v198 = vld [vmem:[%s166 + $0x5c] sm:$0xf]
      %v199 = vld [vmem:[%s166 + $0x60] sm:$0xf]
      %v200 = vld [vmem:[%s166 + $0x64] sm:$0xf]
      %v201 = vld [vmem:[%s166 + $0x68] sm:$0xf]
      %v202 = vld [vmem:[%s166 + $0x6c] sm:$0xf]
      %v203 = vld [vmem:[%s166 + $0x70] sm:$0xf]
      %v204 = vld [vmem:[%s166 + $0x74] sm:$0xf]
      %v205 = vld [vmem:[%s166 + $0x78] sm:$0xf]
      %v206 = vld [vmem:[%s166 + $0x7c] sm:$0xf]
      %v207 = vld [vmem:[%s166 + $0x80] sm:$0xf]
      %v208 = vld [vmem:[%s166 + $0x84] sm:$0xf]
      %v209 = vld [vmem:[%s166 + $0x88] sm:$0xf]
      %v210 = vld [vmem:[%s166 + $0x8c] sm:$0xf]
      %v211 = vld [vmem:[%s166 + $0x90] sm:$0xf]
      %v212 = vld [vmem:[%s166 + $0x94] sm:$0xf]
      %v213 = vld [vmem:[%s166 + $0x98] sm:$0xf]
      %v214 = vld [vmem:[%s166 + $0x9c] sm:$0xf]
      %v215 = vld [vmem:[%s166 + $0xa0] sm:$0xf]
      %v216 = vld [vmem:[%s166 + $0xa4] sm:$0xf]
      %v217 = vld [vmem:[%s166 + $0xa8] sm:$0xf]
      %v218 = vld [vmem:[%s166 + $0xac] sm:$0xf]
      %v219 = vld [vmem:[%s166 + $0xb0] sm:$0xf]
      %v220 = vld [vmem:[%s166 + $0xb4] sm:$0xf]
      %v221 = vld [vmem:[%s166 + $0xb8] sm:$0xf]
      %v222 = vld [vmem:[%s166 + $0xbc] sm:$0xf]
      %v223 = vld [vmem:[%s166 + $0xc0] sm:$0xf]
      %v224 = vld [vmem:[%s166 + $0xc4] sm:$0xf]
      %v225 = vld [vmem:[%s166 + $0xc8] sm:$0xf]
      %v226 = vld [vmem:[%s166 + $0xcc] sm:$0xf]
      %v227 = vld [vmem:[%s166 + $0xd0] sm:$0xf]
      %v228 = vld [vmem:[%s166 + $0xd4] sm:$0xf]
      %v229 = vld [vmem:[%s166 + $0xd8] sm:$0xf]
      %v230 = vld [vmem:[%s166 + $0xdc] sm:$0xf]
      %v231 = vld [vmem:[%s166 + $0xe0] sm:$0xf]
      %v232 = vld [vmem:[%s166 + $0xe4] sm:$0xf]
      %v233 = vld [vmem:[%s166 + $0xe8] sm:$0xf]
      %v234 = vld [vmem:[%s166 + $0xec] sm:$0xf]
      %v235 = vld [vmem:[%s166 + $0xf0] sm:$0xf]
      %v236 = vld [vmem:[%s166 + $0xf4] sm:$0xf]
      %v237 = vld [vmem:[%s166 + $0xf8] sm:$0xf]
      %v238 = vld [vmem:[%s166 + $0xfc] sm:$0xf]
      %v239 = vld [vmem:[%s1] sm:$0xf]
      %v240 = vld [vmem:[%s1 + $0x4] sm:$0xf]
      %v241 = vld [vmem:[%s1 + $0x8] sm:$0xf]
      %v242 = vld [vmem:[%s1 + $0xc] sm:$0xf]
      %v243 = vld [vmem:[%s1 + $0x10] sm:$0xf]
      %v244 = vld [vmem:[%s1 + $0x14] sm:$0xf]
      %v245 = vld [vmem:[%s1 + $0x18] sm:$0xf]
      %v246 = vld [vmem:[%s1 + $0x1c] sm:$0xf]
      %v247 = vld [vmem:[%s1 + $0x20] sm:$0xf]
      %v248 = vld [vmem:[%s1 + $0x24] sm:$0xf]
      %v249 = vld [vmem:[%s1 + $0x28] sm:$0xf]
      %v250 = vld [vmem:[%s1 + $0x2c] sm:$0xf]
      %v251 = vld [vmem:[%s1 + $0x30] sm:$0xf]
      %v252 = vld [vmem:[%s1 + $0x34] sm:$0xf]
      %v253 = vld [vmem:[%s1 + $0x38] sm:$0xf]
      %v254 = vld [vmem:[%s1 + $0x3c] sm:$0xf]
      %v255 = vld [vmem:[%s2] sm:$0x1]
      %v257 = vlaneseq
      %v258 = vshrl.u32 %v257, 7
      %v259 = vsub.s32 0, %v258
      %v260 = vrot.slane %v255, %v259
      %v326 = vunpack.c.l.b16 %v175
      %v327 = vunpack.c.l.b16 %v176
      %v328 = vunpack.c.l.b16 %v177
      %v329 = vunpack.c.l.b16 %v178
      %v330 = vunpack.c.l.b16 %v179
      %v331 = vunpack.c.l.b16 %v180
      %v332 = vunpack.c.l.b16 %v181
      %v333 = vunpack.c.l.b16 %v182
      %v334 = vunpack.c.l.b16 %v183
      %v335 = vunpack.c.l.b16 %v184
      %v336 = vunpack.c.l.b16 %v185
      %v337 = vunpack.c.l.b16 %v186
      %v338 = vunpack.c.l.b16 %v187
      %v339 = vunpack.c.l.b16 %v188
      %v340 = vunpack.c.l.b16 %v189
      %v341 = vunpack.c.l.b16 %v190
      %v342 = vunpack.c.l.b16 %v191
      %v343 = vunpack.c.l.b16 %v192
      %v344 = vunpack.c.l.b16 %v193
      %v345 = vunpack.c.l.b16 %v194
      %v346 = vunpack.c.l.b16 %v195
      %v347 = vunpack.c.l.b16 %v196
      %v348 = vunpack.c.l.b16 %v197
      %v349 = vunpack.c.l.b16 %v198
      %v350 = vunpack.c.l.b16 %v199
      %v351 = vunpack.c.l.b16 %v200
      %v352 = vunpack.c.l.b16 %v201
      %v353 = vunpack.c.l.b16 %v202
      %v354 = vunpack.c.l.b16 %v203
      %v355 = vunpack.c.l.b16 %v204
      %v356 = vunpack.c.l.b16 %v205
      %v357 = vunpack.c.l.b16 %v206
      %v358 = vunpack.c.l.b16 %v207
      %v359 = vunpack.c.l.b16 %v208
      %v360 = vunpack.c.l.b16 %v209
      %v361 = vunpack.c.l.b16 %v210
      %v362 = vunpack.c.l.b16 %v211
      %v363 = vunpack.c.l.b16 %v212
      %v364 = vunpack.c.l.b16 %v213
      %v365 = vunpack.c.l.b16 %v214
      %v366 = vunpack.c.l.b16 %v215
      %v367 = vunpack.c.l.b16 %v216
      %v368 = vunpack.c.l.b16 %v217
      %v369 = vunpack.c.l.b16 %v218
      %v370 = vunpack.c.l.b16 %v219
      %v371 = vunpack.c.l.b16 %v220
      %v372 = vunpack.c.l.b16 %v221
      %v373 = vunpack.c.l.b16 %v222
      %v374 = vunpack.c.l.b16 %v223
      %v375 = vunpack.c.l.b16 %v224
      %v376 = vunpack.c.l.b16 %v225
      %v377 = vunpack.c.l.b16 %v226
      %v378 = vunpack.c.l.b16 %v227
      %v379 = vunpack.c.l.b16 %v228
      %v380 = vunpack.c.l.b16 %v229
      %v381 = vunpack.c.l.b16 %v230
      %v382 = vunpack.c.l.b16 %v231
      %v383 = vunpack.c.l.b16 %v232
      %v384 = vunpack.c.l.b16 %v233
      %v385 = vunpack.c.l.b16 %v234
      %v386 = vunpack.c.l.b16 %v235
      %v387 = vunpack.c.l.b16 %v236
      %v388 = vunpack.c.l.b16 %v237
      %v389 = vunpack.c.l.b16 %v238
      %v390 = vpack.c.b16 %v327, %v326
      %v391 = vpack.c.b16 %v329, %v328
      %v392 = vpack.c.b16 %v331, %v330
      %v393 = vpack.c.b16 %v333, %v332
      %v394 = vpack.c.b16 %v335, %v334
      %v395 = vpack.c.b16 %v337, %v336
      %v396 = vpack.c.b16 %v339, %v338
      %v397 = vpack.c.b16 %v341, %v340
      %v398 = vpack.c.b16 %v343, %v342
      %v399 = vpack.c.b16 %v345, %v344
      %v400 = vpack.c.b16 %v347, %v346
      %v401 = vpack.c.b16 %v349, %v348
      %v402 = vpack.c.b16 %v351, %v350
      %v403 = vpack.c.b16 %v353, %v352
      %v404 = vpack.c.b16 %v355, %v354
      %v405 = vpack.c.b16 %v357, %v356
      %v406 = vpack.c.b16 %v359, %v358
      %v407 = vpack.c.b16 %v361, %v360
      %v408 = vpack.c.b16 %v363, %v362
      %v409 = vpack.c.b16 %v365, %v364
      %v410 = vpack.c.b16 %v367, %v366
      %v411 = vpack.c.b16 %v369, %v368
      %v412 = vpack.c.b16 %v371, %v370
      %v413 = vpack.c.b16 %v373, %v372
      %v414 = vpack.c.b16 %v375, %v374
      %v415 = vpack.c.b16 %v377, %v376
      %v416 = vpack.c.b16 %v379, %v378
      %v417 = vpack.c.b16 %v381, %v380
      %v418 = vpack.c.b16 %v383, %v382
      %v419 = vpack.c.b16 %v385, %v384
      %v420 = vpack.c.b16 %v387, %v386
      %v421 = vpack.c.b16 %v389, %v388
      %v470 = vunpack.c.l.b16 %v239
      %v471 = vunpack.c.l.b16 %v240
      %v472 = vunpack.c.l.b16 %v241
      %v473 = vunpack.c.l.b16 %v242
      %v474 = vunpack.c.l.b16 %v243
      %v475 = vunpack.c.l.b16 %v244
      %v476 = vunpack.c.l.b16 %v245
      %v477 = vunpack.c.l.b16 %v246
      %v478 = vunpack.c.l.b16 %v247
      %v479 = vunpack.c.l.b16 %v248
      %v480 = vunpack.c.l.b16 %v249
      %v481 = vunpack.c.l.b16 %v250
      %v482 = vunpack.c.l.b16 %v251
      %v483 = vunpack.c.l.b16 %v252
      %v484 = vunpack.c.l.b16 %v253
      %v485 = vunpack.c.l.b16 %v254
      %v486 = vpack.c.b16 %v471, %v470
      %v487 = vpack.c.b16 %v473, %v472
      %v488 = vpack.c.b16 %v475, %v474
      %v489 = vpack.c.b16 %v477, %v476
      %v490 = vpack.c.b16 %v479, %v478
      %v491 = vpack.c.b16 %v481, %v480
      %v492 = vpack.c.b16 %v483, %v482
      %v493 = vpack.c.b16 %v485, %v484
      %502 = vmatprep.subr.bf16.mxu0 0
      %503 = vmatpush1.bf16.msra.mxu0 %v486
      %504 = vmatprep.subr.bf16.mxu0 0
      %505 = vmatpush1.bf16.msra.mxu0 %v487
      %506 = vmatprep.subr.bf16.mxu0 0
      %507 = vmatpush1.bf16.msra.mxu0 %v488
      %508 = vmatprep.subr.bf16.mxu0 0
      %509 = vmatpush1.bf16.msra.mxu0 %v489
      %510 = vmatprep.subr.bf16.mxu0 0
      %511 = vmatpush1.bf16.msra.mxu0 %v490
      %512 = vmatprep.subr.bf16.mxu0 0
      %513 = vmatpush1.bf16.msra.mxu0 %v491
      %514 = vmatprep.subr.bf16.mxu0 0
      %515 = vmatpush1.bf16.msra.mxu0 %v492
      %516 = vmatprep.subr.bf16.mxu0 0
      %517 = vmatpush1.bf16.msra.mxu0 %v493
      %518 = vmatprep.subr.bf16.mxu0 0
      %519 = vmatpush1.bf16.msra.mxu0 0
      %520 = vmatprep.subr.bf16.mxu0 0
      %521 = vmatpush1.bf16.msra.mxu0 0
      %522 = vmatprep.subr.bf16.mxu0 0
      %523 = vmatpush1.bf16.msra.mxu0 0
      %524 = vmatprep.subr.bf16.mxu0 0
      %525 = vmatpush1.bf16.msra.mxu0 0
      %526 = vmatprep.subr.bf16.mxu0 0
      %527 = vmatpush1.bf16.msra.mxu0 0
      %528 = vmatprep.subr.bf16.mxu0 0
      %529 = vmatpush1.bf16.msra.mxu0 0
      %530 = vmatprep.subr.bf16.mxu0 0
      %531 = vmatpush1.bf16.msra.mxu0 0
      %532 = vmatprep.subr.bf16.mxu0 0
      %533 = vmatpush1.bf16.msra.mxu0 0
      %534 = vmatprep.mubr.bf16.mxu0 0
      %535 = vmatmul.mubr.bf16.gmra.mrb[0].mxu0 %v390
      %v536 = vpop.f32.mrb[0].mxu0
      %v537 = vadd.f32 %v260, %v536
      %v538 = vpop.f32.mrb[0].mxu0
      %v539 = vpop.f32.mrb[0].mxu0
      %v540 = vadd.f32 %v260, %v539
      %v541 = vpop.f32.mrb[0].mxu0
      %542 = vmatprep.mubr.bf16.mxu0 0
      %543 = vmatmul.mubr.bf16.gmra.mrb[0].mxu0 %v391
      %v544 = vpop.f32.mrb[0].mxu0
      %v545 = vadd.f32 %v260, %v544
      %v546 = vpop.f32.mrb[0].mxu0
      %v547 = vpop.f32.mrb[0].mxu0
      %v548 = vadd.f32 %v260, %v547
      %v549 = vpop.f32.mrb[0].mxu0
      %550 = vmatprep.mubr.bf16.mxu0 0
      %551 = vmatmul.mubr.bf16.gmra.mrb[0].mxu0 %v392
      %v552 = vpop.f32.mrb[0].mxu0
      %v553 = vadd.f32 %v260, %v552
      %v554 = vpop.f32.mrb[0].mxu0
      %v555 = vpop.f32.mrb[0].mxu0
      %v556 = vadd.f32 %v260, %v555
      %v557 = vpop.f32.mrb[0].mxu0
      %558 = vmatprep.mubr.bf16.mxu0 0
      %559 = vmatmul.mubr.bf16.gmra.mrb[0].mxu0 %v393
      %v560 = vpop.f32.mrb[0].mxu0
      %v561 = vadd.f32 %v260, %v560
      %v562 = vpop.f32.mrb[0].mxu0
      %v563 = vpop.f32.mrb[0].mxu0
      %v564 = vadd.f32 %v260, %v563
      %v565 = vpop.f32.mrb[0].mxu0
      %566 = vmatprep.mubr.bf16.mxu0 0
      %567 = vmatmul.mubr.bf16.gmra.mrb[0].mxu0 %v394
      %v568 = vpop.f32.mrb[0].mxu0
      %v569 = vadd.f32 %v260, %v568
      %v570 = vpop.f32.mrb[0].mxu0
      %v571 = vpop.f32.mrb[0].mxu0
      %v572 = vadd.f32 %v260, %v571
      %v573 = vpop.f32.mrb[0].mxu0
      %574 = vmatprep.mubr.bf16.mxu0 0
      %575 = vmatmul.mubr.bf16.gmra.mrb[0].mxu0 %v395
      %v576 = vpop.f32.mrb[0].mxu0
      %v577 = vadd.f32 %v260, %v576
      %v578 = vpop.f32.mrb[0].mxu0
      %v579 = vpop.f32.mrb[0].mxu0
      %v580 = vadd.f32 %v260, %v579
      %v581 = vpop.f32.mrb[0].mxu0
      %582 = vmatprep.mubr.bf16.mxu0 0
      %583 = vmatmul.mubr.bf16.gmra.mrb[0].mxu0 %v396
      %v584 = vpop.f32.mrb[0].mxu0
      %v585 = vadd.f32 %v260, %v584
      %v586 = vpop.f32.mrb[0].mxu0
      %v587 = vpop.f32.mrb[0].mxu0
      %v588 = vadd.f32 %v260, %v587
      %v589 = vpop.f32.mrb[0].mxu0
      %590 = vmatprep.mubr.bf16.mxu0 0
      %591 = vmatmul.mubr.bf16.gmra.mrb[0].mxu0 %v397
      %v592 = vpop.f32.mrb[0].mxu0
      %v593 = vadd.f32 %v260, %v592
      %v594 = vpop.f32.mrb[0].mxu0
      %v595 = vpop.f32.mrb[0].mxu0
      %v596 = vadd.f32 %v260, %v595
      %v597 = vpop.f32.mrb[0].mxu0
      %598 = vmatprep.mubr.bf16.mxu0 0
      %599 = vmatmul.mubr.bf16.gmra.mrb[0].mxu0 %v398
      %v600 = vpop.f32.mrb[0].mxu0
      %v601 = vadd.f32 %v260, %v600
      %v602 = vpop.f32.mrb[0].mxu0
      %v603 = vpop.f32.mrb[0].mxu0
      %v604 = vadd.f32 %v260, %v603
      %v605 = vpop.f32.mrb[0].mxu0
      %606 = vmatprep.mubr.bf16.mxu0 0
      %607 = vmatmul.mubr.bf16.gmra.mrb[0].mxu0 %v399
      %v608 = vpop.f32.mrb[0].mxu0
      %v609 = vadd.f32 %v260, %v608
      %v610 = vpop.f32.mrb[0].mxu0
      %v611 = vpop.f32.mrb[0].mxu0
      %v612 = vadd.f32 %v260, %v611
      %v613 = vpop.f32.mrb[0].mxu0
      %614 = vmatprep.mubr.bf16.mxu0 0
      %615 = vmatmul.mubr.bf16.gmra.mrb[0].mxu0 %v400
      %v616 = vpop.f32.mrb[0].mxu0
      %v617 = vadd.f32 %v260, %v616
      %v618 = vpop.f32.mrb[0].mxu0
      %v619 = vpop.f32.mrb[0].mxu0
      %v620 = vadd.f32 %v260, %v619
      %v621 = vpop.f32.mrb[0].mxu0
      %622 = vmatprep.mubr.bf16.mxu0 0
      %623 = vmatmul.mubr.bf16.gmra.mrb[0].mxu0 %v401
      %v624 = vpop.f32.mrb[0].mxu0
      %v625 = vadd.f32 %v260, %v624
      %v626 = vpop.f32.mrb[0].mxu0
      %v627 = vpop.f32.mrb[0].mxu0
      %v628 = vadd.f32 %v260, %v627
      %v629 = vpop.f32.mrb[0].mxu0
      %630 = vmatprep.mubr.bf16.mxu0 0
      %631 = vmatmul.mubr.bf16.gmra.mrb[0].mxu0 %v402
      %v632 = vpop.f32.mrb[0].mxu0
      %v633 = vadd.f32 %v260, %v632
      %v634 = vpop.f32.mrb[0].mxu0
      %v635 = vpop.f32.mrb[0].mxu0
      %v636 = vadd.f32 %v260, %v635
      %v637 = vpop.f32.mrb[0].mxu0
      %638 = vmatprep.mubr.bf16.mxu0 0
      %639 = vmatmul.mubr.bf16.gmra.mrb[0].mxu0 %v403
      %v640 = vpop.f32.mrb[0].mxu0
      %v641 = vadd.f32 %v260, %v640
      %v642 = vpop.f32.mrb[0].mxu0
      %v643 = vpop.f32.mrb[0].mxu0
      %v644 = vadd.f32 %v260, %v643
      %v645 = vpop.f32.mrb[0].mxu0
      %646 = vmatprep.mubr.bf16.mxu0 0
      %647 = vmatmul.mubr.bf16.gmra.mrb[0].mxu0 %v404
      %v648 = vpop.f32.mrb[0].mxu0
      %v649 = vadd.f32 %v260, %v648
      %v650 = vpop.f32.mrb[0].mxu0
      %v651 = vpop.f32.mrb[0].mxu0
      %v652 = vadd.f32 %v260, %v651
      %v653 = vpop.f32.mrb[0].mxu0
      %654 = vmatprep.mubr.bf16.mxu0 0
      %655 = vmatmul.mubr.bf16.gmra.mrb[0].mxu0 %v405
      %v656 = vpop.f32.mrb[0].mxu0
      %v657 = vadd.f32 %v260, %v656
      %v658 = vpop.f32.mrb[0].mxu0
      %v659 = vpop.f32.mrb[0].mxu0
      %v660 = vadd.f32 %v260, %v659
      %v661 = vpop.f32.mrb[0].mxu0
      %662 = vmatprep.mubr.bf16.mxu0 0
      %663 = vmatmul.mubr.bf16.gmra.mrb[0].mxu0 %v406
      %v664 = vpop.f32.mrb[0].mxu0
      %v665 = vadd.f32 %v260, %v664
      %v666 = vpop.f32.mrb[0].mxu0
      %v667 = vpop.f32.mrb[0].mxu0
      %v668 = vadd.f32 %v260, %v667
      %v669 = vpop.f32.mrb[0].mxu0
      %670 = vmatprep.mubr.bf16.mxu0 0
      %671 = vmatmul.mubr.bf16.gmra.mrb[0].mxu0 %v407
      %v672 = vpop.f32.mrb[0].mxu0
      %v673 = vadd.f32 %v260, %v672
      %v674 = vpop.f32.mrb[0].mxu0
      %v675 = vpop.f32.mrb[0].mxu0
      %v676 = vadd.f32 %v260, %v675
      %v677 = vpop.f32.mrb[0].mxu0
      %678 = vmatprep.mubr.bf16.mxu0 0
      %679 = vmatmul.mubr.bf16.gmra.mrb[0].mxu0 %v408
      %v680 = vpop.f32.mrb[0].mxu0
      %v681 = vadd.f32 %v260, %v680
      %v682 = vpop.f32.mrb[0].mxu0
      %v683 = vpop.f32.mrb[0].mxu0
      %v684 = vadd.f32 %v260, %v683
      %v685 = vpop.f32.mrb[0].mxu0
      %686 = vmatprep.mubr.bf16.mxu0 0
      %687 = vmatmul.mubr.bf16.gmra.mrb[0].mxu0 %v409
      %v688 = vpop.f32.mrb[0].mxu0
      %v689 = vadd.f32 %v260, %v688
      %v690 = vpop.f32.mrb[0].mxu0
      %v691 = vpop.f32.mrb[0].mxu0
      %v692 = vadd.f32 %v260, %v691
      %v693 = vpop.f32.mrb[0].mxu0
      %694 = vmatprep.mubr.bf16.mxu0 0
      %695 = vmatmul.mubr.bf16.gmra.mrb[0].mxu0 %v410
      %v696 = vpop.f32.mrb[0].mxu0
      %v697 = vadd.f32 %v260, %v696
      %v698 = vpop.f32.mrb[0].mxu0
      %v699 = vpop.f32.mrb[0].mxu0
      %v700 = vadd.f32 %v260, %v699
      %v701 = vpop.f32.mrb[0].mxu0
      %702 = vmatprep.mubr.bf16.mxu0 0
      %703 = vmatmul.mubr.bf16.gmra.mrb[0].mxu0 %v411
      %v704 = vpop.f32.mrb[0].mxu0
      %v705 = vadd.f32 %v260, %v704
      %v706 = vpop.f32.mrb[0].mxu0
      %v707 = vpop.f32.mrb[0].mxu0
      %v708 = vadd.f32 %v260, %v707
      %v709 = vpop.f32.mrb[0].mxu0
      %710 = vmatprep.mubr.bf16.mxu0 0
      %711 = vmatmul.mubr.bf16.gmra.mrb[0].mxu0 %v412
      %v712 = vpop.f32.mrb[0].mxu0
      %v713 = vadd.f32 %v260, %v712
      %v714 = vpop.f32.mrb[0].mxu0
      %v715 = vpop.f32.mrb[0].mxu0
      %v716 = vadd.f32 %v260, %v715
      %v717 = vpop.f32.mrb[0].mxu0
      %718 = vmatprep.mubr.bf16.mxu0 0
      %719 = vmatmul.mubr.bf16.gmra.mrb[0].mxu0 %v413
      %v720 = vpop.f32.mrb[0].mxu0
      %v721 = vadd.f32 %v260, %v720
      %v722 = vpop.f32.mrb[0].mxu0
      %v723 = vpop.f32.mrb[0].mxu0
      %v724 = vadd.f32 %v260, %v723
      %v725 = vpop.f32.mrb[0].mxu0
      %726 = vmatprep.mubr.bf16.mxu0 0
      %727 = vmatmul.mubr.bf16.gmra.mrb[0].mxu0 %v414
      %v728 = vpop.f32.mrb[0].mxu0
      %v729 = vadd.f32 %v260, %v728
      %v730 = vpop.f32.mrb[0].mxu0
      %v731 = vpop.f32.mrb[0].mxu0
      %v732 = vadd.f32 %v260, %v731
      %v733 = vpop.f32.mrb[0].mxu0
      %734 = vmatprep.mubr.bf16.mxu0 0
      %735 = vmatmul.mubr.bf16.gmra.mrb[0].mxu0 %v415
      %v736 = vpop.f32.mrb[0].mxu0
      %v737 = vadd.f32 %v260, %v736
      %v738 = vpop.f32.mrb[0].mxu0
      %v739 = vpop.f32.mrb[0].mxu0
      %v740 = vadd.f32 %v260, %v739
      %v741 = vpop.f32.mrb[0].mxu0
      %742 = vmatprep.mubr.bf16.mxu0 0
      %743 = vmatmul.mubr.bf16.gmra.mrb[0].mxu0 %v416
      %v744 = vpop.f32.mrb[0].mxu0
      %v745 = vadd.f32 %v260, %v744
      %v746 = vpop.f32.mrb[0].mxu0
      %v747 = vpop.f32.mrb[0].mxu0
      %v748 = vadd.f32 %v260, %v747
      %v749 = vpop.f32.mrb[0].mxu0
      %750 = vmatprep.mubr.bf16.mxu0 0
      %751 = vmatmul.mubr.bf16.gmra.mrb[0].mxu0 %v417
      %v752 = vpop.f32.mrb[0].mxu0
      %v753 = vadd.f32 %v260, %v752
      %v754 = vpop.f32.mrb[0].mxu0
      %v755 = vpop.f32.mrb[0].mxu0
      %v756 = vadd.f32 %v260, %v755
      %v757 = vpop.f32.mrb[0].mxu0
      %758 = vmatprep.mubr.bf16.mxu0 0
      %759 = vmatmul.mubr.bf16.gmra.mrb[0].mxu0 %v418
      %v760 = vpop.f32.mrb[0].mxu0
      %v761 = vadd.f32 %v260, %v760
      %v762 = vpop.f32.mrb[0].mxu0
      %v763 = vpop.f32.mrb[0].mxu0
      %v764 = vadd.f32 %v260, %v763
      %v765 = vpop.f32.mrb[0].mxu0
      %766 = vmatprep.mubr.bf16.mxu0 0
      %767 = vmatmul.mubr.bf16.gmra.mrb[0].mxu0 %v419
      %v768 = vpop.f32.mrb[0].mxu0
      %v769 = vadd.f32 %v260, %v768
      %v770 = vpop.f32.mrb[0].mxu0
      %v771 = vpop.f32.mrb[0].mxu0
      %v772 = vadd.f32 %v260, %v771
      %v773 = vpop.f32.mrb[0].mxu0
      %774 = vmatprep.mubr.bf16.mxu0 0
      %775 = vmatmul.mubr.bf16.gmra.mrb[0].mxu0 %v420
      %v776 = vpop.f32.mrb[0].mxu0
      %v777 = vadd.f32 %v260, %v776
      %v778 = vpop.f32.mrb[0].mxu0
      %v779 = vpop.f32.mrb[0].mxu0
      %v780 = vadd.f32 %v260, %v779
      %v781 = vpop.f32.mrb[0].mxu0
      %782 = vmatprep.mubr.bf16.mxu0 0
      %783 = vmatmul.mubr.bf16.gmra.mrb[0].mxu0 %v421
      %v784 = vpop.f32.mrb[0].mxu0
      %v785 = vadd.f32 %v260, %v784
      %v786 = vpop.f32.mrb[0].mxu0
      %v787 = vpop.f32.mrb[0].mxu0
      %v788 = vadd.f32 %v260, %v787
      %v789 = vpop.f32.mrb[0].mxu0
      %790 = vdwg.mxu0
      %791 = vst [vmem:[%s172] sm:$0xff] %v537
      %792 = vst [vmem:[%s172 + $0x8] sm:$0xff] %v540
      %793 = vst [vmem:[%s172 + $0x10] sm:$0xff] %v545
      %794 = vst [vmem:[%s172 + $0x18] sm:$0xff] %v548
      %795 = vst [vmem:[%s172 + $0x20] sm:$0xff] %v553
      %796 = vst [vmem:[%s172 + $0x28] sm:$0xff] %v556
      %797 = vst [vmem:[%s172 + $0x30] sm:$0xff] %v561
      %798 = vst [vmem:[%s172 + $0x38] sm:$0xff] %v564
      %799 = vst [vmem:[%s172 + $0x40] sm:$0xff] %v569
      %800 = vst [vmem:[%s172 + $0x48] sm:$0xff] %v572
      %801 = vst [vmem:[%s172 + $0x50] sm:$0xff] %v577
      %802 = vst [vmem:[%s172 + $0x58] sm:$0xff] %v580
      %803 = vst [vmem:[%s172 + $0x60] sm:$0xff] %v585
      %804 = vst [vmem:[%s172 + $0x68] sm:$0xff] %v588
      %805 = vst [vmem:[%s172 + $0x70] sm:$0xff] %v593
      %806 = vst [vmem:[%s172 + $0x78] sm:$0xff] %v596
      %807 = vst [vmem:[%s172 + $0x80] sm:$0xff] %v601
      %808 = vst [vmem:[%s172 + $0x88] sm:$0xff] %v604
      %809 = vst [vmem:[%s172 + $0x90] sm:$0xff] %v609
      %810 = vst [vmem:[%s172 + $0x98] sm:$0xff] %v612
      %811 = vst [vmem:[%s172 + $0xa0] sm:$0xff] %v617
      %812 = vst [vmem:[%s172 + $0xa8] sm:$0xff] %v620
      %813 = vst [vmem:[%s172 + $0xb0] sm:$0xff] %v625
      %814 = vst [vmem:[%s172 + $0xb8] sm:$0xff] %v628
      %815 = vst [vmem:[%s172 + $0xc0] sm:$0xff] %v633
      %816 = vst [vmem:[%s172 + $0xc8] sm:$0xff] %v636
      %817 = vst [vmem:[%s172 + $0xd0] sm:$0xff] %v641
      %818 = vst [vmem:[%s172 + $0xd8] sm:$0xff] %v644
      %819 = vst [vmem:[%s172 + $0xe0] sm:$0xff] %v649
      %820 = vst [vmem:[%s172 + $0xe8] sm:$0xff] %v652
      %821 = vst [vmem:[%s172 + $0xf0] sm:$0xff] %v657
      %822 = vst [vmem:[%s172 + $0xf8] sm:$0xff] %v660
      %823 = vst [vmem:[%s172 + $0x100] sm:$0xff] %v665
      %824 = vst [vmem:[%s172 + $0x108] sm:$0xff] %v668
      %825 = vst [vmem:[%s172 + $0x110] sm:$0xff] %v673
      %826 = vst [vmem:[%s172 + $0x118] sm:$0xff] %v676
      %827 = vst [vmem:[%s172 + $0x120] sm:$0xff] %v681
      %828 = vst [vmem:[%s172 + $0x128] sm:$0xff] %v684
      %829 = vst [vmem:[%s172 + $0x130] sm:$0xff] %v689
      %830 = vst [vmem:[%s172 + $0x138] sm:$0xff] %v692
      %831 = vst [vmem:[%s172 + $0x140] sm:$0xff] %v697
      %832 = vst [vmem:[%s172 + $0x148] sm:$0xff] %v700
      %833 = vst [vmem:[%s172 + $0x150] sm:$0xff] %v705
      %834 = vst [vmem:[%s172 + $0x158] sm:$0xff] %v708
      %835 = vst [vmem:[%s172 + $0x160] sm:$0xff] %v713
      %836 = vst [vmem:[%s172 + $0x168] sm:$0xff] %v716
      %837 = vst [vmem:[%s172 + $0x170] sm:$0xff] %v721
      %838 = vst [vmem:[%s172 + $0x178] sm:$0xff] %v724
      %839 = vst [vmem:[%s172 + $0x180] sm:$0xff] %v729
      %840 = vst [vmem:[%s172 + $0x188] sm:$0xff] %v732
      %841 = vst [vmem:[%s172 + $0x190] sm:$0xff] %v737
      %842 = vst [vmem:[%s172 + $0x198] sm:$0xff] %v740
      %843 = vst [vmem:[%s172 + $0x1a0] sm:$0xff] %v745
      %844 = vst [vmem:[%s172 + $0x1a8] sm:$0xff] %v748
      %845 = vst [vmem:[%s172 + $0x1b0] sm:$0xff] %v753
      %846 = vst [vmem:[%s172 + $0x1b8] sm:$0xff] %v756
      %847 = vst [vmem:[%s172 + $0x1c0] sm:$0xff] %v761
      %848 = vst [vmem:[%s172 + $0x1c8] sm:$0xff] %v764
      %849 = vst [vmem:[%s172 + $0x1d0] sm:$0xff] %v769
      %850 = vst [vmem:[%s172 + $0x1d8] sm:$0xff] %v772
      %851 = vst [vmem:[%s172 + $0x1e0] sm:$0xff] %v777
      %852 = vst [vmem:[%s172 + $0x1e8] sm:$0xff] %v780
      %853 = vst [vmem:[%s172 + $0x1f0] sm:$0xff] %v785
      %854 = vst [vmem:[%s172 + $0x1f8] sm:$0xff] %v788
      %s855 = smul.u32 64, %s14
      %p856 = scmp.lt.s32.totalorder %s855, 639
      %s857 = scalar_select %p856, %s855, 639
      %s858 = smul.addr %s857, 8
      %s859 = scalar_lea.vmem %s3, %s858
      // Predicated region
      $region33: #{ggcnn_forward.13} parent=31 // pred_check
        %p860 = pneg %p100
      $region34: #{ggcnn_forward.13} parent=31 // pred_check_branch
        %862 = sbr.rel (%p860) target = $region36
      $region35: #{ggcnn_forward.13} parent=31 // pred_region
        %s863 = smul.u32 64, %s14
      $region36: #{ggcnn_forward.13} parent=31 // pred_fallthru
        _
    $region32: #{ggcnn_forward.13} parent=5 // pred_fallthru
      _
    %p864 = scmp.le.s32.totalorder 2, %s9
    // Predicated region
    $region37: #{ggcnn_forward.13} parent=5 // pred_check
      %p865 = pneg %p864
    $region38: #{ggcnn_forward.13} parent=5 // pred_check_branch
      %867 = sbr.rel (%p865) target = $region40
    $region39: #{ggcnn_forward.13} parent=5 // pred_region
      %s868 = ssub.s32 %s9, 2
      // Predicated region
      $region41: #{ggcnn_forward.13} parent=39 // pred_check
        %p869 = pneg %p106
      $region42: #{ggcnn_forward.13} parent=39 // pred_check_branch
        %871 = sbr.rel (%p869) target = $region44
      $region43: #{ggcnn_forward.13} parent=39 // pred_region
        %s872 = smul.u32 64, %s15
        %p873 = scmp.lt.s32.totalorder %s872, 639
        %s874 = scalar_select %p873, %s872, 639
        %s875 = smul.addr %s874, 8
        %s876 = scalar_lea.vmem %s3, %s875
      $region44: #{ggcnn_forward.13} parent=39 // pred_fallthru
        _
    $region40: #{ggcnn_forward.13} parent=5 // pred_fallthru
      _
  $region6: #{ggcnn_forward.13} parent=0 // loop_footer
    %s13 = sadd.s32 1, %s9
  $region7: #{ggcnn_forward.13} parent=0 // loop_footer_branch
    %8 = sbr.rel target = $region3
  $region8: #{ggcnn_forward.13} parent=0 // loop_exit
    _

</llo_original>
